<compile_context>
chip_gen: v7x
topology: tpu7x:2x2x1
jax: 0.10.0
libtpu: 0.0.40
codegen_flags: <defaults>
</compile_context>

<pallas_src>
from functools import partial

import numpy as np
import jax
import jax.numpy as jnp
from jax.experimental import pallas as pl
from jax.experimental.pallas import tpu as pltpu

EPS = 1e-5
_VMEM_LIMIT = 32 * 1024 * 1024


# ---------------------------------------------------------------------------
# Helpers: tiling + 3x3x3 tap tables (flat offsets & boundary masks)
# ---------------------------------------------------------------------------
def _conv_tiling(S, halo, cap=256):
    """Pick (TM, PH): TM | S, PH | TM, PH multiple of 128, PH >= halo."""
    ph = ((halo + 127) // 128) * 128
    tm = None
    t = ph
    while t <= S:
        if S % t == 0 and t <= max(cap, ph):
            tm = t
        t += ph
    if tm is None:            # fallback: one tile per sample
        ph = S
        tm = S
    assert halo <= ph, "spatial volume too small for the flat-shift conv scheme"
    assert tm % ph == 0 and S % tm == 0
    return tm, ph


def _build_tap_tables(D, H, W):
    """27 flat offsets (d*H*W + h*W + w strides) and (27, S) validity masks."""
    HW = H * W
    dd, hh, ww = np.meshgrid(np.arange(D), np.arange(H), np.arange(W), indexing="ij")
    offs, masks = [], []
    for kd in (-1, 0, 1):
        for kh in (-1, 0, 1):
            for kw in (-1, 0, 1):
                offs.append(kd * HW + kh * W + kw)
                valid = ((dd + kd >= 0) & (dd + kd < D) &
                         (hh + kh >= 0) & (hh + kh < H) &
                         (ww + kw >= 0) & (ww + kw < W))
                masks.append(valid.reshape(-1))
    masks = np.stack(masks).astype(np.float32)          # (27, S)
    mask_needed = tuple(bool(not m.all()) for m in masks)
    return tuple(offs), masks, mask_needed


# ---------------------------------------------------------------------------
# Kernel 1: Mish -> InstanceNorm3d (affine=False), writes a zero-padded flat slab (bf16).
# Input block: (BR, S) f32   Output block: (BR, pad_l + S + pad_r) bf16
# ---------------------------------------------------------------------------
def _mish_inorm_kernel(x_ref, o_ref, *, s, pad_l, pad_r):
    x = x_ref[...]                                       # (BR, S) f32
    # Single-exp Mish:  tanh(softplus(x)) = num/den, t = exp(-|x|)
    t = jnp.exp(-jnp.abs(x))
    pos = x >= 0
    num = jnp.where(pos, 1.0 + 2.0 * t, t * (t + 2.0))
    den = num + jnp.where(pos, 2.0 * t * t, 2.0)
    a = x * num * pl.reciprocal(den, approx=True)        # Mish
    # InstanceNorm (biased var, eps inside rsqrt) over the spatial axis.
    mean = jnp.mean(a, axis=-1, keepdims=True)
    cen = a - mean
    var = jnp.mean(cen * cen, axis=-1, keepdims=True)
    y = cen * jax.lax.rsqrt(var + EPS)
    rows = o_ref.shape[0]
    o_ref[:, :pad_l] = jnp.zeros((rows, pad_l), o_ref.dtype)       # fused zero-pad
    o_ref[:, pad_l:pad_l + s] = y.astype(o_ref.dtype)
    o_ref[:, pad_l + s:] = jnp.zeros((rows, pad_r), o_ref.dtype)


def mish_inorm_padded(x2d, pad_l, pad_r):
    R, S = x2d.shape
    if R % 16 == 0:
        br = 16
    elif R % 8 == 0:
        br = 8
    else:
        br = R
    width = pad_l + S + pad_r
    return pl.pallas_call(
        partial(_mish_inorm_kernel, s=S, pad_l=pad_l, pad_r=pad_r),
        out_shape=jax.ShapeDtypeStruct((R, width), jnp.bfloat16),
        grid=(R // br,),
        in_specs=[pl.BlockSpec((br, S), lambda i: (i, 0))],
        out_specs=pl.BlockSpec((br, width), lambda i: (i, 0)),
        compiler_params=pltpu.CompilerParams(
            dimension_semantics=("parallel",),
            vmem_limit_bytes=_VMEM_LIMIT),
    )(x2d)


# ---------------------------------------------------------------------------
# Kernel 2: 3x3x3 Conv3d (stride=1, pad=1, no bias), spatially tiled, optional
# fused residual add.  Transposed product: out(Cout, TM) = sum_t W_t @ win_t.
# ---------------------------------------------------------------------------
def _conv3x3x3_kernel(w_ref, m_ref, l_ref, c_ref, r_ref, *rest,
                      offsets, mask_needed, tm, ph, add_residual):
    if add_residual:
        res_ref, o_ref, buf_ref = rest
    else:
        o_ref, buf_ref = rest
    cout = o_ref.shape[1]

    # Assemble the haloed activation window in VMEM scratch: (Cin, PH + TM + PH) f32.
    buf_ref[:, :ph] = l_ref[0].astype(jnp.float32)
    buf_ref[:, ph:ph + tm] = c_ref[0].astype(jnp.float32)
    buf_ref[:, ph + tm:] = r_ref[0].astype(jnp.float32)

    w_all = w_ref[...]                                   # (27, Cout, Cin) bf16
    masks = m_ref[...]                                   # (27, TM) f32

    acc = jnp.zeros((cout, tm), jnp.float32)
    for t, off in enumerate(offsets):
        win = buf_ref[:, ph + off:ph + off + tm]         # (Cin, TM) f32, constant shift
        if mask_needed[t]:
            win = win * masks[t:t + 1, :]                # zero taps that cross d/h/w borders
        acc = acc + jnp.dot(w_all[t], win.astype(jnp.bfloat16),
                            preferred_element_type=jnp.float32)
    if add_residual:
        acc = acc + res_ref[0]                           # fused residual add
    o_ref[0] = acc.astype(o_ref.dtype)


def conv3x3x3(ap, wk, masks, offsets, mask_needed, tm, ph, residual=None):
    # ap: (N, Cin, TM + S + PH) bf16 with zero pads already written by kernel 1.
    N, Cin, Sp = ap.shape
    S = Sp - tm - ph
    nt = S // tm
    Cout = wk.shape[1]
    rpb = tm // ph                                       # PH-blocks per TM-block

    in_specs = [
        pl.BlockSpec((27, Cout, Cin), lambda n, i: (0, 0, 0)),              # weights (resident)
        pl.BlockSpec((27, tm), lambda n, i: (0, i)),                        # boundary masks
        pl.BlockSpec((1, Cin, ph), lambda n, i: (n, 0, (i + 1) * rpb - 1)), # left halo
        pl.BlockSpec((1, Cin, tm), lambda n, i: (n, 0, i + 1)),             # main tile
        pl.BlockSpec((1, Cin, ph), lambda n, i: (n, 0, (i + 2) * rpb)),     # right halo
    ]
    args = [wk, masks, ap, ap, ap]
    if residual is not None:
        in_specs.append(pl.BlockSpec((1, Cout, tm), lambda n, i: (n, 0, i)))
        args.append(residual)

    kern = partial(_conv3x3x3_kernel, offsets=offsets, mask_needed=mask_needed,
                   tm=tm, ph=ph, add_residual=residual is not None)
    return pl.pallas_call(
        kern,
        out_shape=jax.ShapeDtypeStruct((N, Cout, S), jnp.float32),
        grid=(N, nt),
        in_specs=in_specs,
        out_specs=pl.BlockSpec((1, Cout, tm), lambda n, i: (n, 0, i)),
        scratch_shapes=[pltpu.VMEM((Cin, tm + 2 * ph), jnp.float32)],
        compiler_params=pltpu.CompilerParams(
            dimension_semantics=("parallel", "parallel"),
            vmem_limit_bytes=_VMEM_LIMIT),
    )(*args)


# ---------------------------------------------------------------------------
# ResBlock forward: x + conv2(conv1(x)), ConvBlock = Mish -> InstanceNorm3d -> Conv3d
# ---------------------------------------------------------------------------
def resblock_pallas(x, w1, w2, *, tile_cap=256):
    # tile_cap=256 keeps >=2 spatial tiles at demo size; raise to 1024-2048 for big volumes.
    N, C, D, H, W = x.shape
    FH = w1.shape[0]
    S = D * H * W
    halo = H * W + W + 1
    tm, ph = _conv_tiling(S, halo, cap=tile_cap)
    offsets, masks_np, mask_needed = _build_tap_tables(D, H, W)
    masks = jnp.asarray(masks_np)                        # (27, S) f32 constant

    def prep_w(w):                                       # (Cout,Cin,3,3,3) -> (27,Cout,Cin) bf16
        cout, cin = w.shape[0], w.shape[1]
        return jnp.transpose(w, (2, 3, 4, 0, 1)).reshape(27, cout, cin).astype(jnp.bfloat16)

    wk1, wk2 = prep_w(w1), prep_w(w2)
    width = tm + S + ph

    # Block 1: Mish -> IN (writes padded bf16 slab) -> Conv3d
    a1 = mish_inorm_padded(x.reshape(N * C, S), pad_l=tm, pad_r=ph)
    h1 = conv3x3x3(a1.reshape(N, C, width), wk1, masks, offsets, mask_needed, tm, ph)

    # Block 2: Mish -> IN (padded bf16 slab) -> Conv3d with fused residual add of x
    a2 = mish_inorm_padded(h1.reshape(N * FH, S), pad_l=tm, pad_r=ph)
    out = conv3x3x3(a2.reshape(N, FH, width), wk2, masks, offsets, mask_needed, tm, ph,
                    residual=x.reshape(N, C, S))
    return out.reshape(N, C, D, H, W)


# ---------------------------------------------------------------------------
# Pure-JAX reference (mirrors the PyTorch module; conv operands in bf16, f32 accum
# to match the kernel's MXU precision).
# ---------------------------------------------------------------------------
def _mish_ref(x):
    return x * jnp.tanh(jax.nn.softplus(x))


def _inorm_ref(x):
    m = jnp.mean(x, axis=(2, 3, 4), keepdims=True)
    v = jnp.mean((x - m) ** 2, axis=(2, 3, 4), keepdims=True)
    return (x - m) * jax.lax.rsqrt(v + EPS)


def _conv3d_ref(x, w):
    return jax.lax.conv_general_dilated(
        x.astype(jnp.bfloat16), w.astype(jnp.bfloat16),
        window_strides=(1, 1, 1), padding=((1, 1), (1, 1), (1, 1)),
        dimension_numbers=("NCDHW", "OIDHW", "NCDHW"),
        preferred_element_type=jnp.float32)


def resblock_ref(x, w1, w2):
    h = _conv3d_ref(_inorm_ref(_mish_ref(x)), w1)
    h = _conv3d_ref(_inorm_ref(_mish_ref(h)), w2)
    return x + h


if __name__ == "__main__":
    # fin = fout = 4, fh = 8, batch = 2, 8^3 volume (matches the module's ResBlock(fin, fh, fout)).
    N, C, FH, D, H, W = 2, 4, 8, 8, 8, 8

    key = jax.random.PRNGKey(0)
    kx, k1, k2 = jax.random.split(key, 3)
    x = jax.random.normal(kx, (N, C, D, H, W), dtype=jnp.float32)
    w1 = jax.random.normal(k1, (FH, C, 3, 3, 3), dtype=jnp.float32) * (1.0 / (C * 27) ** 0.5)
    w2 = jax.random.normal(k2, (C, FH, 3, 3, 3), dtype=jnp.float32) * (1.0 / (FH * 27) ** 0.5)

    out = jax.jit(resblock_pallas)(x, w1, w2)
    out = jax.block_until_ready(out)

    ref = resblock_ref(x, w1, w2)
    assert out.shape == ref.shape == (N, C, D, H, W)
    err = float(jnp.max(jnp.abs(out - ref)))
    # Tolerance covers bf16 MXU operands + approx reciprocal in the fused Mish.
    assert err < 3e-2, f"max abs error too large: {err}"

    print("KERNEL_OK")
</pallas_src>

<mosaic_0001>
module attributes {stable_mosaic.version = 11 : i64} {
  func.func @_mish_inorm_kernel(%arg0: i32, %arg1: memref<8x512xf32, #tpu.memory_space<vmem>>, %arg2: memref<8x896xbf16, #tpu.memory_space<vmem>>) attributes {dimension_semantics = [#tpu.dimension_semantics<parallel>], iteration_bounds = array<i64: 1>, scalar_prefetch = 0 : i64, scratch_operands = 0 : i64, tpu.core_type = #tpu.core_type<tc>, window_params = [{transform_indices = @transform_0, window_bounds = array<i64: 8, 512>}, {transform_indices = @transform_1, window_bounds = array<i64: 8, 896>}]} {
    %c0 = arith.constant 0 : index
    %c0_0 = arith.constant 0 : index
    %0 = vector.load %arg1[%c0, %c0_0] : memref<8x512xf32, #tpu.memory_space<vmem>>, vector<8x512xf32>
    %1 = math.absf %0 : vector<8x512xf32>
    %cst = arith.constant 0.000000e+00 : f32
    %2 = vector.broadcast %cst : f32 to vector<8x512xf32>
    %3 = arith.subf %2, %1 : vector<8x512xf32>
    %4 = math.exp %3 : vector<8x512xf32>
    %cst_1 = arith.constant 0.000000e+00 : f32
    %5 = vector.broadcast %cst_1 : f32 to vector<8x512xf32>
    %6 = arith.cmpf oge, %0, %5 : vector<8x512xf32>
    %cst_2 = arith.constant 2.000000e+00 : f32
    %7 = vector.broadcast %cst_2 : f32 to vector<8x512xf32>
    %8 = arith.mulf %7, %4 : vector<8x512xf32>
    %cst_3 = arith.constant 1.000000e+00 : f32
    %9 = vector.broadcast %cst_3 : f32 to vector<8x512xf32>
    %10 = arith.addf %9, %8 : vector<8x512xf32>
    %cst_4 = arith.constant 2.000000e+00 : f32
    %11 = vector.broadcast %cst_4 : f32 to vector<8x512xf32>
    %12 = arith.addf %4, %11 : vector<8x512xf32>
    %13 = arith.mulf %4, %12 : vector<8x512xf32>
    %14 = arith.select %6, %10, %13 : vector<8x512xi1>, vector<8x512xf32>
    %cst_5 = arith.constant 2.000000e+00 : f32
    %15 = vector.broadcast %cst_5 : f32 to vector<8x512xf32>
    %16 = arith.mulf %15, %4 : vector<8x512xf32>
    %17 = arith.mulf %16, %4 : vector<8x512xf32>
    %cst_6 = arith.constant 2.000000e+00 : f32
    %18 = vector.broadcast %cst_6 : f32 to vector<8x512xf32>
    %19 = arith.select %6, %17, %18 : vector<8x512xi1>, vector<8x512xf32>
    %20 = arith.addf %14, %19 : vector<8x512xf32>
    %21 = arith.mulf %0, %14 : vector<8x512xf32>
    %22 = tpu.reciprocal %20 {approx = true} : vector<8x512xf32> -> vector<8x512xf32>
    %23 = arith.mulf %21, %22 : vector<8x512xf32>
    %cst_7 = arith.constant dense<0.000000e+00> : vector<8xf32>
    %24 = vector.multi_reduction <add>, %23, %cst_7 [1] : vector<8x512xf32> to vector<8xf32>
    %25 = vector.shape_cast %24 : vector<8xf32> to vector<8x1xf32>
    %cst_8 = arith.constant 5.120000e+02 : f32
    %26 = vector.broadcast %cst_8 : f32 to vector<8x1xf32>
    %27 = arith.divf %25, %26 : vector<8x1xf32>
    %28 = vector.broadcast %27 : vector<8x1xf32> to vector<8x512xf32>
    %29 = arith.subf %23, %28 : vector<8x512xf32>
    %30 = arith.mulf %29, %29 : vector<8x512xf32>
    %cst_9 = arith.constant dense<0.000000e+00> : vector<8xf32>
    %31 = vector.multi_reduction <add>, %30, %cst_9 [1] : vector<8x512xf32> to vector<8xf32>
    %32 = vector.shape_cast %31 : vector<8xf32> to vector<8x1xf32>
    %cst_10 = arith.constant 5.120000e+02 : f32
    %33 = vector.broadcast %cst_10 : f32 to vector<8x1xf32>
    %34 = arith.divf %32, %33 : vector<8x1xf32>
    %cst_11 = arith.constant 9.99999974E-6 : f32
    %35 = vector.broadcast %cst_11 : f32 to vector<8x1xf32>
    %36 = arith.addf %34, %35 : vector<8x1xf32>
    %37 = math.rsqrt %36 : vector<8x1xf32>
    %38 = vector.broadcast %37 : vector<8x1xf32> to vector<8x512xf32>
    %39 = arith.mulf %29, %38 : vector<8x512xf32>
    %cst_12 = arith.constant 0.000000e+00 : bf16
    %40 = vector.broadcast %cst_12 : bf16 to vector<8x256xbf16>
    %c0_13 = arith.constant 0 : index
    %c0_14 = arith.constant 0 : index
    %41 = vector.load %arg2[%c0_13, %c0_14] : memref<8x896xbf16, #tpu.memory_space<vmem>>, vector<8x256xbf16>
    tpu.vector_store %arg2[%c0_13, %c0_14], %40 {strides = array<i32>} : memref<8x896xbf16, #tpu.memory_space<vmem>>, vector<8x256xbf16>,
    %42 = arith.truncf %39 : vector<8x512xf32> to vector<8x512xbf16>
    %c0_15 = arith.constant 0 : index
    %c256 = arith.constant 256 : index
    %43 = vector.load %arg2[%c0_15, %c256] : memref<8x896xbf16, #tpu.memory_space<vmem>>, vector<8x512xbf16>
    tpu.vector_store %arg2[%c0_15, %c256], %42 {strides = array<i32>} : memref<8x896xbf16, #tpu.memory_space<vmem>>, vector<8x512xbf16>,
    %cst_16 = arith.constant 0.000000e+00 : bf16
    %44 = vector.broadcast %cst_16 : bf16 to vector<8x128xbf16>
    %c0_17 = arith.constant 0 : index
    %c768 = arith.constant 768 : index
    %45 = vector.load %arg2[%c0_17, %c768] : memref<8x896xbf16, #tpu.memory_space<vmem>>, vector<8x128xbf16>
    tpu.vector_store %arg2[%c0_17, %c768], %44 {strides = array<i32>} : memref<8x896xbf16, #tpu.memory_space<vmem>>, vector<8x128xbf16>,
    return
  }
  func.func @transform_0(%arg0: i32) -> (i32, i32) {
    %c0_i32 = arith.constant 0 : i32
    %c0_i32_0 = arith.constant 0 : i32
    return %arg0, %c0_i32 : i32, i32
  }
  func.func @transform_1(%arg0: i32) -> (i32, i32) {
    %c0_i32 = arith.constant 0 : i32
    %c0_i32_0 = arith.constant 0 : i32
    return %arg0, %c0_i32 : i32, i32
  }
}

module attributes {stable_mosaic.version = 11 : i64} {
  func.func @_conv3x3x3_kernel(%arg0: i32, %arg1: i32, %arg2: memref<27x8x4xbf16, #tpu.memory_space<vmem>>, %arg3: memref<27x256xf32, #tpu.memory_space<vmem>>, %arg4: memref<1x4x128xbf16, #tpu.memory_space<vmem>>, %arg5: memref<1x4x256xbf16, #tpu.memory_space<vmem>>, %arg6: memref<1x4x128xbf16, #tpu.memory_space<vmem>>, %arg7: memref<1x8x256xf32, #tpu.memory_space<vmem>>, %arg8: memref<4x512xf32, #tpu.memory_space<vmem>>) attributes {dimension_semantics = [#tpu.dimension_semantics<parallel>, #tpu.dimension_semantics<parallel>], iteration_bounds = array<i64: 2, 2>, scalar_prefetch = 0 : i64, scratch_operands = 1 : i64, tpu.core_type = #tpu.core_type<tc>, window_params = [{pipeline_mode = #tpu.pipeline_mode<synchronous>, transform_indices = @transform_0, window_bounds = array<i64: 27, 8, 4>}, {transform_indices = @transform_1, window_bounds = array<i64: 27, 256>}, {transform_indices = @transform_2, window_bounds = array<i64: 1, 4, 128>}, {transform_indices = @transform_3, window_bounds = array<i64: 1, 4, 256>}, {transform_indices = @transform_4, window_bounds = array<i64: 1, 4, 128>}, {transform_indices = @transform_5, window_bounds = array<i64: 1, 8, 256>}]} {
    %c0 = arith.constant 0 : index
    %c0_0 = arith.constant 0 : index
    %c0_1 = arith.constant 0 : index
    %0 = vector.load %arg4[%c0, %c0_0, %c0_1] : memref<1x4x128xbf16, #tpu.memory_space<vmem>>, vector<1x4x128xbf16>
    %1 = vector.shape_cast %0 : vector<1x4x128xbf16> to vector<4x128xbf16>
    %2 = arith.extf %1 : vector<4x128xbf16> to vector<4x128xf32>
    %c0_2 = arith.constant 0 : index
    %c0_3 = arith.constant 0 : index
    %3 = vector.load %arg8[%c0_2, %c0_3] : memref<4x512xf32, #tpu.memory_space<vmem>>, vector<4x128xf32>
    tpu.vector_store %arg8[%c0_2, %c0_3], %2 {strides = array<i32>} : memref<4x512xf32, #tpu.memory_space<vmem>>, vector<4x128xf32>,
    %c0_4 = arith.constant 0 : index
    %c0_5 = arith.constant 0 : index
    %c0_6 = arith.constant 0 : index
    %4 = vector.load %arg5[%c0_4, %c0_5, %c0_6] : memref<1x4x256xbf16, #tpu.memory_space<vmem>>, vector<1x4x256xbf16>
    %5 = vector.shape_cast %4 : vector<1x4x256xbf16> to vector<4x256xbf16>
    %6 = arith.extf %5 : vector<4x256xbf16> to vector<4x256xf32>
    %c0_7 = arith.constant 0 : index
    %c128 = arith.constant 128 : index
    %7 = vector.load %arg8[%c0_7, %c128] : memref<4x512xf32, #tpu.memory_space<vmem>>, vector<4x256xf32>
    tpu.vector_store %arg8[%c0_7, %c128], %6 {strides = array<i32>} : memref<4x512xf32, #tpu.memory_space<vmem>>, vector<4x256xf32>,
    %c0_8 = arith.constant 0 : index
    %c0_9 = arith.constant 0 : index
    %c0_10 = arith.constant 0 : index
    %8 = vector.load %arg6[%c0_8, %c0_9, %c0_10] : memref<1x4x128xbf16, #tpu.memory_space<vmem>>, vector<1x4x128xbf16>
    %9 = vector.shape_cast %8 : vector<1x4x128xbf16> to vector<4x128xbf16>
    %10 = arith.extf %9 : vector<4x128xbf16> to vector<4x128xf32>
    %c0_11 = arith.constant 0 : index
    %c384 = arith.constant 384 : index
    %11 = vector.load %arg8[%c0_11, %c384] : memref<4x512xf32, #tpu.memory_space<vmem>>, vector<4x128xf32>
    tpu.vector_store %arg8[%c0_11, %c384], %10 {strides = array<i32>} : memref<4x512xf32, #tpu.memory_space<vmem>>, vector<4x128xf32>,
    %c0_12 = arith.constant 0 : index
    %c0_13 = arith.constant 0 : index
    %c0_14 = arith.constant 0 : index
    %12 = vector.load %arg2[%c0_12, %c0_13, %c0_14] : memref<27x8x4xbf16, #tpu.memory_space<vmem>>, vector<27x8x4xbf16>
    %c0_15 = arith.constant 0 : index
    %c0_16 = arith.constant 0 : index
    %13 = vector.load %arg3[%c0_15, %c0_16] : memref<27x256xf32, #tpu.memory_space<vmem>>, vector<27x256xf32>
    %cst = arith.constant 0.000000e+00 : f32
    %14 = vector.broadcast %cst : f32 to vector<8x256xf32>
    %c0_17 = arith.constant 0 : index
    %c55 = arith.constant 55 : index
    %15 = vector.load %arg8[%c0_17, %c55] : memref<4x512xf32, #tpu.memory_space<vmem>>, vector<4x256xf32>
    %16 = vector.extract_strided_slice %13 {offsets = [0, 0], sizes = [1, 256], strides = [1, 1]} : vector<27x256xf32> to vector<1x256xf32>
    %17 = vector.broadcast %16 : vector<1x256xf32> to vector<4x256xf32>
    %18 = arith.mulf %15, %17 : vector<4x256xf32>
    %19 = vector.extract_strided_slice %12 {offsets = [0, 0, 0], sizes = [1, 8, 4], strides = [1, 1, 1]} : vector<27x8x4xbf16> to vector<1x8x4xbf16>
    %20 = vector.shape_cast %19 : vector<1x8x4xbf16> to vector<8x4xbf16>
    %21 = arith.truncf %18 : vector<4x256xf32> to vector<4x256xbf16>
    %cst_18 = arith.constant dense<0.000000e+00> : vector<8x256xf32>
    %22 = tpu.matmul %20, %21, %cst_18 {dimension_numbers = #tpu.dot_dimension_numbers<[1], [0], [0], [1], [0, 0, 1, 1], [], []>} : vector<8x4xbf16>, vector<4x256xbf16>, vector<8x256xf32> -> vector<8x256xf32>
    %23 = arith.addf %14, %22 : vector<8x256xf32>
    %c0_19 = arith.constant 0 : index
    %c56 = arith.constant 56 : index
    %24 = vector.load %arg8[%c0_19, %c56] : memref<4x512xf32, #tpu.memory_space<vmem>>, vector<4x256xf32>
    %25 = vector.extract_strided_slice %13 {offsets = [1, 0], sizes = [1, 256], strides = [1, 1]} : vector<27x256xf32> to vector<1x256xf32>
    %26 = vector.broadcast %25 : vector<1x256xf32> to vector<4x256xf32>
    %27 = arith.mulf %24, %26 : vector<4x256xf32>
    %28 = vector.extract_strided_slice %12 {offsets = [1, 0, 0], sizes = [1, 8, 4], strides = [1, 1, 1]} : vector<27x8x4xbf16> to vector<1x8x4xbf16>
    %29 = vector.shape_cast %28 : vector<1x8x4xbf16> to vector<8x4xbf16>
    %30 = arith.truncf %27 : vector<4x256xf32> to vector<4x256xbf16>
    %cst_20 = arith.constant dense<0.000000e+00> : vector<8x256xf32>
    %31 = tpu.matmul %29, %30, %cst_20 {dimension_numbers = #tpu.dot_dimension_numbers<[1], [0], [0], [1], [0, 0, 1, 1], [], []>} : vector<8x4xbf16>, vector<4x256xbf16>, vector<8x256xf32> -> vector<8x256xf32>
    %32 = arith.addf %23, %31 : vector<8x256xf32>
    %c0_21 = arith.constant 0 : index
    %c57 = arith.constant 57 : index
    %33 = vector.load %arg8[%c0_21, %c57] : memref<4x512xf32, #tpu.memory_space<vmem>>, vector<4x256xf32>
    %34 = vector.extract_strided_slice %13 {offsets = [2, 0], sizes = [1, 256], strides = [1, 1]} : vector<27x256xf32> to vector<1x256xf32>
    %35 = vector.broadcast %34 : vector<1x256xf32> to vector<4x256xf32>
    %36 = arith.mulf %33, %35 : vector<4x256xf32>
    %37 = vector.extract_strided_slice %12 {offsets = [2, 0, 0], sizes = [1, 8, 4], strides = [1, 1, 1]} : vector<27x8x4xbf16> to vector<1x8x4xbf16>
    %38 = vector.shape_cast %37 : vector<1x8x4xbf16> to vector<8x4xbf16>
    %39 = arith.truncf %36 : vector<4x256xf32> to vector<4x256xbf16>
    %cst_22 = arith.constant dense<0.000000e+00> : vector<8x256xf32>
    %40 = tpu.matmul %38, %39, %cst_22 {dimension_numbers = #tpu.dot_dimension_numbers<[1], [0], [0], [1], [0, 0, 1, 1], [], []>} : vector<8x4xbf16>, vector<4x256xbf16>, vector<8x256xf32> -> vector<8x256xf32>
    %41 = arith.addf %32, %40 : vector<8x256xf32>
    %c0_23 = arith.constant 0 : index
    %c63 = arith.constant 63 : index
    %42 = vector.load %arg8[%c0_23, %c63] : memref<4x512xf32, #tpu.memory_space<vmem>>, vector<4x256xf32>
    %43 = vector.extract_strided_slice %13 {offsets = [3, 0], sizes = [1, 256], strides = [1, 1]} : vector<27x256xf32> to vector<1x256xf32>
    %44 = vector.broadcast %43 : vector<1x256xf32> to vector<4x256xf32>
    %45 = arith.mulf %42, %44 : vector<4x256xf32>
    %46 = vector.extract_strided_slice %12 {offsets = [3, 0, 0], sizes = [1, 8, 4], strides = [1, 1, 1]} : vector<27x8x4xbf16> to vector<1x8x4xbf16>
    %47 = vector.shape_cast %46 : vector<1x8x4xbf16> to vector<8x4xbf16>
    %48 = arith.truncf %45 : vector<4x256xf32> to vector<4x256xbf16>
    %cst_24 = arith.constant dense<0.000000e+00> : vector<8x256xf32>
    %49 = tpu.matmul %47, %48, %cst_24 {dimension_numbers = #tpu.dot_dimension_numbers<[1], [0], [0], [1], [0, 0, 1, 1], [], []>} : vector<8x4xbf16>, vector<4x256xbf16>, vector<8x256xf32> -> vector<8x256xf32>
    %50 = arith.addf %41, %49 : vector<8x256xf32>
    %c0_25 = arith.constant 0 : index
    %c64 = arith.constant 64 : index
    %51 = vector.load %arg8[%c0_25, %c64] : memref<4x512xf32, #tpu.memory_space<vmem>>, vector<4x256xf32>
    %52 = vector.extract_strided_slice %13 {offsets = [4, 0], sizes = [1, 256], strides = [1, 1]} : vector<27x256xf32> to vector<1x256xf32>
    %53 = vector.broadcast %52 : vector<1x256xf32> to vector<4x256xf32>
    %54 = arith.mulf %51, %53 : vector<4x256xf32>
    %55 = vector.extract_strided_slice %12 {offsets = [4, 0, 0], sizes = [1, 8, 4], strides = [1, 1, 1]} : vector<27x8x4xbf16> to vector<1x8x4xbf16>
    %56 = vector.shape_cast %55 : vector<1x8x4xbf16> to vector<8x4xbf16>
    %57 = arith.truncf %54 : vector<4x256xf32> to vector<4x256xbf16>
    %cst_26 = arith.constant dense<0.000000e+00> : vector<8x256xf32>
    %58 = tpu.matmul %56, %57, %cst_26 {dimension_numbers = #tpu.dot_dimension_numbers<[1], [0], [0], [1], [0, 0, 1, 1], [], []>} : vector<8x4xbf16>, vector<4x256xbf16>, vector<8x256xf32> -> vector<8x256xf32>
    %59 = arith.addf %50, %58 : vector<8x256xf32>
    %c0_27 = arith.constant 0 : index
    %c65 = arith.constant 65 : index
    %60 = vector.load %arg8[%c0_27, %c65] : memref<4x512xf32, #tpu.memory_space<vmem>>, vector<4x256xf32>
    %61 = vector.extract_strided_slice %13 {offsets = [5, 0], sizes = [1, 256], strides = [1, 1]} : vector<27x256xf32> to vector<1x256xf32>
    %62 = vector.broadcast %61 : vector<1x256xf32> to vector<4x256xf32>
    %63 = arith.mulf %60, %62 : vector<4x256xf32>
    %64 = vector.extract_strided_slice %12 {offsets = [5, 0, 0], sizes = [1, 8, 4], strides = [1, 1, 1]} : vector<27x8x4xbf16> to vector<1x8x4xbf16>
    %65 = vector.shape_cast %64 : vector<1x8x4xbf16> to vector<8x4xbf16>
    %66 = arith.truncf %63 : vector<4x256xf32> to vector<4x256xbf16>
    %cst_28 = arith.constant dense<0.000000e+00> : vector<8x256xf32>
    %67 = tpu.matmul %65, %66, %cst_28 {dimension_numbers = #tpu.dot_dimension_numbers<[1], [0], [0], [1], [0, 0, 1, 1], [], []>} : vector<8x4xbf16>, vector<4x256xbf16>, vector<8x256xf32> -> vector<8x256xf32>
    %68 = arith.addf %59, %67 : vector<8x256xf32>
    %c0_29 = arith.constant 0 : index
    %c71 = arith.constant 71 : index
    %69 = vector.load %arg8[%c0_29, %c71] : memref<4x512xf32, #tpu.memory_space<vmem>>, vector<4x256xf32>
    %70 = vector.extract_strided_slice %13 {offsets = [6, 0], sizes = [1, 256], strides = [1, 1]} : vector<27x256xf32> to vector<1x256xf32>
    %71 = vector.broadcast %70 : vector<1x256xf32> to vector<4x256xf32>
    %72 = arith.mulf %69, %71 : vector<4x256xf32>
    %73 = vector.extract_strided_slice %12 {offsets = [6, 0, 0], sizes = [1, 8, 4], strides = [1, 1, 1]} : vector<27x8x4xbf16> to vector<1x8x4xbf16>
    %74 = vector.shape_cast %73 : vector<1x8x4xbf16> to vector<8x4xbf16>
    %75 = arith.truncf %72 : vector<4x256xf32> to vector<4x256xbf16>
    %cst_30 = arith.constant dense<0.000000e+00> : vector<8x256xf32>
    %76 = tpu.matmul %74, %75, %cst_30 {dimension_numbers = #tpu.dot_dimension_numbers<[1], [0], [0], [1], [0, 0, 1, 1], [], []>} : vector<8x4xbf16>, vector<4x256xbf16>, vector<8x256xf32> -> vector<8x256xf32>
    %77 = arith.addf %68, %76 : vector<8x256xf32>
    %c0_31 = arith.constant 0 : index
    %c72 = arith.constant 72 : index
    %78 = vector.load %arg8[%c0_31, %c72] : memref<4x512xf32, #tpu.memory_space<vmem>>, vector<4x256xf32>
    %79 = vector.extract_strided_slice %13 {offsets = [7, 0], sizes = [1, 256], strides = [1, 1]} : vector<27x256xf32> to vector<1x256xf32>
    %80 = vector.broadcast %79 : vector<1x256xf32> to vector<4x256xf32>
    %81 = arith.mulf %78, %80 : vector<4x256xf32>
    %82 = vector.extract_strided_slice %12 {offsets = [7, 0, 0], sizes = [1, 8, 4], strides = [1, 1, 1]} : vector<27x8x4xbf16> to vector<1x8x4xbf16>
    %83 = vector.shape_cast %82 : vector<1x8x4xbf16> to vector<8x4xbf16>
    %84 = arith.truncf %81 : vector<4x256xf32> to vector<4x256xbf16>
    %cst_32 = arith.constant dense<0.000000e+00> : vector<8x256xf32>
    %85 = tpu.matmul %83, %84, %cst_32 {dimension_numbers = #tpu.dot_dimension_numbers<[1], [0], [0], [1], [0, 0, 1, 1], [], []>} : vector<8x4xbf16>, vector<4x256xbf16>, vector<8x256xf32> -> vector<8x256xf32>
    %86 = arith.addf %77, %85 : vector<8x256xf32>
    %c0_33 = arith.constant 0 : index
    %c73 = arith.constant 73 : index
    %87 = vector.load %arg8[%c0_33, %c73] : memref<4x512xf32, #tpu.memory_space<vmem>>, vector<4x256xf32>
    %88 = vector.extract_strided_slice %13 {offsets = [8, 0], sizes = [1, 256], strides = [1, 1]} : vector<27x256xf32> to vector<1x256xf32>
    %89 = vector.broadcast %88 : vector<1x256xf32> to vector<4x256xf32>
    %90 = arith.mulf %87, %89 : vector<4x256xf32>
    %91 = vector.extract_strided_slice %12 {offsets = [8, 0, 0], sizes = [1, 8, 4], strides = [1, 1, 1]} : vector<27x8x4xbf16> to vector<1x8x4xbf16>
    %92 = vector.shape_cast %91 : vector<1x8x4xbf16> to vector<8x4xbf16>
    %93 = arith.truncf %90 : vector<4x256xf32> to vector<4x256xbf16>
    %cst_34 = arith.constant dense<0.000000e+00> : vector<8x256xf32>
    %94 = tpu.matmul %92, %93, %cst_34 {dimension_numbers = #tpu.dot_dimension_numbers<[1], [0], [0], [1], [0, 0, 1, 1], [], []>} : vector<8x4xbf16>, vector<4x256xbf16>, vector<8x256xf32> -> vector<8x256xf32>
    %95 = arith.addf %86, %94 : vector<8x256xf32>
    %c0_35 = arith.constant 0 : index
    %c119 = arith.constant 119 : index
    %96 = vector.load %arg8[%c0_35, %c119] : memref<4x512xf32, #tpu.memory_space<vmem>>, vector<4x256xf32>
    %97 = vector.extract_strided_slice %13 {offsets = [9, 0], sizes = [1, 256], strides = [1, 1]} : vector<27x256xf32> to vector<1x256xf32>
    %98 = vector.broadcast %97 : vector<1x256xf32> to vector<4x256xf32>
    %99 = arith.mulf %96, %98 : vector<4x256xf32>
    %100 = vector.extract_strided_slice %12 {offsets = [9, 0, 0], sizes = [1, 8, 4], strides = [1, 1, 1]} : vector<27x8x4xbf16> to vector<1x8x4xbf16>
    %101 = vector.shape_cast %100 : vector<1x8x4xbf16> to vector<8x4xbf16>
    %102 = arith.truncf %99 : vector<4x256xf32> to vector<4x256xbf16>
    %cst_36 = arith.constant dense<0.000000e+00> : vector<8x256xf32>
    %103 = tpu.matmul %101, %102, %cst_36 {dimension_numbers = #tpu.dot_dimension_numbers<[1], [0], [0], [1], [0, 0, 1, 1], [], []>} : vector<8x4xbf16>, vector<4x256xbf16>, vector<8x256xf32> -> vector<8x256xf32>
    %104 = arith.addf %95, %103 : vector<8x256xf32>
    %c0_37 = arith.constant 0 : index
    %c120 = arith.constant 120 : index
    %105 = vector.load %arg8[%c0_37, %c120] : memref<4x512xf32, #tpu.memory_space<vmem>>, vector<4x256xf32>
    %106 = vector.extract_strided_slice %13 {offsets = [10, 0], sizes = [1, 256], strides = [1, 1]} : vector<27x256xf32> to vector<1x256xf32>
    %107 = vector.broadcast %106 : vector<1x256xf32> to vector<4x256xf32>
    %108 = arith.mulf %105, %107 : vector<4x256xf32>
    %109 = vector.extract_strided_slice %12 {offsets = [10, 0, 0], sizes = [1, 8, 4], strides = [1, 1, 1]} : vector<27x8x4xbf16> to vector<1x8x4xbf16>
    %110 = vector.shape_cast %109 : vector<1x8x4xbf16> to vector<8x4xbf16>
    %111 = arith.truncf %108 : vector<4x256xf32> to vector<4x256xbf16>
    %cst_38 = arith.constant dense<0.000000e+00> : vector<8x256xf32>
    %112 = tpu.matmul %110, %111, %cst_38 {dimension_numbers = #tpu.dot_dimension_numbers<[1], [0], [0], [1], [0, 0, 1, 1], [], []>} : vector<8x4xbf16>, vector<4x256xbf16>, vector<8x256xf32> -> vector<8x256xf32>
    %113 = arith.addf %104, %112 : vector<8x256xf32>
    %c0_39 = arith.constant 0 : index
    %c121 = arith.constant 121 : index
    %114 = vector.load %arg8[%c0_39, %c121] : memref<4x512xf32, #tpu.memory_space<vmem>>, vector<4x256xf32>
    %115 = vector.extract_strided_slice %13 {offsets = [11, 0], sizes = [1, 256], strides = [1, 1]} : vector<27x256xf32> to vector<1x256xf32>
    %116 = vector.broadcast %115 : vector<1x256xf32> to vector<4x256xf32>
    %117 = arith.mulf %114, %116 : vector<4x256xf32>
    %118 = vector.extract_strided_slice %12 {offsets = [11, 0, 0], sizes = [1, 8, 4], strides = [1, 1, 1]} : vector<27x8x4xbf16> to vector<1x8x4xbf16>
    %119 = vector.shape_cast %118 : vector<1x8x4xbf16> to vector<8x4xbf16>
    %120 = arith.truncf %117 : vector<4x256xf32> to vector<4x256xbf16>
    %cst_40 = arith.constant dense<0.000000e+00> : vector<8x256xf32>
    %121 = tpu.matmul %119, %120, %cst_40 {dimension_numbers = #tpu.dot_dimension_numbers<[1], [0], [0], [1], [0, 0, 1, 1], [], []>} : vector<8x4xbf16>, vector<4x256xbf16>, vector<8x256xf32> -> vector<8x256xf32>
    %122 = arith.addf %113, %121 : vector<8x256xf32>
    %c0_41 = arith.constant 0 : index
    %c127 = arith.constant 127 : index
    %123 = vector.load %arg8[%c0_41, %c127] : memref<4x512xf32, #tpu.memory_space<vmem>>, vector<4x256xf32>
    %124 = vector.extract_strided_slice %13 {offsets = [12, 0], sizes = [1, 256], strides = [1, 1]} : vector<27x256xf32> to vector<1x256xf32>
    %125 = vector.broadcast %124 : vector<1x256xf32> to vector<4x256xf32>
    %126 = arith.mulf %123, %125 : vector<4x256xf32>
    %127 = vector.extract_strided_slice %12 {offsets = [12, 0, 0], sizes = [1, 8, 4], strides = [1, 1, 1]} : vector<27x8x4xbf16> to vector<1x8x4xbf16>
    %128 = vector.shape_cast %127 : vector<1x8x4xbf16> to vector<8x4xbf16>
    %129 = arith.truncf %126 : vector<4x256xf32> to vector<4x256xbf16>
    %cst_42 = arith.constant dense<0.000000e+00> : vector<8x256xf32>
    %130 = tpu.matmul %128, %129, %cst_42 {dimension_numbers = #tpu.dot_dimension_numbers<[1], [0], [0], [1], [0, 0, 1, 1], [], []>} : vector<8x4xbf16>, vector<4x256xbf16>, vector<8x256xf32> -> vector<8x256xf32>
    %131 = arith.addf %122, %130 : vector<8x256xf32>
    %c0_43 = arith.constant 0 : index
    %c128_44 = arith.constant 128 : index
    %132 = vector.load %arg8[%c0_43, %c128_44] : memref<4x512xf32, #tpu.memory_space<vmem>>, vector<4x256xf32>
    %133 = vector.extract_strided_slice %12 {offsets = [13, 0, 0], sizes = [1, 8, 4], strides = [1, 1, 1]} : vector<27x8x4xbf16> to vector<1x8x4xbf16>
    %134 = vector.shape_cast %133 : vector<1x8x4xbf16> to vector<8x4xbf16>
    %135 = arith.truncf %132 : vector<4x256xf32> to vector<4x256xbf16>
    %cst_45 = arith.constant dense<0.000000e+00> : vector<8x256xf32>
    %136 = tpu.matmul %134, %135, %cst_45 {dimension_numbers = #tpu.dot_dimension_numbers<[1], [0], [0], [1], [0, 0, 1, 1], [], []>} : vector<8x4xbf16>, vector<4x256xbf16>, vector<8x256xf32> -> vector<8x256xf32>
    %137 = arith.addf %131, %136 : vector<8x256xf32>
    %c0_46 = arith.constant 0 : index
    %c129 = arith.constant 129 : index
    %138 = vector.load %arg8[%c0_46, %c129] : memref<4x512xf32, #tpu.memory_space<vmem>>, vector<4x256xf32>
    %139 = vector.extract_strided_slice %13 {offsets = [14, 0], sizes = [1, 256], strides = [1, 1]} : vector<27x256xf32> to vector<1x256xf32>
    %140 = vector.broadcast %139 : vector<1x256xf32> to vector<4x256xf32>
    %141 = arith.mulf %138, %140 : vector<4x256xf32>
    %142 = vector.extract_strided_slice %12 {offsets = [14, 0, 0], sizes = [1, 8, 4], strides = [1, 1, 1]} : vector<27x8x4xbf16> to vector<1x8x4xbf16>
    %143 = vector.shape_cast %142 : vector<1x8x4xbf16> to vector<8x4xbf16>
    %144 = arith.truncf %141 : vector<4x256xf32> to vector<4x256xbf16>
    %cst_47 = arith.constant dense<0.000000e+00> : vector<8x256xf32>
    %145 = tpu.matmul %143, %144, %cst_47 {dimension_numbers = #tpu.dot_dimension_numbers<[1], [0], [0], [1], [0, 0, 1, 1], [], []>} : vector<8x4xbf16>, vector<4x256xbf16>, vector<8x256xf32> -> vector<8x256xf32>
    %146 = arith.addf %137, %145 : vector<8x256xf32>
    %c0_48 = arith.constant 0 : index
    %c135 = arith.constant 135 : index
    %147 = vector.load %arg8[%c0_48, %c135] : memref<4x512xf32, #tpu.memory_space<vmem>>, vector<4x256xf32>
    %148 = vector.extract_strided_slice %13 {offsets = [15, 0], sizes = [1, 256], strides = [1, 1]} : vector<27x256xf32> to vector<1x256xf32>
    %149 = vector.broadcast %148 : vector<1x256xf32> to vector<4x256xf32>
    %150 = arith.mulf %147, %149 : vector<4x256xf32>
    %151 = vector.extract_strided_slice %12 {offsets = [15, 0, 0], sizes = [1, 8, 4], strides = [1, 1, 1]} : vector<27x8x4xbf16> to vector<1x8x4xbf16>
    %152 = vector.shape_cast %151 : vector<1x8x4xbf16> to vector<8x4xbf16>
    %153 = arith.truncf %150 : vector<4x256xf32> to vector<4x256xbf16>
    %cst_49 = arith.constant dense<0.000000e+00> : vector<8x256xf32>
    %154 = tpu.matmul %152, %153, %cst_49 {dimension_numbers = #tpu.dot_dimension_numbers<[1], [0], [0], [1], [0, 0, 1, 1], [], []>} : vector<8x4xbf16>, vector<4x256xbf16>, vector<8x256xf32> -> vector<8x256xf32>
    %155 = arith.addf %146, %154 : vector<8x256xf32>
    %c0_50 = arith.constant 0 : index
    %c136 = arith.constant 136 : index
    %156 = vector.load %arg8[%c0_50, %c136] : memref<4x512xf32, #tpu.memory_space<vmem>>, vector<4x256xf32>
    %157 = vector.extract_strided_slice %13 {offsets = [16, 0], sizes = [1, 256], strides = [1, 1]} : vector<27x256xf32> to vector<1x256xf32>
    %158 = vector.broadcast %157 : vector<1x256xf32> to vector<4x256xf32>
    %159 = arith.mulf %156, %158 : vector<4x256xf32>
    %160 = vector.extract_strided_slice %12 {offsets = [16, 0, 0], sizes = [1, 8, 4], strides = [1, 1, 1]} : vector<27x8x4xbf16> to vector<1x8x4xbf16>
    %161 = vector.shape_cast %160 : vector<1x8x4xbf16> to vector<8x4xbf16>
    %162 = arith.truncf %159 : vector<4x256xf32> to vector<4x256xbf16>
    %cst_51 = arith.constant dense<0.000000e+00> : vector<8x256xf32>
    %163 = tpu.matmul %161, %162, %cst_51 {dimension_numbers = #tpu.dot_dimension_numbers<[1], [0], [0], [1], [0, 0, 1, 1], [], []>} : vector<8x4xbf16>, vector<4x256xbf16>, vector<8x256xf32> -> vector<8x256xf32>
    %164 = arith.addf %155, %163 : vector<8x256xf32>
    %c0_52 = arith.constant 0 : index
    %c137 = arith.constant 137 : index
    %165 = vector.load %arg8[%c0_52, %c137] : memref<4x512xf32, #tpu.memory_space<vmem>>, vector<4x256xf32>
    %166 = vector.extract_strided_slice %13 {offsets = [17, 0], sizes = [1, 256], strides = [1, 1]} : vector<27x256xf32> to vector<1x256xf32>
    %167 = vector.broadcast %166 : vector<1x256xf32> to vector<4x256xf32>
    %168 = arith.mulf %165, %167 : vector<4x256xf32>
    %169 = vector.extract_strided_slice %12 {offsets = [17, 0, 0], sizes = [1, 8, 4], strides = [1, 1, 1]} : vector<27x8x4xbf16> to vector<1x8x4xbf16>
    %170 = vector.shape_cast %169 : vector<1x8x4xbf16> to vector<8x4xbf16>
    %171 = arith.truncf %168 : vector<4x256xf32> to vector<4x256xbf16>
    %cst_53 = arith.constant dense<0.000000e+00> : vector<8x256xf32>
    %172 = tpu.matmul %170, %171, %cst_53 {dimension_numbers = #tpu.dot_dimension_numbers<[1], [0], [0], [1], [0, 0, 1, 1], [], []>} : vector<8x4xbf16>, vector<4x256xbf16>, vector<8x256xf32> -> vector<8x256xf32>
    %173 = arith.addf %164, %172 : vector<8x256xf32>
    %c0_54 = arith.constant 0 : index
    %c183 = arith.constant 183 : index
    %174 = vector.load %arg8[%c0_54, %c183] : memref<4x512xf32, #tpu.memory_space<vmem>>, vector<4x256xf32>
    %175 = vector.extract_strided_slice %13 {offsets = [18, 0], sizes = [1, 256], strides = [1, 1]} : vector<27x256xf32> to vector<1x256xf32>
    %176 = vector.broadcast %175 : vector<1x256xf32> to vector<4x256xf32>
    %177 = arith.mulf %174, %176 : vector<4x256xf32>
    %178 = vector.extract_strided_slice %12 {offsets = [18, 0, 0], sizes = [1, 8, 4], strides = [1, 1, 1]} : vector<27x8x4xbf16> to vector<1x8x4xbf16>
    %179 = vector.shape_cast %178 : vector<1x8x4xbf16> to vector<8x4xbf16>
    %180 = arith.truncf %177 : vector<4x256xf32> to vector<4x256xbf16>
    %cst_55 = arith.constant dense<0.000000e+00> : vector<8x256xf32>
    %181 = tpu.matmul %179, %180, %cst_55 {dimension_numbers = #tpu.dot_dimension_numbers<[1], [0], [0], [1], [0, 0, 1, 1], [], []>} : vector<8x4xbf16>, vector<4x256xbf16>, vector<8x256xf32> -> vector<8x256xf32>
    %182 = arith.addf %173, %181 : vector<8x256xf32>
    %c0_56 = arith.constant 0 : index
    %c184 = arith.constant 184 : index
    %183 = vector.load %arg8[%c0_56, %c184] : memref<4x512xf32, #tpu.memory_space<vmem>>, vector<4x256xf32>
    %184 = vector.extract_strided_slice %13 {offsets = [19, 0], sizes = [1, 256], strides = [1, 1]} : vector<27x256xf32> to vector<1x256xf32>
    %185 = vector.broadcast %184 : vector<1x256xf32> to vector<4x256xf32>
    %186 = arith.mulf %183, %185 : vector<4x256xf32>
    %187 = vector.extract_strided_slice %12 {offsets = [19, 0, 0], sizes = [1, 8, 4], strides = [1, 1, 1]} : vector<27x8x4xbf16> to vector<1x8x4xbf16>
    %188 = vector.shape_cast %187 : vector<1x8x4xbf16> to vector<8x4xbf16>
    %189 = arith.truncf %186 : vector<4x256xf32> to vector<4x256xbf16>
    %cst_57 = arith.constant dense<0.000000e+00> : vector<8x256xf32>
    %190 = tpu.matmul %188, %189, %cst_57 {dimension_numbers = #tpu.dot_dimension_numbers<[1], [0], [0], [1], [0, 0, 1, 1], [], []>} : vector<8x4xbf16>, vector<4x256xbf16>, vector<8x256xf32> -> vector<8x256xf32>
    %191 = arith.addf %182, %190 : vector<8x256xf32>
    %c0_58 = arith.constant 0 : index
    %c185 = arith.constant 185 : index
    %192 = vector.load %arg8[%c0_58, %c185] : memref<4x512xf32, #tpu.memory_space<vmem>>, vector<4x256xf32>
    %193 = vector.extract_strided_slice %13 {offsets = [20, 0], sizes = [1, 256], strides = [1, 1]} : vector<27x256xf32> to vector<1x256xf32>
    %194 = vector.broadcast %193 : vector<1x256xf32> to vector<4x256xf32>
    %195 = arith.mulf %192, %194 : vector<4x256xf32>
    %196 = vector.extract_strided_slice %12 {offsets = [20, 0, 0], sizes = [1, 8, 4], strides = [1, 1, 1]} : vector<27x8x4xbf16> to vector<1x8x4xbf16>
    %197 = vector.shape_cast %196 : vector<1x8x4xbf16> to vector<8x4xbf16>
    %198 = arith.truncf %195 : vector<4x256xf32> to vector<4x256xbf16>
    %cst_59 = arith.constant dense<0.000000e+00> : vector<8x256xf32>
    %199 = tpu.matmul %197, %198, %cst_59 {dimension_numbers = #tpu.dot_dimension_numbers<[1], [0], [0], [1], [0, 0, 1, 1], [], []>} : vector<8x4xbf16>, vector<4x256xbf16>, vector<8x256xf32> -> vector<8x256xf32>
    %200 = arith.addf %191, %199 : vector<8x256xf32>
    %c0_60 = arith.constant 0 : index
    %c191 = arith.constant 191 : index
    %201 = vector.load %arg8[%c0_60, %c191] : memref<4x512xf32, #tpu.memory_space<vmem>>, vector<4x256xf32>
    %202 = vector.extract_strided_slice %13 {offsets = [21, 0], sizes = [1, 256], strides = [1, 1]} : vector<27x256xf32> to vector<1x256xf32>
    %203 = vector.broadcast %202 : vector<1x256xf32> to vector<4x256xf32>
    %204 = arith.mulf %201, %203 : vector<4x256xf32>
    %205 = vector.extract_strided_slice %12 {offsets = [21, 0, 0], sizes = [1, 8, 4], strides = [1, 1, 1]} : vector<27x8x4xbf16> to vector<1x8x4xbf16>
    %206 = vector.shape_cast %205 : vector<1x8x4xbf16> to vector<8x4xbf16>
    %207 = arith.truncf %204 : vector<4x256xf32> to vector<4x256xbf16>
    %cst_61 = arith.constant dense<0.000000e+00> : vector<8x256xf32>
    %208 = tpu.matmul %206, %207, %cst_61 {dimension_numbers = #tpu.dot_dimension_numbers<[1], [0], [0], [1], [0, 0, 1, 1], [], []>} : vector<8x4xbf16>, vector<4x256xbf16>, vector<8x256xf32> -> vector<8x256xf32>
    %209 = arith.addf %200, %208 : vector<8x256xf32>
    %c0_62 = arith.constant 0 : index
    %c192 = arith.constant 192 : index
    %210 = vector.load %arg8[%c0_62, %c192] : memref<4x512xf32, #tpu.memory_space<vmem>>, vector<4x256xf32>
    %211 = vector.extract_strided_slice %13 {offsets = [22, 0], sizes = [1, 256], strides = [1, 1]} : vector<27x256xf32> to vector<1x256xf32>
    %212 = vector.broadcast %211 : vector<1x256xf32> to vector<4x256xf32>
    %213 = arith.mulf %210, %212 : vector<4x256xf32>
    %214 = vector.extract_strided_slice %12 {offsets = [22, 0, 0], sizes = [1, 8, 4], strides = [1, 1, 1]} : vector<27x8x4xbf16> to vector<1x8x4xbf16>
    %215 = vector.shape_cast %214 : vector<1x8x4xbf16> to vector<8x4xbf16>
    %216 = arith.truncf %213 : vector<4x256xf32> to vector<4x256xbf16>
    %cst_63 = arith.constant dense<0.000000e+00> : vector<8x256xf32>
    %217 = tpu.matmul %215, %216, %cst_63 {dimension_numbers = #tpu.dot_dimension_numbers<[1], [0], [0], [1], [0, 0, 1, 1], [], []>} : vector<8x4xbf16>, vector<4x256xbf16>, vector<8x256xf32> -> vector<8x256xf32>
    %218 = arith.addf %209, %217 : vector<8x256xf32>
    %c0_64 = arith.constant 0 : index
    %c193 = arith.constant 193 : index
    %219 = vector.load %arg8[%c0_64, %c193] : memref<4x512xf32, #tpu.memory_space<vmem>>, vector<4x256xf32>
    %220 = vector.extract_strided_slice %13 {offsets = [23, 0], sizes = [1, 256], strides = [1, 1]} : vector<27x256xf32> to vector<1x256xf32>
    %221 = vector.broadcast %220 : vector<1x256xf32> to vector<4x256xf32>
    %222 = arith.mulf %219, %221 : vector<4x256xf32>
    %223 = vector.extract_strided_slice %12 {offsets = [23, 0, 0], sizes = [1, 8, 4], strides = [1, 1, 1]} : vector<27x8x4xbf16> to vector<1x8x4xbf16>
    %224 = vector.shape_cast %223 : vector<1x8x4xbf16> to vector<8x4xbf16>
    %225 = arith.truncf %222 : vector<4x256xf32> to vector<4x256xbf16>
    %cst_65 = arith.constant dense<0.000000e+00> : vector<8x256xf32>
    %226 = tpu.matmul %224, %225, %cst_65 {dimension_numbers = #tpu.dot_dimension_numbers<[1], [0], [0], [1], [0, 0, 1, 1], [], []>} : vector<8x4xbf16>, vector<4x256xbf16>, vector<8x256xf32> -> vector<8x256xf32>
    %227 = arith.addf %218, %226 : vector<8x256xf32>
    %c0_66 = arith.constant 0 : index
    %c199 = arith.constant 199 : index
    %228 = vector.load %arg8[%c0_66, %c199] : memref<4x512xf32, #tpu.memory_space<vmem>>, vector<4x256xf32>
    %229 = vector.extract_strided_slice %13 {offsets = [24, 0], sizes = [1, 256], strides = [1, 1]} : vector<27x256xf32> to vector<1x256xf32>
    %230 = vector.broadcast %229 : vector<1x256xf32> to vector<4x256xf32>
    %231 = arith.mulf %228, %230 : vector<4x256xf32>
    %232 = vector.extract_strided_slice %12 {offsets = [24, 0, 0], sizes = [1, 8, 4], strides = [1, 1, 1]} : vector<27x8x4xbf16> to vector<1x8x4xbf16>
    %233 = vector.shape_cast %232 : vector<1x8x4xbf16> to vector<8x4xbf16>
    %234 = arith.truncf %231 : vector<4x256xf32> to vector<4x256xbf16>
    %cst_67 = arith.constant dense<0.000000e+00> : vector<8x256xf32>
    %235 = tpu.matmul %233, %234, %cst_67 {dimension_numbers = #tpu.dot_dimension_numbers<[1], [0], [0], [1], [0, 0, 1, 1], [], []>} : vector<8x4xbf16>, vector<4x256xbf16>, vector<8x256xf32> -> vector<8x256xf32>
    %236 = arith.addf %227, %235 : vector<8x256xf32>
    %c0_68 = arith.constant 0 : index
    %c200 = arith.constant 200 : index
    %237 = vector.load %arg8[%c0_68, %c200] : memref<4x512xf32, #tpu.memory_space<vmem>>, vector<4x256xf32>
    %238 = vector.extract_strided_slice %13 {offsets = [25, 0], sizes = [1, 256], strides = [1, 1]} : vector<27x256xf32> to vector<1x256xf32>
    %239 = vector.broadcast %238 : vector<1x256xf32> to vector<4x256xf32>
    %240 = arith.mulf %237, %239 : vector<4x256xf32>
    %241 = vector.extract_strided_slice %12 {offsets = [25, 0, 0], sizes = [1, 8, 4], strides = [1, 1, 1]} : vector<27x8x4xbf16> to vector<1x8x4xbf16>
    %242 = vector.shape_cast %241 : vector<1x8x4xbf16> to vector<8x4xbf16>
    %243 = arith.truncf %240 : vector<4x256xf32> to vector<4x256xbf16>
    %cst_69 = arith.constant dense<0.000000e+00> : vector<8x256xf32>
    %244 = tpu.matmul %242, %243, %cst_69 {dimension_numbers = #tpu.dot_dimension_numbers<[1], [0], [0], [1], [0, 0, 1, 1], [], []>} : vector<8x4xbf16>, vector<4x256xbf16>, vector<8x256xf32> -> vector<8x256xf32>
    %245 = arith.addf %236, %244 : vector<8x256xf32>
    %c0_70 = arith.constant 0 : index
    %c201 = arith.constant 201 : index
    %246 = vector.load %arg8[%c0_70, %c201] : memref<4x512xf32, #tpu.memory_space<vmem>>, vector<4x256xf32>
    %247 = vector.extract_strided_slice %13 {offsets = [26, 0], sizes = [1, 256], strides = [1, 1]} : vector<27x256xf32> to vector<1x256xf32>
    %248 = vector.broadcast %247 : vector<1x256xf32> to vector<4x256xf32>
    %249 = arith.mulf %246, %248 : vector<4x256xf32>
    %250 = vector.extract_strided_slice %12 {offsets = [26, 0, 0], sizes = [1, 8, 4], strides = [1, 1, 1]} : vector<27x8x4xbf16> to vector<1x8x4xbf16>
    %251 = vector.shape_cast %250 : vector<1x8x4xbf16> to vector<8x4xbf16>
    %252 = arith.truncf %249 : vector<4x256xf32> to vector<4x256xbf16>
    %cst_71 = arith.constant dense<0.000000e+00> : vector<8x256xf32>
    %253 = tpu.matmul %251, %252, %cst_71 {dimension_numbers = #tpu.dot_dimension_numbers<[1], [0], [0], [1], [0, 0, 1, 1], [], []>} : vector<8x4xbf16>, vector<4x256xbf16>, vector<8x256xf32> -> vector<8x256xf32>
    %254 = arith.addf %245, %253 : vector<8x256xf32>
    %c0_72 = arith.constant 0 : index
    %c0_73 = arith.constant 0 : index
    %c0_74 = arith.constant 0 : index
    %255 = vector.load %arg7[%c0_72, %c0_73, %c0_74] : memref<1x8x256xf32, #tpu.memory_space<vmem>>, vector<1x8x256xf32>
    %256 = vector.shape_cast %255 : vector<1x8x256xf32> to vector<8x256xf32>
    %257 = vector.shape_cast %254 : vector<8x256xf32> to vector<1x8x256xf32>
    tpu.vector_store %arg7[%c0_72, %c0_73, %c0_74], %257 {strides = array<i32>} : memref<1x8x256xf32, #tpu.memory_space<vmem>>, vector<1x8x256xf32>,
    return
  }
  func.func @transform_0(%arg0: i32, %arg1: i32) -> (i32, i32, i32) {
    %c0_i32 = arith.constant 0 : i32
    %c0_i32_0 = arith.constant 0 : i32
    %c0_i32_1 = arith.constant 0 : i32
    %c0_i32_2 = arith.constant 0 : i32
    return %c0_i32, %c0_i32_0, %c0_i32_1 : i32, i32, i32
  }
  func.func @transform_1(%arg0: i32, %arg1: i32) -> (i32, i32) {
    %c0_i32 = arith.constant 0 : i32
    %c0_i32_0 = arith.constant 0 : i32
    return %c0_i32, %arg1 : i32, i32
  }
  func.func @transform_2(%arg0: i32, %arg1: i32) -> (i32, i32, i32) {
    %c1_i32 = arith.constant 1 : i32
    %0 = arith.addi %arg1, %c1_i32 : i32
    %c2_i32 = arith.constant 2 : i32
    %1 = arith.muli %0, %c2_i32 : i32
    %c1_i32_0 = arith.constant 1 : i32
    %2 = arith.subi %1, %c1_i32_0 : i32
    %c0_i32 = arith.constant 0 : i32
    %c0_i32_1 = arith.constant 0 : i32
    return %arg0, %c0_i32, %2 : i32, i32, i32
  }
  func.func @transform_3(%arg0: i32, %arg1: i32) -> (i32, i32, i32) {
    %c1_i32 = arith.constant 1 : i32
    %0 = arith.addi %arg1, %c1_i32 : i32
    %c0_i32 = arith.constant 0 : i32
    %c0_i32_0 = arith.constant 0 : i32
    return %arg0, %c0_i32, %0 : i32, i32, i32
  }
  func.func @transform_4(%arg0: i32, %arg1: i32) -> (i32, i32, i32) {
    %c2_i32 = arith.constant 2 : i32
    %0 = arith.addi %arg1, %c2_i32 : i32
    %c2_i32_0 = arith.constant 2 : i32
    %1 = arith.muli %0, %c2_i32_0 : i32
    %c0_i32 = arith.constant 0 : i32
    %c0_i32_1 = arith.constant 0 : i32
    return %arg0, %c0_i32, %1 : i32, i32, i32
  }
  func.func @transform_5(%arg0: i32, %arg1: i32) -> (i32, i32, i32) {
    %c0_i32 = arith.constant 0 : i32
    %c0_i32_0 = arith.constant 0 : i32
    return %arg0, %c0_i32, %arg1 : i32, i32, i32
  }
}

module attributes {stable_mosaic.version = 11 : i64} {
  func.func @_mish_inorm_kernel(%arg0: i32, %arg1: memref<16x512xf32, #tpu.memory_space<vmem>>, %arg2: memref<16x896xbf16, #tpu.memory_space<vmem>>) attributes {dimension_semantics = [#tpu.dimension_semantics<parallel>], iteration_bounds = array<i64: 1>, scalar_prefetch = 0 : i64, scratch_operands = 0 : i64, tpu.core_type = #tpu.core_type<tc>, window_params = [{transform_indices = @transform_0, window_bounds = array<i64: 16, 512>}, {transform_indices = @transform_1, window_bounds = array<i64: 16, 896>}]} {
    %c0 = arith.constant 0 : index
    %c0_0 = arith.constant 0 : index
    %0 = vector.load %arg1[%c0, %c0_0] : memref<16x512xf32, #tpu.memory_space<vmem>>, vector<16x512xf32>
    %1 = math.absf %0 : vector<16x512xf32>
    %cst = arith.constant 0.000000e+00 : f32
    %2 = vector.broadcast %cst : f32 to vector<16x512xf32>
    %3 = arith.subf %2, %1 : vector<16x512xf32>
    %4 = math.exp %3 : vector<16x512xf32>
    %cst_1 = arith.constant 0.000000e+00 : f32
    %5 = vector.broadcast %cst_1 : f32 to vector<16x512xf32>
    %6 = arith.cmpf oge, %0, %5 : vector<16x512xf32>
    %cst_2 = arith.constant 2.000000e+00 : f32
    %7 = vector.broadcast %cst_2 : f32 to vector<16x512xf32>
    %8 = arith.mulf %7, %4 : vector<16x512xf32>
    %cst_3 = arith.constant 1.000000e+00 : f32
    %9 = vector.broadcast %cst_3 : f32 to vector<16x512xf32>
    %10 = arith.addf %9, %8 : vector<16x512xf32>
    %cst_4 = arith.constant 2.000000e+00 : f32
    %11 = vector.broadcast %cst_4 : f32 to vector<16x512xf32>
    %12 = arith.addf %4, %11 : vector<16x512xf32>
    %13 = arith.mulf %4, %12 : vector<16x512xf32>
    %14 = arith.select %6, %10, %13 : vector<16x512xi1>, vector<16x512xf32>
    %cst_5 = arith.constant 2.000000e+00 : f32
    %15 = vector.broadcast %cst_5 : f32 to vector<16x512xf32>
    %16 = arith.mulf %15, %4 : vector<16x512xf32>
    %17 = arith.mulf %16, %4 : vector<16x512xf32>
    %cst_6 = arith.constant 2.000000e+00 : f32
    %18 = vector.broadcast %cst_6 : f32 to vector<16x512xf32>
    %19 = arith.select %6, %17, %18 : vector<16x512xi1>, vector<16x512xf32>
    %20 = arith.addf %14, %19 : vector<16x512xf32>
    %21 = arith.mulf %0, %14 : vector<16x512xf32>
    %22 = tpu.reciprocal %20 {approx = true} : vector<16x512xf32> -> vector<16x512xf32>
    %23 = arith.mulf %21, %22 : vector<16x512xf32>
    %cst_7 = arith.constant dense<0.000000e+00> : vector<16xf32>
    %24 = vector.multi_reduction <add>, %23, %cst_7 [1] : vector<16x512xf32> to vector<16xf32>
    %25 = vector.shape_cast %24 : vector<16xf32> to vector<16x1xf32>
    %cst_8 = arith.constant 5.120000e+02 : f32
    %26 = vector.broadcast %cst_8 : f32 to vector<16x1xf32>
    %27 = arith.divf %25, %26 : vector<16x1xf32>
    %28 = vector.broadcast %27 : vector<16x1xf32> to vector<16x512xf32>
    %29 = arith.subf %23, %28 : vector<16x512xf32>
    %30 = arith.mulf %29, %29 : vector<16x512xf32>
    %cst_9 = arith.constant dense<0.000000e+00> : vector<16xf32>
    %31 = vector.multi_reduction <add>, %30, %cst_9 [1] : vector<16x512xf32> to vector<16xf32>
    %32 = vector.shape_cast %31 : vector<16xf32> to vector<16x1xf32>
    %cst_10 = arith.constant 5.120000e+02 : f32
    %33 = vector.broadcast %cst_10 : f32 to vector<16x1xf32>
    %34 = arith.divf %32, %33 : vector<16x1xf32>
    %cst_11 = arith.constant 9.99999974E-6 : f32
    %35 = vector.broadcast %cst_11 : f32 to vector<16x1xf32>
    %36 = arith.addf %34, %35 : vector<16x1xf32>
    %37 = math.rsqrt %36 : vector<16x1xf32>
    %38 = vector.broadcast %37 : vector<16x1xf32> to vector<16x512xf32>
    %39 = arith.mulf %29, %38 : vector<16x512xf32>
    %cst_12 = arith.constant 0.000000e+00 : bf16
    %40 = vector.broadcast %cst_12 : bf16 to vector<16x256xbf16>
    %c0_13 = arith.constant 0 : index
    %c0_14 = arith.constant 0 : index
    %41 = vector.load %arg2[%c0_13, %c0_14] : memref<16x896xbf16, #tpu.memory_space<vmem>>, vector<16x256xbf16>
    tpu.vector_store %arg2[%c0_13, %c0_14], %40 {strides = array<i32>} : memref<16x896xbf16, #tpu.memory_space<vmem>>, vector<16x256xbf16>,
    %42 = arith.truncf %39 : vector<16x512xf32> to vector<16x512xbf16>
    %c0_15 = arith.constant 0 : index
    %c256 = arith.constant 256 : index
    %43 = vector.load %arg2[%c0_15, %c256] : memref<16x896xbf16, #tpu.memory_space<vmem>>, vector<16x512xbf16>
    tpu.vector_store %arg2[%c0_15, %c256], %42 {strides = array<i32>} : memref<16x896xbf16, #tpu.memory_space<vmem>>, vector<16x512xbf16>,
    %cst_16 = arith.constant 0.000000e+00 : bf16
    %44 = vector.broadcast %cst_16 : bf16 to vector<16x128xbf16>
    %c0_17 = arith.constant 0 : index
    %c768 = arith.constant 768 : index
    %45 = vector.load %arg2[%c0_17, %c768] : memref<16x896xbf16, #tpu.memory_space<vmem>>, vector<16x128xbf16>
    tpu.vector_store %arg2[%c0_17, %c768], %44 {strides = array<i32>} : memref<16x896xbf16, #tpu.memory_space<vmem>>, vector<16x128xbf16>,
    return
  }
  func.func @transform_0(%arg0: i32) -> (i32, i32) {
    %c0_i32 = arith.constant 0 : i32
    %c0_i32_0 = arith.constant 0 : i32
    return %arg0, %c0_i32 : i32, i32
  }
  func.func @transform_1(%arg0: i32) -> (i32, i32) {
    %c0_i32 = arith.constant 0 : i32
    %c0_i32_0 = arith.constant 0 : i32
    return %arg0, %c0_i32 : i32, i32
  }
}

module attributes {stable_mosaic.version = 11 : i64} {
  func.func @_conv3x3x3_kernel(%arg0: i32, %arg1: i32, %arg2: memref<27x4x8xbf16, #tpu.memory_space<vmem>>, %arg3: memref<27x256xf32, #tpu.memory_space<vmem>>, %arg4: memref<1x8x128xbf16, #tpu.memory_space<vmem>>, %arg5: memref<1x8x256xbf16, #tpu.memory_space<vmem>>, %arg6: memref<1x8x128xbf16, #tpu.memory_space<vmem>>, %arg7: memref<1x4x256xf32, #tpu.memory_space<vmem>>, %arg8: memref<1x4x256xf32, #tpu.memory_space<vmem>>, %arg9: memref<8x512xf32, #tpu.memory_space<vmem>>) attributes {dimension_semantics = [#tpu.dimension_semantics<parallel>, #tpu.dimension_semantics<parallel>], iteration_bounds = array<i64: 2, 2>, scalar_prefetch = 0 : i64, scratch_operands = 1 : i64, tpu.core_type = #tpu.core_type<tc>, window_params = [{pipeline_mode = #tpu.pipeline_mode<synchronous>, transform_indices = @transform_0, window_bounds = array<i64: 27, 4, 8>}, {transform_indices = @transform_1, window_bounds = array<i64: 27, 256>}, {transform_indices = @transform_2, window_bounds = array<i64: 1, 8, 128>}, {transform_indices = @transform_3, window_bounds = array<i64: 1, 8, 256>}, {transform_indices = @transform_4, window_bounds = array<i64: 1, 8, 128>}, {transform_indices = @transform_5, window_bounds = array<i64: 1, 4, 256>}, {transform_indices = @transform_6, window_bounds = array<i64: 1, 4, 256>}]} {
    %c0 = arith.constant 0 : index
    %c0_0 = arith.constant 0 : index
    %c0_1 = arith.constant 0 : index
    %0 = vector.load %arg4[%c0, %c0_0, %c0_1] : memref<1x8x128xbf16, #tpu.memory_space<vmem>>, vector<1x8x128xbf16>
    %1 = vector.shape_cast %0 : vector<1x8x128xbf16> to vector<8x128xbf16>
    %2 = arith.extf %1 : vector<8x128xbf16> to vector<8x128xf32>
    %c0_2 = arith.constant 0 : index
    %c0_3 = arith.constant 0 : index
    %3 = vector.load %arg9[%c0_2, %c0_3] : memref<8x512xf32, #tpu.memory_space<vmem>>, vector<8x128xf32>
    tpu.vector_store %arg9[%c0_2, %c0_3], %2 {strides = array<i32>} : memref<8x512xf32, #tpu.memory_space<vmem>>, vector<8x128xf32>,
    %c0_4 = arith.constant 0 : index
    %c0_5 = arith.constant 0 : index
    %c0_6 = arith.constant 0 : index
    %4 = vector.load %arg5[%c0_4, %c0_5, %c0_6] : memref<1x8x256xbf16, #tpu.memory_space<vmem>>, vector<1x8x256xbf16>
    %5 = vector.shape_cast %4 : vector<1x8x256xbf16> to vector<8x256xbf16>
    %6 = arith.extf %5 : vector<8x256xbf16> to vector<8x256xf32>
    %c0_7 = arith.constant 0 : index
    %c128 = arith.constant 128 : index
    %7 = vector.load %arg9[%c0_7, %c128] : memref<8x512xf32, #tpu.memory_space<vmem>>, vector<8x256xf32>
    tpu.vector_store %arg9[%c0_7, %c128], %6 {strides = array<i32>} : memref<8x512xf32, #tpu.memory_space<vmem>>, vector<8x256xf32>,
    %c0_8 = arith.constant 0 : index
    %c0_9 = arith.constant 0 : index
    %c0_10 = arith.constant 0 : index
    %8 = vector.load %arg6[%c0_8, %c0_9, %c0_10] : memref<1x8x128xbf16, #tpu.memory_space<vmem>>, vector<1x8x128xbf16>
    %9 = vector.shape_cast %8 : vector<1x8x128xbf16> to vector<8x128xbf16>
    %10 = arith.extf %9 : vector<8x128xbf16> to vector<8x128xf32>
    %c0_11 = arith.constant 0 : index
    %c384 = arith.constant 384 : index
    %11 = vector.load %arg9[%c0_11, %c384] : memref<8x512xf32, #tpu.memory_space<vmem>>, vector<8x128xf32>
    tpu.vector_store %arg9[%c0_11, %c384], %10 {strides = array<i32>} : memref<8x512xf32, #tpu.memory_space<vmem>>, vector<8x128xf32>,
    %c0_12 = arith.constant 0 : index
    %c0_13 = arith.constant 0 : index
    %c0_14 = arith.constant 0 : index
    %12 = vector.load %arg2[%c0_12, %c0_13, %c0_14] : memref<27x4x8xbf16, #tpu.memory_space<vmem>>, vector<27x4x8xbf16>
    %c0_15 = arith.constant 0 : index
    %c0_16 = arith.constant 0 : index
    %13 = vector.load %arg3[%c0_15, %c0_16] : memref<27x256xf32, #tpu.memory_space<vmem>>, vector<27x256xf32>
    %cst = arith.constant 0.000000e+00 : f32
    %14 = vector.broadcast %cst : f32 to vector<4x256xf32>
    %c0_17 = arith.constant 0 : index
    %c55 = arith.constant 55 : index
    %15 = vector.load %arg9[%c0_17, %c55] : memref<8x512xf32, #tpu.memory_space<vmem>>, vector<8x256xf32>
    %16 = vector.extract_strided_slice %13 {offsets = [0, 0], sizes = [1, 256], strides = [1, 1]} : vector<27x256xf32> to vector<1x256xf32>
    %17 = vector.broadcast %16 : vector<1x256xf32> to vector<8x256xf32>
    %18 = arith.mulf %15, %17 : vector<8x256xf32>
    %19 = vector.extract_strided_slice %12 {offsets = [0, 0, 0], sizes = [1, 4, 8], strides = [1, 1, 1]} : vector<27x4x8xbf16> to vector<1x4x8xbf16>
    %20 = vector.shape_cast %19 : vector<1x4x8xbf16> to vector<4x8xbf16>
    %21 = arith.truncf %18 : vector<8x256xf32> to vector<8x256xbf16>
    %cst_18 = arith.constant dense<0.000000e+00> : vector<4x256xf32>
    %22 = tpu.matmul %20, %21, %cst_18 {dimension_numbers = #tpu.dot_dimension_numbers<[1], [0], [0], [1], [0, 0, 1, 1], [], []>} : vector<4x8xbf16>, vector<8x256xbf16>, vector<4x256xf32> -> vector<4x256xf32>
    %23 = arith.addf %14, %22 : vector<4x256xf32>
    %c0_19 = arith.constant 0 : index
    %c56 = arith.constant 56 : index
    %24 = vector.load %arg9[%c0_19, %c56] : memref<8x512xf32, #tpu.memory_space<vmem>>, vector<8x256xf32>
    %25 = vector.extract_strided_slice %13 {offsets = [1, 0], sizes = [1, 256], strides = [1, 1]} : vector<27x256xf32> to vector<1x256xf32>
    %26 = vector.broadcast %25 : vector<1x256xf32> to vector<8x256xf32>
    %27 = arith.mulf %24, %26 : vector<8x256xf32>
    %28 = vector.extract_strided_slice %12 {offsets = [1, 0, 0], sizes = [1, 4, 8], strides = [1, 1, 1]} : vector<27x4x8xbf16> to vector<1x4x8xbf16>
    %29 = vector.shape_cast %28 : vector<1x4x8xbf16> to vector<4x8xbf16>
    %30 = arith.truncf %27 : vector<8x256xf32> to vector<8x256xbf16>
    %cst_20 = arith.constant dense<0.000000e+00> : vector<4x256xf32>
    %31 = tpu.matmul %29, %30, %cst_20 {dimension_numbers = #tpu.dot_dimension_numbers<[1], [0], [0], [1], [0, 0, 1, 1], [], []>} : vector<4x8xbf16>, vector<8x256xbf16>, vector<4x256xf32> -> vector<4x256xf32>
    %32 = arith.addf %23, %31 : vector<4x256xf32>
    %c0_21 = arith.constant 0 : index
    %c57 = arith.constant 57 : index
    %33 = vector.load %arg9[%c0_21, %c57] : memref<8x512xf32, #tpu.memory_space<vmem>>, vector<8x256xf32>
    %34 = vector.extract_strided_slice %13 {offsets = [2, 0], sizes = [1, 256], strides = [1, 1]} : vector<27x256xf32> to vector<1x256xf32>
    %35 = vector.broadcast %34 : vector<1x256xf32> to vector<8x256xf32>
    %36 = arith.mulf %33, %35 : vector<8x256xf32>
    %37 = vector.extract_strided_slice %12 {offsets = [2, 0, 0], sizes = [1, 4, 8], strides = [1, 1, 1]} : vector<27x4x8xbf16> to vector<1x4x8xbf16>
    %38 = vector.shape_cast %37 : vector<1x4x8xbf16> to vector<4x8xbf16>
    %39 = arith.truncf %36 : vector<8x256xf32> to vector<8x256xbf16>
    %cst_22 = arith.constant dense<0.000000e+00> : vector<4x256xf32>
    %40 = tpu.matmul %38, %39, %cst_22 {dimension_numbers = #tpu.dot_dimension_numbers<[1], [0], [0], [1], [0, 0, 1, 1], [], []>} : vector<4x8xbf16>, vector<8x256xbf16>, vector<4x256xf32> -> vector<4x256xf32>
    %41 = arith.addf %32, %40 : vector<4x256xf32>
    %c0_23 = arith.constant 0 : index
    %c63 = arith.constant 63 : index
    %42 = vector.load %arg9[%c0_23, %c63] : memref<8x512xf32, #tpu.memory_space<vmem>>, vector<8x256xf32>
    %43 = vector.extract_strided_slice %13 {offsets = [3, 0], sizes = [1, 256], strides = [1, 1]} : vector<27x256xf32> to vector<1x256xf32>
    %44 = vector.broadcast %43 : vector<1x256xf32> to vector<8x256xf32>
    %45 = arith.mulf %42, %44 : vector<8x256xf32>
    %46 = vector.extract_strided_slice %12 {offsets = [3, 0, 0], sizes = [1, 4, 8], strides = [1, 1, 1]} : vector<27x4x8xbf16> to vector<1x4x8xbf16>
    %47 = vector.shape_cast %46 : vector<1x4x8xbf16> to vector<4x8xbf16>
    %48 = arith.truncf %45 : vector<8x256xf32> to vector<8x256xbf16>
    %cst_24 = arith.constant dense<0.000000e+00> : vector<4x256xf32>
    %49 = tpu.matmul %47, %48, %cst_24 {dimension_numbers = #tpu.dot_dimension_numbers<[1], [0], [0], [1], [0, 0, 1, 1], [], []>} : vector<4x8xbf16>, vector<8x256xbf16>, vector<4x256xf32> -> vector<4x256xf32>
    %50 = arith.addf %41, %49 : vector<4x256xf32>
    %c0_25 = arith.constant 0 : index
    %c64 = arith.constant 64 : index
    %51 = vector.load %arg9[%c0_25, %c64] : memref<8x512xf32, #tpu.memory_space<vmem>>, vector<8x256xf32>
    %52 = vector.extract_strided_slice %13 {offsets = [4, 0], sizes = [1, 256], strides = [1, 1]} : vector<27x256xf32> to vector<1x256xf32>
    %53 = vector.broadcast %52 : vector<1x256xf32> to vector<8x256xf32>
    %54 = arith.mulf %51, %53 : vector<8x256xf32>
    %55 = vector.extract_strided_slice %12 {offsets = [4, 0, 0], sizes = [1, 4, 8], strides = [1, 1, 1]} : vector<27x4x8xbf16> to vector<1x4x8xbf16>
    %56 = vector.shape_cast %55 : vector<1x4x8xbf16> to vector<4x8xbf16>
    %57 = arith.truncf %54 : vector<8x256xf32> to vector<8x256xbf16>
    %cst_26 = arith.constant dense<0.000000e+00> : vector<4x256xf32>
    %58 = tpu.matmul %56, %57, %cst_26 {dimension_numbers = #tpu.dot_dimension_numbers<[1], [0], [0], [1], [0, 0, 1, 1], [], []>} : vector<4x8xbf16>, vector<8x256xbf16>, vector<4x256xf32> -> vector<4x256xf32>
    %59 = arith.addf %50, %58 : vector<4x256xf32>
    %c0_27 = arith.constant 0 : index
    %c65 = arith.constant 65 : index
    %60 = vector.load %arg9[%c0_27, %c65] : memref<8x512xf32, #tpu.memory_space<vmem>>, vector<8x256xf32>
    %61 = vector.extract_strided_slice %13 {offsets = [5, 0], sizes = [1, 256], strides = [1, 1]} : vector<27x256xf32> to vector<1x256xf32>
    %62 = vector.broadcast %61 : vector<1x256xf32> to vector<8x256xf32>
    %63 = arith.mulf %60, %62 : vector<8x256xf32>
    %64 = vector.extract_strided_slice %12 {offsets = [5, 0, 0], sizes = [1, 4, 8], strides = [1, 1, 1]} : vector<27x4x8xbf16> to vector<1x4x8xbf16>
    %65 = vector.shape_cast %64 : vector<1x4x8xbf16> to vector<4x8xbf16>
    %66 = arith.truncf %63 : vector<8x256xf32> to vector<8x256xbf16>
    %cst_28 = arith.constant dense<0.000000e+00> : vector<4x256xf32>
    %67 = tpu.matmul %65, %66, %cst_28 {dimension_numbers = #tpu.dot_dimension_numbers<[1], [0], [0], [1], [0, 0, 1, 1], [], []>} : vector<4x8xbf16>, vector<8x256xbf16>, vector<4x256xf32> -> vector<4x256xf32>
    %68 = arith.addf %59, %67 : vector<4x256xf32>
    %c0_29 = arith.constant 0 : index
    %c71 = arith.constant 71 : index
    %69 = vector.load %arg9[%c0_29, %c71] : memref<8x512xf32, #tpu.memory_space<vmem>>, vector<8x256xf32>
    %70 = vector.extract_strided_slice %13 {offsets = [6, 0], sizes = [1, 256], strides = [1, 1]} : vector<27x256xf32> to vector<1x256xf32>
    %71 = vector.broadcast %70 : vector<1x256xf32> to vector<8x256xf32>
    %72 = arith.mulf %69, %71 : vector<8x256xf32>
    %73 = vector.extract_strided_slice %12 {offsets = [6, 0, 0], sizes = [1, 4, 8], strides = [1, 1, 1]} : vector<27x4x8xbf16> to vector<1x4x8xbf16>
    %74 = vector.shape_cast %73 : vector<1x4x8xbf16> to vector<4x8xbf16>
    %75 = arith.truncf %72 : vector<8x256xf32> to vector<8x256xbf16>
    %cst_30 = arith.constant dense<0.000000e+00> : vector<4x256xf32>
    %76 = tpu.matmul %74, %75, %cst_30 {dimension_numbers = #tpu.dot_dimension_numbers<[1], [0], [0], [1], [0, 0, 1, 1], [], []>} : vector<4x8xbf16>, vector<8x256xbf16>, vector<4x256xf32> -> vector<4x256xf32>
    %77 = arith.addf %68, %76 : vector<4x256xf32>
    %c0_31 = arith.constant 0 : index
    %c72 = arith.constant 72 : index
    %78 = vector.load %arg9[%c0_31, %c72] : memref<8x512xf32, #tpu.memory_space<vmem>>, vector<8x256xf32>
    %79 = vector.extract_strided_slice %13 {offsets = [7, 0], sizes = [1, 256], strides = [1, 1]} : vector<27x256xf32> to vector<1x256xf32>
    %80 = vector.broadcast %79 : vector<1x256xf32> to vector<8x256xf32>
    %81 = arith.mulf %78, %80 : vector<8x256xf32>
    %82 = vector.extract_strided_slice %12 {offsets = [7, 0, 0], sizes = [1, 4, 8], strides = [1, 1, 1]} : vector<27x4x8xbf16> to vector<1x4x8xbf16>
    %83 = vector.shape_cast %82 : vector<1x4x8xbf16> to vector<4x8xbf16>
    %84 = arith.truncf %81 : vector<8x256xf32> to vector<8x256xbf16>
    %cst_32 = arith.constant dense<0.000000e+00> : vector<4x256xf32>
    %85 = tpu.matmul %83, %84, %cst_32 {dimension_numbers = #tpu.dot_dimension_numbers<[1], [0], [0], [1], [0, 0, 1, 1], [], []>} : vector<4x8xbf16>, vector<8x256xbf16>, vector<4x256xf32> -> vector<4x256xf32>
    %86 = arith.addf %77, %85 : vector<4x256xf32>
    %c0_33 = arith.constant 0 : index
    %c73 = arith.constant 73 : index
    %87 = vector.load %arg9[%c0_33, %c73] : memref<8x512xf32, #tpu.memory_space<vmem>>, vector<8x256xf32>
    %88 = vector.extract_strided_slice %13 {offsets = [8, 0], sizes = [1, 256], strides = [1, 1]} : vector<27x256xf32> to vector<1x256xf32>
    %89 = vector.broadcast %88 : vector<1x256xf32> to vector<8x256xf32>
    %90 = arith.mulf %87, %89 : vector<8x256xf32>
    %91 = vector.extract_strided_slice %12 {offsets = [8, 0, 0], sizes = [1, 4, 8], strides = [1, 1, 1]} : vector<27x4x8xbf16> to vector<1x4x8xbf16>
    %92 = vector.shape_cast %91 : vector<1x4x8xbf16> to vector<4x8xbf16>
    %93 = arith.truncf %90 : vector<8x256xf32> to vector<8x256xbf16>
    %cst_34 = arith.constant dense<0.000000e+00> : vector<4x256xf32>
    %94 = tpu.matmul %92, %93, %cst_34 {dimension_numbers = #tpu.dot_dimension_numbers<[1], [0], [0], [1], [0, 0, 1, 1], [], []>} : vector<4x8xbf16>, vector<8x256xbf16>, vector<4x256xf32> -> vector<4x256xf32>
    %95 = arith.addf %86, %94 : vector<4x256xf32>
    %c0_35 = arith.constant 0 : index
    %c119 = arith.constant 119 : index
    %96 = vector.load %arg9[%c0_35, %c119] : memref<8x512xf32, #tpu.memory_space<vmem>>, vector<8x256xf32>
    %97 = vector.extract_strided_slice %13 {offsets = [9, 0], sizes = [1, 256], strides = [1, 1]} : vector<27x256xf32> to vector<1x256xf32>
    %98 = vector.broadcast %97 : vector<1x256xf32> to vector<8x256xf32>
    %99 = arith.mulf %96, %98 : vector<8x256xf32>
    %100 = vector.extract_strided_slice %12 {offsets = [9, 0, 0], sizes = [1, 4, 8], strides = [1, 1, 1]} : vector<27x4x8xbf16> to vector<1x4x8xbf16>
    %101 = vector.shape_cast %100 : vector<1x4x8xbf16> to vector<4x8xbf16>
    %102 = arith.truncf %99 : vector<8x256xf32> to vector<8x256xbf16>
    %cst_36 = arith.constant dense<0.000000e+00> : vector<4x256xf32>
    %103 = tpu.matmul %101, %102, %cst_36 {dimension_numbers = #tpu.dot_dimension_numbers<[1], [0], [0], [1], [0, 0, 1, 1], [], []>} : vector<4x8xbf16>, vector<8x256xbf16>, vector<4x256xf32> -> vector<4x256xf32>
    %104 = arith.addf %95, %103 : vector<4x256xf32>
    %c0_37 = arith.constant 0 : index
    %c120 = arith.constant 120 : index
    %105 = vector.load %arg9[%c0_37, %c120] : memref<8x512xf32, #tpu.memory_space<vmem>>, vector<8x256xf32>
    %106 = vector.extract_strided_slice %13 {offsets = [10, 0], sizes = [1, 256], strides = [1, 1]} : vector<27x256xf32> to vector<1x256xf32>
    %107 = vector.broadcast %106 : vector<1x256xf32> to vector<8x256xf32>
    %108 = arith.mulf %105, %107 : vector<8x256xf32>
    %109 = vector.extract_strided_slice %12 {offsets = [10, 0, 0], sizes = [1, 4, 8], strides = [1, 1, 1]} : vector<27x4x8xbf16> to vector<1x4x8xbf16>
    %110 = vector.shape_cast %109 : vector<1x4x8xbf16> to vector<4x8xbf16>
    %111 = arith.truncf %108 : vector<8x256xf32> to vector<8x256xbf16>
    %cst_38 = arith.constant dense<0.000000e+00> : vector<4x256xf32>
    %112 = tpu.matmul %110, %111, %cst_38 {dimension_numbers = #tpu.dot_dimension_numbers<[1], [0], [0], [1], [0, 0, 1, 1], [], []>} : vector<4x8xbf16>, vector<8x256xbf16>, vector<4x256xf32> -> vector<4x256xf32>
    %113 = arith.addf %104, %112 : vector<4x256xf32>
    %c0_39 = arith.constant 0 : index
    %c121 = arith.constant 121 : index
    %114 = vector.load %arg9[%c0_39, %c121] : memref<8x512xf32, #tpu.memory_space<vmem>>, vector<8x256xf32>
    %115 = vector.extract_strided_slice %13 {offsets = [11, 0], sizes = [1, 256], strides = [1, 1]} : vector<27x256xf32> to vector<1x256xf32>
    %116 = vector.broadcast %115 : vector<1x256xf32> to vector<8x256xf32>
    %117 = arith.mulf %114, %116 : vector<8x256xf32>
    %118 = vector.extract_strided_slice %12 {offsets = [11, 0, 0], sizes = [1, 4, 8], strides = [1, 1, 1]} : vector<27x4x8xbf16> to vector<1x4x8xbf16>
    %119 = vector.shape_cast %118 : vector<1x4x8xbf16> to vector<4x8xbf16>
    %120 = arith.truncf %117 : vector<8x256xf32> to vector<8x256xbf16>
    %cst_40 = arith.constant dense<0.000000e+00> : vector<4x256xf32>
    %121 = tpu.matmul %119, %120, %cst_40 {dimension_numbers = #tpu.dot_dimension_numbers<[1], [0], [0], [1], [0, 0, 1, 1], [], []>} : vector<4x8xbf16>, vector<8x256xbf16>, vector<4x256xf32> -> vector<4x256xf32>
    %122 = arith.addf %113, %121 : vector<4x256xf32>
    %c0_41 = arith.constant 0 : index
    %c127 = arith.constant 127 : index
    %123 = vector.load %arg9[%c0_41, %c127] : memref<8x512xf32, #tpu.memory_space<vmem>>, vector<8x256xf32>
    %124 = vector.extract_strided_slice %13 {offsets = [12, 0], sizes = [1, 256], strides = [1, 1]} : vector<27x256xf32> to vector<1x256xf32>
    %125 = vector.broadcast %124 : vector<1x256xf32> to vector<8x256xf32>
    %126 = arith.mulf %123, %125 : vector<8x256xf32>
    %127 = vector.extract_strided_slice %12 {offsets = [12, 0, 0], sizes = [1, 4, 8], strides = [1, 1, 1]} : vector<27x4x8xbf16> to vector<1x4x8xbf16>
    %128 = vector.shape_cast %127 : vector<1x4x8xbf16> to vector<4x8xbf16>
    %129 = arith.truncf %126 : vector<8x256xf32> to vector<8x256xbf16>
    %cst_42 = arith.constant dense<0.000000e+00> : vector<4x256xf32>
    %130 = tpu.matmul %128, %129, %cst_42 {dimension_numbers = #tpu.dot_dimension_numbers<[1], [0], [0], [1], [0, 0, 1, 1], [], []>} : vector<4x8xbf16>, vector<8x256xbf16>, vector<4x256xf32> -> vector<4x256xf32>
    %131 = arith.addf %122, %130 : vector<4x256xf32>
    %c0_43 = arith.constant 0 : index
    %c128_44 = arith.constant 128 : index
    %132 = vector.load %arg9[%c0_43, %c128_44] : memref<8x512xf32, #tpu.memory_space<vmem>>, vector<8x256xf32>
    %133 = vector.extract_strided_slice %12 {offsets = [13, 0, 0], sizes = [1, 4, 8], strides = [1, 1, 1]} : vector<27x4x8xbf16> to vector<1x4x8xbf16>
    %134 = vector.shape_cast %133 : vector<1x4x8xbf16> to vector<4x8xbf16>
    %135 = arith.truncf %132 : vector<8x256xf32> to vector<8x256xbf16>
    %cst_45 = arith.constant dense<0.000000e+00> : vector<4x256xf32>
    %136 = tpu.matmul %134, %135, %cst_45 {dimension_numbers = #tpu.dot_dimension_numbers<[1], [0], [0], [1], [0, 0, 1, 1], [], []>} : vector<4x8xbf16>, vector<8x256xbf16>, vector<4x256xf32> -> vector<4x256xf32>
    %137 = arith.addf %131, %136 : vector<4x256xf32>
    %c0_46 = arith.constant 0 : index
    %c129 = arith.constant 129 : index
    %138 = vector.load %arg9[%c0_46, %c129] : memref<8x512xf32, #tpu.memory_space<vmem>>, vector<8x256xf32>
    %139 = vector.extract_strided_slice %13 {offsets = [14, 0], sizes = [1, 256], strides = [1, 1]} : vector<27x256xf32> to vector<1x256xf32>
    %140 = vector.broadcast %139 : vector<1x256xf32> to vector<8x256xf32>
    %141 = arith.mulf %138, %140 : vector<8x256xf32>
    %142 = vector.extract_strided_slice %12 {offsets = [14, 0, 0], sizes = [1, 4, 8], strides = [1, 1, 1]} : vector<27x4x8xbf16> to vector<1x4x8xbf16>
    %143 = vector.shape_cast %142 : vector<1x4x8xbf16> to vector<4x8xbf16>
    %144 = arith.truncf %141 : vector<8x256xf32> to vector<8x256xbf16>
    %cst_47 = arith.constant dense<0.000000e+00> : vector<4x256xf32>
    %145 = tpu.matmul %143, %144, %cst_47 {dimension_numbers = #tpu.dot_dimension_numbers<[1], [0], [0], [1], [0, 0, 1, 1], [], []>} : vector<4x8xbf16>, vector<8x256xbf16>, vector<4x256xf32> -> vector<4x256xf32>
    %146 = arith.addf %137, %145 : vector<4x256xf32>
    %c0_48 = arith.constant 0 : index
    %c135 = arith.constant 135 : index
    %147 = vector.load %arg9[%c0_48, %c135] : memref<8x512xf32, #tpu.memory_space<vmem>>, vector<8x256xf32>
    %148 = vector.extract_strided_slice %13 {offsets = [15, 0], sizes = [1, 256], strides = [1, 1]} : vector<27x256xf32> to vector<1x256xf32>
    %149 = vector.broadcast %148 : vector<1x256xf32> to vector<8x256xf32>
    %150 = arith.mulf %147, %149 : vector<8x256xf32>
    %151 = vector.extract_strided_slice %12 {offsets = [15, 0, 0], sizes = [1, 4, 8], strides = [1, 1, 1]} : vector<27x4x8xbf16> to vector<1x4x8xbf16>
    %152 = vector.shape_cast %151 : vector<1x4x8xbf16> to vector<4x8xbf16>
    %153 = arith.truncf %150 : vector<8x256xf32> to vector<8x256xbf16>
    %cst_49 = arith.constant dense<0.000000e+00> : vector<4x256xf32>
    %154 = tpu.matmul %152, %153, %cst_49 {dimension_numbers = #tpu.dot_dimension_numbers<[1], [0], [0], [1], [0, 0, 1, 1], [], []>} : vector<4x8xbf16>, vector<8x256xbf16>, vector<4x256xf32> -> vector<4x256xf32>
    %155 = arith.addf %146, %154 : vector<4x256xf32>
    %c0_50 = arith.constant 0 : index
    %c136 = arith.constant 136 : index
    %156 = vector.load %arg9[%c0_50, %c136] : memref<8x512xf32, #tpu.memory_space<vmem>>, vector<8x256xf32>
    %157 = vector.extract_strided_slice %13 {offsets = [16, 0], sizes = [1, 256], strides = [1, 1]} : vector<27x256xf32> to vector<1x256xf32>
    %158 = vector.broadcast %157 : vector<1x256xf32> to vector<8x256xf32>
    %159 = arith.mulf %156, %158 : vector<8x256xf32>
    %160 = vector.extract_strided_slice %12 {offsets = [16, 0, 0], sizes = [1, 4, 8], strides = [1, 1, 1]} : vector<27x4x8xbf16> to vector<1x4x8xbf16>
    %161 = vector.shape_cast %160 : vector<1x4x8xbf16> to vector<4x8xbf16>
    %162 = arith.truncf %159 : vector<8x256xf32> to vector<8x256xbf16>
    %cst_51 = arith.constant dense<0.000000e+00> : vector<4x256xf32>
    %163 = tpu.matmul %161, %162, %cst_51 {dimension_numbers = #tpu.dot_dimension_numbers<[1], [0], [0], [1], [0, 0, 1, 1], [], []>} : vector<4x8xbf16>, vector<8x256xbf16>, vector<4x256xf32> -> vector<4x256xf32>
    %164 = arith.addf %155, %163 : vector<4x256xf32>
    %c0_52 = arith.constant 0 : index
    %c137 = arith.constant 137 : index
    %165 = vector.load %arg9[%c0_52, %c137] : memref<8x512xf32, #tpu.memory_space<vmem>>, vector<8x256xf32>
    %166 = vector.extract_strided_slice %13 {offsets = [17, 0], sizes = [1, 256], strides = [1, 1]} : vector<27x256xf32> to vector<1x256xf32>
    %167 = vector.broadcast %166 : vector<1x256xf32> to vector<8x256xf32>
    %168 = arith.mulf %165, %167 : vector<8x256xf32>
    %169 = vector.extract_strided_slice %12 {offsets = [17, 0, 0], sizes = [1, 4, 8], strides = [1, 1, 1]} : vector<27x4x8xbf16> to vector<1x4x8xbf16>
    %170 = vector.shape_cast %169 : vector<1x4x8xbf16> to vector<4x8xbf16>
    %171 = arith.truncf %168 : vector<8x256xf32> to vector<8x256xbf16>
    %cst_53 = arith.constant dense<0.000000e+00> : vector<4x256xf32>
    %172 = tpu.matmul %170, %171, %cst_53 {dimension_numbers = #tpu.dot_dimension_numbers<[1], [0], [0], [1], [0, 0, 1, 1], [], []>} : vector<4x8xbf16>, vector<8x256xbf16>, vector<4x256xf32> -> vector<4x256xf32>
    %173 = arith.addf %164, %172 : vector<4x256xf32>
    %c0_54 = arith.constant 0 : index
    %c183 = arith.constant 183 : index
    %174 = vector.load %arg9[%c0_54, %c183] : memref<8x512xf32, #tpu.memory_space<vmem>>, vector<8x256xf32>
    %175 = vector.extract_strided_slice %13 {offsets = [18, 0], sizes = [1, 256], strides = [1, 1]} : vector<27x256xf32> to vector<1x256xf32>
    %176 = vector.broadcast %175 : vector<1x256xf32> to vector<8x256xf32>
    %177 = arith.mulf %174, %176 : vector<8x256xf32>
    %178 = vector.extract_strided_slice %12 {offsets = [18, 0, 0], sizes = [1, 4, 8], strides = [1, 1, 1]} : vector<27x4x8xbf16> to vector<1x4x8xbf16>
    %179 = vector.shape_cast %178 : vector<1x4x8xbf16> to vector<4x8xbf16>
    %180 = arith.truncf %177 : vector<8x256xf32> to vector<8x256xbf16>
    %cst_55 = arith.constant dense<0.000000e+00> : vector<4x256xf32>
    %181 = tpu.matmul %179, %180, %cst_55 {dimension_numbers = #tpu.dot_dimension_numbers<[1], [0], [0], [1], [0, 0, 1, 1], [], []>} : vector<4x8xbf16>, vector<8x256xbf16>, vector<4x256xf32> -> vector<4x256xf32>
    %182 = arith.addf %173, %181 : vector<4x256xf32>
    %c0_56 = arith.constant 0 : index
    %c184 = arith.constant 184 : index
    %183 = vector.load %arg9[%c0_56, %c184] : memref<8x512xf32, #tpu.memory_space<vmem>>, vector<8x256xf32>
    %184 = vector.extract_strided_slice %13 {offsets = [19, 0], sizes = [1, 256], strides = [1, 1]} : vector<27x256xf32> to vector<1x256xf32>
    %185 = vector.broadcast %184 : vector<1x256xf32> to vector<8x256xf32>
    %186 = arith.mulf %183, %185 : vector<8x256xf32>
    %187 = vector.extract_strided_slice %12 {offsets = [19, 0, 0], sizes = [1, 4, 8], strides = [1, 1, 1]} : vector<27x4x8xbf16> to vector<1x4x8xbf16>
    %188 = vector.shape_cast %187 : vector<1x4x8xbf16> to vector<4x8xbf16>
    %189 = arith.truncf %186 : vector<8x256xf32> to vector<8x256xbf16>
    %cst_57 = arith.constant dense<0.000000e+00> : vector<4x256xf32>
    %190 = tpu.matmul %188, %189, %cst_57 {dimension_numbers = #tpu.dot_dimension_numbers<[1], [0], [0], [1], [0, 0, 1, 1], [], []>} : vector<4x8xbf16>, vector<8x256xbf16>, vector<4x256xf32> -> vector<4x256xf32>
    %191 = arith.addf %182, %190 : vector<4x256xf32>
    %c0_58 = arith.constant 0 : index
    %c185 = arith.constant 185 : index
    %192 = vector.load %arg9[%c0_58, %c185] : memref<8x512xf32, #tpu.memory_space<vmem>>, vector<8x256xf32>
    %193 = vector.extract_strided_slice %13 {offsets = [20, 0], sizes = [1, 256], strides = [1, 1]} : vector<27x256xf32> to vector<1x256xf32>
    %194 = vector.broadcast %193 : vector<1x256xf32> to vector<8x256xf32>
    %195 = arith.mulf %192, %194 : vector<8x256xf32>
    %196 = vector.extract_strided_slice %12 {offsets = [20, 0, 0], sizes = [1, 4, 8], strides = [1, 1, 1]} : vector<27x4x8xbf16> to vector<1x4x8xbf16>
    %197 = vector.shape_cast %196 : vector<1x4x8xbf16> to vector<4x8xbf16>
    %198 = arith.truncf %195 : vector<8x256xf32> to vector<8x256xbf16>
    %cst_59 = arith.constant dense<0.000000e+00> : vector<4x256xf32>
    %199 = tpu.matmul %197, %198, %cst_59 {dimension_numbers = #tpu.dot_dimension_numbers<[1], [0], [0], [1], [0, 0, 1, 1], [], []>} : vector<4x8xbf16>, vector<8x256xbf16>, vector<4x256xf32> -> vector<4x256xf32>
    %200 = arith.addf %191, %199 : vector<4x256xf32>
    %c0_60 = arith.constant 0 : index
    %c191 = arith.constant 191 : index
    %201 = vector.load %arg9[%c0_60, %c191] : memref<8x512xf32, #tpu.memory_space<vmem>>, vector<8x256xf32>
    %202 = vector.extract_strided_slice %13 {offsets = [21, 0], sizes = [1, 256], strides = [1, 1]} : vector<27x256xf32> to vector<1x256xf32>
    %203 = vector.broadcast %202 : vector<1x256xf32> to vector<8x256xf32>
    %204 = arith.mulf %201, %203 : vector<8x256xf32>
    %205 = vector.extract_strided_slice %12 {offsets = [21, 0, 0], sizes = [1, 4, 8], strides = [1, 1, 1]} : vector<27x4x8xbf16> to vector<1x4x8xbf16>
    %206 = vector.shape_cast %205 : vector<1x4x8xbf16> to vector<4x8xbf16>
    %207 = arith.truncf %204 : vector<8x256xf32> to vector<8x256xbf16>
    %cst_61 = arith.constant dense<0.000000e+00> : vector<4x256xf32>
    %208 = tpu.matmul %206, %207, %cst_61 {dimension_numbers = #tpu.dot_dimension_numbers<[1], [0], [0], [1], [0, 0, 1, 1], [], []>} : vector<4x8xbf16>, vector<8x256xbf16>, vector<4x256xf32> -> vector<4x256xf32>
    %209 = arith.addf %200, %208 : vector<4x256xf32>
    %c0_62 = arith.constant 0 : index
    %c192 = arith.constant 192 : index
    %210 = vector.load %arg9[%c0_62, %c192] : memref<8x512xf32, #tpu.memory_space<vmem>>, vector<8x256xf32>
    %211 = vector.extract_strided_slice %13 {offsets = [22, 0], sizes = [1, 256], strides = [1, 1]} : vector<27x256xf32> to vector<1x256xf32>
    %212 = vector.broadcast %211 : vector<1x256xf32> to vector<8x256xf32>
    %213 = arith.mulf %210, %212 : vector<8x256xf32>
    %214 = vector.extract_strided_slice %12 {offsets = [22, 0, 0], sizes = [1, 4, 8], strides = [1, 1, 1]} : vector<27x4x8xbf16> to vector<1x4x8xbf16>
    %215 = vector.shape_cast %214 : vector<1x4x8xbf16> to vector<4x8xbf16>
    %216 = arith.truncf %213 : vector<8x256xf32> to vector<8x256xbf16>
    %cst_63 = arith.constant dense<0.000000e+00> : vector<4x256xf32>
    %217 = tpu.matmul %215, %216, %cst_63 {dimension_numbers = #tpu.dot_dimension_numbers<[1], [0], [0], [1], [0, 0, 1, 1], [], []>} : vector<4x8xbf16>, vector<8x256xbf16>, vector<4x256xf32> -> vector<4x256xf32>
    %218 = arith.addf %209, %217 : vector<4x256xf32>
    %c0_64 = arith.constant 0 : index
    %c193 = arith.constant 193 : index
    %219 = vector.load %arg9[%c0_64, %c193] : memref<8x512xf32, #tpu.memory_space<vmem>>, vector<8x256xf32>
    %220 = vector.extract_strided_slice %13 {offsets = [23, 0], sizes = [1, 256], strides = [1, 1]} : vector<27x256xf32> to vector<1x256xf32>
    %221 = vector.broadcast %220 : vector<1x256xf32> to vector<8x256xf32>
    %222 = arith.mulf %219, %221 : vector<8x256xf32>
    %223 = vector.extract_strided_slice %12 {offsets = [23, 0, 0], sizes = [1, 4, 8], strides = [1, 1, 1]} : vector<27x4x8xbf16> to vector<1x4x8xbf16>
    %224 = vector.shape_cast %223 : vector<1x4x8xbf16> to vector<4x8xbf16>
    %225 = arith.truncf %222 : vector<8x256xf32> to vector<8x256xbf16>
    %cst_65 = arith.constant dense<0.000000e+00> : vector<4x256xf32>
    %226 = tpu.matmul %224, %225, %cst_65 {dimension_numbers = #tpu.dot_dimension_numbers<[1], [0], [0], [1], [0, 0, 1, 1], [], []>} : vector<4x8xbf16>, vector<8x256xbf16>, vector<4x256xf32> -> vector<4x256xf32>
    %227 = arith.addf %218, %226 : vector<4x256xf32>
    %c0_66 = arith.constant 0 : index
    %c199 = arith.constant 199 : index
    %228 = vector.load %arg9[%c0_66, %c199] : memref<8x512xf32, #tpu.memory_space<vmem>>, vector<8x256xf32>
    %229 = vector.extract_strided_slice %13 {offsets = [24, 0], sizes = [1, 256], strides = [1, 1]} : vector<27x256xf32> to vector<1x256xf32>
    %230 = vector.broadcast %229 : vector<1x256xf32> to vector<8x256xf32>
    %231 = arith.mulf %228, %230 : vector<8x256xf32>
    %232 = vector.extract_strided_slice %12 {offsets = [24, 0, 0], sizes = [1, 4, 8], strides = [1, 1, 1]} : vector<27x4x8xbf16> to vector<1x4x8xbf16>
    %233 = vector.shape_cast %232 : vector<1x4x8xbf16> to vector<4x8xbf16>
    %234 = arith.truncf %231 : vector<8x256xf32> to vector<8x256xbf16>
    %cst_67 = arith.constant dense<0.000000e+00> : vector<4x256xf32>
    %235 = tpu.matmul %233, %234, %cst_67 {dimension_numbers = #tpu.dot_dimension_numbers<[1], [0], [0], [1], [0, 0, 1, 1], [], []>} : vector<4x8xbf16>, vector<8x256xbf16>, vector<4x256xf32> -> vector<4x256xf32>
    %236 = arith.addf %227, %235 : vector<4x256xf32>
    %c0_68 = arith.constant 0 : index
    %c200 = arith.constant 200 : index
    %237 = vector.load %arg9[%c0_68, %c200] : memref<8x512xf32, #tpu.memory_space<vmem>>, vector<8x256xf32>
    %238 = vector.extract_strided_slice %13 {offsets = [25, 0], sizes = [1, 256], strides = [1, 1]} : vector<27x256xf32> to vector<1x256xf32>
    %239 = vector.broadcast %238 : vector<1x256xf32> to vector<8x256xf32>
    %240 = arith.mulf %237, %239 : vector<8x256xf32>
    %241 = vector.extract_strided_slice %12 {offsets = [25, 0, 0], sizes = [1, 4, 8], strides = [1, 1, 1]} : vector<27x4x8xbf16> to vector<1x4x8xbf16>
    %242 = vector.shape_cast %241 : vector<1x4x8xbf16> to vector<4x8xbf16>
    %243 = arith.truncf %240 : vector<8x256xf32> to vector<8x256xbf16>
    %cst_69 = arith.constant dense<0.000000e+00> : vector<4x256xf32>
    %244 = tpu.matmul %242, %243, %cst_69 {dimension_numbers = #tpu.dot_dimension_numbers<[1], [0], [0], [1], [0, 0, 1, 1], [], []>} : vector<4x8xbf16>, vector<8x256xbf16>, vector<4x256xf32> -> vector<4x256xf32>
    %245 = arith.addf %236, %244 : vector<4x256xf32>
    %c0_70 = arith.constant 0 : index
    %c201 = arith.constant 201 : index
    %246 = vector.load %arg9[%c0_70, %c201] : memref<8x512xf32, #tpu.memory_space<vmem>>, vector<8x256xf32>
    %247 = vector.extract_strided_slice %13 {offsets = [26, 0], sizes = [1, 256], strides = [1, 1]} : vector<27x256xf32> to vector<1x256xf32>
    %248 = vector.broadcast %247 : vector<1x256xf32> to vector<8x256xf32>
    %249 = arith.mulf %246, %248 : vector<8x256xf32>
    %250 = vector.extract_strided_slice %12 {offsets = [26, 0, 0], sizes = [1, 4, 8], strides = [1, 1, 1]} : vector<27x4x8xbf16> to vector<1x4x8xbf16>
    %251 = vector.shape_cast %250 : vector<1x4x8xbf16> to vector<4x8xbf16>
    %252 = arith.truncf %249 : vector<8x256xf32> to vector<8x256xbf16>
    %cst_71 = arith.constant dense<0.000000e+00> : vector<4x256xf32>
    %253 = tpu.matmul %251, %252, %cst_71 {dimension_numbers = #tpu.dot_dimension_numbers<[1], [0], [0], [1], [0, 0, 1, 1], [], []>} : vector<4x8xbf16>, vector<8x256xbf16>, vector<4x256xf32> -> vector<4x256xf32>
    %254 = arith.addf %245, %253 : vector<4x256xf32>
    %c0_72 = arith.constant 0 : index
    %c0_73 = arith.constant 0 : index
    %c0_74 = arith.constant 0 : index
    %255 = vector.load %arg7[%c0_72, %c0_73, %c0_74] : memref<1x4x256xf32, #tpu.memory_space<vmem>>, vector<1x4x256xf32>
    %256 = vector.shape_cast %255 : vector<1x4x256xf32> to vector<4x256xf32>
    %257 = arith.addf %254, %256 : vector<4x256xf32>
    %c0_75 = arith.constant 0 : index
    %c0_76 = arith.constant 0 : index
    %c0_77 = arith.constant 0 : index
    %258 = vector.load %arg8[%c0_75, %c0_76, %c0_77] : memref<1x4x256xf32, #tpu.memory_space<vmem>>, vector<1x4x256xf32>
    %259 = vector.shape_cast %258 : vector<1x4x256xf32> to vector<4x256xf32>
    %260 = vector.shape_cast %257 : vector<4x256xf32> to vector<1x4x256xf32>
    tpu.vector_store %arg8[%c0_75, %c0_76, %c0_77], %260 {strides = array<i32>} : memref<1x4x256xf32, #tpu.memory_space<vmem>>, vector<1x4x256xf32>,
    return
  }
  func.func @transform_0(%arg0: i32, %arg1: i32) -> (i32, i32, i32) {
    %c0_i32 = arith.constant 0 : i32
    %c0_i32_0 = arith.constant 0 : i32
    %c0_i32_1 = arith.constant 0 : i32
    %c0_i32_2 = arith.constant 0 : i32
    return %c0_i32, %c0_i32_0, %c0_i32_1 : i32, i32, i32
  }
  func.func @transform_1(%arg0: i32, %arg1: i32) -> (i32, i32) {
    %c0_i32 = arith.constant 0 : i32
    %c0_i32_0 = arith.constant 0 : i32
    return %c0_i32, %arg1 : i32, i32
  }
  func.func @transform_2(%arg0: i32, %arg1: i32) -> (i32, i32, i32) {
    %c1_i32 = arith.constant 1 : i32
    %0 = arith.addi %arg1, %c1_i32 : i32
    %c2_i32 = arith.constant 2 : i32
    %1 = arith.muli %0, %c2_i32 : i32
    %c1_i32_0 = arith.constant 1 : i32
    %2 = arith.subi %1, %c1_i32_0 : i32
    %c0_i32 = arith.constant 0 : i32
    %c0_i32_1 = arith.constant 0 : i32
    return %arg0, %c0_i32, %2 : i32, i32, i32
  }
  func.func @transform_3(%arg0: i32, %arg1: i32) -> (i32, i32, i32) {
    %c1_i32 = arith.constant 1 : i32
    %0 = arith.addi %arg1, %c1_i32 : i32
    %c0_i32 = arith.constant 0 : i32
    %c0_i32_0 = arith.constant 0 : i32
    return %arg0, %c0_i32, %0 : i32, i32, i32
  }
  func.func @transform_4(%arg0: i32, %arg1: i32) -> (i32, i32, i32) {
    %c2_i32 = arith.constant 2 : i32
    %0 = arith.addi %arg1, %c2_i32 : i32
    %c2_i32_0 = arith.constant 2 : i32
    %1 = arith.muli %0, %c2_i32_0 : i32
    %c0_i32 = arith.constant 0 : i32
    %c0_i32_1 = arith.constant 0 : i32
    return %arg0, %c0_i32, %1 : i32, i32, i32
  }
  func.func @transform_5(%arg0: i32, %arg1: i32) -> (i32, i32, i32) {
    %c0_i32 = arith.constant 0 : i32
    %c0_i32_0 = arith.constant 0 : i32
    return %arg0, %c0_i32, %arg1 : i32, i32, i32
  }
  func.func @transform_6(%arg0: i32, %arg1: i32) -> (i32, i32, i32) {
    %c0_i32 = arith.constant 0 : i32
    %c0_i32_0 = arith.constant 0 : i32
    return %arg0, %c0_i32, %arg1 : i32, i32, i32
  }
}

</mosaic_0001>

<llo_original>
// kernel: resblock_pallas.4
$region0: #{resblock_pallas.4}
  #allocation0 [shape = 'u32[]', space=smem, size = 0x4, offset = 0x4, fixed_abs, tag = 'smem constant byte address 0x4 - core index']
  #allocation1 [shape = 'u32[144,128]{1,0:T(1,128)}', space=vmem, size = 0x12000, scoped, tag = 'internal scratch']
  %s0 = inlined_call_operand.vmem [shape: f32[8,512], index: 0, kind: input, shape index: {}]
  %s1 = inlined_call_operand.vmem [shape: bf16[8,896], index: 1, kind: output, shape index: {}]
  %s2 = sld [smem:[#allocation0]]
  $region14: #{resblock_pallas.4} parent=0
    _
  %s4 = ssub.s32 1, %s2
  %s5 = scalar_select 0, %s4, %s2
  // Predicated region
  $region2: #{resblock_pallas.4} parent=0 // pred_check
    _
  $region3: #{resblock_pallas.4} parent=0 // pred_check_branch
    %7 = sbr.rel (0) target = $region5
  $region4: #{resblock_pallas.4} parent=0 // pred_region
    _
  $region5: #{resblock_pallas.4} parent=0 // pred_fallthru
    _
  %v9 = vld [vmem:[%s0] sm:$0xff]
  %v10 = vld [vmem:[%s0 + $0x8] sm:$0xff]
  %v11 = vld [vmem:[%s0 + $0x10] sm:$0xff]
  %v12 = vld [vmem:[%s0 + $0x18] sm:$0xff]
  %v13 = vand.u32 2147483647, %v9
  %v14 = vand.u32 2147483647, %v10
  %v15 = vand.u32 2147483647, %v11
  %v16 = vand.u32 2147483647, %v12
  %v17 = vsub.f32 0.0, %v13
  %v18 = vsub.f32 0.0, %v14
  %v19 = vsub.f32 0.0, %v15
  %v20 = vsub.f32 0.0, %v16
  %v21 = vmul.f32 %v17, 1.442695
  %v22 = vpow.pop %v21
  %v23 = vmul.f32 %v18, 1.442695
  %v24 = vpow.pop %v23
  %v25 = vmul.f32 %v19, 1.442695
  %v26 = vpow.pop %v25
  %v27 = vmul.f32 %v20, 1.442695
  %v28 = vpow.pop %v27
  %vm29 = vcmp.ge.f32.partialorder %v9, 0.0
  %vm30 = vcmp.ge.f32.partialorder %v10, 0.0
  %vm31 = vcmp.ge.f32.partialorder %v11, 0.0
  %vm32 = vcmp.ge.f32.partialorder %v12, 0.0
  %v33 = vmul.f32 %v22, 2.0
  %v34 = vmul.f32 %v24, 2.0
  %v35 = vmul.f32 %v26, 2.0
  %v36 = vmul.f32 %v28, 2.0
  %v37 = vadd.f32 %v33, 1.0
  %v38 = vadd.f32 %v34, 1.0
  %v39 = vadd.f32 %v35, 1.0
  %v40 = vadd.f32 %v36, 1.0
  %v41 = vadd.f32 %v22, 2.0
  %v42 = vadd.f32 %v24, 2.0
  %v43 = vadd.f32 %v26, 2.0
  %v44 = vadd.f32 %v28, 2.0
  %v45 = vmul.f32 %v22, %v41
  %v46 = vmul.f32 %v24, %v42
  %v47 = vmul.f32 %v26, %v43
  %v48 = vmul.f32 %v28, %v44
  %v49 = vsel %vm29, %v37, %v45
  %v50 = vsel %vm30, %v38, %v46
  %v51 = vsel %vm31, %v39, %v47
  %v52 = vsel %vm32, %v40, %v48
  %v53 = vmul.f32 %v33, %v22
  %v54 = vmul.f32 %v34, %v24
  %v55 = vmul.f32 %v35, %v26
  %v56 = vmul.f32 %v36, %v28
  %v57 = vsel %vm29, %v53, 2.0
  %v58 = vsel %vm30, %v54, 2.0
  %v59 = vsel %vm31, %v55, 2.0
  %v60 = vsel %vm32, %v56, 2.0
  %v61 = vadd.f32 %v49, %v57
  %v62 = vadd.f32 %v50, %v58
  %v63 = vadd.f32 %v51, %v59
  %v64 = vadd.f32 %v52, %v60
  %v65 = vmul.f32 %v9, %v49
  %v66 = vmul.f32 %v10, %v50
  %v67 = vmul.f32 %v11, %v51
  %v68 = vmul.f32 %v12, %v52
  %v69 = vrcp.pop %v61
  %v70 = vrcp.pop %v62
  %v71 = vrcp.pop %v63
  %v72 = vrcp.pop %v64
  %v73 = vmul.f32 %v65, %v69
  %v74 = vmul.f32 %v66, %v70
  %v75 = vmul.f32 %v67, %v71
  %v76 = vmul.f32 %v68, %v72
  %v77 = vadd.f32 %v73, %v74
  %v78 = vadd.f32 %v77, %v75
  %v79 = vadd.f32 %v78, %v76
  %80 = vadd.xlane.f32.xlu0 %v79
  %v81 = vpop.xlane.xlu0 %80
  %v82 = vrcp.pop 512.0
  %v83 = vmul.f32 %v81, %v82
  %v84 = vsub.f32 %v73, %v83
  %v85 = vsub.f32 %v74, %v83
  %v86 = vsub.f32 %v75, %v83
  %v87 = vsub.f32 %v76, %v83
  %v88 = vmul.f32 %v84, %v84
  %v89 = vmul.f32 %v85, %v85
  %v90 = vmul.f32 %v86, %v86
  %v91 = vmul.f32 %v87, %v87
  %v92 = vadd.f32 %v88, %v89
  %v93 = vadd.f32 %v92, %v90
  %v94 = vadd.f32 %v93, %v91
  %95 = vadd.xlane.f32.xlu0 %v94
  %v96 = vpop.xlane.xlu0 %95
  %v97 = vmul.f32 %v96, %v82
  %v98 = vadd.f32 %v97, 1e-05
  %v99 = vrsqrt.pop %v98
  %v100 = vmul.f32 %v84, %v99
  %v101 = vmul.f32 %v85, %v99
  %v102 = vmul.f32 %v86, %v99
  %v103 = vmul.f32 %v87, %v99
  %104 = vst [vmem:[%s1] sm:$0xff] 0
  %v105 = vpack.c.bf16 %v100, %v100
  %v106 = vpack.c.bf16 %v101, %v101
  %v107 = vpack.c.bf16 %v102, %v102
  %v108 = vpack.c.bf16 %v103, %v103
  %v113 = vunpack.c.l.b16 %v105
  %v114 = vunpack.c.l.b16 %v106
  %v115 = vunpack.c.l.b16 %v107
  %v116 = vunpack.c.l.b16 %v108
  %v117 = vpack.c.b16 %v114, %v113
  %v118 = vpack.c.b16 %v116, %v115
  %121 = vst [vmem:[%s1 + $0x8] sm:$0xff] %v117
  %122 = vst [vmem:[%s1 + $0x10] sm:$0xff] %v118
  %123 = vst [vmem:[%s1 + $0x18] sm:$0xf] 0
  // Predicated region
  $region6: #{resblock_pallas.4} parent=0 // pred_check
    _
  $region7: #{resblock_pallas.4} parent=0 // pred_check_branch
    %125 = sbr.rel (0) target = $region9
  $region8: #{resblock_pallas.4} parent=0 // pred_region
    _
  $region9: #{resblock_pallas.4} parent=0 // pred_fallthru
    _
  // Predicated region
  $region10: #{resblock_pallas.4} parent=0 // pred_check
    _
  $region11: #{resblock_pallas.4} parent=0 // pred_check_branch
    %127 = sbr.rel (0) target = $region13
  $region12: #{resblock_pallas.4} parent=0 // pred_region
    _
  $region13: #{resblock_pallas.4} parent=0 // pred_fallthru
    _

// kernel: resblock_pallas.6
$region0: #{resblock_pallas.6}
  #allocation0 [shape = 'u32[]', space=smem, size = 0x4, offset = 0x4, fixed_abs, tag = 'smem constant byte address 0x4 - core index']
  #allocation1 [shape = 'u32[144,128]{1,0:T(1,128)}', space=vmem, size = 0x12000, scoped, tag = 'internal scratch']
  %s0 = inlined_call_operand.vmem [shape: f32[16,512], index: 0, kind: input, shape index: {}]
  %s1 = inlined_call_operand.vmem [shape: bf16[16,896], index: 1, kind: output, shape index: {}]
  %s2 = sld [smem:[#allocation0]]
  $region14: #{resblock_pallas.6} parent=0
    _
  %s4 = ssub.s32 1, %s2
  %s5 = scalar_select 0, %s4, %s2
  // Predicated region
  $region2: #{resblock_pallas.6} parent=0 // pred_check
    _
  $region3: #{resblock_pallas.6} parent=0 // pred_check_branch
    %7 = sbr.rel (0) target = $region5
  $region4: #{resblock_pallas.6} parent=0 // pred_region
    _
  $region5: #{resblock_pallas.6} parent=0 // pred_fallthru
    _
  %v9 = vld [vmem:[%s0] sm:$0xff]
  %v10 = vld [vmem:[%s0 + $0x8] sm:$0xff]
  %v11 = vld [vmem:[%s0 + $0x10] sm:$0xff]
  %v12 = vld [vmem:[%s0 + $0x18] sm:$0xff]
  %v13 = vld [vmem:[%s0 + $0x20] sm:$0xff]
  %v14 = vld [vmem:[%s0 + $0x28] sm:$0xff]
  %v15 = vld [vmem:[%s0 + $0x30] sm:$0xff]
  %v16 = vld [vmem:[%s0 + $0x38] sm:$0xff]
  %v17 = vand.u32 2147483647, %v9
  %v18 = vand.u32 2147483647, %v10
  %v19 = vand.u32 2147483647, %v11
  %v20 = vand.u32 2147483647, %v12
  %v21 = vand.u32 2147483647, %v13
  %v22 = vand.u32 2147483647, %v14
  %v23 = vand.u32 2147483647, %v15
  %v24 = vand.u32 2147483647, %v16
  %v25 = vsub.f32 0.0, %v17
  %v26 = vsub.f32 0.0, %v18
  %v27 = vsub.f32 0.0, %v19
  %v28 = vsub.f32 0.0, %v20
  %v29 = vsub.f32 0.0, %v21
  %v30 = vsub.f32 0.0, %v22
  %v31 = vsub.f32 0.0, %v23
  %v32 = vsub.f32 0.0, %v24
  %v33 = vmul.f32 %v25, 1.442695
  %v34 = vpow.pop %v33
  %v35 = vmul.f32 %v26, 1.442695
  %v36 = vpow.pop %v35
  %v37 = vmul.f32 %v27, 1.442695
  %v38 = vpow.pop %v37
  %v39 = vmul.f32 %v28, 1.442695
  %v40 = vpow.pop %v39
  %v41 = vmul.f32 %v29, 1.442695
  %v42 = vpow.pop %v41
  %v43 = vmul.f32 %v30, 1.442695
  %v44 = vpow.pop %v43
  %v45 = vmul.f32 %v31, 1.442695
  %v46 = vpow.pop %v45
  %v47 = vmul.f32 %v32, 1.442695
  %v48 = vpow.pop %v47
  %vm49 = vcmp.ge.f32.partialorder %v9, 0.0
  %vm50 = vcmp.ge.f32.partialorder %v10, 0.0
  %vm51 = vcmp.ge.f32.partialorder %v11, 0.0
  %vm52 = vcmp.ge.f32.partialorder %v12, 0.0
  %vm53 = vcmp.ge.f32.partialorder %v13, 0.0
  %vm54 = vcmp.ge.f32.partialorder %v14, 0.0
  %vm55 = vcmp.ge.f32.partialorder %v15, 0.0
  %vm56 = vcmp.ge.f32.partialorder %v16, 0.0
  %v57 = vmul.f32 %v34, 2.0
  %v58 = vmul.f32 %v36, 2.0
  %v59 = vmul.f32 %v38, 2.0
  %v60 = vmul.f32 %v40, 2.0
  %v61 = vmul.f32 %v42, 2.0
  %v62 = vmul.f32 %v44, 2.0
  %v63 = vmul.f32 %v46, 2.0
  %v64 = vmul.f32 %v48, 2.0
  %v65 = vadd.f32 %v57, 1.0
  %v66 = vadd.f32 %v58, 1.0
  %v67 = vadd.f32 %v59, 1.0
  %v68 = vadd.f32 %v60, 1.0
  %v69 = vadd.f32 %v61, 1.0
  %v70 = vadd.f32 %v62, 1.0
  %v71 = vadd.f32 %v63, 1.0
  %v72 = vadd.f32 %v64, 1.0
  %v73 = vadd.f32 %v34, 2.0
  %v74 = vadd.f32 %v36, 2.0
  %v75 = vadd.f32 %v38, 2.0
  %v76 = vadd.f32 %v40, 2.0
  %v77 = vadd.f32 %v42, 2.0
  %v78 = vadd.f32 %v44, 2.0
  %v79 = vadd.f32 %v46, 2.0
  %v80 = vadd.f32 %v48, 2.0
  %v81 = vmul.f32 %v34, %v73
  %v82 = vmul.f32 %v36, %v74
  %v83 = vmul.f32 %v38, %v75
  %v84 = vmul.f32 %v40, %v76
  %v85 = vmul.f32 %v42, %v77
  %v86 = vmul.f32 %v44, %v78
  %v87 = vmul.f32 %v46, %v79
  %v88 = vmul.f32 %v48, %v80
  %v89 = vsel %vm49, %v65, %v81
  %v90 = vsel %vm50, %v66, %v82
  %v91 = vsel %vm51, %v67, %v83
  %v92 = vsel %vm52, %v68, %v84
  %v93 = vsel %vm53, %v69, %v85
  %v94 = vsel %vm54, %v70, %v86
  %v95 = vsel %vm55, %v71, %v87
  %v96 = vsel %vm56, %v72, %v88
  %v97 = vmul.f32 %v57, %v34
  %v98 = vmul.f32 %v58, %v36
  %v99 = vmul.f32 %v59, %v38
  %v100 = vmul.f32 %v60, %v40
  %v101 = vmul.f32 %v61, %v42
  %v102 = vmul.f32 %v62, %v44
  %v103 = vmul.f32 %v63, %v46
  %v104 = vmul.f32 %v64, %v48
  %v105 = vsel %vm49, %v97, 2.0
  %v106 = vsel %vm50, %v98, 2.0
  %v107 = vsel %vm51, %v99, 2.0
  %v108 = vsel %vm52, %v100, 2.0
  %v109 = vsel %vm53, %v101, 2.0
  %v110 = vsel %vm54, %v102, 2.0
  %v111 = vsel %vm55, %v103, 2.0
  %v112 = vsel %vm56, %v104, 2.0
  %v113 = vadd.f32 %v89, %v105
  %v114 = vadd.f32 %v90, %v106
  %v115 = vadd.f32 %v91, %v107
  %v116 = vadd.f32 %v92, %v108
  %v117 = vadd.f32 %v93, %v109
  %v118 = vadd.f32 %v94, %v110
  %v119 = vadd.f32 %v95, %v111
  %v120 = vadd.f32 %v96, %v112
  %v121 = vmul.f32 %v9, %v89
  %v122 = vmul.f32 %v10, %v90
  %v123 = vmul.f32 %v11, %v91
  %v124 = vmul.f32 %v12, %v92
  %v125 = vmul.f32 %v13, %v93
  %v126 = vmul.f32 %v14, %v94
  %v127 = vmul.f32 %v15, %v95
  %v128 = vmul.f32 %v16, %v96
  %v129 = vrcp.pop %v113
  %v130 = vrcp.pop %v114
  %v131 = vrcp.pop %v115
  %v132 = vrcp.pop %v116
  %v133 = vrcp.pop %v117
  %v134 = vrcp.pop %v118
  %v135 = vrcp.pop %v119
  %v136 = vrcp.pop %v120
  %v137 = vmul.f32 %v121, %v129
  %v138 = vmul.f32 %v122, %v130
  %v139 = vmul.f32 %v123, %v131
  %v140 = vmul.f32 %v124, %v132
  %v141 = vmul.f32 %v125, %v133
  %v142 = vmul.f32 %v126, %v134
  %v143 = vmul.f32 %v127, %v135
  %v144 = vmul.f32 %v128, %v136
  %v145 = vadd.f32 %v137, %v138
  %v146 = vadd.f32 %v145, %v139
  %v147 = vadd.f32 %v146, %v140
  %148 = vadd.xlane.f32.xlu0 %v147
  %v149 = vpop.xlane.xlu0 %148
  %v150 = vadd.f32 %v141, %v142
  %v151 = vadd.f32 %v150, %v143
  %v152 = vadd.f32 %v151, %v144
  %153 = vadd.xlane.f32.xlu0 %v152
  %v154 = vpop.xlane.xlu0 %153
  %v155 = vrcp.pop 512.0
  %v156 = vmul.f32 %v149, %v155
  %v157 = vmul.f32 %v154, %v155
  %v158 = vsub.f32 %v137, %v156
  %v159 = vsub.f32 %v138, %v156
  %v160 = vsub.f32 %v139, %v156
  %v161 = vsub.f32 %v140, %v156
  %v162 = vsub.f32 %v141, %v157
  %v163 = vsub.f32 %v142, %v157
  %v164 = vsub.f32 %v143, %v157
  %v165 = vsub.f32 %v144, %v157
  %v166 = vmul.f32 %v158, %v158
  %v167 = vmul.f32 %v159, %v159
  %v168 = vmul.f32 %v160, %v160
  %v169 = vmul.f32 %v161, %v161
  %v170 = vmul.f32 %v162, %v162
  %v171 = vmul.f32 %v163, %v163
  %v172 = vmul.f32 %v164, %v164
  %v173 = vmul.f32 %v165, %v165
  %v174 = vadd.f32 %v166, %v167
  %v175 = vadd.f32 %v174, %v168
  %v176 = vadd.f32 %v175, %v169
  %177 = vadd.xlane.f32.xlu0 %v176
  %v178 = vpop.xlane.xlu0 %177
  %v179 = vadd.f32 %v170, %v171
  %v180 = vadd.f32 %v179, %v172
  %v181 = vadd.f32 %v180, %v173
  %182 = vadd.xlane.f32.xlu0 %v181
  %v183 = vpop.xlane.xlu0 %182
  %v184 = vmul.f32 %v178, %v155
  %v185 = vmul.f32 %v183, %v155
  %v186 = vadd.f32 %v184, 1e-05
  %v187 = vadd.f32 %v185, 1e-05
  %v188 = vrsqrt.pop %v186
  %v189 = vrsqrt.pop %v187
  %v190 = vmul.f32 %v158, %v188
  %v191 = vmul.f32 %v159, %v188
  %v192 = vmul.f32 %v160, %v188
  %v193 = vmul.f32 %v161, %v188
  %v194 = vmul.f32 %v162, %v189
  %v195 = vmul.f32 %v163, %v189
  %v196 = vmul.f32 %v164, %v189
  %v197 = vmul.f32 %v165, %v189
  %198 = vst [vmem:[%s1] sm:$0xff] 0
  %199 = vst [vmem:[%s1 + $0x1c] sm:$0xff] 0
  %v200 = vpack.c.bf16 %v194, %v190
  %v201 = vpack.c.bf16 %v195, %v191
  %v202 = vpack.c.bf16 %v196, %v192
  %v203 = vpack.c.bf16 %v197, %v193
  %v208 = vunpack.c.l.b16 %v200
  %v209 = vunpack.c.l.b16 %v201
  %v210 = vunpack.c.l.b16 %v202
  %v211 = vunpack.c.l.b16 %v203
  %v212 = vunpack.c.h.b16 %v200
  %v213 = vunpack.c.h.b16 %v201
  %v214 = vunpack.c.h.b16 %v202
  %v215 = vunpack.c.h.b16 %v203
  %v216 = vpack.c.b16 %v209, %v208
  %v217 = vpack.c.b16 %v211, %v210
  %v218 = vpack.c.b16 %v213, %v212
  %v219 = vpack.c.b16 %v215, %v214
  %224 = vst [vmem:[%s1 + $0x8] sm:$0xff] %v216
  %225 = vst [vmem:[%s1 + $0x10] sm:$0xff] %v217
  %226 = vst [vmem:[%s1 + $0x24] sm:$0xff] %v218
  %227 = vst [vmem:[%s1 + $0x2c] sm:$0xff] %v219
  %228 = vst [vmem:[%s1 + $0x18] sm:$0xf] 0
  %229 = vst [vmem:[%s1 + $0x34] sm:$0xf] 0
  // Predicated region
  $region6: #{resblock_pallas.6} parent=0 // pred_check
    _
  $region7: #{resblock_pallas.6} parent=0 // pred_check_branch
    %231 = sbr.rel (0) target = $region9
  $region8: #{resblock_pallas.6} parent=0 // pred_region
    _
  $region9: #{resblock_pallas.6} parent=0 // pred_fallthru
    _
  // Predicated region
  $region10: #{resblock_pallas.6} parent=0 // pred_check
    _
  $region11: #{resblock_pallas.6} parent=0 // pred_check_branch
    %233 = sbr.rel (0) target = $region13
  $region12: #{resblock_pallas.6} parent=0 // pred_region
    _
  $region13: #{resblock_pallas.6} parent=0 // pred_fallthru
    _

// kernel: resblock_pallas.5
$region0: #{resblock_pallas.5}
  #allocation0 [shape = 'u32[]', space=smem, size = 0x4, offset = 0x4, fixed_abs, tag = 'smem constant byte address 0x4 - core index']
  #allocation1 [shape = 'u32[144,128]{1,0:T(1,128)}', space=vmem, size = 0x12000, scoped, tag = 'internal scratch']
  #allocation2 [shape = 'f32[4,512]{1,0:T(4,128)}', space=vmem, size = 0x2000, scoped, tag = 'scratch operand']
  %s0 = inlined_call_operand.vmem [shape: bf16[27,8,4], index: 0, kind: input, shape index: {}]
  %s1 = inlined_call_operand.vmem [shape: f32[27,512], index: 1, kind: input, shape index: {}]
  %s2 = inlined_call_operand.vmem [shape: bf16[2,4,896], index: 2, kind: input, shape index: {}, may-alias: {2,3,4}]
  %s3 = inlined_call_operand.vmem [shape: bf16[2,4,896], index: 3, kind: input, shape index: {}, may-alias: {2,3,4}]
  %s4 = inlined_call_operand.vmem [shape: bf16[2,4,896], index: 4, kind: input, shape index: {}, may-alias: {2,3,4}]
  %s5 = inlined_call_operand.vmem [shape: f32[2,8,512], index: 5, kind: output, shape index: {}]
  %s6 = sld [smem:[#allocation0]]
  $region76: #{resblock_pallas.5} parent=0
    _
  %s8 = ssub.s32 1, %s6
  %s9 = scalar_select 0, %s8, %s6
  $region1: #{resblock_pallas.5} parent=0
    #allocation3 [shape = 'u8[65536]{0}', space=vmem, size = 0x10000, scoped, tag = 'input window, operand 1']
    loop: start=0, step=1, limit=6
    $region2: #{resblock_pallas.5} parent=1 // loop_pre_header
      _
    $region3: #{resblock_pallas.5} parent=1 // loop_header
      %s11 = sphi 0, %s15
      %p12 = scmp.ge.s32.totalorder %s11, 6
      %s18 = sphi 0, %s30
      %s19 = sphi 0, %s26
      %s20 = sphi 0, %s18
      %s21 = sphi 0, %s19
      %s22 = sphi 0, %s20
      %s23 = sphi 0, %s21
      %s31 = sphi 0, %s31
      %s33 = sphi 0, %s31
      %s34 = sphi 0, %s33
      %s48 = sphi 0, %s34
      %s54 = sphi 0, %s56
      %s57 = sphi 0, %s54
      %s58 = sphi 0, %s57
      %s74 = sphi 0, %s58
      %s88 = sphi 0, %s90
      %s91 = sphi 0, %s88
      %s92 = sphi 0, %s91
      %s108 = sphi 0, %s92
      %s118 = sphi 0, %s120
      %s121 = sphi 0, %s118
      %s122 = sphi 0, %s121
      %s138 = sphi 0, %s122
      %s150 = sphi 0, %s152
      %s153 = sphi 0, %s150
      %s154 = sphi 0, %s153
      %s170 = sphi 0, %s154
      %s178 = sphi 0, %s180
      %s181 = sphi 0, %s178
      %s182 = sphi 0, %s181
      %s198 = sphi 0, %s182
    $region4: #{resblock_pallas.5} parent=1 // loop_header_branch
      %14 = sbr.rel (%p12) target = $region8
    $region5: #{resblock_pallas.5} parent=1 // loop_body
      %s16 = ssub.s32 %s11, 1
      %s17 = ssub.s32 %s11, 2
      %s24 = sadd.s32 1, %s19
      %p25 = scmp.ge.s32.totalorder %s24, 2
      %s26 = scalar_select %p25, 0, %s24
      %s27 = sadd.s32 1, %s18
      %s28 = scalar_select %p25, %s27, %s18
      %p29 = scmp.ge.s32.totalorder %s28, 2
      %s30 = scalar_select %p29, 0, %s28
      %s32 = sadd.s32 %s31, 1
      %p35 = scmp.eq.s32.totalorder %s11, 3
      %p36 = scmp.ne.s32.totalorder %s31, %s33
      %p37 = scmp.eq.s32.totalorder %s11, 0
      %p38 = por %p36, %p37
      %p39 = scmp.ne.s32.totalorder %s31, %s33
      %p40 = scmp.eq.s32.totalorder %s16, 3
      %p41 = por %p39, %p40
      %p42 = scmp.ne.s32.totalorder %s33, %s34
      %p43 = scmp.eq.s32.totalorder %s16, 0
      %p44 = por %p42, %p43
      %p45 = scmp.ne.s32.totalorder %s33, %s34
      %p46 = scmp.eq.s32.totalorder %s17, 3
      %p47 = por %p45, %p46
      %p49 = scmp.ne.s32.totalorder %s34, %s48
      %p50 = scmp.eq.s32.totalorder %s17, 0
      %p51 = por %p49, %p50
      %s52 = ssub.s32 %s19, %s26
      %p53 = scmp.eq.s32.totalorder %s52, 0
      %s55 = sadd.s32 %s54, 1
      %s56 = scalar_select %p53, %s54, %s55
      %p59 = pneg %p53
      %p60 = scmp.eq.s32.totalorder %s11, 3
      %p61 = por %p59, %p60
      %p62 = scmp.ne.s32.totalorder %s54, %s57
      %p63 = scmp.eq.s32.totalorder %s11, 0
      %p64 = por %p62, %p63
      %p65 = scmp.ne.s32.totalorder %s54, %s57
      %p66 = scmp.eq.s32.totalorder %s16, 3
      %p67 = por %p65, %p66
      %p68 = scmp.ne.s32.totalorder %s57, %s58
      %p69 = scmp.eq.s32.totalorder %s16, 0
      %p70 = por %p68, %p69
      %p71 = scmp.ne.s32.totalorder %s57, %s58
      %p72 = scmp.eq.s32.totalorder %s17, 3
      %p73 = por %p71, %p72
      %p75 = scmp.ne.s32.totalorder %s58, %s74
      %p76 = scmp.eq.s32.totalorder %s17, 0
      %p77 = por %p75, %p76
      %s78 = sadd.s32 %s19, 1
      %s79 = smul.u32 %s78, 2
      %s80 = ssub.s32 %s79, 1
      %s81 = sadd.s32 %s26, 1
      %s82 = smul.u32 %s81, 2
      %s83 = ssub.s32 %s82, 1
      %s84 = ssub.s32 %s18, %s30
      %s85 = ssub.s32 %s80, %s83
      %s86 = sor.u32 %s84, %s85
      %p87 = scmp.eq.s32.totalorder %s86, 0
      %s89 = sadd.s32 %s88, 1
      %s90 = scalar_select %p87, %s88, %s89
      %p93 = pneg %p87
      %p94 = scmp.eq.s32.totalorder %s11, 3
      %p95 = por %p93, %p94
      %p96 = scmp.ne.s32.totalorder %s88, %s91
      %p97 = scmp.eq.s32.totalorder %s11, 0
      %p98 = por %p96, %p97
      %p99 = scmp.ne.s32.totalorder %s88, %s91
      %p100 = scmp.eq.s32.totalorder %s16, 3
      %p101 = por %p99, %p100
      %p102 = scmp.ne.s32.totalorder %s91, %s92
      %p103 = scmp.eq.s32.totalorder %s16, 0
      %p104 = por %p102, %p103
      %p105 = scmp.ne.s32.totalorder %s91, %s92
      %p106 = scmp.eq.s32.totalorder %s17, 3
      %p107 = por %p105, %p106
      %p109 = scmp.ne.s32.totalorder %s92, %s108
      %p110 = scmp.eq.s32.totalorder %s17, 0
      %p111 = por %p109, %p110
      %s112 = sadd.s32 %s19, 1
      %s113 = sadd.s32 %s26, 1
      %s114 = ssub.s32 %s18, %s30
      %s115 = ssub.s32 %s112, %s113
      %s116 = sor.u32 %s114, %s115
      %p117 = scmp.eq.s32.totalorder %s116, 0
      %s119 = sadd.s32 %s118, 1
      %s120 = scalar_select %p117, %s118, %s119
      %p123 = pneg %p117
      %p124 = scmp.eq.s32.totalorder %s11, 3
      %p125 = por %p123, %p124
      %p126 = scmp.ne.s32.totalorder %s118, %s121
      %p127 = scmp.eq.s32.totalorder %s11, 0
      %p128 = por %p126, %p127
      %p129 = scmp.ne.s32.totalorder %s118, %s121
      %p130 = scmp.eq.s32.totalorder %s16, 3
      %p131 = por %p129, %p130
      %p132 = scmp.ne.s32.totalorder %s121, %s122
      %p133 = scmp.eq.s32.totalorder %s16, 0
      %p134 = por %p132, %p133
      %p135 = scmp.ne.s32.totalorder %s121, %s122
      %p136 = scmp.eq.s32.totalorder %s17, 3
      %p137 = por %p135, %p136
      %p139 = scmp.ne.s32.totalorder %s122, %s138
      %p140 = scmp.eq.s32.totalorder %s17, 0
      %p141 = por %p139, %p140
      %s142 = sadd.s32 %s19, 2
      %s143 = smul.u32 %s142, 2
      %s144 = sadd.s32 %s26, 2
      %s145 = smul.u32 %s144, 2
      %s146 = ssub.s32 %s18, %s30
      %s147 = ssub.s32 %s143, %s145
      %s148 = sor.u32 %s146, %s147
      %p149 = scmp.eq.s32.totalorder %s148, 0
      %s151 = sadd.s32 %s150, 1
      %s152 = scalar_select %p149, %s150, %s151
      %p155 = pneg %p149
      %p156 = scmp.eq.s32.totalorder %s11, 3
      %p157 = por %p155, %p156
      %p158 = scmp.ne.s32.totalorder %s150, %s153
      %p159 = scmp.eq.s32.totalorder %s11, 0
      %p160 = por %p158, %p159
      %p161 = scmp.ne.s32.totalorder %s150, %s153
      %p162 = scmp.eq.s32.totalorder %s16, 3
      %p163 = por %p161, %p162
      %p164 = scmp.ne.s32.totalorder %s153, %s154
      %p165 = scmp.eq.s32.totalorder %s16, 0
      %p166 = por %p164, %p165
      %p167 = scmp.ne.s32.totalorder %s153, %s154
      %p168 = scmp.eq.s32.totalorder %s17, 3
      %p169 = por %p167, %p168
      %p171 = scmp.ne.s32.totalorder %s154, %s170
      %p172 = scmp.eq.s32.totalorder %s17, 0
      %p173 = por %p171, %p172
      %s174 = ssub.s32 %s18, %s30
      %s175 = ssub.s32 %s19, %s26
      %s176 = sor.u32 %s174, %s175
      %p177 = scmp.eq.s32.totalorder %s176, 0
      %s179 = sadd.s32 %s178, 1
      %s180 = scalar_select %p177, %s178, %s179
      %p183 = pneg %p177
      %p184 = scmp.eq.s32.totalorder %s11, 3
      %p185 = por %p183, %p184
      %p186 = scmp.ne.s32.totalorder %s178, %s181
      %p187 = scmp.eq.s32.totalorder %s11, 0
      %p188 = por %p186, %p187
      %p189 = scmp.ne.s32.totalorder %s178, %s181
      %p190 = scmp.eq.s32.totalorder %s16, 3
      %p191 = por %p189, %p190
      %p192 = scmp.ne.s32.totalorder %s181, %s182
      %p193 = scmp.eq.s32.totalorder %s16, 0
      %p194 = por %p192, %p193
      %p195 = scmp.ne.s32.totalorder %s181, %s182
      %p196 = scmp.eq.s32.totalorder %s17, 3
      %p197 = por %p195, %p196
      %p199 = scmp.ne.s32.totalorder %s182, %s198
      %p200 = scmp.eq.s32.totalorder %s17, 0
      %p201 = por %p199, %p200
      %p202 = scmp.le.s32.totalorder 1, %s11
      %p203 = scmp.lt.s32.totalorder %s11, 5
      %p204 = pnand %p202, %p203
      %p205 = pneg %p204
      // Predicated region
      $region9: #{resblock_pallas.5} parent=5 // pred_check
        _
      $region10: #{resblock_pallas.5} parent=5 // pred_check_branch
        %207 = sbr.rel (%p204) target = $region12
      $region11: #{resblock_pallas.5} parent=5 // pred_region
        %s208 = ssub.s32 %s11, 1
        // Predicated region
        $region13: #{resblock_pallas.5} parent=11 // pred_check
          %p209 = pneg %p44
        $region14: #{resblock_pallas.5} parent=11 // pred_check_branch
          %211 = sbr.rel (%p209) target = $region16
        $region15: #{resblock_pallas.5} parent=11 // pred_region
          _
        $region16: #{resblock_pallas.5} parent=11 // pred_fallthru
          _
      $region12: #{resblock_pallas.5} parent=5 // pred_fallthru
        _
      %p212 = scmp.lt.s32.totalorder %s11, 4
      // Predicated region
      $region17: #{resblock_pallas.5} parent=5 // pred_check
        %p213 = pneg %p212
      $region18: #{resblock_pallas.5} parent=5 // pred_check_branch
        %215 = sbr.rel (%p213) target = $region20
      $region19: #{resblock_pallas.5} parent=5 // pred_region
        // Predicated region
        $region21: #{resblock_pallas.5} parent=19 // pred_check
          %p216 = pneg %p64
        $region22: #{resblock_pallas.5} parent=19 // pred_check_branch
          %218 = sbr.rel (%p216) target = $region24
        $region23: #{resblock_pallas.5} parent=19 // pred_region
          %s219 = sand.u32 %s54, 1
          %s220 = sand.u32 %s54, 1
          %s221 = smul.addr %s220, 64
          %s222 = scalar_lea.vmem [#allocation3], %s221
          %s223 = smul.u32 2, %s19
          %s224 = smul.addr %s223, 8
          %s225 = scalar_lea.vmem %s1, %s224
          // Predicated region
          $region25: #{resblock_pallas.5} parent=23 // pred_check
            _
          $region26: #{resblock_pallas.5} parent=23 // pred_check_branch
            %227 = sbr.rel (0) target = $region28
          $region27: #{resblock_pallas.5} parent=23 // pred_region
            // Predicated region
            $region29: #{resblock_pallas.5} parent=27 // pred_check
              _
            $region30: #{resblock_pallas.5} parent=27 // pred_check_branch
              %229 = sbr.rel (0) target = $region32
            $region31: #{resblock_pallas.5} parent=27 // pred_region
              loop: start=0, step=1, limit=1
              $region33: #{resblock_pallas.5} parent=31 // loop_pre_header
                _
              $region34: #{resblock_pallas.5} parent=31 // loop_header
                %s231 = sphi 0, %s235
                %p232 = scmp.ge.s32.totalorder %s231, 1
                %s236 = sphi %s225, %s225
                %s237 = sphi %s222, %s222
              $region35: #{resblock_pallas.5} parent=31 // loop_header_branch
                %234 = sbr.rel (%p232) target = $region39
              $region36: #{resblock_pallas.5} parent=31 // loop_body
                %v238 = vld [vmem:[%s236] sm:$0xff]
                %239 = vst [vmem:[%s237] sm:$0xff] %v238
                %v240 = vld [vmem:[%s236 + $0x8] sm:$0xff]
                %241 = vst [vmem:[%s237 + $0x8] sm:$0xff] %v240
                %v242 = vld [vmem:[%s236 + $0x20] sm:$0xff]
                %243 = vst [vmem:[%s237 + $0x10] sm:$0xff] %v242
                %v244 = vld [vmem:[%s236 + $0x28] sm:$0xff]
                %245 = vst [vmem:[%s237 + $0x18] sm:$0xff] %v244
                %v246 = vld [vmem:[%s236 + $0x40] sm:$0xff]
                %247 = vst [vmem:[%s237 + $0x20] sm:$0xff] %v246
                %v248 = vld [vmem:[%s236 + $0x48] sm:$0xff]
                %249 = vst [vmem:[%s237 + $0x28] sm:$0xff] %v248
                %v250 = vld [vmem:[%s236 + $0x60] sm:$0xff]
                %251 = vst [vmem:[%s237 + $0x30] sm:$0xff] %v250
                %v252 = vld [vmem:[%s236 + $0x68] sm:$0xff]
                %253 = vst [vmem:[%s237 + $0x38] sm:$0xff] %v252
              $region37: #{resblock_pallas.5} parent=31 // loop_footer
                %s235 = sadd.s32 1, %s231
              $region38: #{resblock_pallas.5} parent=31 // loop_footer_branch
                %230 = sbr.rel target = $region34
              $region39: #{resblock_pallas.5} parent=31 // loop_exit
                _
            $region32: #{resblock_pallas.5} parent=27 // pred_fallthru
              _
            // Predicated region
            $region40: #{resblock_pallas.5} parent=27 // pred_check
              _
            $region41: #{resblock_pallas.5} parent=27 // pred_check_branch
              %255 = sbr.rel target = $region43
            $region42: #{resblock_pallas.5} parent=27 // pred_region
              _
            $region43: #{resblock_pallas.5} parent=27 // pred_fallthru
              _
          $region28: #{resblock_pallas.5} parent=23 // pred_fallthru
            _
          %256 = vnop
        $region24: #{resblock_pallas.5} parent=19 // pred_fallthru
          _
        // Predicated region
        $region44: #{resblock_pallas.5} parent=19 // pred_check
          %p257 = pneg %p98
        $region45: #{resblock_pallas.5} parent=19 // pred_check_branch
          %259 = sbr.rel (%p257) target = $region47
        $region46: #{resblock_pallas.5} parent=19 // pred_region
          %s260 = sadd.s32 %s19, 1
          %s261 = smul.u32 %s260, 2
          %s262 = ssub.s32 %s261, 1
          %p263 = scmp.lt.s32.totalorder %s18, 1
          %s264 = scalar_select %p263, %s18, 1
          %p265 = scmp.lt.s32.totalorder %s262, 6
          %s266 = scalar_select %p265, %s262, 6
          %s267 = smul.addr %s264, 7
          %s268 = sadd.s32 %s266, %s267
          %s269 = smul.addr %s268, 2
          %s270 = scalar_lea.vmem %s2, %s269
          %s271 = sadd.s32 %s19, 1
          %s272 = smul.u32 %s271, 2
          %s273 = ssub.s32 %s272, 1
        $region47: #{resblock_pallas.5} parent=19 // pred_fallthru
          _
        // Predicated region
        $region48: #{resblock_pallas.5} parent=19 // pred_check
          %p274 = pneg %p128
        $region49: #{resblock_pallas.5} parent=19 // pred_check_branch
          %276 = sbr.rel (%p274) target = $region51
        $region50: #{resblock_pallas.5} parent=19 // pred_region
          %s277 = sadd.s32 %s19, 1
          %s278 = smul.u32 2, %s277
          %s279 = ssub.s32 7, %s278
          %p280 = scmp.lt.s32.totalorder %s279, 2
          %s281 = scalar_select %p280, %s279, 2
          %s282 = smul.u32 32, %s281
          %p283 = scmp.lt.s32.totalorder %s18, 1
          %s284 = scalar_select %p283, %s18, 1
          %p285 = scmp.lt.s32.totalorder %s278, 6
          %s286 = scalar_select %p285, %s278, 6
          %s287 = smul.addr %s284, 7
          %s288 = sadd.s32 %s286, %s287
          %s289 = smul.addr %s288, 2
          %s290 = scalar_lea.vmem %s3, %s289
          %s291 = sadd.s32 %s19, 1
          %s292 = smul.u32 2, %s291
          %s293 = ssub.s32 7, %s292
          %p294 = scmp.lt.s32.totalorder %s293, 2
          %s295 = scalar_select %p294, %s293, 2
          %s296 = smul.u32 32, %s295
        $region51: #{resblock_pallas.5} parent=19 // pred_fallthru
          _
        // Predicated region
        $region52: #{resblock_pallas.5} parent=19 // pred_check
          %p297 = pneg %p160
        $region53: #{resblock_pallas.5} parent=19 // pred_check_branch
          %299 = sbr.rel (%p297) target = $region55
        $region54: #{resblock_pallas.5} parent=19 // pred_region
          %s300 = sadd.s32 %s19, 2
          %s301 = smul.u32 %s300, 2
          %p302 = scmp.lt.s32.totalorder %s18, 1
          %s303 = scalar_select %p302, %s18, 1
          %p304 = scmp.lt.s32.totalorder %s301, 6
          %s305 = scalar_select %p304, %s301, 6
          %s306 = smul.addr %s303, 7
          %s307 = sadd.s32 %s305, %s306
          %s308 = smul.addr %s307, 2
          %s309 = scalar_lea.vmem %s4, %s308
          %s310 = sadd.s32 %s19, 2
          %s311 = smul.u32 %s310, 2
        $region55: #{resblock_pallas.5} parent=19 // pred_fallthru
          _
      $region20: #{resblock_pallas.5} parent=5 // pred_fallthru
        _
      %p312 = scmp.le.s32.totalorder 1, %s11
      %p313 = scmp.lt.s32.totalorder %s11, 5
      %p314 = pnand %p312, %p313
      %p315 = pneg %p314
      // Predicated region
      $region56: #{resblock_pallas.5} parent=5 // pred_check
        _
      $region57: #{resblock_pallas.5} parent=5 // pred_check_branch
        %317 = sbr.rel (%p314) target = $region59
      $region58: #{resblock_pallas.5} parent=5 // pred_region
        %s318 = ssub.s32 %s11, 1
        %s319 = sand.u32 %s57, 1
        %s320 = sand.u32 %s57, 1
        %s321 = smul.addr %s320, 64
        %s322 = scalar_lea.vmem [#allocation3], %s321
        // Predicated region
        $region60: #{resblock_pallas.5} parent=58 // pred_check
          %p323 = pneg %p70
        $region61: #{resblock_pallas.5} parent=58 // pred_check_branch
          %325 = sbr.rel (%p323) target = $region63
        $region62: #{resblock_pallas.5} parent=58 // pred_region
          _
        $region63: #{resblock_pallas.5} parent=58 // pred_fallthru
          _
        %p326 = pneg %p44
        %p327 = pneg %p41
        %s328 = sand.u32 %s57, 1
        %s329 = sand.u32 %s57, 1
        %s330 = smul.addr %s329, 64
        %s331 = scalar_lea.vmem [#allocation3], %s330
        %p332 = pneg %p70
        %p333 = pneg %p67
        %s334 = sadd.s32 %s21, 1
        %s335 = smul.u32 %s334, 2
        %s336 = ssub.s32 %s335, 1
        %p337 = scmp.lt.s32.totalorder %s20, 1
        %s338 = scalar_select %p337, %s20, 1
        %p339 = scmp.lt.s32.totalorder %s336, 6
        %s340 = scalar_select %p339, %s336, 6
        %s341 = smul.addr %s338, 7
        %s342 = sadd.s32 %s340, %s341
        %s343 = smul.addr %s342, 2
        %s344 = scalar_lea.vmem %s2, %s343
        %p345 = pneg %p104
        %p346 = pneg %p101
        %s347 = sadd.s32 %s21, 1
        %s348 = smul.u32 2, %s347
        %s349 = ssub.s32 7, %s348
        %p350 = scmp.lt.s32.totalorder %s349, 2
        %s351 = scalar_select %p350, %s349, 2
        %s352 = smul.u32 32, %s351
        %p353 = scmp.lt.s32.totalorder %s20, 1
        %s354 = scalar_select %p353, %s20, 1
        %p355 = scmp.lt.s32.totalorder %s348, 6
        %s356 = scalar_select %p355, %s348, 6
        %s357 = smul.addr %s354, 7
        %s358 = sadd.s32 %s356, %s357
        %s359 = smul.addr %s358, 2
        %s360 = scalar_lea.vmem %s3, %s359
        %p361 = pneg %p134
        %p362 = pneg %p131
        %s363 = sadd.s32 %s21, 2
        %s364 = smul.u32 %s363, 2
        %p365 = scmp.lt.s32.totalorder %s20, 1
        %s366 = scalar_select %p365, %s20, 1
        %p367 = scmp.lt.s32.totalorder %s364, 6
        %s368 = scalar_select %p367, %s364, 6
        %s369 = smul.addr %s366, 7
        %s370 = sadd.s32 %s368, %s369
        %s371 = smul.addr %s370, 2
        %s372 = scalar_lea.vmem %s4, %s371
        %p373 = pneg %p166
        %p374 = pneg %p163
        %p375 = pneg %p194
        %p376 = pneg %p191
        %s377 = smul.u32 2, %s21
        %p378 = scmp.lt.s32.totalorder %s20, 1
        %s379 = scalar_select %p378, %s20, 1
        %p380 = scmp.lt.s32.totalorder %s377, 3
        %s381 = scalar_select %p380, %s377, 3
        %s382 = smul.addr %s379, 4
        %s383 = sadd.s32 %s381, %s382
        %s384 = smul.addr %s383, 8
        %s385 = scalar_lea.vmem %s5, %s384
        %s386 = smul.u32 2, %s21
        %s387 = sadd.s32 %s21, 1
        %s388 = smul.u32 %s387, 2
        %s389 = ssub.s32 %s388, 1
        %p390 = scmp.lt.s32.totalorder %s20, 1
        %s391 = scalar_select %p390, %s20, 1
        %p392 = scmp.lt.s32.totalorder %s389, 6
        %s393 = scalar_select %p392, %s389, 6
        %s394 = smul.addr %s391, 7
        %s395 = sadd.s32 %s393, %s394
        %s396 = smul.addr %s395, 2
        %s397 = scalar_lea.vmem %s2, %s396
        %s398 = sadd.s32 %s21, 1
        %s399 = smul.u32 %s398, 2
        %s400 = ssub.s32 %s399, 1
        %s401 = sadd.s32 %s21, 1
        %s402 = smul.u32 2, %s401
        %s403 = ssub.s32 7, %s402
        %p404 = scmp.lt.s32.totalorder %s403, 2
        %s405 = scalar_select %p404, %s403, 2
        %s406 = smul.u32 32, %s405
        %p407 = scmp.lt.s32.totalorder %s20, 1
        %s408 = scalar_select %p407, %s20, 1
        %p409 = scmp.lt.s32.totalorder %s402, 6
        %s410 = scalar_select %p409, %s402, 6
        %s411 = smul.addr %s408, 7
        %s412 = sadd.s32 %s410, %s411
        %s413 = smul.addr %s412, 2
        %s414 = scalar_lea.vmem %s3, %s413
        %s415 = sadd.s32 %s21, 1
        %s416 = smul.u32 2, %s415
        %s417 = ssub.s32 7, %s416
        %p418 = scmp.lt.s32.totalorder %s417, 2
        %s419 = scalar_select %p418, %s417, 2
        %s420 = smul.u32 32, %s419
        %s421 = sadd.s32 %s21, 2
        %s422 = smul.u32 %s421, 2
        %p423 = scmp.lt.s32.totalorder %s20, 1
        %s424 = scalar_select %p423, %s20, 1
        %p425 = scmp.lt.s32.totalorder %s422, 6
        %s426 = scalar_select %p425, %s422, 6
        %s427 = smul.addr %s424, 7
        %s428 = sadd.s32 %s426, %s427
        %s429 = smul.addr %s428, 2
        %s430 = scalar_lea.vmem %s4, %s429
        %s431 = sadd.s32 %s21, 2
        %s432 = smul.u32 %s431, 2
        %s433 = smul.u32 2, %s21
        %p434 = scmp.lt.s32.totalorder %s20, 1
        %s435 = scalar_select %p434, %s20, 1
        %p436 = scmp.lt.s32.totalorder %s433, 3
        %s437 = scalar_select %p436, %s433, 3
        %s438 = smul.addr %s435, 4
        %s439 = sadd.s32 %s437, %s438
        %s440 = smul.addr %s439, 8
        %s441 = scalar_lea.vmem %s5, %s440
        %s442 = smul.u32 2, %s21
        %v444 = vld [vmem:[%s397] sm:$0x3]
        %v445 = vunpack.c.l.bf16 %v444
        %446 = vst [vmem:[#allocation2] sm:$0xf] %v445
        %v447 = vld [vmem:[%s414] sm:$0xf]
        %v448 = vunpack.c.l.bf16 %v447
        %449 = vst [vmem:[#allocation2 + $0x4] sm:$0xff] %v448
        %v450 = vld [vmem:[%s430] sm:$0x3]
        %v451 = vunpack.c.l.bf16 %v450
        %452 = vst [vmem:[#allocation2 + $0xc] sm:$0xf] %v451
        %v453 = vld [vmem:[%s0] sm:$0xf]
        %v454 = vld [vmem:[%s0 + $0x4] sm:$0xf]
        %v455 = vld [vmem:[%s0 + $0x8] sm:$0xf]
        %v456 = vld [vmem:[%s0 + $0xc] sm:$0xf]
        %v457 = vld [vmem:[%s0 + $0x10] sm:$0xf]
        %v458 = vld [vmem:[%s0 + $0x14] sm:$0xf]
        %v459 = vld [vmem:[%s0 + $0x18] sm:$0xf]
        %v460 = vld [vmem:[%s0 + $0x1c] sm:$0xf]
        %v461 = vld [vmem:[%s0 + $0x20] sm:$0xf]
        %v462 = vld [vmem:[%s0 + $0x24] sm:$0xf]
        %v463 = vld [vmem:[%s0 + $0x28] sm:$0xf]
        %v464 = vld [vmem:[%s0 + $0x2c] sm:$0xf]
        %v465 = vld [vmem:[%s0 + $0x30] sm:$0xf]
        %v466 = vld [vmem:[%s0 + $0x34] sm:$0xf]
        %v467 = vld [vmem:[%s0 + $0x38] sm:$0xf]
        %v468 = vld [vmem:[%s0 + $0x3c] sm:$0xf]
        %v469 = vld [vmem:[%s0 + $0x40] sm:$0xf]
        %v470 = vld [vmem:[%s0 + $0x44] sm:$0xf]
        %v471 = vld [vmem:[%s0 + $0x48] sm:$0xf]
        %v472 = vld [vmem:[%s0 + $0x4c] sm:$0xf]
        %v473 = vld [vmem:[%s0 + $0x50] sm:$0xf]
        %v474 = vld [vmem:[%s0 + $0x54] sm:$0xf]
        %v475 = vld [vmem:[%s0 + $0x58] sm:$0xf]
        %v476 = vld [vmem:[%s0 + $0x5c] sm:$0xf]
        %v477 = vld [vmem:[%s0 + $0x60] sm:$0xf]
        %v478 = vld [vmem:[%s0 + $0x64] sm:$0xf]
        %v479 = vld [vmem:[%s0 + $0x68] sm:$0xf]
        %v480 = vld [vmem:[%s322] sm:$0xff]
        %v481 = vld [vmem:[%s322 + $0x8] sm:$0xff]
        %v482 = vld [vmem:[%s322 + $0x10] sm:$0xff]
        %v483 = vld [vmem:[%s322 + $0x18] sm:$0xff]
        %v484 = vld [vmem:[%s322 + $0x20] sm:$0xff]
        %v485 = vld [vmem:[%s322 + $0x28] sm:$0xff]
        %v486 = vld [vmem:[%s322 + $0x30] sm:$0x7]
        %v487 = vld [vmem:[%s322 + $0x38] sm:$0x7]
        %v488 = vld [vmem:[#allocation2] sm:$0xff]
        %v489 = vld [vmem:[#allocation2 + $0x8] sm:$0xf]
        %v490 = vlaneseq
        %v491 = vshrl.u32 %v490, 7
        %v492 = vsub.s32 0, %v491
        %v493 = vrot.slane %v480, %v492
        %v494 = vlaneseq
        %v495 = vshrl.u32 %v494, 7
        %v496 = vsub.s32 0, %v495
        %v497 = vrot.slane %v481, %v496
        %v500 = vcombine.low %v493, %v497
        %501 = vrot.lane.b32.xlu0 %v500, 55
        %v502 = vpop.permute.xlu0 %501
        %v503 = vrot.slane %v502, 4
        %vm504 = vcmask 449536
        %v505 = vsel %vm504, %v503, %v502
        %v508 = vmul.f32 %v488, %v505
        %v509 = vmul.f32 %v489, %v503
        %v511 = vcombine.high %v508, %v508
        %v513 = vpack.c.bf16 %v508, %v508
        %v514 = vpack.c.bf16 %v511, %v511
        %v515 = vpack.c.bf16 %v509, %v509
        %v516 = vlaneseq
        %v517 = vshrl.u32 %v516, 7
        %v518 = vsub.s32 1, %v517
        %v519 = vrot.slane %v480, %v518
        %v520 = vlaneseq
        %v521 = vshrl.u32 %v520, 7
        %v522 = vsub.s32 1, %v521
        %v523 = vrot.slane %v481, %v522
        %v526 = vcombine.low %v519, %v523
        %527 = vrot.lane.b32.xlu0 %v526, 56
        %v528 = vpop.permute.xlu0 %527
        %v529 = vrot.slane %v528, 4
        %vm530 = vcmask 457728
        %v531 = vsel %vm530, %v529, %v528
        %v534 = vmul.f32 %v488, %v531
        %v535 = vmul.f32 %v489, %v529
        %v537 = vcombine.high %v534, %v534
        %v539 = vpack.c.bf16 %v534, %v534
        %v540 = vpack.c.bf16 %v537, %v537
        %v541 = vpack.c.bf16 %v535, %v535
        %545 = vrot.lane.b32.xlu0 %v539, 72
        %v546 = vpop.permute.xlu0 %545
        %547 = vrot.lane.b32.xlu0 %v540, 72
        %v548 = vpop.permute.xlu0 %547
        %549 = vrot.lane.b32.xlu0 %v541, 72
        %v550 = vpop.permute.xlu0 %549
        %vm551 = vcmask 588800
        %v552 = vsel %vm551, %v546, %v548
        %v553 = vsel %vm551, %v548, %v550
        %vm554 = vcmask 31744
        %v556 = vsel %vm554, %v454, 0
        %vm558 = vcmask 1041408
        %v560 = vsel %vm558, %v552, 0
        %v563 = vsel %vm558, %v553, 0
        %565 = vmatprep.subr.bf16.mxu0 %v563
        %566 = vmatpush1.bf16.msra.mxu0 %v560
        %567 = vmatprep.subr.bf16.mxu0 0
        %568 = vmatpush1.bf16.msra.mxu0 0
        %569 = vmatprep.subr.bf16.mxu0 0
        %570 = vmatpush1.bf16.msra.mxu0 0
        %571 = vmatprep.subr.bf16.mxu0 0
        %572 = vmatpush1.bf16.msra.mxu0 0
        %573 = vmatprep.subr.bf16.mxu0 0
        %574 = vmatpush1.bf16.msra.mxu0 0
        %575 = vmatprep.subr.bf16.mxu0 0
        %576 = vmatpush1.bf16.msra.mxu0 0
        %577 = vmatprep.subr.bf16.mxu0 0
        %578 = vmatpush1.bf16.msra.mxu0 0
        %579 = vmatprep.subr.bf16.mxu0 0
        %580 = vmatpush1.bf16.msra.mxu0 0
        %581 = vmatprep.subr.bf16.mxu0 0
        %582 = vmatpush1.bf16.msra.mxu0 0
        %583 = vmatprep.subr.bf16.mxu0 0
        %584 = vmatpush1.bf16.msra.mxu0 0
        %585 = vmatprep.subr.bf16.mxu0 0
        %586 = vmatpush1.bf16.msra.mxu0 0
        %587 = vmatprep.subr.bf16.mxu0 0
        %588 = vmatpush1.bf16.msra.mxu0 0
        %589 = vmatprep.subr.bf16.mxu0 0
        %590 = vmatpush1.bf16.msra.mxu0 0
        %591 = vmatprep.subr.bf16.mxu0 0
        %592 = vmatpush1.bf16.msra.mxu0 0
        %593 = vmatprep.subr.bf16.mxu0 0
        %594 = vmatpush1.bf16.msra.mxu0 0
        %595 = vmatprep.subr.bf16.mxu0 0
        %596 = vmatpush1.bf16.msra.mxu0 0
        %597 = vmatprep.mubr.bf16.mxu0 0
        %598 = vmatmul.mubr.bf16.gmra.mrb[0].mxu0 %v556
        %v599 = vpop.f32.mrb[0].mxu0
        %v600 = vadd.f32 0.0, %v599
        %v601 = vpop.f32.mrb[0].mxu0
        %v602 = vadd.f32 0.0, %v601
        %v603 = vpop.f32.mrb[0].mxu0
        %v604 = vpop.f32.mrb[0].mxu0
        %605 = vdwg.mxu0
        %609 = vrot.lane.b32.xlu0 %v513, 73
        %v610 = vpop.permute.xlu0 %609
        %611 = vrot.lane.b32.xlu0 %v514, 73
        %v612 = vpop.permute.xlu0 %611
        %613 = vrot.lane.b32.xlu0 %v515, 73
        %v614 = vpop.permute.xlu0 %613
        %vm615 = vcmask 596992
        %v616 = vsel %vm615, %v610, %v612
        %v617 = vsel %vm615, %v612, %v614
        %v619 = vsel %vm554, %v453, 0
        %v622 = vsel %vm558, %v616, 0
        %v625 = vsel %vm558, %v617, 0
        %627 = vmatprep.subr.bf16.mxu0 %v625
        %628 = vmatpush1.bf16.msra.mxu0 %v622
        %629 = vmatprep.subr.bf16.mxu0 0
        %630 = vmatpush1.bf16.msra.mxu0 0
        %631 = vmatprep.subr.bf16.mxu0 0
        %632 = vmatpush1.bf16.msra.mxu0 0
        %633 = vmatprep.subr.bf16.mxu0 0
        %634 = vmatpush1.bf16.msra.mxu0 0
        %635 = vmatprep.subr.bf16.mxu0 0
        %636 = vmatpush1.bf16.msra.mxu0 0
        %637 = vmatprep.subr.bf16.mxu0 0
        %638 = vmatpush1.bf16.msra.mxu0 0
        %639 = vmatprep.subr.bf16.mxu0 0
        %640 = vmatpush1.bf16.msra.mxu0 0
        %641 = vmatprep.subr.bf16.mxu0 0
        %642 = vmatpush1.bf16.msra.mxu0 0
        %643 = vmatprep.subr.bf16.mxu0 0
        %644 = vmatpush1.bf16.msra.mxu0 0
        %645 = vmatprep.subr.bf16.mxu0 0
        %646 = vmatpush1.bf16.msra.mxu0 0
        %647 = vmatprep.subr.bf16.mxu0 0
        %648 = vmatpush1.bf16.msra.mxu0 0
        %649 = vmatprep.subr.bf16.mxu0 0
        %650 = vmatpush1.bf16.msra.mxu0 0
        %651 = vmatprep.subr.bf16.mxu0 0
        %652 = vmatpush1.bf16.msra.mxu0 0
        %653 = vmatprep.subr.bf16.mxu0 0
        %654 = vmatpush1.bf16.msra.mxu0 0
        %655 = vmatprep.subr.bf16.mxu0 0
        %656 = vmatpush1.bf16.msra.mxu0 0
        %657 = vmatprep.subr.bf16.mxu0 0
        %658 = vmatpush1.bf16.msra.mxu0 0
        %659 = vmatprep.mubr.bf16.mxu0 0
        %660 = vmatmul.mubr.bf16.gmra.mrb[0].mxu0 %v619
        %v661 = vpop.f32.mrb[0].mxu0
        %v662 = vadd.f32 %v600, %v661
        %v663 = vpop.f32.mrb[0].mxu0
        %v664 = vadd.f32 %v602, %v663
        %v665 = vpop.f32.mrb[0].mxu0
        %v666 = vpop.f32.mrb[0].mxu0
        %667 = vdwg.mxu0
        %v668 = vld [vmem:[#allocation2] sm:$0xff]
        %v669 = vld [vmem:[#allocation2 + $0x8] sm:$0xf]
        %v670 = vlaneseq
        %v671 = vshrl.u32 %v670, 7
        %v672 = vsub.s32 2, %v671
        %v673 = vrot.slane %v480, %v672
        %v674 = vlaneseq
        %v675 = vshrl.u32 %v674, 7
        %v676 = vsub.s32 2, %v675
        %v677 = vrot.slane %v481, %v676
        %v680 = vcombine.low %v673, %v677
        %681 = vrot.lane.b32.xlu0 %v680, 57
        %v682 = vpop.permute.xlu0 %681
        %v683 = vrot.slane %v682, 4
        %vm684 = vcmask 465920
        %v685 = vsel %vm684, %v683, %v682
        %v688 = vmul.f32 %v668, %v685
        %v689 = vmul.f32 %v669, %v683
        %v691 = vcombine.high %v688, %v688
        %v693 = vpack.c.bf16 %v688, %v688
        %v694 = vpack.c.bf16 %v691, %v691
        %v695 = vpack.c.bf16 %v689, %v689
        %699 = vrot.lane.b32.xlu0 %v693, 71
        %v700 = vpop.permute.xlu0 %699
        %701 = vrot.lane.b32.xlu0 %v694, 71
        %v702 = vpop.permute.xlu0 %701
        %703 = vrot.lane.b32.xlu0 %v695, 71
        %v704 = vpop.permute.xlu0 %703
        %vm705 = vcmask 580608
        %v706 = vsel %vm705, %v700, %v702
        %v707 = vsel %vm705, %v702, %v704
        %v709 = vsel %vm554, %v455, 0
        %v712 = vsel %vm558, %v706, 0
        %v715 = vsel %vm558, %v707, 0
        %717 = vmatprep.subr.bf16.mxu0 %v715
        %718 = vmatpush1.bf16.msra.mxu0 %v712
        %719 = vmatprep.subr.bf16.mxu0 0
        %720 = vmatpush1.bf16.msra.mxu0 0
        %721 = vmatprep.subr.bf16.mxu0 0
        %722 = vmatpush1.bf16.msra.mxu0 0
        %723 = vmatprep.subr.bf16.mxu0 0
        %724 = vmatpush1.bf16.msra.mxu0 0
        %725 = vmatprep.subr.bf16.mxu0 0
        %726 = vmatpush1.bf16.msra.mxu0 0
        %727 = vmatprep.subr.bf16.mxu0 0
        %728 = vmatpush1.bf16.msra.mxu0 0
        %729 = vmatprep.subr.bf16.mxu0 0
        %730 = vmatpush1.bf16.msra.mxu0 0
        %731 = vmatprep.subr.bf16.mxu0 0
        %732 = vmatpush1.bf16.msra.mxu0 0
        %733 = vmatprep.subr.bf16.mxu0 0
        %734 = vmatpush1.bf16.msra.mxu0 0
        %735 = vmatprep.subr.bf16.mxu0 0
        %736 = vmatpush1.bf16.msra.mxu0 0
        %737 = vmatprep.subr.bf16.mxu0 0
        %738 = vmatpush1.bf16.msra.mxu0 0
        %739 = vmatprep.subr.bf16.mxu0 0
        %740 = vmatpush1.bf16.msra.mxu0 0
        %741 = vmatprep.subr.bf16.mxu0 0
        %742 = vmatpush1.bf16.msra.mxu0 0
        %743 = vmatprep.subr.bf16.mxu0 0
        %744 = vmatpush1.bf16.msra.mxu0 0
        %745 = vmatprep.subr.bf16.mxu0 0
        %746 = vmatpush1.bf16.msra.mxu0 0
        %747 = vmatprep.subr.bf16.mxu0 0
        %748 = vmatpush1.bf16.msra.mxu0 0
        %749 = vmatprep.mubr.bf16.mxu0 0
        %750 = vmatmul.mubr.bf16.gmra.mrb[0].mxu0 %v709
        %v751 = vpop.f32.mrb[0].mxu0
        %v752 = vadd.f32 0.0, %v751
        %v753 = vpop.f32.mrb[0].mxu0
        %v754 = vadd.f32 0.0, %v753
        %v755 = vpop.f32.mrb[0].mxu0
        %v756 = vpop.f32.mrb[0].mxu0
        %757 = vdwg.mxu0
        %v758 = vadd.f32 %v662, %v752
        %v759 = vadd.f32 %v664, %v754
        %v760 = vld [vmem:[#allocation2] sm:$0xff]
        %v761 = vld [vmem:[#allocation2 + $0x8] sm:$0xf]
        %v762 = vlaneseq
        %v763 = vshrl.u32 %v762, 7
        %v764 = vsub.s32 3, %v763
        %v765 = vrot.slane %v480, %v764
        %v766 = vlaneseq
        %v767 = vshrl.u32 %v766, 7
        %v768 = vsub.s32 3, %v767
        %v769 = vrot.slane %v481, %v768
        %v772 = vcombine.low %v765, %v769
        %773 = vrot.lane.b32.xlu0 %v772, 63
        %v774 = vpop.permute.xlu0 %773
        %v775 = vrot.slane %v774, 4
        %vm776 = vcmask 515072
        %v777 = vsel %vm776, %v775, %v774
        %v780 = vmul.f32 %v760, %v777
        %v781 = vmul.f32 %v761, %v775
        %v783 = vcombine.high %v780, %v780
        %v785 = vpack.c.bf16 %v780, %v780
        %v786 = vpack.c.bf16 %v783, %v783
        %v787 = vpack.c.bf16 %v781, %v781
        %791 = vrot.lane.b32.xlu0 %v785, 65
        %v792 = vpop.permute.xlu0 %791
        %793 = vrot.lane.b32.xlu0 %v786, 65
        %v794 = vpop.permute.xlu0 %793
        %795 = vrot.lane.b32.xlu0 %v787, 65
        %v796 = vpop.permute.xlu0 %795
        %vm797 = vcmask 531456
        %v798 = vsel %vm797, %v792, %v794
        %v799 = vsel %vm797, %v794, %v796
        %v801 = vsel %vm554, %v456, 0
        %v804 = vsel %vm558, %v798, 0
        %v807 = vsel %vm558, %v799, 0
        %809 = vmatprep.subr.bf16.mxu0 %v807
        %810 = vmatpush1.bf16.msra.mxu0 %v804
        %811 = vmatprep.subr.bf16.mxu0 0
        %812 = vmatpush1.bf16.msra.mxu0 0
        %813 = vmatprep.subr.bf16.mxu0 0
        %814 = vmatpush1.bf16.msra.mxu0 0
        %815 = vmatprep.subr.bf16.mxu0 0
        %816 = vmatpush1.bf16.msra.mxu0 0
        %817 = vmatprep.subr.bf16.mxu0 0
        %818 = vmatpush1.bf16.msra.mxu0 0
        %819 = vmatprep.subr.bf16.mxu0 0
        %820 = vmatpush1.bf16.msra.mxu0 0
        %821 = vmatprep.subr.bf16.mxu0 0
        %822 = vmatpush1.bf16.msra.mxu0 0
        %823 = vmatprep.subr.bf16.mxu0 0
        %824 = vmatpush1.bf16.msra.mxu0 0
        %825 = vmatprep.subr.bf16.mxu0 0
        %826 = vmatpush1.bf16.msra.mxu0 0
        %827 = vmatprep.subr.bf16.mxu0 0
        %828 = vmatpush1.bf16.msra.mxu0 0
        %829 = vmatprep.subr.bf16.mxu0 0
        %830 = vmatpush1.bf16.msra.mxu0 0
        %831 = vmatprep.subr.bf16.mxu0 0
        %832 = vmatpush1.bf16.msra.mxu0 0
        %833 = vmatprep.subr.bf16.mxu0 0
        %834 = vmatpush1.bf16.msra.mxu0 0
        %835 = vmatprep.subr.bf16.mxu0 0
        %836 = vmatpush1.bf16.msra.mxu0 0
        %837 = vmatprep.subr.bf16.mxu0 0
        %838 = vmatpush1.bf16.msra.mxu0 0
        %839 = vmatprep.subr.bf16.mxu0 0
        %840 = vmatpush1.bf16.msra.mxu0 0
        %841 = vmatprep.mubr.bf16.mxu0 0
        %842 = vmatmul.mubr.bf16.gmra.mrb[0].mxu0 %v801
        %v843 = vpop.f32.mrb[0].mxu0
        %v844 = vadd.f32 0.0, %v843
        %v845 = vpop.f32.mrb[0].mxu0
        %v846 = vadd.f32 0.0, %v845
        %v847 = vpop.f32.mrb[0].mxu0
        %v848 = vpop.f32.mrb[0].mxu0
        %849 = vdwg.mxu0
        %v850 = vadd.f32 %v758, %v844
        %v851 = vadd.f32 %v759, %v846
        %v852 = vld [vmem:[#allocation2] sm:$0xff]
        %v853 = vld [vmem:[#allocation2 + $0x8] sm:$0xf]
        %v854 = vlaneseq
        %v855 = vshrl.u32 %v854, 7
        %v856 = vsub.s32 4, %v855
        %v857 = vrot.slane %v480, %v856
        %v858 = vlaneseq
        %v859 = vshrl.u32 %v858, 7
        %v860 = vsub.s32 4, %v859
        %v861 = vrot.slane %v481, %v860
        %v864 = vcombine.low %v857, %v861
        %865 = vrot.lane.b32.xlu0 %v864, 64
        %v866 = vpop.permute.xlu0 %865
        %v867 = vrot.slane %v866, 4
        %vm868 = vcmask 523264
        %v869 = vsel %vm868, %v867, %v866
        %v872 = vmul.f32 %v852, %v869
        %v873 = vmul.f32 %v853, %v867
        %v875 = vcombine.high %v872, %v872
        %v877 = vpack.c.bf16 %v872, %v872
        %v878 = vpack.c.bf16 %v875, %v875
        %v879 = vpack.c.bf16 %v873, %v873
        %883 = vrot.lane.b32.xlu0 %v877, 64
        %v884 = vpop.permute.xlu0 %883
        %885 = vrot.lane.b32.xlu0 %v878, 64
        %v886 = vpop.permute.xlu0 %885
        %887 = vrot.lane.b32.xlu0 %v879, 64
        %v888 = vpop.permute.xlu0 %887
        %vm889 = vcmask 523264
        %v890 = vsel %vm889, %v884, %v886
        %v891 = vsel %vm889, %v886, %v888
        %v893 = vsel %vm554, %v457, 0
        %v896 = vsel %vm558, %v890, 0
        %v899 = vsel %vm558, %v891, 0
        %901 = vmatprep.subr.bf16.mxu0 %v899
        %902 = vmatpush1.bf16.msra.mxu0 %v896
        %903 = vmatprep.subr.bf16.mxu0 0
        %904 = vmatpush1.bf16.msra.mxu0 0
        %905 = vmatprep.subr.bf16.mxu0 0
        %906 = vmatpush1.bf16.msra.mxu0 0
        %907 = vmatprep.subr.bf16.mxu0 0
        %908 = vmatpush1.bf16.msra.mxu0 0
        %909 = vmatprep.subr.bf16.mxu0 0
        %910 = vmatpush1.bf16.msra.mxu0 0
        %911 = vmatprep.subr.bf16.mxu0 0
        %912 = vmatpush1.bf16.msra.mxu0 0
        %913 = vmatprep.subr.bf16.mxu0 0
        %914 = vmatpush1.bf16.msra.mxu0 0
        %915 = vmatprep.subr.bf16.mxu0 0
        %916 = vmatpush1.bf16.msra.mxu0 0
        %917 = vmatprep.subr.bf16.mxu0 0
        %918 = vmatpush1.bf16.msra.mxu0 0
        %919 = vmatprep.subr.bf16.mxu0 0
        %920 = vmatpush1.bf16.msra.mxu0 0
        %921 = vmatprep.subr.bf16.mxu0 0
        %922 = vmatpush1.bf16.msra.mxu0 0
        %923 = vmatprep.subr.bf16.mxu0 0
        %924 = vmatpush1.bf16.msra.mxu0 0
        %925 = vmatprep.subr.bf16.mxu0 0
        %926 = vmatpush1.bf16.msra.mxu0 0
        %927 = vmatprep.subr.bf16.mxu0 0
        %928 = vmatpush1.bf16.msra.mxu0 0
        %929 = vmatprep.subr.bf16.mxu0 0
        %930 = vmatpush1.bf16.msra.mxu0 0
        %931 = vmatprep.subr.bf16.mxu0 0
        %932 = vmatpush1.bf16.msra.mxu0 0
        %933 = vmatprep.mubr.bf16.mxu0 0
        %934 = vmatmul.mubr.bf16.gmra.mrb[0].mxu0 %v893
        %v935 = vpop.f32.mrb[0].mxu0
        %v936 = vadd.f32 0.0, %v935
        %v937 = vpop.f32.mrb[0].mxu0
        %v938 = vadd.f32 0.0, %v937
        %v939 = vpop.f32.mrb[0].mxu0
        %v940 = vpop.f32.mrb[0].mxu0
        %941 = vdwg.mxu0
        %v942 = vadd.f32 %v850, %v936
        %v943 = vadd.f32 %v851, %v938
        %v944 = vld [vmem:[#allocation2] sm:$0xff]
        %v945 = vld [vmem:[#allocation2 + $0x8] sm:$0xf]
        %v946 = vlaneseq
        %v947 = vshrl.u32 %v946, 7
        %v948 = vsub.s32 5, %v947
        %v949 = vrot.slane %v480, %v948
        %v950 = vlaneseq
        %v951 = vshrl.u32 %v950, 7
        %v952 = vsub.s32 5, %v951
        %v953 = vrot.slane %v481, %v952
        %v956 = vcombine.low %v949, %v953
        %957 = vrot.lane.b32.xlu0 %v956, 65
        %v958 = vpop.permute.xlu0 %957
        %v959 = vrot.slane %v958, 4
        %vm960 = vcmask 531456
        %v961 = vsel %vm960, %v959, %v958
        %v964 = vmul.f32 %v944, %v961
        %v965 = vmul.f32 %v945, %v959
        %v967 = vcombine.high %v964, %v964
        %v969 = vpack.c.bf16 %v964, %v964
        %v970 = vpack.c.bf16 %v967, %v967
        %v971 = vpack.c.bf16 %v965, %v965
        %975 = vrot.lane.b32.xlu0 %v969, 63
        %v976 = vpop.permute.xlu0 %975
        %977 = vrot.lane.b32.xlu0 %v970, 63
        %v978 = vpop.permute.xlu0 %977
        %979 = vrot.lane.b32.xlu0 %v971, 63
        %v980 = vpop.permute.xlu0 %979
        %vm981 = vcmask 515072
        %v982 = vsel %vm981, %v976, %v978
        %v983 = vsel %vm981, %v978, %v980
        %v985 = vsel %vm554, %v458, 0
        %v988 = vsel %vm558, %v982, 0
        %v991 = vsel %vm558, %v983, 0
        %993 = vmatprep.subr.bf16.mxu0 %v991
        %994 = vmatpush1.bf16.msra.mxu0 %v988
        %995 = vmatprep.subr.bf16.mxu0 0
        %996 = vmatpush1.bf16.msra.mxu0 0
        %997 = vmatprep.subr.bf16.mxu0 0
        %998 = vmatpush1.bf16.msra.mxu0 0
        %999 = vmatprep.subr.bf16.mxu0 0
        %1000 = vmatpush1.bf16.msra.mxu0 0
        %1001 = vmatprep.subr.bf16.mxu0 0
        %1002 = vmatpush1.bf16.msra.mxu0 0
        %1003 = vmatprep.subr.bf16.mxu0 0
        %1004 = vmatpush1.bf16.msra.mxu0 0
        %1005 = vmatprep.subr.bf16.mxu0 0
        %1006 = vmatpush1.bf16.msra.mxu0 0
        %1007 = vmatprep.subr.bf16.mxu0 0
        %1008 = vmatpush1.bf16.msra.mxu0 0
        %1009 = vmatprep.subr.bf16.mxu0 0
        %1010 = vmatpush1.bf16.msra.mxu0 0
        %1011 = vmatprep.subr.bf16.mxu0 0
        %1012 = vmatpush1.bf16.msra.mxu0 0
        %1013 = vmatprep.subr.bf16.mxu0 0
        %1014 = vmatpush1.bf16.msra.mxu0 0
        %1015 = vmatprep.subr.bf16.mxu0 0
        %1016 = vmatpush1.bf16.msra.mxu0 0
        %1017 = vmatprep.subr.bf16.mxu0 0
        %1018 = vmatpush1.bf16.msra.mxu0 0
        %1019 = vmatprep.subr.bf16.mxu0 0
        %1020 = vmatpush1.bf16.msra.mxu0 0
        %1021 = vmatprep.subr.bf16.mxu0 0
        %1022 = vmatpush1.bf16.msra.mxu0 0
        %1023 = vmatprep.subr.bf16.mxu0 0
        %1024 = vmatpush1.bf16.msra.mxu0 0
        %1025 = vmatprep.mubr.bf16.mxu0 0
        %1026 = vmatmul.mubr.bf16.gmra.mrb[0].mxu0 %v985
        %v1027 = vpop.f32.mrb[0].mxu0
        %v1028 = vadd.f32 0.0, %v1027
        %v1029 = vpop.f32.mrb[0].mxu0
        %v1030 = vadd.f32 0.0, %v1029
        %v1031 = vpop.f32.mrb[0].mxu0
        %v1032 = vpop.f32.mrb[0].mxu0
        %1033 = vdwg.mxu0
        %v1034 = vadd.f32 %v942, %v1028
        %v1035 = vadd.f32 %v943, %v1030
        %v1036 = vld [vmem:[#allocation2] sm:$0xff]
        %v1037 = vld [vmem:[#allocation2 + $0x8] sm:$0xf]
        %v1038 = vlaneseq
        %v1039 = vshrl.u32 %v1038, 7
        %v1040 = vsub.s32 6, %v1039
        %v1041 = vrot.slane %v480, %v1040
        %v1042 = vlaneseq
        %v1043 = vshrl.u32 %v1042, 7
        %v1044 = vsub.s32 6, %v1043
        %v1045 = vrot.slane %v481, %v1044
        %v1048 = vcombine.low %v1041, %v1045
        %1049 = vrot.lane.b32.xlu0 %v1048, 71
        %v1050 = vpop.permute.xlu0 %1049
        %v1051 = vrot.slane %v1050, 4
        %vm1052 = vcmask 580608
        %v1053 = vsel %vm1052, %v1051, %v1050
        %v1056 = vmul.f32 %v1036, %v1053
        %v1057 = vmul.f32 %v1037, %v1051
        %v1059 = vcombine.high %v1056, %v1056
        %v1061 = vpack.c.bf16 %v1056, %v1056
        %v1062 = vpack.c.bf16 %v1059, %v1059
        %v1063 = vpack.c.bf16 %v1057, %v1057
        %1067 = vrot.lane.b32.xlu0 %v1061, 57
        %v1068 = vpop.permute.xlu0 %1067
        %1069 = vrot.lane.b32.xlu0 %v1062, 57
        %v1070 = vpop.permute.xlu0 %1069
        %1071 = vrot.lane.b32.xlu0 %v1063, 57
        %v1072 = vpop.permute.xlu0 %1071
        %vm1073 = vcmask 465920
        %v1074 = vsel %vm1073, %v1068, %v1070
        %v1075 = vsel %vm1073, %v1070, %v1072
        %v1077 = vsel %vm554, %v459, 0
        %v1080 = vsel %vm558, %v1074, 0
        %v1083 = vsel %vm558, %v1075, 0
        %1085 = vmatprep.subr.bf16.mxu0 %v1083
        %1086 = vmatpush1.bf16.msra.mxu0 %v1080
        %1087 = vmatprep.subr.bf16.mxu0 0
        %1088 = vmatpush1.bf16.msra.mxu0 0
        %1089 = vmatprep.subr.bf16.mxu0 0
        %1090 = vmatpush1.bf16.msra.mxu0 0
        %1091 = vmatprep.subr.bf16.mxu0 0
        %1092 = vmatpush1.bf16.msra.mxu0 0
        %1093 = vmatprep.subr.bf16.mxu0 0
        %1094 = vmatpush1.bf16.msra.mxu0 0
        %1095 = vmatprep.subr.bf16.mxu0 0
        %1096 = vmatpush1.bf16.msra.mxu0 0
        %1097 = vmatprep.subr.bf16.mxu0 0
        %1098 = vmatpush1.bf16.msra.mxu0 0
        %1099 = vmatprep.subr.bf16.mxu0 0
        %1100 = vmatpush1.bf16.msra.mxu0 0
        %1101 = vmatprep.subr.bf16.mxu0 0
        %1102 = vmatpush1.bf16.msra.mxu0 0
        %1103 = vmatprep.subr.bf16.mxu0 0
        %1104 = vmatpush1.bf16.msra.mxu0 0
        %1105 = vmatprep.subr.bf16.mxu0 0
        %1106 = vmatpush1.bf16.msra.mxu0 0
        %1107 = vmatprep.subr.bf16.mxu0 0
        %1108 = vmatpush1.bf16.msra.mxu0 0
        %1109 = vmatprep.subr.bf16.mxu0 0
        %1110 = vmatpush1.bf16.msra.mxu0 0
        %1111 = vmatprep.subr.bf16.mxu0 0
        %1112 = vmatpush1.bf16.msra.mxu0 0
        %1113 = vmatprep.subr.bf16.mxu0 0
        %1114 = vmatpush1.bf16.msra.mxu0 0
        %1115 = vmatprep.subr.bf16.mxu0 0
        %1116 = vmatpush1.bf16.msra.mxu0 0
        %1117 = vmatprep.mubr.bf16.mxu0 0
        %1118 = vmatmul.mubr.bf16.gmra.mrb[0].mxu0 %v1077
        %v1119 = vpop.f32.mrb[0].mxu0
        %v1120 = vadd.f32 0.0, %v1119
        %v1121 = vpop.f32.mrb[0].mxu0
        %v1122 = vadd.f32 0.0, %v1121
        %v1123 = vpop.f32.mrb[0].mxu0
        %v1124 = vpop.f32.mrb[0].mxu0
        %1125 = vdwg.mxu0
        %v1126 = vadd.f32 %v1034, %v1120
        %v1127 = vadd.f32 %v1035, %v1122
        %v1128 = vld [vmem:[#allocation2] sm:$0xff]
        %v1129 = vld [vmem:[#allocation2 + $0x8] sm:$0xf]
        %v1130 = vlaneseq
        %v1131 = vshrl.u32 %v1130, 7
        %v1132 = vsub.s32 7, %v1131
        %v1133 = vrot.slane %v480, %v1132
        %v1134 = vlaneseq
        %v1135 = vshrl.u32 %v1134, 7
        %v1136 = vsub.s32 7, %v1135
        %v1137 = vrot.slane %v481, %v1136
        %v1140 = vcombine.low %v1133, %v1137
        %1141 = vrot.lane.b32.xlu0 %v1140, 72
        %v1142 = vpop.permute.xlu0 %1141
        %v1143 = vrot.slane %v1142, 4
        %vm1144 = vcmask 588800
        %v1145 = vsel %vm1144, %v1143, %v1142
        %v1148 = vmul.f32 %v1128, %v1145
        %v1149 = vmul.f32 %v1129, %v1143
        %v1151 = vcombine.high %v1148, %v1148
        %v1153 = vpack.c.bf16 %v1148, %v1148
        %v1154 = vpack.c.bf16 %v1151, %v1151
        %v1155 = vpack.c.bf16 %v1149, %v1149
        %1159 = vrot.lane.b32.xlu0 %v1153, 56
        %v1160 = vpop.permute.xlu0 %1159
        %1161 = vrot.lane.b32.xlu0 %v1154, 56
        %v1162 = vpop.permute.xlu0 %1161
        %1163 = vrot.lane.b32.xlu0 %v1155, 56
        %v1164 = vpop.permute.xlu0 %1163
        %vm1165 = vcmask 457728
        %v1166 = vsel %vm1165, %v1160, %v1162
        %v1167 = vsel %vm1165, %v1162, %v1164
        %v1169 = vsel %vm554, %v460, 0
        %v1172 = vsel %vm558, %v1166, 0
        %v1175 = vsel %vm558, %v1167, 0
        %1177 = vmatprep.subr.bf16.mxu0 %v1175
        %1178 = vmatpush1.bf16.msra.mxu0 %v1172
        %1179 = vmatprep.subr.bf16.mxu0 0
        %1180 = vmatpush1.bf16.msra.mxu0 0
        %1181 = vmatprep.subr.bf16.mxu0 0
        %1182 = vmatpush1.bf16.msra.mxu0 0
        %1183 = vmatprep.subr.bf16.mxu0 0
        %1184 = vmatpush1.bf16.msra.mxu0 0
        %1185 = vmatprep.subr.bf16.mxu0 0
        %1186 = vmatpush1.bf16.msra.mxu0 0
        %1187 = vmatprep.subr.bf16.mxu0 0
        %1188 = vmatpush1.bf16.msra.mxu0 0
        %1189 = vmatprep.subr.bf16.mxu0 0
        %1190 = vmatpush1.bf16.msra.mxu0 0
        %1191 = vmatprep.subr.bf16.mxu0 0
        %1192 = vmatpush1.bf16.msra.mxu0 0
        %1193 = vmatprep.subr.bf16.mxu0 0
        %1194 = vmatpush1.bf16.msra.mxu0 0
        %1195 = vmatprep.subr.bf16.mxu0 0
        %1196 = vmatpush1.bf16.msra.mxu0 0
        %1197 = vmatprep.subr.bf16.mxu0 0
        %1198 = vmatpush1.bf16.msra.mxu0 0
        %1199 = vmatprep.subr.bf16.mxu0 0
        %1200 = vmatpush1.bf16.msra.mxu0 0
        %1201 = vmatprep.subr.bf16.mxu0 0
        %1202 = vmatpush1.bf16.msra.mxu0 0
        %1203 = vmatprep.subr.bf16.mxu0 0
        %1204 = vmatpush1.bf16.msra.mxu0 0
        %1205 = vmatprep.subr.bf16.mxu0 0
        %1206 = vmatpush1.bf16.msra.mxu0 0
        %1207 = vmatprep.subr.bf16.mxu0 0
        %1208 = vmatpush1.bf16.msra.mxu0 0
        %1209 = vmatprep.mubr.bf16.mxu0 0
        %1210 = vmatmul.mubr.bf16.gmra.mrb[0].mxu0 %v1169
        %v1211 = vpop.f32.mrb[0].mxu0
        %v1212 = vadd.f32 0.0, %v1211
        %v1213 = vpop.f32.mrb[0].mxu0
        %v1214 = vadd.f32 0.0, %v1213
        %v1215 = vpop.f32.mrb[0].mxu0
        %v1216 = vpop.f32.mrb[0].mxu0
        %1217 = vdwg.mxu0
        %v1218 = vadd.f32 %v1126, %v1212
        %v1219 = vadd.f32 %v1127, %v1214
        %v1220 = vld [vmem:[#allocation2] sm:$0xff]
        %v1221 = vld [vmem:[#allocation2 + $0x8] sm:$0xf]
        %v1222 = vlaneseq
        %v1223 = vshrl.u32 %v1222, 7
        %v1224 = vsub.s32 0, %v1223
        %v1225 = vrot.slane %v482, %v1224
        %v1226 = vlaneseq
        %v1227 = vshrl.u32 %v1226, 7
        %v1228 = vsub.s32 0, %v1227
        %v1229 = vrot.slane %v483, %v1228
        %v1232 = vcombine.low %v1225, %v1229
        %1233 = vrot.lane.b32.xlu0 %v1232, 73
        %v1234 = vpop.permute.xlu0 %1233
        %v1235 = vrot.slane %v1234, 4
        %vm1236 = vcmask 596992
        %v1237 = vsel %vm1236, %v1235, %v1234
        %v1240 = vmul.f32 %v1220, %v1237
        %v1241 = vmul.f32 %v1221, %v1235
        %v1243 = vcombine.high %v1240, %v1240
        %v1245 = vpack.c.bf16 %v1240, %v1240
        %v1246 = vpack.c.bf16 %v1243, %v1243
        %v1247 = vpack.c.bf16 %v1241, %v1241
        %1251 = vrot.lane.b32.xlu0 %v1245, 55
        %v1252 = vpop.permute.xlu0 %1251
        %1253 = vrot.lane.b32.xlu0 %v1246, 55
        %v1254 = vpop.permute.xlu0 %1253
        %1255 = vrot.lane.b32.xlu0 %v1247, 55
        %v1256 = vpop.permute.xlu0 %1255
        %vm1257 = vcmask 449536
        %v1258 = vsel %vm1257, %v1252, %v1254
        %v1259 = vsel %vm1257, %v1254, %v1256
        %v1261 = vsel %vm554, %v461, 0
        %v1264 = vsel %vm558, %v1258, 0
        %v1267 = vsel %vm558, %v1259, 0
        %1269 = vmatprep.subr.bf16.mxu0 %v1267
        %1270 = vmatpush1.bf16.msra.mxu0 %v1264
        %1271 = vmatprep.subr.bf16.mxu0 0
        %1272 = vmatpush1.bf16.msra.mxu0 0
        %1273 = vmatprep.subr.bf16.mxu0 0
        %1274 = vmatpush1.bf16.msra.mxu0 0
        %1275 = vmatprep.subr.bf16.mxu0 0
        %1276 = vmatpush1.bf16.msra.mxu0 0
        %1277 = vmatprep.subr.bf16.mxu0 0
        %1278 = vmatpush1.bf16.msra.mxu0 0
        %1279 = vmatprep.subr.bf16.mxu0 0
        %1280 = vmatpush1.bf16.msra.mxu0 0
        %1281 = vmatprep.subr.bf16.mxu0 0
        %1282 = vmatpush1.bf16.msra.mxu0 0
        %1283 = vmatprep.subr.bf16.mxu0 0
        %1284 = vmatpush1.bf16.msra.mxu0 0
        %1285 = vmatprep.subr.bf16.mxu0 0
        %1286 = vmatpush1.bf16.msra.mxu0 0
        %1287 = vmatprep.subr.bf16.mxu0 0
        %1288 = vmatpush1.bf16.msra.mxu0 0
        %1289 = vmatprep.subr.bf16.mxu0 0
        %1290 = vmatpush1.bf16.msra.mxu0 0
        %1291 = vmatprep.subr.bf16.mxu0 0
        %1292 = vmatpush1.bf16.msra.mxu0 0
        %1293 = vmatprep.subr.bf16.mxu0 0
        %1294 = vmatpush1.bf16.msra.mxu0 0
        %1295 = vmatprep.subr.bf16.mxu0 0
        %1296 = vmatpush1.bf16.msra.mxu0 0
        %1297 = vmatprep.subr.bf16.mxu0 0
        %1298 = vmatpush1.bf16.msra.mxu0 0
        %1299 = vmatprep.subr.bf16.mxu0 0
        %1300 = vmatpush1.bf16.msra.mxu0 0
        %1301 = vmatprep.mubr.bf16.mxu0 0
        %1302 = vmatmul.mubr.bf16.gmra.mrb[0].mxu0 %v1261
        %v1303 = vpop.f32.mrb[0].mxu0
        %v1304 = vadd.f32 0.0, %v1303
        %v1305 = vpop.f32.mrb[0].mxu0
        %v1306 = vadd.f32 0.0, %v1305
        %v1307 = vpop.f32.mrb[0].mxu0
        %v1308 = vpop.f32.mrb[0].mxu0
        %1309 = vdwg.mxu0
        %v1310 = vadd.f32 %v1218, %v1304
        %v1311 = vadd.f32 %v1219, %v1306
        %v1312 = vld [vmem:[#allocation2] sm:$0xff]
        %v1313 = vld [vmem:[#allocation2 + $0x8] sm:$0xf]
        %v1314 = vlaneseq
        %v1315 = vshrl.u32 %v1314, 7
        %v1316 = vsub.s32 1, %v1315
        %v1317 = vrot.slane %v482, %v1316
        %v1318 = vlaneseq
        %v1319 = vshrl.u32 %v1318, 7
        %v1320 = vsub.s32 1, %v1319
        %v1321 = vrot.slane %v483, %v1320
        %v1324 = vcombine.low %v1317, %v1321
        %1325 = vrot.lane.b32.xlu0 %v1324, 119
        %v1326 = vpop.permute.xlu0 %1325
        %v1327 = vrot.slane %v1326, 4
        %vm1328 = vcmask 973824
        %v1329 = vsel %vm1328, %v1327, %v1326
        %v1332 = vmul.f32 %v1312, %v1329
        %v1333 = vmul.f32 %v1313, %v1327
        %v1335 = vcombine.high %v1332, %v1332
        %v1337 = vpack.c.bf16 %v1332, %v1332
        %v1338 = vpack.c.bf16 %v1335, %v1335
        %v1339 = vpack.c.bf16 %v1333, %v1333
        %1343 = vrot.lane.b32.xlu0 %v1337, 9
        %v1344 = vpop.permute.xlu0 %1343
        %1345 = vrot.lane.b32.xlu0 %v1338, 9
        %v1346 = vpop.permute.xlu0 %1345
        %1347 = vrot.lane.b32.xlu0 %v1339, 9
        %v1348 = vpop.permute.xlu0 %1347
        %vm1349 = vcmask 72704
        %v1350 = vsel %vm1349, %v1344, %v1346
        %v1351 = vsel %vm1349, %v1346, %v1348
        %v1353 = vsel %vm554, %v462, 0
        %v1356 = vsel %vm558, %v1350, 0
        %v1359 = vsel %vm558, %v1351, 0
        %1361 = vmatprep.subr.bf16.mxu0 %v1359
        %1362 = vmatpush1.bf16.msra.mxu0 %v1356
        %1363 = vmatprep.subr.bf16.mxu0 0
        %1364 = vmatpush1.bf16.msra.mxu0 0
        %1365 = vmatprep.subr.bf16.mxu0 0
        %1366 = vmatpush1.bf16.msra.mxu0 0
        %1367 = vmatprep.subr.bf16.mxu0 0
        %1368 = vmatpush1.bf16.msra.mxu0 0
        %1369 = vmatprep.subr.bf16.mxu0 0
        %1370 = vmatpush1.bf16.msra.mxu0 0
        %1371 = vmatprep.subr.bf16.mxu0 0
        %1372 = vmatpush1.bf16.msra.mxu0 0
        %1373 = vmatprep.subr.bf16.mxu0 0
        %1374 = vmatpush1.bf16.msra.mxu0 0
        %1375 = vmatprep.subr.bf16.mxu0 0
        %1376 = vmatpush1.bf16.msra.mxu0 0
        %1377 = vmatprep.subr.bf16.mxu0 0
        %1378 = vmatpush1.bf16.msra.mxu0 0
        %1379 = vmatprep.subr.bf16.mxu0 0
        %1380 = vmatpush1.bf16.msra.mxu0 0
        %1381 = vmatprep.subr.bf16.mxu0 0
        %1382 = vmatpush1.bf16.msra.mxu0 0
        %1383 = vmatprep.subr.bf16.mxu0 0
        %1384 = vmatpush1.bf16.msra.mxu0 0
        %1385 = vmatprep.subr.bf16.mxu0 0
        %1386 = vmatpush1.bf16.msra.mxu0 0
        %1387 = vmatprep.subr.bf16.mxu0 0
        %1388 = vmatpush1.bf16.msra.mxu0 0
        %1389 = vmatprep.subr.bf16.mxu0 0
        %1390 = vmatpush1.bf16.msra.mxu0 0
        %1391 = vmatprep.subr.bf16.mxu0 0
        %1392 = vmatpush1.bf16.msra.mxu0 0
        %1393 = vmatprep.mubr.bf16.mxu0 0
        %1394 = vmatmul.mubr.bf16.gmra.mrb[0].mxu0 %v1353
        %v1395 = vpop.f32.mrb[0].mxu0
        %v1396 = vadd.f32 0.0, %v1395
        %v1397 = vpop.f32.mrb[0].mxu0
        %v1398 = vadd.f32 0.0, %v1397
        %v1399 = vpop.f32.mrb[0].mxu0
        %v1400 = vpop.f32.mrb[0].mxu0
        %1401 = vdwg.mxu0
        %v1402 = vadd.f32 %v1310, %v1396
        %v1403 = vadd.f32 %v1311, %v1398
        %v1404 = vld [vmem:[#allocation2] sm:$0xff]
        %v1405 = vld [vmem:[#allocation2 + $0x8] sm:$0xf]
        %v1406 = vlaneseq
        %v1407 = vshrl.u32 %v1406, 7
        %v1408 = vsub.s32 2, %v1407
        %v1409 = vrot.slane %v482, %v1408
        %v1410 = vlaneseq
        %v1411 = vshrl.u32 %v1410, 7
        %v1412 = vsub.s32 2, %v1411
        %v1413 = vrot.slane %v483, %v1412
        %v1416 = vcombine.low %v1409, %v1413
        %1417 = vrot.lane.b32.xlu0 %v1416, 120
        %v1418 = vpop.permute.xlu0 %1417
        %v1419 = vrot.slane %v1418, 4
        %vm1420 = vcmask 982016
        %v1421 = vsel %vm1420, %v1419, %v1418
        %v1424 = vmul.f32 %v1404, %v1421
        %v1425 = vmul.f32 %v1405, %v1419
        %v1427 = vcombine.high %v1424, %v1424
        %v1429 = vpack.c.bf16 %v1424, %v1424
        %v1430 = vpack.c.bf16 %v1427, %v1427
        %v1431 = vpack.c.bf16 %v1425, %v1425
        %1435 = vrot.lane.b32.xlu0 %v1429, 8
        %v1436 = vpop.permute.xlu0 %1435
        %1437 = vrot.lane.b32.xlu0 %v1430, 8
        %v1438 = vpop.permute.xlu0 %1437
        %1439 = vrot.lane.b32.xlu0 %v1431, 8
        %v1440 = vpop.permute.xlu0 %1439
        %vm1441 = vcmask 64512
        %v1442 = vsel %vm1441, %v1436, %v1438
        %v1443 = vsel %vm1441, %v1438, %v1440
        %v1445 = vsel %vm554, %v463, 0
        %v1448 = vsel %vm558, %v1442, 0
        %v1451 = vsel %vm558, %v1443, 0
        %1453 = vmatprep.subr.bf16.mxu0 %v1451
        %1454 = vmatpush1.bf16.msra.mxu0 %v1448
        %1455 = vmatprep.subr.bf16.mxu0 0
        %1456 = vmatpush1.bf16.msra.mxu0 0
        %1457 = vmatprep.subr.bf16.mxu0 0
        %1458 = vmatpush1.bf16.msra.mxu0 0
        %1459 = vmatprep.subr.bf16.mxu0 0
        %1460 = vmatpush1.bf16.msra.mxu0 0
        %1461 = vmatprep.subr.bf16.mxu0 0
        %1462 = vmatpush1.bf16.msra.mxu0 0
        %1463 = vmatprep.subr.bf16.mxu0 0
        %1464 = vmatpush1.bf16.msra.mxu0 0
        %1465 = vmatprep.subr.bf16.mxu0 0
        %1466 = vmatpush1.bf16.msra.mxu0 0
        %1467 = vmatprep.subr.bf16.mxu0 0
        %1468 = vmatpush1.bf16.msra.mxu0 0
        %1469 = vmatprep.subr.bf16.mxu0 0
        %1470 = vmatpush1.bf16.msra.mxu0 0
        %1471 = vmatprep.subr.bf16.mxu0 0
        %1472 = vmatpush1.bf16.msra.mxu0 0
        %1473 = vmatprep.subr.bf16.mxu0 0
        %1474 = vmatpush1.bf16.msra.mxu0 0
        %1475 = vmatprep.subr.bf16.mxu0 0
        %1476 = vmatpush1.bf16.msra.mxu0 0
        %1477 = vmatprep.subr.bf16.mxu0 0
        %1478 = vmatpush1.bf16.msra.mxu0 0
        %1479 = vmatprep.subr.bf16.mxu0 0
        %1480 = vmatpush1.bf16.msra.mxu0 0
        %1481 = vmatprep.subr.bf16.mxu0 0
        %1482 = vmatpush1.bf16.msra.mxu0 0
        %1483 = vmatprep.subr.bf16.mxu0 0
        %1484 = vmatpush1.bf16.msra.mxu0 0
        %1485 = vmatprep.mubr.bf16.mxu0 0
        %1486 = vmatmul.mubr.bf16.gmra.mrb[0].mxu0 %v1445
        %v1487 = vpop.f32.mrb[0].mxu0
        %v1488 = vadd.f32 0.0, %v1487
        %v1489 = vpop.f32.mrb[0].mxu0
        %v1490 = vadd.f32 0.0, %v1489
        %v1491 = vpop.f32.mrb[0].mxu0
        %v1492 = vpop.f32.mrb[0].mxu0
        %1493 = vdwg.mxu0
        %v1494 = vadd.f32 %v1402, %v1488
        %v1495 = vadd.f32 %v1403, %v1490
        %v1496 = vld [vmem:[#allocation2] sm:$0xff]
        %v1497 = vld [vmem:[#allocation2 + $0x8] sm:$0xf]
        %v1498 = vlaneseq
        %v1499 = vshrl.u32 %v1498, 7
        %v1500 = vsub.s32 3, %v1499
        %v1501 = vrot.slane %v482, %v1500
        %v1502 = vlaneseq
        %v1503 = vshrl.u32 %v1502, 7
        %v1504 = vsub.s32 3, %v1503
        %v1505 = vrot.slane %v483, %v1504
        %v1508 = vcombine.low %v1501, %v1505
        %1509 = vrot.lane.b32.xlu0 %v1508, 121
        %v1510 = vpop.permute.xlu0 %1509
        %v1511 = vrot.slane %v1510, 4
        %vm1512 = vcmask 990208
        %v1513 = vsel %vm1512, %v1511, %v1510
        %v1516 = vmul.f32 %v1496, %v1513
        %v1517 = vmul.f32 %v1497, %v1511
        %v1519 = vcombine.high %v1516, %v1516
        %v1521 = vpack.c.bf16 %v1516, %v1516
        %v1522 = vpack.c.bf16 %v1519, %v1519
        %v1523 = vpack.c.bf16 %v1517, %v1517
        %1527 = vrot.lane.b32.xlu0 %v1521, 7
        %v1528 = vpop.permute.xlu0 %1527
        %1529 = vrot.lane.b32.xlu0 %v1522, 7
        %v1530 = vpop.permute.xlu0 %1529
        %1531 = vrot.lane.b32.xlu0 %v1523, 7
        %v1532 = vpop.permute.xlu0 %1531
        %vm1533 = vcmask 56320
        %v1534 = vsel %vm1533, %v1528, %v1530
        %v1535 = vsel %vm1533, %v1530, %v1532
        %v1537 = vsel %vm554, %v464, 0
        %v1540 = vsel %vm558, %v1534, 0
        %v1543 = vsel %vm558, %v1535, 0
        %1545 = vmatprep.subr.bf16.mxu0 %v1543
        %1546 = vmatpush1.bf16.msra.mxu0 %v1540
        %1547 = vmatprep.subr.bf16.mxu0 0
        %1548 = vmatpush1.bf16.msra.mxu0 0
        %1549 = vmatprep.subr.bf16.mxu0 0
        %1550 = vmatpush1.bf16.msra.mxu0 0
        %1551 = vmatprep.subr.bf16.mxu0 0
        %1552 = vmatpush1.bf16.msra.mxu0 0
        %1553 = vmatprep.subr.bf16.mxu0 0
        %1554 = vmatpush1.bf16.msra.mxu0 0
        %1555 = vmatprep.subr.bf16.mxu0 0
        %1556 = vmatpush1.bf16.msra.mxu0 0
        %1557 = vmatprep.subr.bf16.mxu0 0
        %1558 = vmatpush1.bf16.msra.mxu0 0
        %1559 = vmatprep.subr.bf16.mxu0 0
        %1560 = vmatpush1.bf16.msra.mxu0 0
        %1561 = vmatprep.subr.bf16.mxu0 0
        %1562 = vmatpush1.bf16.msra.mxu0 0
        %1563 = vmatprep.subr.bf16.mxu0 0
        %1564 = vmatpush1.bf16.msra.mxu0 0
        %1565 = vmatprep.subr.bf16.mxu0 0
        %1566 = vmatpush1.bf16.msra.mxu0 0
        %1567 = vmatprep.subr.bf16.mxu0 0
        %1568 = vmatpush1.bf16.msra.mxu0 0
        %1569 = vmatprep.subr.bf16.mxu0 0
        %1570 = vmatpush1.bf16.msra.mxu0 0
        %1571 = vmatprep.subr.bf16.mxu0 0
        %1572 = vmatpush1.bf16.msra.mxu0 0
        %1573 = vmatprep.subr.bf16.mxu0 0
        %1574 = vmatpush1.bf16.msra.mxu0 0
        %1575 = vmatprep.subr.bf16.mxu0 0
        %1576 = vmatpush1.bf16.msra.mxu0 0
        %1577 = vmatprep.mubr.bf16.mxu0 0
        %1578 = vmatmul.mubr.bf16.gmra.mrb[0].mxu0 %v1537
        %v1579 = vpop.f32.mrb[0].mxu0
        %v1580 = vadd.f32 0.0, %v1579
        %v1581 = vpop.f32.mrb[0].mxu0
        %v1582 = vadd.f32 0.0, %v1581
        %v1583 = vpop.f32.mrb[0].mxu0
        %v1584 = vpop.f32.mrb[0].mxu0
        %1585 = vdwg.mxu0
        %v1586 = vadd.f32 %v1494, %v1580
        %v1587 = vadd.f32 %v1495, %v1582
        %v1588 = vld [vmem:[#allocation2] sm:$0xff]
        %v1589 = vld [vmem:[#allocation2 + $0x8] sm:$0xf]
        %v1590 = vlaneseq
        %v1591 = vshrl.u32 %v1590, 7
        %v1592 = vsub.s32 4, %v1591
        %v1593 = vrot.slane %v482, %v1592
        %v1594 = vlaneseq
        %v1595 = vshrl.u32 %v1594, 7
        %v1596 = vsub.s32 4, %v1595
        %v1597 = vrot.slane %v483, %v1596
        %v1600 = vcombine.low %v1593, %v1597
        %1601 = vrot.lane.b32.xlu0 %v1600, 127
        %v1602 = vpop.permute.xlu0 %1601
        %v1603 = vrot.slane %v1602, 4
        %vm1604 = vcmask 1039360
        %v1605 = vsel %vm1604, %v1603, %v1602
        %v1608 = vmul.f32 %v1588, %v1605
        %v1609 = vmul.f32 %v1589, %v1603
        %v1611 = vcombine.high %v1608, %v1608
        %v1613 = vpack.c.bf16 %v1608, %v1608
        %v1614 = vpack.c.bf16 %v1611, %v1611
        %v1615 = vpack.c.bf16 %v1609, %v1609
        %1619 = vrot.lane.b32.xlu0 %v1613, 1
        %v1620 = vpop.permute.xlu0 %1619
        %1621 = vrot.lane.b32.xlu0 %v1614, 1
        %v1622 = vpop.permute.xlu0 %1621
        %1623 = vrot.lane.b32.xlu0 %v1615, 1
        %v1624 = vpop.permute.xlu0 %1623
        %vm1625 = vcmask 7168
        %v1626 = vsel %vm1625, %v1620, %v1622
        %v1627 = vsel %vm1625, %v1622, %v1624
        %v1629 = vsel %vm554, %v465, 0
        %v1632 = vsel %vm558, %v1626, 0
        %v1635 = vsel %vm558, %v1627, 0
        %1637 = vmatprep.subr.bf16.mxu0 %v1635
        %1638 = vmatpush1.bf16.msra.mxu0 %v1632
        %1639 = vmatprep.subr.bf16.mxu0 0
        %1640 = vmatpush1.bf16.msra.mxu0 0
        %1641 = vmatprep.subr.bf16.mxu0 0
        %1642 = vmatpush1.bf16.msra.mxu0 0
        %1643 = vmatprep.subr.bf16.mxu0 0
        %1644 = vmatpush1.bf16.msra.mxu0 0
        %1645 = vmatprep.subr.bf16.mxu0 0
        %1646 = vmatpush1.bf16.msra.mxu0 0
        %1647 = vmatprep.subr.bf16.mxu0 0
        %1648 = vmatpush1.bf16.msra.mxu0 0
        %1649 = vmatprep.subr.bf16.mxu0 0
        %1650 = vmatpush1.bf16.msra.mxu0 0
        %1651 = vmatprep.subr.bf16.mxu0 0
        %1652 = vmatpush1.bf16.msra.mxu0 0
        %1653 = vmatprep.subr.bf16.mxu0 0
        %1654 = vmatpush1.bf16.msra.mxu0 0
        %1655 = vmatprep.subr.bf16.mxu0 0
        %1656 = vmatpush1.bf16.msra.mxu0 0
        %1657 = vmatprep.subr.bf16.mxu0 0
        %1658 = vmatpush1.bf16.msra.mxu0 0
        %1659 = vmatprep.subr.bf16.mxu0 0
        %1660 = vmatpush1.bf16.msra.mxu0 0
        %1661 = vmatprep.subr.bf16.mxu0 0
        %1662 = vmatpush1.bf16.msra.mxu0 0
        %1663 = vmatprep.subr.bf16.mxu0 0
        %1664 = vmatpush1.bf16.msra.mxu0 0
        %1665 = vmatprep.subr.bf16.mxu0 0
        %1666 = vmatpush1.bf16.msra.mxu0 0
        %1667 = vmatprep.subr.bf16.mxu0 0
        %1668 = vmatpush1.bf16.msra.mxu0 0
        %1669 = vmatprep.mubr.bf16.mxu0 0
        %1670 = vmatmul.mubr.bf16.gmra.mrb[0].mxu0 %v1629
        %v1671 = vpop.f32.mrb[0].mxu0
        %v1672 = vadd.f32 0.0, %v1671
        %v1673 = vpop.f32.mrb[0].mxu0
        %v1674 = vadd.f32 0.0, %v1673
        %v1675 = vpop.f32.mrb[0].mxu0
        %v1676 = vpop.f32.mrb[0].mxu0
        %1677 = vdwg.mxu0
        %v1678 = vadd.f32 %v1586, %v1672
        %v1679 = vadd.f32 %v1587, %v1674
        %v1680 = vld [vmem:[#allocation2 + $0x4] sm:$0xff]
        %v1682 = vcombine.high %v1680, %v1680
        %v1684 = vpack.c.bf16 %v1680, %v1680
        %v1685 = vpack.c.bf16 %v1682, %v1682
        %v1687 = vsel %vm554, %v466, 0
        %v1690 = vsel %vm558, %v1684, 0
        %v1693 = vsel %vm558, %v1685, 0
        %1695 = vmatprep.subr.bf16.mxu0 %v1693
        %1696 = vmatpush1.bf16.msra.mxu0 %v1690
        %1697 = vmatprep.subr.bf16.mxu0 0
        %1698 = vmatpush1.bf16.msra.mxu0 0
        %1699 = vmatprep.subr.bf16.mxu0 0
        %1700 = vmatpush1.bf16.msra.mxu0 0
        %1701 = vmatprep.subr.bf16.mxu0 0
        %1702 = vmatpush1.bf16.msra.mxu0 0
        %1703 = vmatprep.subr.bf16.mxu0 0
        %1704 = vmatpush1.bf16.msra.mxu0 0
        %1705 = vmatprep.subr.bf16.mxu0 0
        %1706 = vmatpush1.bf16.msra.mxu0 0
        %1707 = vmatprep.subr.bf16.mxu0 0
        %1708 = vmatpush1.bf16.msra.mxu0 0
        %1709 = vmatprep.subr.bf16.mxu0 0
        %1710 = vmatpush1.bf16.msra.mxu0 0
        %1711 = vmatprep.subr.bf16.mxu0 0
        %1712 = vmatpush1.bf16.msra.mxu0 0
        %1713 = vmatprep.subr.bf16.mxu0 0
        %1714 = vmatpush1.bf16.msra.mxu0 0
        %1715 = vmatprep.subr.bf16.mxu0 0
        %1716 = vmatpush1.bf16.msra.mxu0 0
        %1717 = vmatprep.subr.bf16.mxu0 0
        %1718 = vmatpush1.bf16.msra.mxu0 0
        %1719 = vmatprep.subr.bf16.mxu0 0
        %1720 = vmatpush1.bf16.msra.mxu0 0
        %1721 = vmatprep.subr.bf16.mxu0 0
        %1722 = vmatpush1.bf16.msra.mxu0 0
        %1723 = vmatprep.subr.bf16.mxu0 0
        %1724 = vmatpush1.bf16.msra.mxu0 0
        %1725 = vmatprep.subr.bf16.mxu0 0
        %1726 = vmatpush1.bf16.msra.mxu0 0
        %1727 = vmatprep.mubr.bf16.mxu0 0
        %1728 = vmatmul.mubr.bf16.gmra.mrb[0].mxu0 %v1687
        %v1729 = vpop.f32.mrb[0].mxu0
        %v1730 = vadd.f32 0.0, %v1729
        %v1731 = vpop.f32.mrb[0].mxu0
        %v1732 = vadd.f32 0.0, %v1731
        %v1733 = vpop.f32.mrb[0].mxu0
        %v1734 = vpop.f32.mrb[0].mxu0
        %1735 = vdwg.mxu0
        %v1736 = vadd.f32 %v1678, %v1730
        %v1737 = vadd.f32 %v1679, %v1732
        %v1738 = vld [vmem:[#allocation2 + $0x4] sm:$0xff]
        %v1739 = vld [vmem:[#allocation2 + $0xc] sm:$0xf]
        %v1740 = vlaneseq
        %v1741 = vshrl.u32 %v1740, 7
        %v1742 = vsub.s32 6, %v1741
        %v1743 = vrot.slane %v482, %v1742
        %v1744 = vlaneseq
        %v1745 = vshrl.u32 %v1744, 7
        %v1746 = vsub.s32 6, %v1745
        %v1747 = vrot.slane %v483, %v1746
        %v1750 = vcombine.low %v1743, %v1747
        %1751 = vrot.lane.b32.xlu0 %v1750, 1
        %v1752 = vpop.permute.xlu0 %1751
        %v1753 = vrot.slane %v1752, 4
        %vm1754 = vcmask 7168
        %v1755 = vsel %vm1754, %v1753, %v1752
        %v1758 = vmul.f32 %v1738, %v1755
        %v1759 = vmul.f32 %v1739, %v1753
        %v1761 = vcombine.high %v1758, %v1758
        %v1763 = vpack.c.bf16 %v1758, %v1758
        %v1764 = vpack.c.bf16 %v1761, %v1761
        %v1765 = vpack.c.bf16 %v1759, %v1759
        %1769 = vrot.lane.b32.xlu0 %v1763, 127
        %v1770 = vpop.permute.xlu0 %1769
        %1771 = vrot.lane.b32.xlu0 %v1764, 127
        %v1772 = vpop.permute.xlu0 %1771
        %1773 = vrot.lane.b32.xlu0 %v1765, 127
        %v1774 = vpop.permute.xlu0 %1773
        %vm1775 = vcmask 1039360
        %v1776 = vsel %vm1775, %v1770, %v1772
        %v1777 = vsel %vm1775, %v1772, %v1774
        %v1779 = vsel %vm554, %v467, 0
        %v1782 = vsel %vm558, %v1776, 0
        %v1785 = vsel %vm558, %v1777, 0
        %1787 = vmatprep.subr.bf16.mxu0 %v1785
        %1788 = vmatpush1.bf16.msra.mxu0 %v1782
        %1789 = vmatprep.subr.bf16.mxu0 0
        %1790 = vmatpush1.bf16.msra.mxu0 0
        %1791 = vmatprep.subr.bf16.mxu0 0
        %1792 = vmatpush1.bf16.msra.mxu0 0
        %1793 = vmatprep.subr.bf16.mxu0 0
        %1794 = vmatpush1.bf16.msra.mxu0 0
        %1795 = vmatprep.subr.bf16.mxu0 0
        %1796 = vmatpush1.bf16.msra.mxu0 0
        %1797 = vmatprep.subr.bf16.mxu0 0
        %1798 = vmatpush1.bf16.msra.mxu0 0
        %1799 = vmatprep.subr.bf16.mxu0 0
        %1800 = vmatpush1.bf16.msra.mxu0 0
        %1801 = vmatprep.subr.bf16.mxu0 0
        %1802 = vmatpush1.bf16.msra.mxu0 0
        %1803 = vmatprep.subr.bf16.mxu0 0
        %1804 = vmatpush1.bf16.msra.mxu0 0
        %1805 = vmatprep.subr.bf16.mxu0 0
        %1806 = vmatpush1.bf16.msra.mxu0 0
        %1807 = vmatprep.subr.bf16.mxu0 0
        %1808 = vmatpush1.bf16.msra.mxu0 0
        %1809 = vmatprep.subr.bf16.mxu0 0
        %1810 = vmatpush1.bf16.msra.mxu0 0
        %1811 = vmatprep.subr.bf16.mxu0 0
        %1812 = vmatpush1.bf16.msra.mxu0 0
        %1813 = vmatprep.subr.bf16.mxu0 0
        %1814 = vmatpush1.bf16.msra.mxu0 0
        %1815 = vmatprep.subr.bf16.mxu0 0
        %1816 = vmatpush1.bf16.msra.mxu0 0
        %1817 = vmatprep.subr.bf16.mxu0 0
        %1818 = vmatpush1.bf16.msra.mxu0 0
        %1819 = vmatprep.mubr.bf16.mxu0 0
        %1820 = vmatmul.mubr.bf16.gmra.mrb[0].mxu0 %v1779
        %v1821 = vpop.f32.mrb[0].mxu0
        %v1822 = vadd.f32 0.0, %v1821
        %v1823 = vpop.f32.mrb[0].mxu0
        %v1824 = vadd.f32 0.0, %v1823
        %v1825 = vpop.f32.mrb[0].mxu0
        %v1826 = vpop.f32.mrb[0].mxu0
        %1827 = vdwg.mxu0
        %v1828 = vadd.f32 %v1736, %v1822
        %v1829 = vadd.f32 %v1737, %v1824
        %v1830 = vld [vmem:[#allocation2 + $0x4] sm:$0xff]
        %v1831 = vld [vmem:[#allocation2 + $0xc] sm:$0xf]
        %v1832 = vlaneseq
        %v1833 = vshrl.u32 %v1832, 7
        %v1834 = vsub.s32 7, %v1833
        %v1835 = vrot.slane %v482, %v1834
        %v1836 = vlaneseq
        %v1837 = vshrl.u32 %v1836, 7
        %v1838 = vsub.s32 7, %v1837
        %v1839 = vrot.slane %v483, %v1838
        %v1842 = vcombine.low %v1835, %v1839
        %1843 = vrot.lane.b32.xlu0 %v1842, 7
        %v1844 = vpop.permute.xlu0 %1843
        %v1845 = vrot.slane %v1844, 4
        %vm1846 = vcmask 56320
        %v1847 = vsel %vm1846, %v1845, %v1844
        %v1850 = vmul.f32 %v1830, %v1847
        %v1851 = vmul.f32 %v1831, %v1845
        %v1853 = vcombine.high %v1850, %v1850
        %v1855 = vpack.c.bf16 %v1850, %v1850
        %v1856 = vpack.c.bf16 %v1853, %v1853
        %v1857 = vpack.c.bf16 %v1851, %v1851
        %1861 = vrot.lane.b32.xlu0 %v1855, 121
        %v1862 = vpop.permute.xlu0 %1861
        %1863 = vrot.lane.b32.xlu0 %v1856, 121
        %v1864 = vpop.permute.xlu0 %1863
        %1865 = vrot.lane.b32.xlu0 %v1857, 121
        %v1866 = vpop.permute.xlu0 %1865
        %vm1867 = vcmask 990208
        %v1868 = vsel %vm1867, %v1862, %v1864
        %v1869 = vsel %vm1867, %v1864, %v1866
        %v1871 = vsel %vm554, %v468, 0
        %v1874 = vsel %vm558, %v1868, 0
        %v1877 = vsel %vm558, %v1869, 0
        %1879 = vmatprep.subr.bf16.mxu0 %v1877
        %1880 = vmatpush1.bf16.msra.mxu0 %v1874
        %1881 = vmatprep.subr.bf16.mxu0 0
        %1882 = vmatpush1.bf16.msra.mxu0 0
        %1883 = vmatprep.subr.bf16.mxu0 0
        %1884 = vmatpush1.bf16.msra.mxu0 0
        %1885 = vmatprep.subr.bf16.mxu0 0
        %1886 = vmatpush1.bf16.msra.mxu0 0
        %1887 = vmatprep.subr.bf16.mxu0 0
        %1888 = vmatpush1.bf16.msra.mxu0 0
        %1889 = vmatprep.subr.bf16.mxu0 0
        %1890 = vmatpush1.bf16.msra.mxu0 0
        %1891 = vmatprep.subr.bf16.mxu0 0
        %1892 = vmatpush1.bf16.msra.mxu0 0
        %1893 = vmatprep.subr.bf16.mxu0 0
        %1894 = vmatpush1.bf16.msra.mxu0 0
        %1895 = vmatprep.subr.bf16.mxu0 0
        %1896 = vmatpush1.bf16.msra.mxu0 0
        %1897 = vmatprep.subr.bf16.mxu0 0
        %1898 = vmatpush1.bf16.msra.mxu0 0
        %1899 = vmatprep.subr.bf16.mxu0 0
        %1900 = vmatpush1.bf16.msra.mxu0 0
        %1901 = vmatprep.subr.bf16.mxu0 0
        %1902 = vmatpush1.bf16.msra.mxu0 0
        %1903 = vmatprep.subr.bf16.mxu0 0
        %1904 = vmatpush1.bf16.msra.mxu0 0
        %1905 = vmatprep.subr.bf16.mxu0 0
        %1906 = vmatpush1.bf16.msra.mxu0 0
        %1907 = vmatprep.subr.bf16.mxu0 0
        %1908 = vmatpush1.bf16.msra.mxu0 0
        %1909 = vmatprep.subr.bf16.mxu0 0
        %1910 = vmatpush1.bf16.msra.mxu0 0
        %1911 = vmatprep.mubr.bf16.mxu0 0
        %1912 = vmatmul.mubr.bf16.gmra.mrb[0].mxu0 %v1871
        %v1913 = vpop.f32.mrb[0].mxu0
        %v1914 = vadd.f32 0.0, %v1913
        %v1915 = vpop.f32.mrb[0].mxu0
        %v1916 = vadd.f32 0.0, %v1915
        %v1917 = vpop.f32.mrb[0].mxu0
        %v1918 = vpop.f32.mrb[0].mxu0
        %1919 = vdwg.mxu0
        %v1920 = vadd.f32 %v1828, %v1914
        %v1921 = vadd.f32 %v1829, %v1916
        %v1922 = vld [vmem:[#allocation2 + $0x4] sm:$0xff]
        %v1923 = vld [vmem:[#allocation2 + $0xc] sm:$0xf]
        %v1924 = vlaneseq
        %v1925 = vshrl.u32 %v1924, 7
        %v1926 = vsub.s32 0, %v1925
        %v1927 = vrot.slane %v484, %v1926
        %v1928 = vlaneseq
        %v1929 = vshrl.u32 %v1928, 7
        %v1930 = vsub.s32 0, %v1929
        %v1931 = vrot.slane %v485, %v1930
        %v1934 = vcombine.low %v1927, %v1931
        %1935 = vrot.lane.b32.xlu0 %v1934, 8
        %v1936 = vpop.permute.xlu0 %1935
        %v1937 = vrot.slane %v1936, 4
        %vm1938 = vcmask 64512
        %v1939 = vsel %vm1938, %v1937, %v1936
        %v1942 = vmul.f32 %v1922, %v1939
        %v1943 = vmul.f32 %v1923, %v1937
        %v1945 = vcombine.high %v1942, %v1942
        %v1947 = vpack.c.bf16 %v1942, %v1942
        %v1948 = vpack.c.bf16 %v1945, %v1945
        %v1949 = vpack.c.bf16 %v1943, %v1943
        %1953 = vrot.lane.b32.xlu0 %v1947, 120
        %v1954 = vpop.permute.xlu0 %1953
        %1955 = vrot.lane.b32.xlu0 %v1948, 120
        %v1956 = vpop.permute.xlu0 %1955
        %1957 = vrot.lane.b32.xlu0 %v1949, 120
        %v1958 = vpop.permute.xlu0 %1957
        %vm1959 = vcmask 982016
        %v1960 = vsel %vm1959, %v1954, %v1956
        %v1961 = vsel %vm1959, %v1956, %v1958
        %v1963 = vsel %vm554, %v469, 0
        %v1966 = vsel %vm558, %v1960, 0
        %v1969 = vsel %vm558, %v1961, 0
        %1971 = vmatprep.subr.bf16.mxu0 %v1969
        %1972 = vmatpush1.bf16.msra.mxu0 %v1966
        %1973 = vmatprep.subr.bf16.mxu0 0
        %1974 = vmatpush1.bf16.msra.mxu0 0
        %1975 = vmatprep.subr.bf16.mxu0 0
        %1976 = vmatpush1.bf16.msra.mxu0 0
        %1977 = vmatprep.subr.bf16.mxu0 0
        %1978 = vmatpush1.bf16.msra.mxu0 0
        %1979 = vmatprep.subr.bf16.mxu0 0
        %1980 = vmatpush1.bf16.msra.mxu0 0
        %1981 = vmatprep.subr.bf16.mxu0 0
        %1982 = vmatpush1.bf16.msra.mxu0 0
        %1983 = vmatprep.subr.bf16.mxu0 0
        %1984 = vmatpush1.bf16.msra.mxu0 0
        %1985 = vmatprep.subr.bf16.mxu0 0
        %1986 = vmatpush1.bf16.msra.mxu0 0
        %1987 = vmatprep.subr.bf16.mxu0 0
        %1988 = vmatpush1.bf16.msra.mxu0 0
        %1989 = vmatprep.subr.bf16.mxu0 0
        %1990 = vmatpush1.bf16.msra.mxu0 0
        %1991 = vmatprep.subr.bf16.mxu0 0
        %1992 = vmatpush1.bf16.msra.mxu0 0
        %1993 = vmatprep.subr.bf16.mxu0 0
        %1994 = vmatpush1.bf16.msra.mxu0 0
        %1995 = vmatprep.subr.bf16.mxu0 0
        %1996 = vmatpush1.bf16.msra.mxu0 0
        %1997 = vmatprep.subr.bf16.mxu0 0
        %1998 = vmatpush1.bf16.msra.mxu0 0
        %1999 = vmatprep.subr.bf16.mxu0 0
        %2000 = vmatpush1.bf16.msra.mxu0 0
        %2001 = vmatprep.subr.bf16.mxu0 0
        %2002 = vmatpush1.bf16.msra.mxu0 0
        %2003 = vmatprep.mubr.bf16.mxu0 0
        %2004 = vmatmul.mubr.bf16.gmra.mrb[0].mxu0 %v1963
        %v2005 = vpop.f32.mrb[0].mxu0
        %v2006 = vadd.f32 0.0, %v2005
        %v2007 = vpop.f32.mrb[0].mxu0
        %v2008 = vadd.f32 0.0, %v2007
        %v2009 = vpop.f32.mrb[0].mxu0
        %v2010 = vpop.f32.mrb[0].mxu0
        %2011 = vdwg.mxu0
        %v2012 = vadd.f32 %v1920, %v2006
        %v2013 = vadd.f32 %v1921, %v2008
        %v2014 = vld [vmem:[#allocation2 + $0x4] sm:$0xff]
        %v2015 = vld [vmem:[#allocation2 + $0xc] sm:$0xf]
        %v2016 = vlaneseq
        %v2017 = vshrl.u32 %v2016, 7
        %v2018 = vsub.s32 1, %v2017
        %v2019 = vrot.slane %v484, %v2018
        %v2020 = vlaneseq
        %v2021 = vshrl.u32 %v2020, 7
        %v2022 = vsub.s32 1, %v2021
        %v2023 = vrot.slane %v485, %v2022
        %v2026 = vcombine.low %v2019, %v2023
        %2027 = vrot.lane.b32.xlu0 %v2026, 9
        %v2028 = vpop.permute.xlu0 %2027
        %v2029 = vrot.slane %v2028, 4
        %vm2030 = vcmask 72704
        %v2031 = vsel %vm2030, %v2029, %v2028
        %v2034 = vmul.f32 %v2014, %v2031
        %v2035 = vmul.f32 %v2015, %v2029
        %v2037 = vcombine.high %v2034, %v2034
        %v2039 = vpack.c.bf16 %v2034, %v2034
        %v2040 = vpack.c.bf16 %v2037, %v2037
        %v2041 = vpack.c.bf16 %v2035, %v2035
        %2045 = vrot.lane.b32.xlu0 %v2039, 119
        %v2046 = vpop.permute.xlu0 %2045
        %2047 = vrot.lane.b32.xlu0 %v2040, 119
        %v2048 = vpop.permute.xlu0 %2047
        %2049 = vrot.lane.b32.xlu0 %v2041, 119
        %v2050 = vpop.permute.xlu0 %2049
        %vm2051 = vcmask 973824
        %v2052 = vsel %vm2051, %v2046, %v2048
        %v2053 = vsel %vm2051, %v2048, %v2050
        %v2055 = vsel %vm554, %v470, 0
        %v2058 = vsel %vm558, %v2052, 0
        %v2061 = vsel %vm558, %v2053, 0
        %2063 = vmatprep.subr.bf16.mxu0 %v2061
        %2064 = vmatpush1.bf16.msra.mxu0 %v2058
        %2065 = vmatprep.subr.bf16.mxu0 0
        %2066 = vmatpush1.bf16.msra.mxu0 0
        %2067 = vmatprep.subr.bf16.mxu0 0
        %2068 = vmatpush1.bf16.msra.mxu0 0
        %2069 = vmatprep.subr.bf16.mxu0 0
        %2070 = vmatpush1.bf16.msra.mxu0 0
        %2071 = vmatprep.subr.bf16.mxu0 0
        %2072 = vmatpush1.bf16.msra.mxu0 0
        %2073 = vmatprep.subr.bf16.mxu0 0
        %2074 = vmatpush1.bf16.msra.mxu0 0
        %2075 = vmatprep.subr.bf16.mxu0 0
        %2076 = vmatpush1.bf16.msra.mxu0 0
        %2077 = vmatprep.subr.bf16.mxu0 0
        %2078 = vmatpush1.bf16.msra.mxu0 0
        %2079 = vmatprep.subr.bf16.mxu0 0
        %2080 = vmatpush1.bf16.msra.mxu0 0
        %2081 = vmatprep.subr.bf16.mxu0 0
        %2082 = vmatpush1.bf16.msra.mxu0 0
        %2083 = vmatprep.subr.bf16.mxu0 0
        %2084 = vmatpush1.bf16.msra.mxu0 0
        %2085 = vmatprep.subr.bf16.mxu0 0
        %2086 = vmatpush1.bf16.msra.mxu0 0
        %2087 = vmatprep.subr.bf16.mxu0 0
        %2088 = vmatpush1.bf16.msra.mxu0 0
        %2089 = vmatprep.subr.bf16.mxu0 0
        %2090 = vmatpush1.bf16.msra.mxu0 0
        %2091 = vmatprep.subr.bf16.mxu0 0
        %2092 = vmatpush1.bf16.msra.mxu0 0
        %2093 = vmatprep.subr.bf16.mxu0 0
        %2094 = vmatpush1.bf16.msra.mxu0 0
        %2095 = vmatprep.mubr.bf16.mxu0 0
        %2096 = vmatmul.mubr.bf16.gmra.mrb[0].mxu0 %v2055
        %v2097 = vpop.f32.mrb[0].mxu0
        %v2098 = vadd.f32 0.0, %v2097
        %v2099 = vpop.f32.mrb[0].mxu0
        %v2100 = vadd.f32 0.0, %v2099
        %v2101 = vpop.f32.mrb[0].mxu0
        %v2102 = vpop.f32.mrb[0].mxu0
        %2103 = vdwg.mxu0
        %v2104 = vadd.f32 %v2012, %v2098
        %v2105 = vadd.f32 %v2013, %v2100
        %v2106 = vld [vmem:[#allocation2 + $0x4] sm:$0xff]
        %v2107 = vld [vmem:[#allocation2 + $0xc] sm:$0xf]
        %v2108 = vlaneseq
        %v2109 = vshrl.u32 %v2108, 7
        %v2110 = vsub.s32 2, %v2109
        %v2111 = vrot.slane %v484, %v2110
        %v2112 = vlaneseq
        %v2113 = vshrl.u32 %v2112, 7
        %v2114 = vsub.s32 2, %v2113
        %v2115 = vrot.slane %v485, %v2114
        %v2118 = vcombine.low %v2111, %v2115
        %2119 = vrot.lane.b32.xlu0 %v2118, 55
        %v2120 = vpop.permute.xlu0 %2119
        %v2121 = vrot.slane %v2120, 4
        %v2122 = vsel %vm504, %v2121, %v2120
        %v2125 = vmul.f32 %v2106, %v2122
        %v2126 = vmul.f32 %v2107, %v2121
        %v2128 = vcombine.high %v2125, %v2125
        %v2130 = vpack.c.bf16 %v2125, %v2125
        %v2131 = vpack.c.bf16 %v2128, %v2128
        %v2132 = vpack.c.bf16 %v2126, %v2126
        %2136 = vrot.lane.b32.xlu0 %v2130, 73
        %v2137 = vpop.permute.xlu0 %2136
        %2138 = vrot.lane.b32.xlu0 %v2131, 73
        %v2139 = vpop.permute.xlu0 %2138
        %2140 = vrot.lane.b32.xlu0 %v2132, 73
        %v2141 = vpop.permute.xlu0 %2140
        %v2142 = vsel %vm615, %v2137, %v2139
        %v2143 = vsel %vm615, %v2139, %v2141
        %v2145 = vsel %vm554, %v471, 0
        %v2148 = vsel %vm558, %v2142, 0
        %v2151 = vsel %vm558, %v2143, 0
        %2153 = vmatprep.subr.bf16.mxu0 %v2151
        %2154 = vmatpush1.bf16.msra.mxu0 %v2148
        %2155 = vmatprep.subr.bf16.mxu0 0
        %2156 = vmatpush1.bf16.msra.mxu0 0
        %2157 = vmatprep.subr.bf16.mxu0 0
        %2158 = vmatpush1.bf16.msra.mxu0 0
        %2159 = vmatprep.subr.bf16.mxu0 0
        %2160 = vmatpush1.bf16.msra.mxu0 0
        %2161 = vmatprep.subr.bf16.mxu0 0
        %2162 = vmatpush1.bf16.msra.mxu0 0
        %2163 = vmatprep.subr.bf16.mxu0 0
        %2164 = vmatpush1.bf16.msra.mxu0 0
        %2165 = vmatprep.subr.bf16.mxu0 0
        %2166 = vmatpush1.bf16.msra.mxu0 0
        %2167 = vmatprep.subr.bf16.mxu0 0
        %2168 = vmatpush1.bf16.msra.mxu0 0
        %2169 = vmatprep.subr.bf16.mxu0 0
        %2170 = vmatpush1.bf16.msra.mxu0 0
        %2171 = vmatprep.subr.bf16.mxu0 0
        %2172 = vmatpush1.bf16.msra.mxu0 0
        %2173 = vmatprep.subr.bf16.mxu0 0
        %2174 = vmatpush1.bf16.msra.mxu0 0
        %2175 = vmatprep.subr.bf16.mxu0 0
        %2176 = vmatpush1.bf16.msra.mxu0 0
        %2177 = vmatprep.subr.bf16.mxu0 0
        %2178 = vmatpush1.bf16.msra.mxu0 0
        %2179 = vmatprep.subr.bf16.mxu0 0
        %2180 = vmatpush1.bf16.msra.mxu0 0
        %2181 = vmatprep.subr.bf16.mxu0 0
        %2182 = vmatpush1.bf16.msra.mxu0 0
        %2183 = vmatprep.subr.bf16.mxu0 0
        %2184 = vmatpush1.bf16.msra.mxu0 0
        %2185 = vmatprep.mubr.bf16.mxu0 0
        %2186 = vmatmul.mubr.bf16.gmra.mrb[0].mxu0 %v2145
        %v2187 = vpop.f32.mrb[0].mxu0
        %v2188 = vadd.f32 0.0, %v2187
        %v2189 = vpop.f32.mrb[0].mxu0
        %v2190 = vadd.f32 0.0, %v2189
        %v2191 = vpop.f32.mrb[0].mxu0
        %v2192 = vpop.f32.mrb[0].mxu0
        %2193 = vdwg.mxu0
        %v2194 = vadd.f32 %v2104, %v2188
        %v2195 = vadd.f32 %v2105, %v2190
        %v2196 = vld [vmem:[#allocation2 + $0x4] sm:$0xff]
        %v2197 = vld [vmem:[#allocation2 + $0xc] sm:$0xf]
        %v2198 = vlaneseq
        %v2199 = vshrl.u32 %v2198, 7
        %v2200 = vsub.s32 3, %v2199
        %v2201 = vrot.slane %v484, %v2200
        %v2202 = vlaneseq
        %v2203 = vshrl.u32 %v2202, 7
        %v2204 = vsub.s32 3, %v2203
        %v2205 = vrot.slane %v485, %v2204
        %v2208 = vcombine.low %v2201, %v2205
        %2209 = vrot.lane.b32.xlu0 %v2208, 56
        %v2210 = vpop.permute.xlu0 %2209
        %v2211 = vrot.slane %v2210, 4
        %v2212 = vsel %vm530, %v2211, %v2210
        %v2215 = vmul.f32 %v2196, %v2212
        %v2216 = vmul.f32 %v2197, %v2211
        %v2218 = vcombine.high %v2215, %v2215
        %v2220 = vpack.c.bf16 %v2215, %v2215
        %v2221 = vpack.c.bf16 %v2218, %v2218
        %v2222 = vpack.c.bf16 %v2216, %v2216
        %2226 = vrot.lane.b32.xlu0 %v2220, 72
        %v2227 = vpop.permute.xlu0 %2226
        %2228 = vrot.lane.b32.xlu0 %v2221, 72
        %v2229 = vpop.permute.xlu0 %2228
        %2230 = vrot.lane.b32.xlu0 %v2222, 72
        %v2231 = vpop.permute.xlu0 %2230
        %v2232 = vsel %vm551, %v2227, %v2229
        %v2233 = vsel %vm551, %v2229, %v2231
        %v2235 = vsel %vm554, %v472, 0
        %v2238 = vsel %vm558, %v2232, 0
        %v2241 = vsel %vm558, %v2233, 0
        %2243 = vmatprep.subr.bf16.mxu0 %v2241
        %2244 = vmatpush1.bf16.msra.mxu0 %v2238
        %2245 = vmatprep.subr.bf16.mxu0 0
        %2246 = vmatpush1.bf16.msra.mxu0 0
        %2247 = vmatprep.subr.bf16.mxu0 0
        %2248 = vmatpush1.bf16.msra.mxu0 0
        %2249 = vmatprep.subr.bf16.mxu0 0
        %2250 = vmatpush1.bf16.msra.mxu0 0
        %2251 = vmatprep.subr.bf16.mxu0 0
        %2252 = vmatpush1.bf16.msra.mxu0 0
        %2253 = vmatprep.subr.bf16.mxu0 0
        %2254 = vmatpush1.bf16.msra.mxu0 0
        %2255 = vmatprep.subr.bf16.mxu0 0
        %2256 = vmatpush1.bf16.msra.mxu0 0
        %2257 = vmatprep.subr.bf16.mxu0 0
        %2258 = vmatpush1.bf16.msra.mxu0 0
        %2259 = vmatprep.subr.bf16.mxu0 0
        %2260 = vmatpush1.bf16.msra.mxu0 0
        %2261 = vmatprep.subr.bf16.mxu0 0
        %2262 = vmatpush1.bf16.msra.mxu0 0
        %2263 = vmatprep.subr.bf16.mxu0 0
        %2264 = vmatpush1.bf16.msra.mxu0 0
        %2265 = vmatprep.subr.bf16.mxu0 0
        %2266 = vmatpush1.bf16.msra.mxu0 0
        %2267 = vmatprep.subr.bf16.mxu0 0
        %2268 = vmatpush1.bf16.msra.mxu0 0
        %2269 = vmatprep.subr.bf16.mxu0 0
        %2270 = vmatpush1.bf16.msra.mxu0 0
        %2271 = vmatprep.subr.bf16.mxu0 0
        %2272 = vmatpush1.bf16.msra.mxu0 0
        %2273 = vmatprep.subr.bf16.mxu0 0
        %2274 = vmatpush1.bf16.msra.mxu0 0
        %2275 = vmatprep.mubr.bf16.mxu0 0
        %2276 = vmatmul.mubr.bf16.gmra.mrb[0].mxu0 %v2235
        %v2277 = vpop.f32.mrb[0].mxu0
        %v2278 = vadd.f32 0.0, %v2277
        %v2279 = vpop.f32.mrb[0].mxu0
        %v2280 = vadd.f32 0.0, %v2279
        %v2281 = vpop.f32.mrb[0].mxu0
        %v2282 = vpop.f32.mrb[0].mxu0
        %2283 = vdwg.mxu0
        %v2284 = vadd.f32 %v2194, %v2278
        %v2285 = vadd.f32 %v2195, %v2280
        %v2286 = vld [vmem:[#allocation2 + $0x4] sm:$0xff]
        %v2287 = vld [vmem:[#allocation2 + $0xc] sm:$0xf]
        %v2288 = vlaneseq
        %v2289 = vshrl.u32 %v2288, 7
        %v2290 = vsub.s32 4, %v2289
        %v2291 = vrot.slane %v484, %v2290
        %v2292 = vlaneseq
        %v2293 = vshrl.u32 %v2292, 7
        %v2294 = vsub.s32 4, %v2293
        %v2295 = vrot.slane %v485, %v2294
        %v2298 = vcombine.low %v2291, %v2295
        %2299 = vrot.lane.b32.xlu0 %v2298, 57
        %v2300 = vpop.permute.xlu0 %2299
        %v2301 = vrot.slane %v2300, 4
        %v2302 = vsel %vm684, %v2301, %v2300
        %v2305 = vmul.f32 %v2286, %v2302
        %v2306 = vmul.f32 %v2287, %v2301
        %v2308 = vcombine.high %v2305, %v2305
        %v2310 = vpack.c.bf16 %v2305, %v2305
        %v2311 = vpack.c.bf16 %v2308, %v2308
        %v2312 = vpack.c.bf16 %v2306, %v2306
        %2316 = vrot.lane.b32.xlu0 %v2310, 71
        %v2317 = vpop.permute.xlu0 %2316
        %2318 = vrot.lane.b32.xlu0 %v2311, 71
        %v2319 = vpop.permute.xlu0 %2318
        %2320 = vrot.lane.b32.xlu0 %v2312, 71
        %v2321 = vpop.permute.xlu0 %2320
        %v2322 = vsel %vm705, %v2317, %v2319
        %v2323 = vsel %vm705, %v2319, %v2321
        %v2325 = vsel %vm554, %v473, 0
        %v2328 = vsel %vm558, %v2322, 0
        %v2331 = vsel %vm558, %v2323, 0
        %2333 = vmatprep.subr.bf16.mxu0 %v2331
        %2334 = vmatpush1.bf16.msra.mxu0 %v2328
        %2335 = vmatprep.subr.bf16.mxu0 0
        %2336 = vmatpush1.bf16.msra.mxu0 0
        %2337 = vmatprep.subr.bf16.mxu0 0
        %2338 = vmatpush1.bf16.msra.mxu0 0
        %2339 = vmatprep.subr.bf16.mxu0 0
        %2340 = vmatpush1.bf16.msra.mxu0 0
        %2341 = vmatprep.subr.bf16.mxu0 0
        %2342 = vmatpush1.bf16.msra.mxu0 0
        %2343 = vmatprep.subr.bf16.mxu0 0
        %2344 = vmatpush1.bf16.msra.mxu0 0
        %2345 = vmatprep.subr.bf16.mxu0 0
        %2346 = vmatpush1.bf16.msra.mxu0 0
        %2347 = vmatprep.subr.bf16.mxu0 0
        %2348 = vmatpush1.bf16.msra.mxu0 0
        %2349 = vmatprep.subr.bf16.mxu0 0
        %2350 = vmatpush1.bf16.msra.mxu0 0
        %2351 = vmatprep.subr.bf16.mxu0 0
        %2352 = vmatpush1.bf16.msra.mxu0 0
        %2353 = vmatprep.subr.bf16.mxu0 0
        %2354 = vmatpush1.bf16.msra.mxu0 0
        %2355 = vmatprep.subr.bf16.mxu0 0
        %2356 = vmatpush1.bf16.msra.mxu0 0
        %2357 = vmatprep.subr.bf16.mxu0 0
        %2358 = vmatpush1.bf16.msra.mxu0 0
        %2359 = vmatprep.subr.bf16.mxu0 0
        %2360 = vmatpush1.bf16.msra.mxu0 0
        %2361 = vmatprep.subr.bf16.mxu0 0
        %2362 = vmatpush1.bf16.msra.mxu0 0
        %2363 = vmatprep.subr.bf16.mxu0 0
        %2364 = vmatpush1.bf16.msra.mxu0 0
        %2365 = vmatprep.mubr.bf16.mxu0 0
        %2366 = vmatmul.mubr.bf16.gmra.mrb[0].mxu0 %v2325
        %v2367 = vpop.f32.mrb[0].mxu0
        %v2368 = vadd.f32 0.0, %v2367
        %v2369 = vpop.f32.mrb[0].mxu0
        %v2370 = vadd.f32 0.0, %v2369
        %v2371 = vpop.f32.mrb[0].mxu0
        %v2372 = vpop.f32.mrb[0].mxu0
        %2373 = vdwg.mxu0
        %v2374 = vadd.f32 %v2284, %v2368
        %v2375 = vadd.f32 %v2285, %v2370
        %v2376 = vld [vmem:[#allocation2 + $0x4] sm:$0xff]
        %v2377 = vld [vmem:[#allocation2 + $0xc] sm:$0xf]
        %v2378 = vlaneseq
        %v2379 = vshrl.u32 %v2378, 7
        %v2380 = vsub.s32 5, %v2379
        %v2381 = vrot.slane %v484, %v2380
        %v2382 = vlaneseq
        %v2383 = vshrl.u32 %v2382, 7
        %v2384 = vsub.s32 5, %v2383
        %v2385 = vrot.slane %v485, %v2384
        %v2388 = vcombine.low %v2381, %v2385
        %2389 = vrot.lane.b32.xlu0 %v2388, 63
        %v2390 = vpop.permute.xlu0 %2389
        %v2391 = vrot.slane %v2390, 4
        %v2392 = vsel %vm776, %v2391, %v2390
        %v2395 = vmul.f32 %v2376, %v2392
        %v2396 = vmul.f32 %v2377, %v2391
        %v2398 = vcombine.high %v2395, %v2395
        %v2400 = vpack.c.bf16 %v2395, %v2395
        %v2401 = vpack.c.bf16 %v2398, %v2398
        %v2402 = vpack.c.bf16 %v2396, %v2396
        %2406 = vrot.lane.b32.xlu0 %v2400, 65
        %v2407 = vpop.permute.xlu0 %2406
        %2408 = vrot.lane.b32.xlu0 %v2401, 65
        %v2409 = vpop.permute.xlu0 %2408
        %2410 = vrot.lane.b32.xlu0 %v2402, 65
        %v2411 = vpop.permute.xlu0 %2410
        %v2412 = vsel %vm797, %v2407, %v2409
        %v2413 = vsel %vm797, %v2409, %v2411
        %v2415 = vsel %vm554, %v474, 0
        %v2418 = vsel %vm558, %v2412, 0
        %v2421 = vsel %vm558, %v2413, 0
        %2423 = vmatprep.subr.bf16.mxu0 %v2421
        %2424 = vmatpush1.bf16.msra.mxu0 %v2418
        %2425 = vmatprep.subr.bf16.mxu0 0
        %2426 = vmatpush1.bf16.msra.mxu0 0
        %2427 = vmatprep.subr.bf16.mxu0 0
        %2428 = vmatpush1.bf16.msra.mxu0 0
        %2429 = vmatprep.subr.bf16.mxu0 0
        %2430 = vmatpush1.bf16.msra.mxu0 0
        %2431 = vmatprep.subr.bf16.mxu0 0
        %2432 = vmatpush1.bf16.msra.mxu0 0
        %2433 = vmatprep.subr.bf16.mxu0 0
        %2434 = vmatpush1.bf16.msra.mxu0 0
        %2435 = vmatprep.subr.bf16.mxu0 0
        %2436 = vmatpush1.bf16.msra.mxu0 0
        %2437 = vmatprep.subr.bf16.mxu0 0
        %2438 = vmatpush1.bf16.msra.mxu0 0
        %2439 = vmatprep.subr.bf16.mxu0 0
        %2440 = vmatpush1.bf16.msra.mxu0 0
        %2441 = vmatprep.subr.bf16.mxu0 0
        %2442 = vmatpush1.bf16.msra.mxu0 0
        %2443 = vmatprep.subr.bf16.mxu0 0
        %2444 = vmatpush1.bf16.msra.mxu0 0
        %2445 = vmatprep.subr.bf16.mxu0 0
        %2446 = vmatpush1.bf16.msra.mxu0 0
        %2447 = vmatprep.subr.bf16.mxu0 0
        %2448 = vmatpush1.bf16.msra.mxu0 0
        %2449 = vmatprep.subr.bf16.mxu0 0
        %2450 = vmatpush1.bf16.msra.mxu0 0
        %2451 = vmatprep.subr.bf16.mxu0 0
        %2452 = vmatpush1.bf16.msra.mxu0 0
        %2453 = vmatprep.subr.bf16.mxu0 0
        %2454 = vmatpush1.bf16.msra.mxu0 0
        %2455 = vmatprep.mubr.bf16.mxu0 0
        %2456 = vmatmul.mubr.bf16.gmra.mrb[0].mxu0 %v2415
        %v2457 = vpop.f32.mrb[0].mxu0
        %v2458 = vadd.f32 0.0, %v2457
        %v2459 = vpop.f32.mrb[0].mxu0
        %v2460 = vadd.f32 0.0, %v2459
        %v2461 = vpop.f32.mrb[0].mxu0
        %v2462 = vpop.f32.mrb[0].mxu0
        %2463 = vdwg.mxu0
        %v2464 = vadd.f32 %v2374, %v2458
        %v2465 = vadd.f32 %v2375, %v2460
        %v2466 = vld [vmem:[#allocation2 + $0x4] sm:$0xff]
        %v2467 = vld [vmem:[#allocation2 + $0xc] sm:$0xf]
        %v2468 = vlaneseq
        %v2469 = vshrl.u32 %v2468, 7
        %v2470 = vsub.s32 6, %v2469
        %v2471 = vrot.slane %v484, %v2470
        %v2472 = vlaneseq
        %v2473 = vshrl.u32 %v2472, 7
        %v2474 = vsub.s32 6, %v2473
        %v2475 = vrot.slane %v485, %v2474
        %v2478 = vcombine.low %v2471, %v2475
        %2479 = vrot.lane.b32.xlu0 %v2478, 64
        %v2480 = vpop.permute.xlu0 %2479
        %v2481 = vrot.slane %v2480, 4
        %v2482 = vsel %vm868, %v2481, %v2480
        %v2485 = vmul.f32 %v2466, %v2482
        %v2486 = vmul.f32 %v2467, %v2481
        %v2488 = vcombine.high %v2485, %v2485
        %v2490 = vpack.c.bf16 %v2485, %v2485
        %v2491 = vpack.c.bf16 %v2488, %v2488
        %v2492 = vpack.c.bf16 %v2486, %v2486
        %2496 = vrot.lane.b32.xlu0 %v2490, 64
        %v2497 = vpop.permute.xlu0 %2496
        %2498 = vrot.lane.b32.xlu0 %v2491, 64
        %v2499 = vpop.permute.xlu0 %2498
        %2500 = vrot.lane.b32.xlu0 %v2492, 64
        %v2501 = vpop.permute.xlu0 %2500
        %v2502 = vsel %vm889, %v2497, %v2499
        %v2503 = vsel %vm889, %v2499, %v2501
        %v2505 = vsel %vm554, %v475, 0
        %v2508 = vsel %vm558, %v2502, 0
        %v2511 = vsel %vm558, %v2503, 0
        %2513 = vmatprep.subr.bf16.mxu0 %v2511
        %2514 = vmatpush1.bf16.msra.mxu0 %v2508
        %2515 = vmatprep.subr.bf16.mxu0 0
        %2516 = vmatpush1.bf16.msra.mxu0 0
        %2517 = vmatprep.subr.bf16.mxu0 0
        %2518 = vmatpush1.bf16.msra.mxu0 0
        %2519 = vmatprep.subr.bf16.mxu0 0
        %2520 = vmatpush1.bf16.msra.mxu0 0
        %2521 = vmatprep.subr.bf16.mxu0 0
        %2522 = vmatpush1.bf16.msra.mxu0 0
        %2523 = vmatprep.subr.bf16.mxu0 0
        %2524 = vmatpush1.bf16.msra.mxu0 0
        %2525 = vmatprep.subr.bf16.mxu0 0
        %2526 = vmatpush1.bf16.msra.mxu0 0
        %2527 = vmatprep.subr.bf16.mxu0 0
        %2528 = vmatpush1.bf16.msra.mxu0 0
        %2529 = vmatprep.subr.bf16.mxu0 0
        %2530 = vmatpush1.bf16.msra.mxu0 0
        %2531 = vmatprep.subr.bf16.mxu0 0
        %2532 = vmatpush1.bf16.msra.mxu0 0
        %2533 = vmatprep.subr.bf16.mxu0 0
        %2534 = vmatpush1.bf16.msra.mxu0 0
        %2535 = vmatprep.subr.bf16.mxu0 0
        %2536 = vmatpush1.bf16.msra.mxu0 0
        %2537 = vmatprep.subr.bf16.mxu0 0
        %2538 = vmatpush1.bf16.msra.mxu0 0
        %2539 = vmatprep.subr.bf16.mxu0 0
        %2540 = vmatpush1.bf16.msra.mxu0 0
        %2541 = vmatprep.subr.bf16.mxu0 0
        %2542 = vmatpush1.bf16.msra.mxu0 0
        %2543 = vmatprep.subr.bf16.mxu0 0
        %2544 = vmatpush1.bf16.msra.mxu0 0
        %2545 = vmatprep.mubr.bf16.mxu0 0
        %2546 = vmatmul.mubr.bf16.gmra.mrb[0].mxu0 %v2505
        %v2547 = vpop.f32.mrb[0].mxu0
        %v2548 = vadd.f32 0.0, %v2547
        %v2549 = vpop.f32.mrb[0].mxu0
        %v2550 = vadd.f32 0.0, %v2549
        %v2551 = vpop.f32.mrb[0].mxu0
        %v2552 = vpop.f32.mrb[0].mxu0
        %2553 = vdwg.mxu0
        %v2554 = vadd.f32 %v2464, %v2548
        %v2555 = vadd.f32 %v2465, %v2550
        %v2556 = vld [vmem:[#allocation2 + $0x4] sm:$0xff]
        %v2557 = vld [vmem:[#allocation2 + $0xc] sm:$0xf]
        %v2558 = vlaneseq
        %v2559 = vshrl.u32 %v2558, 7
        %v2560 = vsub.s32 7, %v2559
        %v2561 = vrot.slane %v484, %v2560
        %v2562 = vlaneseq
        %v2563 = vshrl.u32 %v2562, 7
        %v2564 = vsub.s32 7, %v2563
        %v2565 = vrot.slane %v485, %v2564
        %v2568 = vcombine.low %v2561, %v2565
        %2569 = vrot.lane.b32.xlu0 %v2568, 65
        %v2570 = vpop.permute.xlu0 %2569
        %v2571 = vrot.slane %v2570, 4
        %v2572 = vsel %vm960, %v2571, %v2570
        %v2575 = vmul.f32 %v2556, %v2572
        %v2576 = vmul.f32 %v2557, %v2571
        %v2578 = vcombine.high %v2575, %v2575
        %v2580 = vpack.c.bf16 %v2575, %v2575
        %v2581 = vpack.c.bf16 %v2578, %v2578
        %v2582 = vpack.c.bf16 %v2576, %v2576
        %2586 = vrot.lane.b32.xlu0 %v2580, 63
        %v2587 = vpop.permute.xlu0 %2586
        %2588 = vrot.lane.b32.xlu0 %v2581, 63
        %v2589 = vpop.permute.xlu0 %2588
        %2590 = vrot.lane.b32.xlu0 %v2582, 63
        %v2591 = vpop.permute.xlu0 %2590
        %v2592 = vsel %vm981, %v2587, %v2589
        %v2593 = vsel %vm981, %v2589, %v2591
        %v2595 = vsel %vm554, %v476, 0
        %v2598 = vsel %vm558, %v2592, 0
        %v2601 = vsel %vm558, %v2593, 0
        %2603 = vmatprep.subr.bf16.mxu0 %v2601
        %2604 = vmatpush1.bf16.msra.mxu0 %v2598
        %2605 = vmatprep.subr.bf16.mxu0 0
        %2606 = vmatpush1.bf16.msra.mxu0 0
        %2607 = vmatprep.subr.bf16.mxu0 0
        %2608 = vmatpush1.bf16.msra.mxu0 0
        %2609 = vmatprep.subr.bf16.mxu0 0
        %2610 = vmatpush1.bf16.msra.mxu0 0
        %2611 = vmatprep.subr.bf16.mxu0 0
        %2612 = vmatpush1.bf16.msra.mxu0 0
        %2613 = vmatprep.subr.bf16.mxu0 0
        %2614 = vmatpush1.bf16.msra.mxu0 0
        %2615 = vmatprep.subr.bf16.mxu0 0
        %2616 = vmatpush1.bf16.msra.mxu0 0
        %2617 = vmatprep.subr.bf16.mxu0 0
        %2618 = vmatpush1.bf16.msra.mxu0 0
        %2619 = vmatprep.subr.bf16.mxu0 0
        %2620 = vmatpush1.bf16.msra.mxu0 0
        %2621 = vmatprep.subr.bf16.mxu0 0
        %2622 = vmatpush1.bf16.msra.mxu0 0
        %2623 = vmatprep.subr.bf16.mxu0 0
        %2624 = vmatpush1.bf16.msra.mxu0 0
        %2625 = vmatprep.subr.bf16.mxu0 0
        %2626 = vmatpush1.bf16.msra.mxu0 0
        %2627 = vmatprep.subr.bf16.mxu0 0
        %2628 = vmatpush1.bf16.msra.mxu0 0
        %2629 = vmatprep.subr.bf16.mxu0 0
        %2630 = vmatpush1.bf16.msra.mxu0 0
        %2631 = vmatprep.subr.bf16.mxu0 0
        %2632 = vmatpush1.bf16.msra.mxu0 0
        %2633 = vmatprep.subr.bf16.mxu0 0
        %2634 = vmatpush1.bf16.msra.mxu0 0
        %2635 = vmatprep.mubr.bf16.mxu0 0
        %2636 = vmatmul.mubr.bf16.gmra.mrb[0].mxu0 %v2595
        %v2637 = vpop.f32.mrb[0].mxu0
        %v2638 = vadd.f32 0.0, %v2637
        %v2639 = vpop.f32.mrb[0].mxu0
        %v2640 = vadd.f32 0.0, %v2639
        %v2641 = vpop.f32.mrb[0].mxu0
        %v2642 = vpop.f32.mrb[0].mxu0
        %2643 = vdwg.mxu0
        %v2644 = vadd.f32 %v2554, %v2638
        %v2645 = vadd.f32 %v2555, %v2640
        %v2646 = vld [vmem:[#allocation2 + $0x4] sm:$0xff]
        %v2647 = vld [vmem:[#allocation2 + $0xc] sm:$0xf]
        %v2648 = vlaneseq
        %v2649 = vshrl.u32 %v2648, 7
        %v2650 = vsub.s32 0, %v2649
        %v2651 = vrot.slane %v486, %v2650
        %v2652 = vlaneseq
        %v2653 = vshrl.u32 %v2652, 7
        %v2654 = vsub.s32 0, %v2653
        %v2655 = vrot.slane %v487, %v2654
        %v2658 = vcombine.low %v2651, %v2655
        %2659 = vrot.lane.b32.xlu0 %v2658, 71
        %v2660 = vpop.permute.xlu0 %2659
        %v2661 = vrot.slane %v2660, 4
        %v2662 = vsel %vm1052, %v2661, %v2660
        %v2665 = vmul.f32 %v2646, %v2662
        %v2666 = vmul.f32 %v2647, %v2661
        %v2668 = vcombine.high %v2665, %v2665
        %v2670 = vpack.c.bf16 %v2665, %v2665
        %v2671 = vpack.c.bf16 %v2668, %v2668
        %v2672 = vpack.c.bf16 %v2666, %v2666
        %2676 = vrot.lane.b32.xlu0 %v2670, 57
        %v2677 = vpop.permute.xlu0 %2676
        %2678 = vrot.lane.b32.xlu0 %v2671, 57
        %v2679 = vpop.permute.xlu0 %2678
        %2680 = vrot.lane.b32.xlu0 %v2672, 57
        %v2681 = vpop.permute.xlu0 %2680
        %v2682 = vsel %vm1073, %v2677, %v2679
        %v2683 = vsel %vm1073, %v2679, %v2681
        %v2685 = vsel %vm554, %v477, 0
        %v2688 = vsel %vm558, %v2682, 0
        %v2691 = vsel %vm558, %v2683, 0
        %2693 = vmatprep.subr.bf16.mxu0 %v2691
        %2694 = vmatpush1.bf16.msra.mxu0 %v2688
        %2695 = vmatprep.subr.bf16.mxu0 0
        %2696 = vmatpush1.bf16.msra.mxu0 0
        %2697 = vmatprep.subr.bf16.mxu0 0
        %2698 = vmatpush1.bf16.msra.mxu0 0
        %2699 = vmatprep.subr.bf16.mxu0 0
        %2700 = vmatpush1.bf16.msra.mxu0 0
        %2701 = vmatprep.subr.bf16.mxu0 0
        %2702 = vmatpush1.bf16.msra.mxu0 0
        %2703 = vmatprep.subr.bf16.mxu0 0
        %2704 = vmatpush1.bf16.msra.mxu0 0
        %2705 = vmatprep.subr.bf16.mxu0 0
        %2706 = vmatpush1.bf16.msra.mxu0 0
        %2707 = vmatprep.subr.bf16.mxu0 0
        %2708 = vmatpush1.bf16.msra.mxu0 0
        %2709 = vmatprep.subr.bf16.mxu0 0
        %2710 = vmatpush1.bf16.msra.mxu0 0
        %2711 = vmatprep.subr.bf16.mxu0 0
        %2712 = vmatpush1.bf16.msra.mxu0 0
        %2713 = vmatprep.subr.bf16.mxu0 0
        %2714 = vmatpush1.bf16.msra.mxu0 0
        %2715 = vmatprep.subr.bf16.mxu0 0
        %2716 = vmatpush1.bf16.msra.mxu0 0
        %2717 = vmatprep.subr.bf16.mxu0 0
        %2718 = vmatpush1.bf16.msra.mxu0 0
        %2719 = vmatprep.subr.bf16.mxu0 0
        %2720 = vmatpush1.bf16.msra.mxu0 0
        %2721 = vmatprep.subr.bf16.mxu0 0
        %2722 = vmatpush1.bf16.msra.mxu0 0
        %2723 = vmatprep.subr.bf16.mxu0 0
        %2724 = vmatpush1.bf16.msra.mxu0 0
        %2725 = vmatprep.mubr.bf16.mxu0 0
        %2726 = vmatmul.mubr.bf16.gmra.mrb[0].mxu0 %v2685
        %v2727 = vpop.f32.mrb[0].mxu0
        %v2728 = vadd.f32 0.0, %v2727
        %v2729 = vpop.f32.mrb[0].mxu0
        %v2730 = vadd.f32 0.0, %v2729
        %v2731 = vpop.f32.mrb[0].mxu0
        %v2732 = vpop.f32.mrb[0].mxu0
        %2733 = vdwg.mxu0
        %v2734 = vadd.f32 %v2644, %v2728
        %v2735 = vadd.f32 %v2645, %v2730
        %v2736 = vld [vmem:[#allocation2 + $0x4] sm:$0xff]
        %v2737 = vld [vmem:[#allocation2 + $0xc] sm:$0xf]
        %v2738 = vlaneseq
        %v2739 = vshrl.u32 %v2738, 7
        %v2740 = vsub.s32 1, %v2739
        %v2741 = vrot.slane %v486, %v2740
        %v2742 = vlaneseq
        %v2743 = vshrl.u32 %v2742, 7
        %v2744 = vsub.s32 1, %v2743
        %v2745 = vrot.slane %v487, %v2744
        %v2748 = vcombine.low %v2741, %v2745
        %2749 = vrot.lane.b32.xlu0 %v2748, 72
        %v2750 = vpop.permute.xlu0 %2749
        %v2751 = vrot.slane %v2750, 4
        %v2752 = vsel %vm1144, %v2751, %v2750
        %v2755 = vmul.f32 %v2736, %v2752
        %v2756 = vmul.f32 %v2737, %v2751
        %v2758 = vcombine.high %v2755, %v2755
        %v2760 = vpack.c.bf16 %v2755, %v2755
        %v2761 = vpack.c.bf16 %v2758, %v2758
        %v2762 = vpack.c.bf16 %v2756, %v2756
        %2766 = vrot.lane.b32.xlu0 %v2760, 56
        %v2767 = vpop.permute.xlu0 %2766
        %2768 = vrot.lane.b32.xlu0 %v2761, 56
        %v2769 = vpop.permute.xlu0 %2768
        %2770 = vrot.lane.b32.xlu0 %v2762, 56
        %v2771 = vpop.permute.xlu0 %2770
        %v2772 = vsel %vm1165, %v2767, %v2769
        %v2773 = vsel %vm1165, %v2769, %v2771
        %v2775 = vsel %vm554, %v478, 0
        %v2778 = vsel %vm558, %v2772, 0
        %v2781 = vsel %vm558, %v2773, 0
        %2783 = vmatprep.subr.bf16.mxu0 %v2781
        %2784 = vmatpush1.bf16.msra.mxu0 %v2778
        %2785 = vmatprep.subr.bf16.mxu0 0
        %2786 = vmatpush1.bf16.msra.mxu0 0
        %2787 = vmatprep.subr.bf16.mxu0 0
        %2788 = vmatpush1.bf16.msra.mxu0 0
        %2789 = vmatprep.subr.bf16.mxu0 0
        %2790 = vmatpush1.bf16.msra.mxu0 0
        %2791 = vmatprep.subr.bf16.mxu0 0
        %2792 = vmatpush1.bf16.msra.mxu0 0
        %2793 = vmatprep.subr.bf16.mxu0 0
        %2794 = vmatpush1.bf16.msra.mxu0 0
        %2795 = vmatprep.subr.bf16.mxu0 0
        %2796 = vmatpush1.bf16.msra.mxu0 0
        %2797 = vmatprep.subr.bf16.mxu0 0
        %2798 = vmatpush1.bf16.msra.mxu0 0
        %2799 = vmatprep.subr.bf16.mxu0 0
        %2800 = vmatpush1.bf16.msra.mxu0 0
        %2801 = vmatprep.subr.bf16.mxu0 0
        %2802 = vmatpush1.bf16.msra.mxu0 0
        %2803 = vmatprep.subr.bf16.mxu0 0
        %2804 = vmatpush1.bf16.msra.mxu0 0
        %2805 = vmatprep.subr.bf16.mxu0 0
        %2806 = vmatpush1.bf16.msra.mxu0 0
        %2807 = vmatprep.subr.bf16.mxu0 0
        %2808 = vmatpush1.bf16.msra.mxu0 0
        %2809 = vmatprep.subr.bf16.mxu0 0
        %2810 = vmatpush1.bf16.msra.mxu0 0
        %2811 = vmatprep.subr.bf16.mxu0 0
        %2812 = vmatpush1.bf16.msra.mxu0 0
        %2813 = vmatprep.subr.bf16.mxu0 0
        %2814 = vmatpush1.bf16.msra.mxu0 0
        %2815 = vmatprep.mubr.bf16.mxu0 0
        %2816 = vmatmul.mubr.bf16.gmra.mrb[0].mxu0 %v2775
        %v2817 = vpop.f32.mrb[0].mxu0
        %v2818 = vadd.f32 0.0, %v2817
        %v2819 = vpop.f32.mrb[0].mxu0
        %v2820 = vadd.f32 0.0, %v2819
        %v2821 = vpop.f32.mrb[0].mxu0
        %v2822 = vpop.f32.mrb[0].mxu0
        %2823 = vdwg.mxu0
        %v2824 = vadd.f32 %v2734, %v2818
        %v2825 = vadd.f32 %v2735, %v2820
        %v2826 = vld [vmem:[#allocation2 + $0x4] sm:$0xff]
        %v2827 = vld [vmem:[#allocation2 + $0xc] sm:$0xf]
        %v2828 = vlaneseq
        %v2829 = vshrl.u32 %v2828, 7
        %v2830 = vsub.s32 2, %v2829
        %v2831 = vrot.slane %v486, %v2830
        %v2832 = vlaneseq
        %v2833 = vshrl.u32 %v2832, 7
        %v2834 = vsub.s32 2, %v2833
        %v2835 = vrot.slane %v487, %v2834
        %v2838 = vcombine.low %v2831, %v2835
        %2839 = vrot.lane.b32.xlu0 %v2838, 73
        %v2840 = vpop.permute.xlu0 %2839
        %v2841 = vrot.slane %v2840, 4
        %v2842 = vsel %vm1236, %v2841, %v2840
        %v2845 = vmul.f32 %v2826, %v2842
        %v2846 = vmul.f32 %v2827, %v2841
        %v2848 = vcombine.high %v2845, %v2845
        %v2850 = vpack.c.bf16 %v2845, %v2845
        %v2851 = vpack.c.bf16 %v2848, %v2848
        %v2852 = vpack.c.bf16 %v2846, %v2846
        %2856 = vrot.lane.b32.xlu0 %v2850, 55
        %v2857 = vpop.permute.xlu0 %2856
        %2858 = vrot.lane.b32.xlu0 %v2851, 55
        %v2859 = vpop.permute.xlu0 %2858
        %2860 = vrot.lane.b32.xlu0 %v2852, 55
        %v2861 = vpop.permute.xlu0 %2860
        %v2862 = vsel %vm1257, %v2857, %v2859
        %v2863 = vsel %vm1257, %v2859, %v2861
        %v2865 = vsel %vm554, %v479, 0
        %v2868 = vsel %vm558, %v2862, 0
        %v2871 = vsel %vm558, %v2863, 0
        %2873 = vmatprep.subr.bf16.mxu0 %v2871
        %2874 = vmatpush1.bf16.msra.mxu0 %v2868
        %2875 = vmatprep.subr.bf16.mxu0 0
        %2876 = vmatpush1.bf16.msra.mxu0 0
        %2877 = vmatprep.subr.bf16.mxu0 0
        %2878 = vmatpush1.bf16.msra.mxu0 0
        %2879 = vmatprep.subr.bf16.mxu0 0
        %2880 = vmatpush1.bf16.msra.mxu0 0
        %2881 = vmatprep.subr.bf16.mxu0 0
        %2882 = vmatpush1.bf16.msra.mxu0 0
        %2883 = vmatprep.subr.bf16.mxu0 0
        %2884 = vmatpush1.bf16.msra.mxu0 0
        %2885 = vmatprep.subr.bf16.mxu0 0
        %2886 = vmatpush1.bf16.msra.mxu0 0
        %2887 = vmatprep.subr.bf16.mxu0 0
        %2888 = vmatpush1.bf16.msra.mxu0 0
        %2889 = vmatprep.subr.bf16.mxu0 0
        %2890 = vmatpush1.bf16.msra.mxu0 0
        %2891 = vmatprep.subr.bf16.mxu0 0
        %2892 = vmatpush1.bf16.msra.mxu0 0
        %2893 = vmatprep.subr.bf16.mxu0 0
        %2894 = vmatpush1.bf16.msra.mxu0 0
        %2895 = vmatprep.subr.bf16.mxu0 0
        %2896 = vmatpush1.bf16.msra.mxu0 0
        %2897 = vmatprep.subr.bf16.mxu0 0
        %2898 = vmatpush1.bf16.msra.mxu0 0
        %2899 = vmatprep.subr.bf16.mxu0 0
        %2900 = vmatpush1.bf16.msra.mxu0 0
        %2901 = vmatprep.subr.bf16.mxu0 0
        %2902 = vmatpush1.bf16.msra.mxu0 0
        %2903 = vmatprep.subr.bf16.mxu0 0
        %2904 = vmatpush1.bf16.msra.mxu0 0
        %2905 = vmatprep.mubr.bf16.mxu0 0
        %2906 = vmatmul.mubr.bf16.gmra.mrb[0].mxu0 %v2865
        %v2907 = vpop.f32.mrb[0].mxu0
        %v2908 = vadd.f32 0.0, %v2907
        %v2909 = vpop.f32.mrb[0].mxu0
        %v2910 = vadd.f32 0.0, %v2909
        %v2911 = vpop.f32.mrb[0].mxu0
        %v2912 = vpop.f32.mrb[0].mxu0
        %2913 = vdwg.mxu0
        %v2914 = vadd.f32 %v2824, %v2908
        %v2915 = vadd.f32 %v2825, %v2910
        %2916 = vst [vmem:[%s441] sm:$0xff] %v2914
        %2917 = vst [vmem:[%s441 + $0x8] sm:$0xff] %v2915
        %s2918 = smul.u32 2, %s21
        %p2919 = scmp.lt.s32.totalorder %s20, 1
        %s2920 = scalar_select %p2919, %s20, 1
        %p2921 = scmp.lt.s32.totalorder %s2918, 3
        %s2922 = scalar_select %p2921, %s2918, 3
        %s2923 = smul.addr %s2920, 4
        %s2924 = sadd.s32 %s2922, %s2923
        %s2925 = smul.addr %s2924, 8
        %s2926 = scalar_lea.vmem %s5, %s2925
        // Predicated region
        $region64: #{resblock_pallas.5} parent=58 // pred_check
          %p2927 = pneg %p191
        $region65: #{resblock_pallas.5} parent=58 // pred_check_branch
          %2929 = sbr.rel (%p2927) target = $region67
        $region66: #{resblock_pallas.5} parent=58 // pred_region
          %s2930 = smul.u32 2, %s21
        $region67: #{resblock_pallas.5} parent=58 // pred_fallthru
          _
      $region59: #{resblock_pallas.5} parent=5 // pred_fallthru
        _
      %p2931 = scmp.le.s32.totalorder 2, %s11
      // Predicated region
      $region68: #{resblock_pallas.5} parent=5 // pred_check
        %p2932 = pneg %p2931
      $region69: #{resblock_pallas.5} parent=5 // pred_check_branch
        %2934 = sbr.rel (%p2932) target = $region71
      $region70: #{resblock_pallas.5} parent=5 // pred_region
        %s2935 = ssub.s32 %s11, 2
        // Predicated region
        $region72: #{resblock_pallas.5} parent=70 // pred_check
          %p2936 = pneg %p197
        $region73: #{resblock_pallas.5} parent=70 // pred_check_branch
          %2938 = sbr.rel (%p2936) target = $region75
        $region74: #{resblock_pallas.5} parent=70 // pred_region
          %s2939 = smul.u32 2, %s23
          %p2940 = scmp.lt.s32.totalorder %s22, 1
          %s2941 = scalar_select %p2940, %s22, 1
          %p2942 = scmp.lt.s32.totalorder %s2939, 3
          %s2943 = scalar_select %p2942, %s2939, 3
          %s2944 = smul.addr %s2941, 4
          %s2945 = sadd.s32 %s2943, %s2944
          %s2946 = smul.addr %s2945, 8
          %s2947 = scalar_lea.vmem %s5, %s2946
        $region75: #{resblock_pallas.5} parent=70 // pred_fallthru
          _
      $region71: #{resblock_pallas.5} parent=5 // pred_fallthru
        _
    $region6: #{resblock_pallas.5} parent=1 // loop_footer
      %s15 = sadd.s32 1, %s11
    $region7: #{resblock_pallas.5} parent=1 // loop_footer_branch
      %10 = sbr.rel target = $region3
    $region8: #{resblock_pallas.5} parent=1 // loop_exit
      _

// kernel: resblock_pallas.7
$region0: #{resblock_pallas.7}
  #allocation0 [shape = 'u32[]', space=smem, size = 0x4, offset = 0x4, fixed_abs, tag = 'smem constant byte address 0x4 - core index']
  #allocation1 [shape = 'u32[144,128]{1,0:T(1,128)}', space=vmem, size = 0x12000, scoped, tag = 'internal scratch']
  #allocation2 [shape = 'f32[8,512]{1,0:T(8,128)}', space=vmem, size = 0x4000, scoped, tag = 'scratch operand']
  %s0 = inlined_call_operand.vmem [shape: bf16[27,4,8], index: 0, kind: input, shape index: {}]
  %s1 = inlined_call_operand.vmem [shape: f32[27,512], index: 1, kind: input, shape index: {}]
  %s2 = inlined_call_operand.vmem [shape: bf16[2,8,896], index: 2, kind: input, shape index: {}, may-alias: {2,3,4}]
  %s3 = inlined_call_operand.vmem [shape: bf16[2,8,896], index: 3, kind: input, shape index: {}, may-alias: {2,3,4}]
  %s4 = inlined_call_operand.vmem [shape: bf16[2,8,896], index: 4, kind: input, shape index: {}, may-alias: {2,3,4}]
  %s5 = inlined_call_operand.vmem [shape: f32[2,4,512], index: 5, kind: input, shape index: {}]
  %s6 = inlined_call_operand.vmem [shape: f32[2,4,512], index: 6, kind: output, shape index: {}]
  %s7 = sld [smem:[#allocation0]]
  $region80: #{resblock_pallas.7} parent=0
    _
  %s9 = ssub.s32 1, %s7
  %s10 = scalar_select 0, %s9, %s7
  $region1: #{resblock_pallas.7} parent=0
    #allocation3 [shape = 'u8[65536]{0}', space=vmem, size = 0x10000, scoped, tag = 'input window, operand 1']
    loop: start=0, step=1, limit=6
    $region2: #{resblock_pallas.7} parent=1 // loop_pre_header
      _
    $region3: #{resblock_pallas.7} parent=1 // loop_header
      %s12 = sphi 0, %s16
      %p13 = scmp.ge.s32.totalorder %s12, 6
      %s19 = sphi 0, %s31
      %s20 = sphi 0, %s27
      %s21 = sphi 0, %s19
      %s22 = sphi 0, %s20
      %s23 = sphi 0, %s21
      %s24 = sphi 0, %s22
      %s32 = sphi 0, %s32
      %s34 = sphi 0, %s32
      %s35 = sphi 0, %s34
      %s49 = sphi 0, %s35
      %s55 = sphi 0, %s57
      %s58 = sphi 0, %s55
      %s59 = sphi 0, %s58
      %s75 = sphi 0, %s59
      %s89 = sphi 0, %s91
      %s92 = sphi 0, %s89
      %s93 = sphi 0, %s92
      %s109 = sphi 0, %s93
      %s119 = sphi 0, %s121
      %s122 = sphi 0, %s119
      %s123 = sphi 0, %s122
      %s139 = sphi 0, %s123
      %s151 = sphi 0, %s153
      %s154 = sphi 0, %s151
      %s155 = sphi 0, %s154
      %s171 = sphi 0, %s155
      %s179 = sphi 0, %s181
      %s182 = sphi 0, %s179
      %s183 = sphi 0, %s182
      %s199 = sphi 0, %s183
      %s207 = sphi 0, %s209
      %s210 = sphi 0, %s207
      %s211 = sphi 0, %s210
      %s227 = sphi 0, %s211
    $region4: #{resblock_pallas.7} parent=1 // loop_header_branch
      %15 = sbr.rel (%p13) target = $region8
    $region5: #{resblock_pallas.7} parent=1 // loop_body
      %s17 = ssub.s32 %s12, 1
      %s18 = ssub.s32 %s12, 2
      %s25 = sadd.s32 1, %s20
      %p26 = scmp.ge.s32.totalorder %s25, 2
      %s27 = scalar_select %p26, 0, %s25
      %s28 = sadd.s32 1, %s19
      %s29 = scalar_select %p26, %s28, %s19
      %p30 = scmp.ge.s32.totalorder %s29, 2
      %s31 = scalar_select %p30, 0, %s29
      %s33 = sadd.s32 %s32, 1
      %p36 = scmp.eq.s32.totalorder %s12, 3
      %p37 = scmp.ne.s32.totalorder %s32, %s34
      %p38 = scmp.eq.s32.totalorder %s12, 0
      %p39 = por %p37, %p38
      %p40 = scmp.ne.s32.totalorder %s32, %s34
      %p41 = scmp.eq.s32.totalorder %s17, 3
      %p42 = por %p40, %p41
      %p43 = scmp.ne.s32.totalorder %s34, %s35
      %p44 = scmp.eq.s32.totalorder %s17, 0
      %p45 = por %p43, %p44
      %p46 = scmp.ne.s32.totalorder %s34, %s35
      %p47 = scmp.eq.s32.totalorder %s18, 3
      %p48 = por %p46, %p47
      %p50 = scmp.ne.s32.totalorder %s35, %s49
      %p51 = scmp.eq.s32.totalorder %s18, 0
      %p52 = por %p50, %p51
      %s53 = ssub.s32 %s20, %s27
      %p54 = scmp.eq.s32.totalorder %s53, 0
      %s56 = sadd.s32 %s55, 1
      %s57 = scalar_select %p54, %s55, %s56
      %p60 = pneg %p54
      %p61 = scmp.eq.s32.totalorder %s12, 3
      %p62 = por %p60, %p61
      %p63 = scmp.ne.s32.totalorder %s55, %s58
      %p64 = scmp.eq.s32.totalorder %s12, 0
      %p65 = por %p63, %p64
      %p66 = scmp.ne.s32.totalorder %s55, %s58
      %p67 = scmp.eq.s32.totalorder %s17, 3
      %p68 = por %p66, %p67
      %p69 = scmp.ne.s32.totalorder %s58, %s59
      %p70 = scmp.eq.s32.totalorder %s17, 0
      %p71 = por %p69, %p70
      %p72 = scmp.ne.s32.totalorder %s58, %s59
      %p73 = scmp.eq.s32.totalorder %s18, 3
      %p74 = por %p72, %p73
      %p76 = scmp.ne.s32.totalorder %s59, %s75
      %p77 = scmp.eq.s32.totalorder %s18, 0
      %p78 = por %p76, %p77
      %s79 = sadd.s32 %s20, 1
      %s80 = smul.u32 %s79, 2
      %s81 = ssub.s32 %s80, 1
      %s82 = sadd.s32 %s27, 1
      %s83 = smul.u32 %s82, 2
      %s84 = ssub.s32 %s83, 1
      %s85 = ssub.s32 %s19, %s31
      %s86 = ssub.s32 %s81, %s84
      %s87 = sor.u32 %s85, %s86
      %p88 = scmp.eq.s32.totalorder %s87, 0
      %s90 = sadd.s32 %s89, 1
      %s91 = scalar_select %p88, %s89, %s90
      %p94 = pneg %p88
      %p95 = scmp.eq.s32.totalorder %s12, 3
      %p96 = por %p94, %p95
      %p97 = scmp.ne.s32.totalorder %s89, %s92
      %p98 = scmp.eq.s32.totalorder %s12, 0
      %p99 = por %p97, %p98
      %p100 = scmp.ne.s32.totalorder %s89, %s92
      %p101 = scmp.eq.s32.totalorder %s17, 3
      %p102 = por %p100, %p101
      %p103 = scmp.ne.s32.totalorder %s92, %s93
      %p104 = scmp.eq.s32.totalorder %s17, 0
      %p105 = por %p103, %p104
      %p106 = scmp.ne.s32.totalorder %s92, %s93
      %p107 = scmp.eq.s32.totalorder %s18, 3
      %p108 = por %p106, %p107
      %p110 = scmp.ne.s32.totalorder %s93, %s109
      %p111 = scmp.eq.s32.totalorder %s18, 0
      %p112 = por %p110, %p111
      %s113 = sadd.s32 %s20, 1
      %s114 = sadd.s32 %s27, 1
      %s115 = ssub.s32 %s19, %s31
      %s116 = ssub.s32 %s113, %s114
      %s117 = sor.u32 %s115, %s116
      %p118 = scmp.eq.s32.totalorder %s117, 0
      %s120 = sadd.s32 %s119, 1
      %s121 = scalar_select %p118, %s119, %s120
      %p124 = pneg %p118
      %p125 = scmp.eq.s32.totalorder %s12, 3
      %p126 = por %p124, %p125
      %p127 = scmp.ne.s32.totalorder %s119, %s122
      %p128 = scmp.eq.s32.totalorder %s12, 0
      %p129 = por %p127, %p128
      %p130 = scmp.ne.s32.totalorder %s119, %s122
      %p131 = scmp.eq.s32.totalorder %s17, 3
      %p132 = por %p130, %p131
      %p133 = scmp.ne.s32.totalorder %s122, %s123
      %p134 = scmp.eq.s32.totalorder %s17, 0
      %p135 = por %p133, %p134
      %p136 = scmp.ne.s32.totalorder %s122, %s123
      %p137 = scmp.eq.s32.totalorder %s18, 3
      %p138 = por %p136, %p137
      %p140 = scmp.ne.s32.totalorder %s123, %s139
      %p141 = scmp.eq.s32.totalorder %s18, 0
      %p142 = por %p140, %p141
      %s143 = sadd.s32 %s20, 2
      %s144 = smul.u32 %s143, 2
      %s145 = sadd.s32 %s27, 2
      %s146 = smul.u32 %s145, 2
      %s147 = ssub.s32 %s19, %s31
      %s148 = ssub.s32 %s144, %s146
      %s149 = sor.u32 %s147, %s148
      %p150 = scmp.eq.s32.totalorder %s149, 0
      %s152 = sadd.s32 %s151, 1
      %s153 = scalar_select %p150, %s151, %s152
      %p156 = pneg %p150
      %p157 = scmp.eq.s32.totalorder %s12, 3
      %p158 = por %p156, %p157
      %p159 = scmp.ne.s32.totalorder %s151, %s154
      %p160 = scmp.eq.s32.totalorder %s12, 0
      %p161 = por %p159, %p160
      %p162 = scmp.ne.s32.totalorder %s151, %s154
      %p163 = scmp.eq.s32.totalorder %s17, 3
      %p164 = por %p162, %p163
      %p165 = scmp.ne.s32.totalorder %s154, %s155
      %p166 = scmp.eq.s32.totalorder %s17, 0
      %p167 = por %p165, %p166
      %p168 = scmp.ne.s32.totalorder %s154, %s155
      %p169 = scmp.eq.s32.totalorder %s18, 3
      %p170 = por %p168, %p169
      %p172 = scmp.ne.s32.totalorder %s155, %s171
      %p173 = scmp.eq.s32.totalorder %s18, 0
      %p174 = por %p172, %p173
      %s175 = ssub.s32 %s19, %s31
      %s176 = ssub.s32 %s20, %s27
      %s177 = sor.u32 %s175, %s176
      %p178 = scmp.eq.s32.totalorder %s177, 0
      %s180 = sadd.s32 %s179, 1
      %s181 = scalar_select %p178, %s179, %s180
      %p184 = pneg %p178
      %p185 = scmp.eq.s32.totalorder %s12, 3
      %p186 = por %p184, %p185
      %p187 = scmp.ne.s32.totalorder %s179, %s182
      %p188 = scmp.eq.s32.totalorder %s12, 0
      %p189 = por %p187, %p188
      %p190 = scmp.ne.s32.totalorder %s179, %s182
      %p191 = scmp.eq.s32.totalorder %s17, 3
      %p192 = por %p190, %p191
      %p193 = scmp.ne.s32.totalorder %s182, %s183
      %p194 = scmp.eq.s32.totalorder %s17, 0
      %p195 = por %p193, %p194
      %p196 = scmp.ne.s32.totalorder %s182, %s183
      %p197 = scmp.eq.s32.totalorder %s18, 3
      %p198 = por %p196, %p197
      %p200 = scmp.ne.s32.totalorder %s183, %s199
      %p201 = scmp.eq.s32.totalorder %s18, 0
      %p202 = por %p200, %p201
      %s203 = ssub.s32 %s19, %s31
      %s204 = ssub.s32 %s20, %s27
      %s205 = sor.u32 %s203, %s204
      %p206 = scmp.eq.s32.totalorder %s205, 0
      %s208 = sadd.s32 %s207, 1
      %s209 = scalar_select %p206, %s207, %s208
      %p212 = pneg %p206
      %p213 = scmp.eq.s32.totalorder %s12, 3
      %p214 = por %p212, %p213
      %p215 = scmp.ne.s32.totalorder %s207, %s210
      %p216 = scmp.eq.s32.totalorder %s12, 0
      %p217 = por %p215, %p216
      %p218 = scmp.ne.s32.totalorder %s207, %s210
      %p219 = scmp.eq.s32.totalorder %s17, 3
      %p220 = por %p218, %p219
      %p221 = scmp.ne.s32.totalorder %s210, %s211
      %p222 = scmp.eq.s32.totalorder %s17, 0
      %p223 = por %p221, %p222
      %p224 = scmp.ne.s32.totalorder %s210, %s211
      %p225 = scmp.eq.s32.totalorder %s18, 3
      %p226 = por %p224, %p225
      %p228 = scmp.ne.s32.totalorder %s211, %s227
      %p229 = scmp.eq.s32.totalorder %s18, 0
      %p230 = por %p228, %p229
      %p231 = scmp.le.s32.totalorder 1, %s12
      %p232 = scmp.lt.s32.totalorder %s12, 5
      %p233 = pnand %p231, %p232
      %p234 = pneg %p233
      // Predicated region
      $region9: #{resblock_pallas.7} parent=5 // pred_check
        _
      $region10: #{resblock_pallas.7} parent=5 // pred_check_branch
        %236 = sbr.rel (%p233) target = $region12
      $region11: #{resblock_pallas.7} parent=5 // pred_region
        %s237 = ssub.s32 %s12, 1
        // Predicated region
        $region13: #{resblock_pallas.7} parent=11 // pred_check
          %p238 = pneg %p45
        $region14: #{resblock_pallas.7} parent=11 // pred_check_branch
          %240 = sbr.rel (%p238) target = $region16
        $region15: #{resblock_pallas.7} parent=11 // pred_region
          _
        $region16: #{resblock_pallas.7} parent=11 // pred_fallthru
          _
      $region12: #{resblock_pallas.7} parent=5 // pred_fallthru
        _
      %p241 = scmp.lt.s32.totalorder %s12, 4
      // Predicated region
      $region17: #{resblock_pallas.7} parent=5 // pred_check
        %p242 = pneg %p241
      $region18: #{resblock_pallas.7} parent=5 // pred_check_branch
        %244 = sbr.rel (%p242) target = $region20
      $region19: #{resblock_pallas.7} parent=5 // pred_region
        // Predicated region
        $region21: #{resblock_pallas.7} parent=19 // pred_check
          %p245 = pneg %p65
        $region22: #{resblock_pallas.7} parent=19 // pred_check_branch
          %247 = sbr.rel (%p245) target = $region24
        $region23: #{resblock_pallas.7} parent=19 // pred_region
          %s248 = sand.u32 %s55, 1
          %s249 = sand.u32 %s55, 1
          %s250 = smul.addr %s249, 64
          %s251 = scalar_lea.vmem [#allocation3], %s250
          %s252 = smul.u32 2, %s20
          %s253 = smul.addr %s252, 8
          %s254 = scalar_lea.vmem %s1, %s253
          // Predicated region
          $region25: #{resblock_pallas.7} parent=23 // pred_check
            _
          $region26: #{resblock_pallas.7} parent=23 // pred_check_branch
            %256 = sbr.rel (0) target = $region28
          $region27: #{resblock_pallas.7} parent=23 // pred_region
            // Predicated region
            $region29: #{resblock_pallas.7} parent=27 // pred_check
              _
            $region30: #{resblock_pallas.7} parent=27 // pred_check_branch
              %258 = sbr.rel (0) target = $region32
            $region31: #{resblock_pallas.7} parent=27 // pred_region
              loop: start=0, step=1, limit=1
              $region33: #{resblock_pallas.7} parent=31 // loop_pre_header
                _
              $region34: #{resblock_pallas.7} parent=31 // loop_header
                %s260 = sphi 0, %s264
                %p261 = scmp.ge.s32.totalorder %s260, 1
                %s265 = sphi %s254, %s254
                %s266 = sphi %s251, %s251
              $region35: #{resblock_pallas.7} parent=31 // loop_header_branch
                %263 = sbr.rel (%p261) target = $region39
              $region36: #{resblock_pallas.7} parent=31 // loop_body
                %v267 = vld [vmem:[%s265] sm:$0xff]
                %268 = vst [vmem:[%s266] sm:$0xff] %v267
                %v269 = vld [vmem:[%s265 + $0x8] sm:$0xff]
                %270 = vst [vmem:[%s266 + $0x8] sm:$0xff] %v269
                %v271 = vld [vmem:[%s265 + $0x20] sm:$0xff]
                %272 = vst [vmem:[%s266 + $0x10] sm:$0xff] %v271
                %v273 = vld [vmem:[%s265 + $0x28] sm:$0xff]
                %274 = vst [vmem:[%s266 + $0x18] sm:$0xff] %v273
                %v275 = vld [vmem:[%s265 + $0x40] sm:$0xff]
                %276 = vst [vmem:[%s266 + $0x20] sm:$0xff] %v275
                %v277 = vld [vmem:[%s265 + $0x48] sm:$0xff]
                %278 = vst [vmem:[%s266 + $0x28] sm:$0xff] %v277
                %v279 = vld [vmem:[%s265 + $0x60] sm:$0xff]
                %280 = vst [vmem:[%s266 + $0x30] sm:$0xff] %v279
                %v281 = vld [vmem:[%s265 + $0x68] sm:$0xff]
                %282 = vst [vmem:[%s266 + $0x38] sm:$0xff] %v281
              $region37: #{resblock_pallas.7} parent=31 // loop_footer
                %s264 = sadd.s32 1, %s260
              $region38: #{resblock_pallas.7} parent=31 // loop_footer_branch
                %259 = sbr.rel target = $region34
              $region39: #{resblock_pallas.7} parent=31 // loop_exit
                _
            $region32: #{resblock_pallas.7} parent=27 // pred_fallthru
              _
            // Predicated region
            $region40: #{resblock_pallas.7} parent=27 // pred_check
              _
            $region41: #{resblock_pallas.7} parent=27 // pred_check_branch
              %284 = sbr.rel target = $region43
            $region42: #{resblock_pallas.7} parent=27 // pred_region
              _
            $region43: #{resblock_pallas.7} parent=27 // pred_fallthru
              _
          $region28: #{resblock_pallas.7} parent=23 // pred_fallthru
            _
          %285 = vnop
        $region24: #{resblock_pallas.7} parent=19 // pred_fallthru
          _
        // Predicated region
        $region44: #{resblock_pallas.7} parent=19 // pred_check
          %p286 = pneg %p99
        $region45: #{resblock_pallas.7} parent=19 // pred_check_branch
          %288 = sbr.rel (%p286) target = $region47
        $region46: #{resblock_pallas.7} parent=19 // pred_region
          %s289 = sadd.s32 %s20, 1
          %s290 = smul.u32 %s289, 2
          %s291 = ssub.s32 %s290, 1
          %p292 = scmp.lt.s32.totalorder %s19, 1
          %s293 = scalar_select %p292, %s19, 1
          %p294 = scmp.lt.s32.totalorder %s291, 6
          %s295 = scalar_select %p294, %s291, 6
          %s296 = smul.addr %s293, 7
          %s297 = sadd.s32 %s295, %s296
          %s298 = smul.addr %s297, 4
          %s299 = scalar_lea.vmem %s2, %s298
          %s300 = sadd.s32 %s20, 1
          %s301 = smul.u32 %s300, 2
          %s302 = ssub.s32 %s301, 1
        $region47: #{resblock_pallas.7} parent=19 // pred_fallthru
          _
        // Predicated region
        $region48: #{resblock_pallas.7} parent=19 // pred_check
          %p303 = pneg %p129
        $region49: #{resblock_pallas.7} parent=19 // pred_check_branch
          %305 = sbr.rel (%p303) target = $region51
        $region50: #{resblock_pallas.7} parent=19 // pred_region
          %s306 = sadd.s32 %s20, 1
          %s307 = smul.u32 2, %s306
          %s308 = ssub.s32 7, %s307
          %p309 = scmp.lt.s32.totalorder %s308, 2
          %s310 = scalar_select %p309, %s308, 2
          %s311 = smul.u32 64, %s310
          %p312 = scmp.lt.s32.totalorder %s19, 1
          %s313 = scalar_select %p312, %s19, 1
          %p314 = scmp.lt.s32.totalorder %s307, 6
          %s315 = scalar_select %p314, %s307, 6
          %s316 = smul.addr %s313, 7
          %s317 = sadd.s32 %s315, %s316
          %s318 = smul.addr %s317, 4
          %s319 = scalar_lea.vmem %s3, %s318
          %s320 = sadd.s32 %s20, 1
          %s321 = smul.u32 2, %s320
          %s322 = ssub.s32 7, %s321
          %p323 = scmp.lt.s32.totalorder %s322, 2
          %s324 = scalar_select %p323, %s322, 2
          %s325 = smul.u32 64, %s324
        $region51: #{resblock_pallas.7} parent=19 // pred_fallthru
          _
        // Predicated region
        $region52: #{resblock_pallas.7} parent=19 // pred_check
          %p326 = pneg %p161
        $region53: #{resblock_pallas.7} parent=19 // pred_check_branch
          %328 = sbr.rel (%p326) target = $region55
        $region54: #{resblock_pallas.7} parent=19 // pred_region
          %s329 = sadd.s32 %s20, 2
          %s330 = smul.u32 %s329, 2
          %p331 = scmp.lt.s32.totalorder %s19, 1
          %s332 = scalar_select %p331, %s19, 1
          %p333 = scmp.lt.s32.totalorder %s330, 6
          %s334 = scalar_select %p333, %s330, 6
          %s335 = smul.addr %s332, 7
          %s336 = sadd.s32 %s334, %s335
          %s337 = smul.addr %s336, 4
          %s338 = scalar_lea.vmem %s4, %s337
          %s339 = sadd.s32 %s20, 2
          %s340 = smul.u32 %s339, 2
        $region55: #{resblock_pallas.7} parent=19 // pred_fallthru
          _
        // Predicated region
        $region56: #{resblock_pallas.7} parent=19 // pred_check
          %p341 = pneg %p189
        $region57: #{resblock_pallas.7} parent=19 // pred_check_branch
          %343 = sbr.rel (%p341) target = $region59
        $region58: #{resblock_pallas.7} parent=19 // pred_region
          %s344 = smul.u32 2, %s20
          %p345 = scmp.lt.s32.totalorder %s19, 1
          %s346 = scalar_select %p345, %s19, 1
          %p347 = scmp.lt.s32.totalorder %s344, 3
          %s348 = scalar_select %p347, %s344, 3
          %s349 = smul.addr %s346, 4
          %s350 = sadd.s32 %s348, %s349
          %s351 = smul.addr %s350, 4
          %s352 = scalar_lea.vmem %s5, %s351
          %s353 = smul.u32 2, %s20
        $region59: #{resblock_pallas.7} parent=19 // pred_fallthru
          _
      $region20: #{resblock_pallas.7} parent=5 // pred_fallthru
        _
      %p354 = scmp.le.s32.totalorder 1, %s12
      %p355 = scmp.lt.s32.totalorder %s12, 5
      %p356 = pnand %p354, %p355
      %p357 = pneg %p356
      // Predicated region
      $region60: #{resblock_pallas.7} parent=5 // pred_check
        _
      $region61: #{resblock_pallas.7} parent=5 // pred_check_branch
        %359 = sbr.rel (%p356) target = $region63
      $region62: #{resblock_pallas.7} parent=5 // pred_region
        %s360 = ssub.s32 %s12, 1
        %s361 = sand.u32 %s58, 1
        %s362 = sand.u32 %s58, 1
        %s363 = smul.addr %s362, 64
        %s364 = scalar_lea.vmem [#allocation3], %s363
        // Predicated region
        $region64: #{resblock_pallas.7} parent=62 // pred_check
          %p365 = pneg %p71
        $region65: #{resblock_pallas.7} parent=62 // pred_check_branch
          %367 = sbr.rel (%p365) target = $region67
        $region66: #{resblock_pallas.7} parent=62 // pred_region
          _
        $region67: #{resblock_pallas.7} parent=62 // pred_fallthru
          _
        %p368 = pneg %p45
        %p369 = pneg %p42
        %s370 = sand.u32 %s58, 1
        %s371 = sand.u32 %s58, 1
        %s372 = smul.addr %s371, 64
        %s373 = scalar_lea.vmem [#allocation3], %s372
        %p374 = pneg %p71
        %p375 = pneg %p68
        %s376 = sadd.s32 %s22, 1
        %s377 = smul.u32 %s376, 2
        %s378 = ssub.s32 %s377, 1
        %p379 = scmp.lt.s32.totalorder %s21, 1
        %s380 = scalar_select %p379, %s21, 1
        %p381 = scmp.lt.s32.totalorder %s378, 6
        %s382 = scalar_select %p381, %s378, 6
        %s383 = smul.addr %s380, 7
        %s384 = sadd.s32 %s382, %s383
        %s385 = smul.addr %s384, 4
        %s386 = scalar_lea.vmem %s2, %s385
        %p387 = pneg %p105
        %p388 = pneg %p102
        %s389 = sadd.s32 %s22, 1
        %s390 = smul.u32 2, %s389
        %s391 = ssub.s32 7, %s390
        %p392 = scmp.lt.s32.totalorder %s391, 2
        %s393 = scalar_select %p392, %s391, 2
        %s394 = smul.u32 64, %s393
        %p395 = scmp.lt.s32.totalorder %s21, 1
        %s396 = scalar_select %p395, %s21, 1
        %p397 = scmp.lt.s32.totalorder %s390, 6
        %s398 = scalar_select %p397, %s390, 6
        %s399 = smul.addr %s396, 7
        %s400 = sadd.s32 %s398, %s399
        %s401 = smul.addr %s400, 4
        %s402 = scalar_lea.vmem %s3, %s401
        %p403 = pneg %p135
        %p404 = pneg %p132
        %s405 = sadd.s32 %s22, 2
        %s406 = smul.u32 %s405, 2
        %p407 = scmp.lt.s32.totalorder %s21, 1
        %s408 = scalar_select %p407, %s21, 1
        %p409 = scmp.lt.s32.totalorder %s406, 6
        %s410 = scalar_select %p409, %s406, 6
        %s411 = smul.addr %s408, 7
        %s412 = sadd.s32 %s410, %s411
        %s413 = smul.addr %s412, 4
        %s414 = scalar_lea.vmem %s4, %s413
        %p415 = pneg %p167
        %p416 = pneg %p164
        %s417 = smul.u32 2, %s22
        %p418 = scmp.lt.s32.totalorder %s21, 1
        %s419 = scalar_select %p418, %s21, 1
        %p420 = scmp.lt.s32.totalorder %s417, 3
        %s421 = scalar_select %p420, %s417, 3
        %s422 = smul.addr %s419, 4
        %s423 = sadd.s32 %s421, %s422
        %s424 = smul.addr %s423, 4
        %s425 = scalar_lea.vmem %s5, %s424
        %p426 = pneg %p195
        %p427 = pneg %p192
        %p428 = pneg %p223
        %p429 = pneg %p220
        %s430 = smul.u32 2, %s22
        %p431 = scmp.lt.s32.totalorder %s21, 1
        %s432 = scalar_select %p431, %s21, 1
        %p433 = scmp.lt.s32.totalorder %s430, 3
        %s434 = scalar_select %p433, %s430, 3
        %s435 = smul.addr %s432, 4
        %s436 = sadd.s32 %s434, %s435
        %s437 = smul.addr %s436, 4
        %s438 = scalar_lea.vmem %s6, %s437
        %s439 = smul.u32 2, %s22
        %s440 = sadd.s32 %s22, 1
        %s441 = smul.u32 %s440, 2
        %s442 = ssub.s32 %s441, 1
        %p443 = scmp.lt.s32.totalorder %s21, 1
        %s444 = scalar_select %p443, %s21, 1
        %p445 = scmp.lt.s32.totalorder %s442, 6
        %s446 = scalar_select %p445, %s442, 6
        %s447 = smul.addr %s444, 7
        %s448 = sadd.s32 %s446, %s447
        %s449 = smul.addr %s448, 4
        %s450 = scalar_lea.vmem %s2, %s449
        %s451 = sadd.s32 %s22, 1
        %s452 = smul.u32 %s451, 2
        %s453 = ssub.s32 %s452, 1
        %s454 = sadd.s32 %s22, 1
        %s455 = smul.u32 2, %s454
        %s456 = ssub.s32 7, %s455
        %p457 = scmp.lt.s32.totalorder %s456, 2
        %s458 = scalar_select %p457, %s456, 2
        %s459 = smul.u32 64, %s458
        %p460 = scmp.lt.s32.totalorder %s21, 1
        %s461 = scalar_select %p460, %s21, 1
        %p462 = scmp.lt.s32.totalorder %s455, 6
        %s463 = scalar_select %p462, %s455, 6
        %s464 = smul.addr %s461, 7
        %s465 = sadd.s32 %s463, %s464
        %s466 = smul.addr %s465, 4
        %s467 = scalar_lea.vmem %s3, %s466
        %s468 = sadd.s32 %s22, 1
        %s469 = smul.u32 2, %s468
        %s470 = ssub.s32 7, %s469
        %p471 = scmp.lt.s32.totalorder %s470, 2
        %s472 = scalar_select %p471, %s470, 2
        %s473 = smul.u32 64, %s472
        %s474 = sadd.s32 %s22, 2
        %s475 = smul.u32 %s474, 2
        %p476 = scmp.lt.s32.totalorder %s21, 1
        %s477 = scalar_select %p476, %s21, 1
        %p478 = scmp.lt.s32.totalorder %s475, 6
        %s479 = scalar_select %p478, %s475, 6
        %s480 = smul.addr %s477, 7
        %s481 = sadd.s32 %s479, %s480
        %s482 = smul.addr %s481, 4
        %s483 = scalar_lea.vmem %s4, %s482
        %s484 = sadd.s32 %s22, 2
        %s485 = smul.u32 %s484, 2
        %s486 = smul.u32 2, %s22
        %p487 = scmp.lt.s32.totalorder %s21, 1
        %s488 = scalar_select %p487, %s21, 1
        %p489 = scmp.lt.s32.totalorder %s486, 3
        %s490 = scalar_select %p489, %s486, 3
        %s491 = smul.addr %s488, 4
        %s492 = sadd.s32 %s490, %s491
        %s493 = smul.addr %s492, 4
        %s494 = scalar_lea.vmem %s5, %s493
        %s495 = smul.u32 2, %s22
        %s496 = smul.u32 2, %s22
        %p497 = scmp.lt.s32.totalorder %s21, 1
        %s498 = scalar_select %p497, %s21, 1
        %p499 = scmp.lt.s32.totalorder %s496, 3
        %s500 = scalar_select %p499, %s496, 3
        %s501 = smul.addr %s498, 4
        %s502 = sadd.s32 %s500, %s501
        %s503 = smul.addr %s502, 4
        %s504 = scalar_lea.vmem %s6, %s503
        %s505 = smul.u32 2, %s22
        %v507 = vld [vmem:[%s450] sm:$0xf]
        %v508 = vunpack.c.l.bf16 %v507
        %509 = vst [vmem:[#allocation2] sm:$0xff] %v508
        %v510 = vld [vmem:[%s467] sm:$0xff]
        %v511 = vunpack.c.l.bf16 %v510
        %v512 = vunpack.c.h.bf16 %v510
        %513 = vst [vmem:[#allocation2 + $0x8] sm:$0xff] %v511
        %514 = vst [vmem:[#allocation2 + $0x10] sm:$0xff] %v512
        %v515 = vld [vmem:[%s483] sm:$0xf]
        %v516 = vunpack.c.l.bf16 %v515
        %517 = vst [vmem:[#allocation2 + $0x18] sm:$0xff] %v516
        %v518 = vld [vmem:[%s0] sm:$0x3]
        %v519 = vld [vmem:[%s0 + $0x2] sm:$0x3]
        %v520 = vld [vmem:[%s0 + $0x4] sm:$0x3]
        %v521 = vld [vmem:[%s0 + $0x6] sm:$0x3]
        %v522 = vld [vmem:[%s0 + $0x8] sm:$0x3]
        %v523 = vld [vmem:[%s0 + $0xa] sm:$0x3]
        %v524 = vld [vmem:[%s0 + $0xc] sm:$0x3]
        %v525 = vld [vmem:[%s0 + $0xe] sm:$0x3]
        %v526 = vld [vmem:[%s0 + $0x10] sm:$0x3]
        %v527 = vld [vmem:[%s0 + $0x12] sm:$0x3]
        %v528 = vld [vmem:[%s0 + $0x14] sm:$0x3]
        %v529 = vld [vmem:[%s0 + $0x16] sm:$0x3]
        %v530 = vld [vmem:[%s0 + $0x18] sm:$0x3]
        %v531 = vld [vmem:[%s0 + $0x1a] sm:$0x3]
        %v532 = vld [vmem:[%s0 + $0x1c] sm:$0x3]
        %v533 = vld [vmem:[%s0 + $0x1e] sm:$0x3]
        %v534 = vld [vmem:[%s0 + $0x20] sm:$0x3]
        %v535 = vld [vmem:[%s0 + $0x22] sm:$0x3]
        %v536 = vld [vmem:[%s0 + $0x24] sm:$0x3]
        %v537 = vld [vmem:[%s0 + $0x26] sm:$0x3]
        %v538 = vld [vmem:[%s0 + $0x28] sm:$0x3]
        %v539 = vld [vmem:[%s0 + $0x2a] sm:$0x3]
        %v540 = vld [vmem:[%s0 + $0x2c] sm:$0x3]
        %v541 = vld [vmem:[%s0 + $0x2e] sm:$0x3]
        %v542 = vld [vmem:[%s0 + $0x30] sm:$0x3]
        %v543 = vld [vmem:[%s0 + $0x32] sm:$0x3]
        %v544 = vld [vmem:[%s0 + $0x34] sm:$0x3]
        %v545 = vld [vmem:[%s364] sm:$0xff]
        %v546 = vld [vmem:[%s364 + $0x8] sm:$0xff]
        %v547 = vld [vmem:[%s364 + $0x10] sm:$0xff]
        %v548 = vld [vmem:[%s364 + $0x18] sm:$0xff]
        %v549 = vld [vmem:[%s364 + $0x20] sm:$0xff]
        %v550 = vld [vmem:[%s364 + $0x28] sm:$0xff]
        %v551 = vld [vmem:[%s364 + $0x30] sm:$0x7]
        %v552 = vld [vmem:[%s364 + $0x38] sm:$0x7]
        %v553 = vld [vmem:[#allocation2] sm:$0xff]
        %v554 = vld [vmem:[#allocation2 + $0x8] sm:$0xff]
        %v555 = vld [vmem:[#allocation2 + $0x10] sm:$0xff]
        %v556 = vlaneseq
        %v557 = vshrl.u32 %v556, 7
        %v558 = vsub.s32 0, %v557
        %v559 = vrot.slane %v545, %v558
        %v560 = vlaneseq
        %v561 = vshrl.u32 %v560, 7
        %v562 = vsub.s32 0, %v561
        %v563 = vrot.slane %v546, %v562
        %566 = vrot.lane.b32.xlu0 %v559, 55
        %v567 = vpop.permute.xlu0 %566
        %568 = vrot.lane.b32.xlu0 %v563, 55
        %v569 = vpop.permute.xlu0 %568
        %vm570 = vcmask 449536
        %v571 = vsel %vm570, %v567, %v569
        %v575 = vmul.f32 %v553, %v567
        %v576 = vmul.f32 %v554, %v571
        %v577 = vmul.f32 %v555, %v569
        %v578 = vpack.c.bf16 %v575, %v575
        %v579 = vpack.c.bf16 %v576, %v576
        %v580 = vpack.c.bf16 %v577, %v577
        %v581 = vlaneseq
        %v582 = vshrl.u32 %v581, 7
        %v583 = vsub.s32 1, %v582
        %v584 = vrot.slane %v545, %v583
        %v585 = vlaneseq
        %v586 = vshrl.u32 %v585, 7
        %v587 = vsub.s32 1, %v586
        %v588 = vrot.slane %v546, %v587
        %591 = vrot.lane.b32.xlu0 %v584, 56
        %v592 = vpop.permute.xlu0 %591
        %593 = vrot.lane.b32.xlu0 %v588, 56
        %v594 = vpop.permute.xlu0 %593
        %vm595 = vcmask 457728
        %v596 = vsel %vm595, %v592, %v594
        %v600 = vmul.f32 %v553, %v592
        %v601 = vmul.f32 %v554, %v596
        %v602 = vmul.f32 %v555, %v594
        %v603 = vpack.c.bf16 %v600, %v600
        %v604 = vpack.c.bf16 %v601, %v601
        %v605 = vpack.c.bf16 %v602, %v602
        %609 = vrot.lane.b32.xlu0 %v603, 72
        %v610 = vpop.permute.xlu0 %609
        %611 = vrot.lane.b32.xlu0 %v604, 72
        %v612 = vpop.permute.xlu0 %611
        %613 = vrot.lane.b32.xlu0 %v605, 72
        %v614 = vpop.permute.xlu0 %613
        %vm615 = vcmask 588800
        %v616 = vsel %vm615, %v610, %v612
        %v617 = vsel %vm615, %v612, %v614
        %vm618 = vcmask 64512
        %v620 = vsel %vm618, %v519, 0
        %vm622 = vcmask 1043456
        %v624 = vsel %vm622, %v616, 0
        %v627 = vsel %vm622, %v617, 0
        %629 = vmatprep.subr.bf16.mxu0 %v627
        %630 = vmatpush1.bf16.msra.mxu0 %v624
        %631 = vmatprep.subr.bf16.mxu0 0
        %632 = vmatpush1.bf16.msra.mxu0 0
        %633 = vmatprep.subr.bf16.mxu0 0
        %634 = vmatpush1.bf16.msra.mxu0 0
        %635 = vmatprep.subr.bf16.mxu0 0
        %636 = vmatpush1.bf16.msra.mxu0 0
        %637 = vmatprep.subr.bf16.mxu0 0
        %638 = vmatpush1.bf16.msra.mxu0 0
        %639 = vmatprep.subr.bf16.mxu0 0
        %640 = vmatpush1.bf16.msra.mxu0 0
        %641 = vmatprep.subr.bf16.mxu0 0
        %642 = vmatpush1.bf16.msra.mxu0 0
        %643 = vmatprep.subr.bf16.mxu0 0
        %644 = vmatpush1.bf16.msra.mxu0 0
        %645 = vmatprep.subr.bf16.mxu0 0
        %646 = vmatpush1.bf16.msra.mxu0 0
        %647 = vmatprep.subr.bf16.mxu0 0
        %648 = vmatpush1.bf16.msra.mxu0 0
        %649 = vmatprep.subr.bf16.mxu0 0
        %650 = vmatpush1.bf16.msra.mxu0 0
        %651 = vmatprep.subr.bf16.mxu0 0
        %652 = vmatpush1.bf16.msra.mxu0 0
        %653 = vmatprep.subr.bf16.mxu0 0
        %654 = vmatpush1.bf16.msra.mxu0 0
        %655 = vmatprep.subr.bf16.mxu0 0
        %656 = vmatpush1.bf16.msra.mxu0 0
        %657 = vmatprep.subr.bf16.mxu0 0
        %658 = vmatpush1.bf16.msra.mxu0 0
        %659 = vmatprep.subr.bf16.mxu0 0
        %660 = vmatpush1.bf16.msra.mxu0 0
        %661 = vmatprep.mubr.bf16.mxu0 0
        %662 = vmatmul.mubr.bf16.gmra.mrb[0].mxu0 %v620
        %v663 = vpop.f32.mrb[0].mxu0
        %v664 = vadd.f32 0.0, %v663
        %v665 = vpop.f32.mrb[0].mxu0
        %v666 = vadd.f32 0.0, %v665
        %v667 = vpop.f32.mrb[0].mxu0
        %v668 = vpop.f32.mrb[0].mxu0
        %669 = vdwg.mxu0
        %673 = vrot.lane.b32.xlu0 %v578, 73
        %v674 = vpop.permute.xlu0 %673
        %675 = vrot.lane.b32.xlu0 %v579, 73
        %v676 = vpop.permute.xlu0 %675
        %677 = vrot.lane.b32.xlu0 %v580, 73
        %v678 = vpop.permute.xlu0 %677
        %vm679 = vcmask 596992
        %v680 = vsel %vm679, %v674, %v676
        %v681 = vsel %vm679, %v676, %v678
        %v683 = vsel %vm618, %v518, 0
        %v686 = vsel %vm622, %v680, 0
        %v689 = vsel %vm622, %v681, 0
        %691 = vmatprep.subr.bf16.mxu0 %v689
        %692 = vmatpush1.bf16.msra.mxu0 %v686
        %693 = vmatprep.subr.bf16.mxu0 0
        %694 = vmatpush1.bf16.msra.mxu0 0
        %695 = vmatprep.subr.bf16.mxu0 0
        %696 = vmatpush1.bf16.msra.mxu0 0
        %697 = vmatprep.subr.bf16.mxu0 0
        %698 = vmatpush1.bf16.msra.mxu0 0
        %699 = vmatprep.subr.bf16.mxu0 0
        %700 = vmatpush1.bf16.msra.mxu0 0
        %701 = vmatprep.subr.bf16.mxu0 0
        %702 = vmatpush1.bf16.msra.mxu0 0
        %703 = vmatprep.subr.bf16.mxu0 0
        %704 = vmatpush1.bf16.msra.mxu0 0
        %705 = vmatprep.subr.bf16.mxu0 0
        %706 = vmatpush1.bf16.msra.mxu0 0
        %707 = vmatprep.subr.bf16.mxu0 0
        %708 = vmatpush1.bf16.msra.mxu0 0
        %709 = vmatprep.subr.bf16.mxu0 0
        %710 = vmatpush1.bf16.msra.mxu0 0
        %711 = vmatprep.subr.bf16.mxu0 0
        %712 = vmatpush1.bf16.msra.mxu0 0
        %713 = vmatprep.subr.bf16.mxu0 0
        %714 = vmatpush1.bf16.msra.mxu0 0
        %715 = vmatprep.subr.bf16.mxu0 0
        %716 = vmatpush1.bf16.msra.mxu0 0
        %717 = vmatprep.subr.bf16.mxu0 0
        %718 = vmatpush1.bf16.msra.mxu0 0
        %719 = vmatprep.subr.bf16.mxu0 0
        %720 = vmatpush1.bf16.msra.mxu0 0
        %721 = vmatprep.subr.bf16.mxu0 0
        %722 = vmatpush1.bf16.msra.mxu0 0
        %723 = vmatprep.mubr.bf16.mxu0 0
        %724 = vmatmul.mubr.bf16.gmra.mrb[0].mxu0 %v683
        %v725 = vpop.f32.mrb[0].mxu0
        %v726 = vadd.f32 %v664, %v725
        %v727 = vpop.f32.mrb[0].mxu0
        %v728 = vadd.f32 %v666, %v727
        %v729 = vpop.f32.mrb[0].mxu0
        %v730 = vpop.f32.mrb[0].mxu0
        %731 = vdwg.mxu0
        %v732 = vlaneseq
        %v733 = vshrl.u32 %v732, 7
        %v734 = vsub.s32 2, %v733
        %v735 = vrot.slane %v545, %v734
        %v736 = vlaneseq
        %v737 = vshrl.u32 %v736, 7
        %v738 = vsub.s32 2, %v737
        %v739 = vrot.slane %v546, %v738
        %742 = vrot.lane.b32.xlu0 %v735, 57
        %v743 = vpop.permute.xlu0 %742
        %744 = vrot.lane.b32.xlu0 %v739, 57
        %v745 = vpop.permute.xlu0 %744
        %vm746 = vcmask 465920
        %v747 = vsel %vm746, %v743, %v745
        %v751 = vmul.f32 %v553, %v743
        %v752 = vmul.f32 %v554, %v747
        %v753 = vmul.f32 %v555, %v745
        %v754 = vpack.c.bf16 %v751, %v751
        %v755 = vpack.c.bf16 %v752, %v752
        %v756 = vpack.c.bf16 %v753, %v753
        %760 = vrot.lane.b32.xlu0 %v754, 71
        %v761 = vpop.permute.xlu0 %760
        %762 = vrot.lane.b32.xlu0 %v755, 71
        %v763 = vpop.permute.xlu0 %762
        %764 = vrot.lane.b32.xlu0 %v756, 71
        %v765 = vpop.permute.xlu0 %764
        %vm766 = vcmask 580608
        %v767 = vsel %vm766, %v761, %v763
        %v768 = vsel %vm766, %v763, %v765
        %v770 = vsel %vm618, %v520, 0
        %v773 = vsel %vm622, %v767, 0
        %v776 = vsel %vm622, %v768, 0
        %778 = vmatprep.subr.bf16.mxu0 %v776
        %779 = vmatpush1.bf16.msra.mxu0 %v773
        %780 = vmatprep.subr.bf16.mxu0 0
        %781 = vmatpush1.bf16.msra.mxu0 0
        %782 = vmatprep.subr.bf16.mxu0 0
        %783 = vmatpush1.bf16.msra.mxu0 0
        %784 = vmatprep.subr.bf16.mxu0 0
        %785 = vmatpush1.bf16.msra.mxu0 0
        %786 = vmatprep.subr.bf16.mxu0 0
        %787 = vmatpush1.bf16.msra.mxu0 0
        %788 = vmatprep.subr.bf16.mxu0 0
        %789 = vmatpush1.bf16.msra.mxu0 0
        %790 = vmatprep.subr.bf16.mxu0 0
        %791 = vmatpush1.bf16.msra.mxu0 0
        %792 = vmatprep.subr.bf16.mxu0 0
        %793 = vmatpush1.bf16.msra.mxu0 0
        %794 = vmatprep.subr.bf16.mxu0 0
        %795 = vmatpush1.bf16.msra.mxu0 0
        %796 = vmatprep.subr.bf16.mxu0 0
        %797 = vmatpush1.bf16.msra.mxu0 0
        %798 = vmatprep.subr.bf16.mxu0 0
        %799 = vmatpush1.bf16.msra.mxu0 0
        %800 = vmatprep.subr.bf16.mxu0 0
        %801 = vmatpush1.bf16.msra.mxu0 0
        %802 = vmatprep.subr.bf16.mxu0 0
        %803 = vmatpush1.bf16.msra.mxu0 0
        %804 = vmatprep.subr.bf16.mxu0 0
        %805 = vmatpush1.bf16.msra.mxu0 0
        %806 = vmatprep.subr.bf16.mxu0 0
        %807 = vmatpush1.bf16.msra.mxu0 0
        %808 = vmatprep.subr.bf16.mxu0 0
        %809 = vmatpush1.bf16.msra.mxu0 0
        %810 = vmatprep.mubr.bf16.mxu0 0
        %811 = vmatmul.mubr.bf16.gmra.mrb[0].mxu0 %v770
        %v812 = vpop.f32.mrb[0].mxu0
        %v813 = vadd.f32 0.0, %v812
        %v814 = vpop.f32.mrb[0].mxu0
        %v815 = vadd.f32 0.0, %v814
        %v816 = vpop.f32.mrb[0].mxu0
        %v817 = vpop.f32.mrb[0].mxu0
        %818 = vdwg.mxu0
        %v819 = vadd.f32 %v726, %v813
        %v820 = vadd.f32 %v728, %v815
        %v821 = vlaneseq
        %v822 = vshrl.u32 %v821, 7
        %v823 = vsub.s32 3, %v822
        %v824 = vrot.slane %v545, %v823
        %v825 = vlaneseq
        %v826 = vshrl.u32 %v825, 7
        %v827 = vsub.s32 3, %v826
        %v828 = vrot.slane %v546, %v827
        %831 = vrot.lane.b32.xlu0 %v824, 63
        %v832 = vpop.permute.xlu0 %831
        %833 = vrot.lane.b32.xlu0 %v828, 63
        %v834 = vpop.permute.xlu0 %833
        %vm835 = vcmask 515072
        %v836 = vsel %vm835, %v832, %v834
        %v840 = vmul.f32 %v553, %v832
        %v841 = vmul.f32 %v554, %v836
        %v842 = vmul.f32 %v555, %v834
        %v843 = vpack.c.bf16 %v840, %v840
        %v844 = vpack.c.bf16 %v841, %v841
        %v845 = vpack.c.bf16 %v842, %v842
        %849 = vrot.lane.b32.xlu0 %v843, 65
        %v850 = vpop.permute.xlu0 %849
        %851 = vrot.lane.b32.xlu0 %v844, 65
        %v852 = vpop.permute.xlu0 %851
        %853 = vrot.lane.b32.xlu0 %v845, 65
        %v854 = vpop.permute.xlu0 %853
        %vm855 = vcmask 531456
        %v856 = vsel %vm855, %v850, %v852
        %v857 = vsel %vm855, %v852, %v854
        %v859 = vsel %vm618, %v521, 0
        %v862 = vsel %vm622, %v856, 0
        %v865 = vsel %vm622, %v857, 0
        %867 = vmatprep.subr.bf16.mxu0 %v865
        %868 = vmatpush1.bf16.msra.mxu0 %v862
        %869 = vmatprep.subr.bf16.mxu0 0
        %870 = vmatpush1.bf16.msra.mxu0 0
        %871 = vmatprep.subr.bf16.mxu0 0
        %872 = vmatpush1.bf16.msra.mxu0 0
        %873 = vmatprep.subr.bf16.mxu0 0
        %874 = vmatpush1.bf16.msra.mxu0 0
        %875 = vmatprep.subr.bf16.mxu0 0
        %876 = vmatpush1.bf16.msra.mxu0 0
        %877 = vmatprep.subr.bf16.mxu0 0
        %878 = vmatpush1.bf16.msra.mxu0 0
        %879 = vmatprep.subr.bf16.mxu0 0
        %880 = vmatpush1.bf16.msra.mxu0 0
        %881 = vmatprep.subr.bf16.mxu0 0
        %882 = vmatpush1.bf16.msra.mxu0 0
        %883 = vmatprep.subr.bf16.mxu0 0
        %884 = vmatpush1.bf16.msra.mxu0 0
        %885 = vmatprep.subr.bf16.mxu0 0
        %886 = vmatpush1.bf16.msra.mxu0 0
        %887 = vmatprep.subr.bf16.mxu0 0
        %888 = vmatpush1.bf16.msra.mxu0 0
        %889 = vmatprep.subr.bf16.mxu0 0
        %890 = vmatpush1.bf16.msra.mxu0 0
        %891 = vmatprep.subr.bf16.mxu0 0
        %892 = vmatpush1.bf16.msra.mxu0 0
        %893 = vmatprep.subr.bf16.mxu0 0
        %894 = vmatpush1.bf16.msra.mxu0 0
        %895 = vmatprep.subr.bf16.mxu0 0
        %896 = vmatpush1.bf16.msra.mxu0 0
        %897 = vmatprep.subr.bf16.mxu0 0
        %898 = vmatpush1.bf16.msra.mxu0 0
        %899 = vmatprep.mubr.bf16.mxu0 0
        %900 = vmatmul.mubr.bf16.gmra.mrb[0].mxu0 %v859
        %v901 = vpop.f32.mrb[0].mxu0
        %v902 = vadd.f32 0.0, %v901
        %v903 = vpop.f32.mrb[0].mxu0
        %v904 = vadd.f32 0.0, %v903
        %v905 = vpop.f32.mrb[0].mxu0
        %v906 = vpop.f32.mrb[0].mxu0
        %907 = vdwg.mxu0
        %v908 = vadd.f32 %v819, %v902
        %v909 = vadd.f32 %v820, %v904
        %v910 = vlaneseq
        %v911 = vshrl.u32 %v910, 7
        %v912 = vsub.s32 4, %v911
        %v913 = vrot.slane %v545, %v912
        %v914 = vlaneseq
        %v915 = vshrl.u32 %v914, 7
        %v916 = vsub.s32 4, %v915
        %v917 = vrot.slane %v546, %v916
        %920 = vrot.lane.b32.xlu0 %v913, 64
        %v921 = vpop.permute.xlu0 %920
        %922 = vrot.lane.b32.xlu0 %v917, 64
        %v923 = vpop.permute.xlu0 %922
        %vm924 = vcmask 523264
        %v925 = vsel %vm924, %v921, %v923
        %v929 = vmul.f32 %v553, %v921
        %v930 = vmul.f32 %v554, %v925
        %v931 = vmul.f32 %v555, %v923
        %v932 = vpack.c.bf16 %v929, %v929
        %v933 = vpack.c.bf16 %v930, %v930
        %v934 = vpack.c.bf16 %v931, %v931
        %938 = vrot.lane.b32.xlu0 %v932, 64
        %v939 = vpop.permute.xlu0 %938
        %940 = vrot.lane.b32.xlu0 %v933, 64
        %v941 = vpop.permute.xlu0 %940
        %942 = vrot.lane.b32.xlu0 %v934, 64
        %v943 = vpop.permute.xlu0 %942
        %vm944 = vcmask 523264
        %v945 = vsel %vm944, %v939, %v941
        %v946 = vsel %vm944, %v941, %v943
        %v948 = vsel %vm618, %v522, 0
        %v951 = vsel %vm622, %v945, 0
        %v954 = vsel %vm622, %v946, 0
        %956 = vmatprep.subr.bf16.mxu0 %v954
        %957 = vmatpush1.bf16.msra.mxu0 %v951
        %958 = vmatprep.subr.bf16.mxu0 0
        %959 = vmatpush1.bf16.msra.mxu0 0
        %960 = vmatprep.subr.bf16.mxu0 0
        %961 = vmatpush1.bf16.msra.mxu0 0
        %962 = vmatprep.subr.bf16.mxu0 0
        %963 = vmatpush1.bf16.msra.mxu0 0
        %964 = vmatprep.subr.bf16.mxu0 0
        %965 = vmatpush1.bf16.msra.mxu0 0
        %966 = vmatprep.subr.bf16.mxu0 0
        %967 = vmatpush1.bf16.msra.mxu0 0
        %968 = vmatprep.subr.bf16.mxu0 0
        %969 = vmatpush1.bf16.msra.mxu0 0
        %970 = vmatprep.subr.bf16.mxu0 0
        %971 = vmatpush1.bf16.msra.mxu0 0
        %972 = vmatprep.subr.bf16.mxu0 0
        %973 = vmatpush1.bf16.msra.mxu0 0
        %974 = vmatprep.subr.bf16.mxu0 0
        %975 = vmatpush1.bf16.msra.mxu0 0
        %976 = vmatprep.subr.bf16.mxu0 0
        %977 = vmatpush1.bf16.msra.mxu0 0
        %978 = vmatprep.subr.bf16.mxu0 0
        %979 = vmatpush1.bf16.msra.mxu0 0
        %980 = vmatprep.subr.bf16.mxu0 0
        %981 = vmatpush1.bf16.msra.mxu0 0
        %982 = vmatprep.subr.bf16.mxu0 0
        %983 = vmatpush1.bf16.msra.mxu0 0
        %984 = vmatprep.subr.bf16.mxu0 0
        %985 = vmatpush1.bf16.msra.mxu0 0
        %986 = vmatprep.subr.bf16.mxu0 0
        %987 = vmatpush1.bf16.msra.mxu0 0
        %988 = vmatprep.mubr.bf16.mxu0 0
        %989 = vmatmul.mubr.bf16.gmra.mrb[0].mxu0 %v948
        %v990 = vpop.f32.mrb[0].mxu0
        %v991 = vadd.f32 0.0, %v990
        %v992 = vpop.f32.mrb[0].mxu0
        %v993 = vadd.f32 0.0, %v992
        %v994 = vpop.f32.mrb[0].mxu0
        %v995 = vpop.f32.mrb[0].mxu0
        %996 = vdwg.mxu0
        %v997 = vadd.f32 %v908, %v991
        %v998 = vadd.f32 %v909, %v993
        %v999 = vlaneseq
        %v1000 = vshrl.u32 %v999, 7
        %v1001 = vsub.s32 5, %v1000
        %v1002 = vrot.slane %v545, %v1001
        %v1003 = vlaneseq
        %v1004 = vshrl.u32 %v1003, 7
        %v1005 = vsub.s32 5, %v1004
        %v1006 = vrot.slane %v546, %v1005
        %1009 = vrot.lane.b32.xlu0 %v1002, 65
        %v1010 = vpop.permute.xlu0 %1009
        %1011 = vrot.lane.b32.xlu0 %v1006, 65
        %v1012 = vpop.permute.xlu0 %1011
        %vm1013 = vcmask 531456
        %v1014 = vsel %vm1013, %v1010, %v1012
        %v1018 = vmul.f32 %v553, %v1010
        %v1019 = vmul.f32 %v554, %v1014
        %v1020 = vmul.f32 %v555, %v1012
        %v1021 = vpack.c.bf16 %v1018, %v1018
        %v1022 = vpack.c.bf16 %v1019, %v1019
        %v1023 = vpack.c.bf16 %v1020, %v1020
        %1027 = vrot.lane.b32.xlu0 %v1021, 63
        %v1028 = vpop.permute.xlu0 %1027
        %1029 = vrot.lane.b32.xlu0 %v1022, 63
        %v1030 = vpop.permute.xlu0 %1029
        %1031 = vrot.lane.b32.xlu0 %v1023, 63
        %v1032 = vpop.permute.xlu0 %1031
        %vm1033 = vcmask 515072
        %v1034 = vsel %vm1033, %v1028, %v1030
        %v1035 = vsel %vm1033, %v1030, %v1032
        %v1037 = vsel %vm618, %v523, 0
        %v1040 = vsel %vm622, %v1034, 0
        %v1043 = vsel %vm622, %v1035, 0
        %1045 = vmatprep.subr.bf16.mxu0 %v1043
        %1046 = vmatpush1.bf16.msra.mxu0 %v1040
        %1047 = vmatprep.subr.bf16.mxu0 0
        %1048 = vmatpush1.bf16.msra.mxu0 0
        %1049 = vmatprep.subr.bf16.mxu0 0
        %1050 = vmatpush1.bf16.msra.mxu0 0
        %1051 = vmatprep.subr.bf16.mxu0 0
        %1052 = vmatpush1.bf16.msra.mxu0 0
        %1053 = vmatprep.subr.bf16.mxu0 0
        %1054 = vmatpush1.bf16.msra.mxu0 0
        %1055 = vmatprep.subr.bf16.mxu0 0
        %1056 = vmatpush1.bf16.msra.mxu0 0
        %1057 = vmatprep.subr.bf16.mxu0 0
        %1058 = vmatpush1.bf16.msra.mxu0 0
        %1059 = vmatprep.subr.bf16.mxu0 0
        %1060 = vmatpush1.bf16.msra.mxu0 0
        %1061 = vmatprep.subr.bf16.mxu0 0
        %1062 = vmatpush1.bf16.msra.mxu0 0
        %1063 = vmatprep.subr.bf16.mxu0 0
        %1064 = vmatpush1.bf16.msra.mxu0 0
        %1065 = vmatprep.subr.bf16.mxu0 0
        %1066 = vmatpush1.bf16.msra.mxu0 0
        %1067 = vmatprep.subr.bf16.mxu0 0
        %1068 = vmatpush1.bf16.msra.mxu0 0
        %1069 = vmatprep.subr.bf16.mxu0 0
        %1070 = vmatpush1.bf16.msra.mxu0 0
        %1071 = vmatprep.subr.bf16.mxu0 0
        %1072 = vmatpush1.bf16.msra.mxu0 0
        %1073 = vmatprep.subr.bf16.mxu0 0
        %1074 = vmatpush1.bf16.msra.mxu0 0
        %1075 = vmatprep.subr.bf16.mxu0 0
        %1076 = vmatpush1.bf16.msra.mxu0 0
        %1077 = vmatprep.mubr.bf16.mxu0 0
        %1078 = vmatmul.mubr.bf16.gmra.mrb[0].mxu0 %v1037
        %v1079 = vpop.f32.mrb[0].mxu0
        %v1080 = vadd.f32 0.0, %v1079
        %v1081 = vpop.f32.mrb[0].mxu0
        %v1082 = vadd.f32 0.0, %v1081
        %v1083 = vpop.f32.mrb[0].mxu0
        %v1084 = vpop.f32.mrb[0].mxu0
        %1085 = vdwg.mxu0
        %v1086 = vadd.f32 %v997, %v1080
        %v1087 = vadd.f32 %v998, %v1082
        %v1088 = vlaneseq
        %v1089 = vshrl.u32 %v1088, 7
        %v1090 = vsub.s32 6, %v1089
        %v1091 = vrot.slane %v545, %v1090
        %v1092 = vlaneseq
        %v1093 = vshrl.u32 %v1092, 7
        %v1094 = vsub.s32 6, %v1093
        %v1095 = vrot.slane %v546, %v1094
        %1098 = vrot.lane.b32.xlu0 %v1091, 71
        %v1099 = vpop.permute.xlu0 %1098
        %1100 = vrot.lane.b32.xlu0 %v1095, 71
        %v1101 = vpop.permute.xlu0 %1100
        %vm1102 = vcmask 580608
        %v1103 = vsel %vm1102, %v1099, %v1101
        %v1107 = vmul.f32 %v553, %v1099
        %v1108 = vmul.f32 %v554, %v1103
        %v1109 = vmul.f32 %v555, %v1101
        %v1110 = vpack.c.bf16 %v1107, %v1107
        %v1111 = vpack.c.bf16 %v1108, %v1108
        %v1112 = vpack.c.bf16 %v1109, %v1109
        %1116 = vrot.lane.b32.xlu0 %v1110, 57
        %v1117 = vpop.permute.xlu0 %1116
        %1118 = vrot.lane.b32.xlu0 %v1111, 57
        %v1119 = vpop.permute.xlu0 %1118
        %1120 = vrot.lane.b32.xlu0 %v1112, 57
        %v1121 = vpop.permute.xlu0 %1120
        %vm1122 = vcmask 465920
        %v1123 = vsel %vm1122, %v1117, %v1119
        %v1124 = vsel %vm1122, %v1119, %v1121
        %v1126 = vsel %vm618, %v524, 0
        %v1129 = vsel %vm622, %v1123, 0
        %v1132 = vsel %vm622, %v1124, 0
        %1134 = vmatprep.subr.bf16.mxu0 %v1132
        %1135 = vmatpush1.bf16.msra.mxu0 %v1129
        %1136 = vmatprep.subr.bf16.mxu0 0
        %1137 = vmatpush1.bf16.msra.mxu0 0
        %1138 = vmatprep.subr.bf16.mxu0 0
        %1139 = vmatpush1.bf16.msra.mxu0 0
        %1140 = vmatprep.subr.bf16.mxu0 0
        %1141 = vmatpush1.bf16.msra.mxu0 0
        %1142 = vmatprep.subr.bf16.mxu0 0
        %1143 = vmatpush1.bf16.msra.mxu0 0
        %1144 = vmatprep.subr.bf16.mxu0 0
        %1145 = vmatpush1.bf16.msra.mxu0 0
        %1146 = vmatprep.subr.bf16.mxu0 0
        %1147 = vmatpush1.bf16.msra.mxu0 0
        %1148 = vmatprep.subr.bf16.mxu0 0
        %1149 = vmatpush1.bf16.msra.mxu0 0
        %1150 = vmatprep.subr.bf16.mxu0 0
        %1151 = vmatpush1.bf16.msra.mxu0 0
        %1152 = vmatprep.subr.bf16.mxu0 0
        %1153 = vmatpush1.bf16.msra.mxu0 0
        %1154 = vmatprep.subr.bf16.mxu0 0
        %1155 = vmatpush1.bf16.msra.mxu0 0
        %1156 = vmatprep.subr.bf16.mxu0 0
        %1157 = vmatpush1.bf16.msra.mxu0 0
        %1158 = vmatprep.subr.bf16.mxu0 0
        %1159 = vmatpush1.bf16.msra.mxu0 0
        %1160 = vmatprep.subr.bf16.mxu0 0
        %1161 = vmatpush1.bf16.msra.mxu0 0
        %1162 = vmatprep.subr.bf16.mxu0 0
        %1163 = vmatpush1.bf16.msra.mxu0 0
        %1164 = vmatprep.subr.bf16.mxu0 0
        %1165 = vmatpush1.bf16.msra.mxu0 0
        %1166 = vmatprep.mubr.bf16.mxu0 0
        %1167 = vmatmul.mubr.bf16.gmra.mrb[0].mxu0 %v1126
        %v1168 = vpop.f32.mrb[0].mxu0
        %v1169 = vadd.f32 0.0, %v1168
        %v1170 = vpop.f32.mrb[0].mxu0
        %v1171 = vadd.f32 0.0, %v1170
        %v1172 = vpop.f32.mrb[0].mxu0
        %v1173 = vpop.f32.mrb[0].mxu0
        %1174 = vdwg.mxu0
        %v1175 = vadd.f32 %v1086, %v1169
        %v1176 = vadd.f32 %v1087, %v1171
        %v1177 = vlaneseq
        %v1178 = vshrl.u32 %v1177, 7
        %v1179 = vsub.s32 7, %v1178
        %v1180 = vrot.slane %v545, %v1179
        %v1181 = vlaneseq
        %v1182 = vshrl.u32 %v1181, 7
        %v1183 = vsub.s32 7, %v1182
        %v1184 = vrot.slane %v546, %v1183
        %1187 = vrot.lane.b32.xlu0 %v1180, 72
        %v1188 = vpop.permute.xlu0 %1187
        %1189 = vrot.lane.b32.xlu0 %v1184, 72
        %v1190 = vpop.permute.xlu0 %1189
        %vm1191 = vcmask 588800
        %v1192 = vsel %vm1191, %v1188, %v1190
        %v1196 = vmul.f32 %v553, %v1188
        %v1197 = vmul.f32 %v554, %v1192
        %v1198 = vmul.f32 %v555, %v1190
        %v1199 = vpack.c.bf16 %v1196, %v1196
        %v1200 = vpack.c.bf16 %v1197, %v1197
        %v1201 = vpack.c.bf16 %v1198, %v1198
        %1205 = vrot.lane.b32.xlu0 %v1199, 56
        %v1206 = vpop.permute.xlu0 %1205
        %1207 = vrot.lane.b32.xlu0 %v1200, 56
        %v1208 = vpop.permute.xlu0 %1207
        %1209 = vrot.lane.b32.xlu0 %v1201, 56
        %v1210 = vpop.permute.xlu0 %1209
        %vm1211 = vcmask 457728
        %v1212 = vsel %vm1211, %v1206, %v1208
        %v1213 = vsel %vm1211, %v1208, %v1210
        %v1215 = vsel %vm618, %v525, 0
        %v1218 = vsel %vm622, %v1212, 0
        %v1221 = vsel %vm622, %v1213, 0
        %1223 = vmatprep.subr.bf16.mxu0 %v1221
        %1224 = vmatpush1.bf16.msra.mxu0 %v1218
        %1225 = vmatprep.subr.bf16.mxu0 0
        %1226 = vmatpush1.bf16.msra.mxu0 0
        %1227 = vmatprep.subr.bf16.mxu0 0
        %1228 = vmatpush1.bf16.msra.mxu0 0
        %1229 = vmatprep.subr.bf16.mxu0 0
        %1230 = vmatpush1.bf16.msra.mxu0 0
        %1231 = vmatprep.subr.bf16.mxu0 0
        %1232 = vmatpush1.bf16.msra.mxu0 0
        %1233 = vmatprep.subr.bf16.mxu0 0
        %1234 = vmatpush1.bf16.msra.mxu0 0
        %1235 = vmatprep.subr.bf16.mxu0 0
        %1236 = vmatpush1.bf16.msra.mxu0 0
        %1237 = vmatprep.subr.bf16.mxu0 0
        %1238 = vmatpush1.bf16.msra.mxu0 0
        %1239 = vmatprep.subr.bf16.mxu0 0
        %1240 = vmatpush1.bf16.msra.mxu0 0
        %1241 = vmatprep.subr.bf16.mxu0 0
        %1242 = vmatpush1.bf16.msra.mxu0 0
        %1243 = vmatprep.subr.bf16.mxu0 0
        %1244 = vmatpush1.bf16.msra.mxu0 0
        %1245 = vmatprep.subr.bf16.mxu0 0
        %1246 = vmatpush1.bf16.msra.mxu0 0
        %1247 = vmatprep.subr.bf16.mxu0 0
        %1248 = vmatpush1.bf16.msra.mxu0 0
        %1249 = vmatprep.subr.bf16.mxu0 0
        %1250 = vmatpush1.bf16.msra.mxu0 0
        %1251 = vmatprep.subr.bf16.mxu0 0
        %1252 = vmatpush1.bf16.msra.mxu0 0
        %1253 = vmatprep.subr.bf16.mxu0 0
        %1254 = vmatpush1.bf16.msra.mxu0 0
        %1255 = vmatprep.mubr.bf16.mxu0 0
        %1256 = vmatmul.mubr.bf16.gmra.mrb[0].mxu0 %v1215
        %v1257 = vpop.f32.mrb[0].mxu0
        %v1258 = vadd.f32 0.0, %v1257
        %v1259 = vpop.f32.mrb[0].mxu0
        %v1260 = vadd.f32 0.0, %v1259
        %v1261 = vpop.f32.mrb[0].mxu0
        %v1262 = vpop.f32.mrb[0].mxu0
        %1263 = vdwg.mxu0
        %v1264 = vadd.f32 %v1175, %v1258
        %v1265 = vadd.f32 %v1176, %v1260
        %v1266 = vlaneseq
        %v1267 = vshrl.u32 %v1266, 7
        %v1268 = vsub.s32 0, %v1267
        %v1269 = vrot.slane %v547, %v1268
        %v1270 = vlaneseq
        %v1271 = vshrl.u32 %v1270, 7
        %v1272 = vsub.s32 0, %v1271
        %v1273 = vrot.slane %v548, %v1272
        %1276 = vrot.lane.b32.xlu0 %v1269, 73
        %v1277 = vpop.permute.xlu0 %1276
        %1278 = vrot.lane.b32.xlu0 %v1273, 73
        %v1279 = vpop.permute.xlu0 %1278
        %vm1280 = vcmask 596992
        %v1281 = vsel %vm1280, %v1277, %v1279
        %v1285 = vmul.f32 %v553, %v1277
        %v1286 = vmul.f32 %v554, %v1281
        %v1287 = vmul.f32 %v555, %v1279
        %v1288 = vpack.c.bf16 %v1285, %v1285
        %v1289 = vpack.c.bf16 %v1286, %v1286
        %v1290 = vpack.c.bf16 %v1287, %v1287
        %1294 = vrot.lane.b32.xlu0 %v1288, 55
        %v1295 = vpop.permute.xlu0 %1294
        %1296 = vrot.lane.b32.xlu0 %v1289, 55
        %v1297 = vpop.permute.xlu0 %1296
        %1298 = vrot.lane.b32.xlu0 %v1290, 55
        %v1299 = vpop.permute.xlu0 %1298
        %vm1300 = vcmask 449536
        %v1301 = vsel %vm1300, %v1295, %v1297
        %v1302 = vsel %vm1300, %v1297, %v1299
        %v1304 = vsel %vm618, %v526, 0
        %v1307 = vsel %vm622, %v1301, 0
        %v1310 = vsel %vm622, %v1302, 0
        %1312 = vmatprep.subr.bf16.mxu0 %v1310
        %1313 = vmatpush1.bf16.msra.mxu0 %v1307
        %1314 = vmatprep.subr.bf16.mxu0 0
        %1315 = vmatpush1.bf16.msra.mxu0 0
        %1316 = vmatprep.subr.bf16.mxu0 0
        %1317 = vmatpush1.bf16.msra.mxu0 0
        %1318 = vmatprep.subr.bf16.mxu0 0
        %1319 = vmatpush1.bf16.msra.mxu0 0
        %1320 = vmatprep.subr.bf16.mxu0 0
        %1321 = vmatpush1.bf16.msra.mxu0 0
        %1322 = vmatprep.subr.bf16.mxu0 0
        %1323 = vmatpush1.bf16.msra.mxu0 0
        %1324 = vmatprep.subr.bf16.mxu0 0
        %1325 = vmatpush1.bf16.msra.mxu0 0
        %1326 = vmatprep.subr.bf16.mxu0 0
        %1327 = vmatpush1.bf16.msra.mxu0 0
        %1328 = vmatprep.subr.bf16.mxu0 0
        %1329 = vmatpush1.bf16.msra.mxu0 0
        %1330 = vmatprep.subr.bf16.mxu0 0
        %1331 = vmatpush1.bf16.msra.mxu0 0
        %1332 = vmatprep.subr.bf16.mxu0 0
        %1333 = vmatpush1.bf16.msra.mxu0 0
        %1334 = vmatprep.subr.bf16.mxu0 0
        %1335 = vmatpush1.bf16.msra.mxu0 0
        %1336 = vmatprep.subr.bf16.mxu0 0
        %1337 = vmatpush1.bf16.msra.mxu0 0
        %1338 = vmatprep.subr.bf16.mxu0 0
        %1339 = vmatpush1.bf16.msra.mxu0 0
        %1340 = vmatprep.subr.bf16.mxu0 0
        %1341 = vmatpush1.bf16.msra.mxu0 0
        %1342 = vmatprep.subr.bf16.mxu0 0
        %1343 = vmatpush1.bf16.msra.mxu0 0
        %1344 = vmatprep.mubr.bf16.mxu0 0
        %1345 = vmatmul.mubr.bf16.gmra.mrb[0].mxu0 %v1304
        %v1346 = vpop.f32.mrb[0].mxu0
        %v1347 = vadd.f32 0.0, %v1346
        %v1348 = vpop.f32.mrb[0].mxu0
        %v1349 = vadd.f32 0.0, %v1348
        %v1350 = vpop.f32.mrb[0].mxu0
        %v1351 = vpop.f32.mrb[0].mxu0
        %1352 = vdwg.mxu0
        %v1353 = vadd.f32 %v1264, %v1347
        %v1354 = vadd.f32 %v1265, %v1349
        %v1355 = vlaneseq
        %v1356 = vshrl.u32 %v1355, 7
        %v1357 = vsub.s32 1, %v1356
        %v1358 = vrot.slane %v547, %v1357
        %v1359 = vlaneseq
        %v1360 = vshrl.u32 %v1359, 7
        %v1361 = vsub.s32 1, %v1360
        %v1362 = vrot.slane %v548, %v1361
        %1365 = vrot.lane.b32.xlu0 %v1358, 119
        %v1366 = vpop.permute.xlu0 %1365
        %1367 = vrot.lane.b32.xlu0 %v1362, 119
        %v1368 = vpop.permute.xlu0 %1367
        %vm1369 = vcmask 973824
        %v1370 = vsel %vm1369, %v1366, %v1368
        %v1374 = vmul.f32 %v553, %v1366
        %v1375 = vmul.f32 %v554, %v1370
        %v1376 = vmul.f32 %v555, %v1368
        %v1377 = vpack.c.bf16 %v1374, %v1374
        %v1378 = vpack.c.bf16 %v1375, %v1375
        %v1379 = vpack.c.bf16 %v1376, %v1376
        %1383 = vrot.lane.b32.xlu0 %v1377, 9
        %v1384 = vpop.permute.xlu0 %1383
        %1385 = vrot.lane.b32.xlu0 %v1378, 9
        %v1386 = vpop.permute.xlu0 %1385
        %1387 = vrot.lane.b32.xlu0 %v1379, 9
        %v1388 = vpop.permute.xlu0 %1387
        %vm1389 = vcmask 72704
        %v1390 = vsel %vm1389, %v1384, %v1386
        %v1391 = vsel %vm1389, %v1386, %v1388
        %v1393 = vsel %vm618, %v527, 0
        %v1396 = vsel %vm622, %v1390, 0
        %v1399 = vsel %vm622, %v1391, 0
        %1401 = vmatprep.subr.bf16.mxu0 %v1399
        %1402 = vmatpush1.bf16.msra.mxu0 %v1396
        %1403 = vmatprep.subr.bf16.mxu0 0
        %1404 = vmatpush1.bf16.msra.mxu0 0
        %1405 = vmatprep.subr.bf16.mxu0 0
        %1406 = vmatpush1.bf16.msra.mxu0 0
        %1407 = vmatprep.subr.bf16.mxu0 0
        %1408 = vmatpush1.bf16.msra.mxu0 0
        %1409 = vmatprep.subr.bf16.mxu0 0
        %1410 = vmatpush1.bf16.msra.mxu0 0
        %1411 = vmatprep.subr.bf16.mxu0 0
        %1412 = vmatpush1.bf16.msra.mxu0 0
        %1413 = vmatprep.subr.bf16.mxu0 0
        %1414 = vmatpush1.bf16.msra.mxu0 0
        %1415 = vmatprep.subr.bf16.mxu0 0
        %1416 = vmatpush1.bf16.msra.mxu0 0
        %1417 = vmatprep.subr.bf16.mxu0 0
        %1418 = vmatpush1.bf16.msra.mxu0 0
        %1419 = vmatprep.subr.bf16.mxu0 0
        %1420 = vmatpush1.bf16.msra.mxu0 0
        %1421 = vmatprep.subr.bf16.mxu0 0
        %1422 = vmatpush1.bf16.msra.mxu0 0
        %1423 = vmatprep.subr.bf16.mxu0 0
        %1424 = vmatpush1.bf16.msra.mxu0 0
        %1425 = vmatprep.subr.bf16.mxu0 0
        %1426 = vmatpush1.bf16.msra.mxu0 0
        %1427 = vmatprep.subr.bf16.mxu0 0
        %1428 = vmatpush1.bf16.msra.mxu0 0
        %1429 = vmatprep.subr.bf16.mxu0 0
        %1430 = vmatpush1.bf16.msra.mxu0 0
        %1431 = vmatprep.subr.bf16.mxu0 0
        %1432 = vmatpush1.bf16.msra.mxu0 0
        %1433 = vmatprep.mubr.bf16.mxu0 0
        %1434 = vmatmul.mubr.bf16.gmra.mrb[0].mxu0 %v1393
        %v1435 = vpop.f32.mrb[0].mxu0
        %v1436 = vadd.f32 0.0, %v1435
        %v1437 = vpop.f32.mrb[0].mxu0
        %v1438 = vadd.f32 0.0, %v1437
        %v1439 = vpop.f32.mrb[0].mxu0
        %v1440 = vpop.f32.mrb[0].mxu0
        %1441 = vdwg.mxu0
        %v1442 = vadd.f32 %v1353, %v1436
        %v1443 = vadd.f32 %v1354, %v1438
        %v1444 = vlaneseq
        %v1445 = vshrl.u32 %v1444, 7
        %v1446 = vsub.s32 2, %v1445
        %v1447 = vrot.slane %v547, %v1446
        %v1448 = vlaneseq
        %v1449 = vshrl.u32 %v1448, 7
        %v1450 = vsub.s32 2, %v1449
        %v1451 = vrot.slane %v548, %v1450
        %1454 = vrot.lane.b32.xlu0 %v1447, 120
        %v1455 = vpop.permute.xlu0 %1454
        %1456 = vrot.lane.b32.xlu0 %v1451, 120
        %v1457 = vpop.permute.xlu0 %1456
        %vm1458 = vcmask 982016
        %v1459 = vsel %vm1458, %v1455, %v1457
        %v1463 = vmul.f32 %v553, %v1455
        %v1464 = vmul.f32 %v554, %v1459
        %v1465 = vmul.f32 %v555, %v1457
        %v1466 = vpack.c.bf16 %v1463, %v1463
        %v1467 = vpack.c.bf16 %v1464, %v1464
        %v1468 = vpack.c.bf16 %v1465, %v1465
        %1472 = vrot.lane.b32.xlu0 %v1466, 8
        %v1473 = vpop.permute.xlu0 %1472
        %1474 = vrot.lane.b32.xlu0 %v1467, 8
        %v1475 = vpop.permute.xlu0 %1474
        %1476 = vrot.lane.b32.xlu0 %v1468, 8
        %v1477 = vpop.permute.xlu0 %1476
        %vm1478 = vcmask 64512
        %v1479 = vsel %vm1478, %v1473, %v1475
        %v1480 = vsel %vm1478, %v1475, %v1477
        %v1482 = vsel %vm618, %v528, 0
        %v1485 = vsel %vm622, %v1479, 0
        %v1488 = vsel %vm622, %v1480, 0
        %1490 = vmatprep.subr.bf16.mxu0 %v1488
        %1491 = vmatpush1.bf16.msra.mxu0 %v1485
        %1492 = vmatprep.subr.bf16.mxu0 0
        %1493 = vmatpush1.bf16.msra.mxu0 0
        %1494 = vmatprep.subr.bf16.mxu0 0
        %1495 = vmatpush1.bf16.msra.mxu0 0
        %1496 = vmatprep.subr.bf16.mxu0 0
        %1497 = vmatpush1.bf16.msra.mxu0 0
        %1498 = vmatprep.subr.bf16.mxu0 0
        %1499 = vmatpush1.bf16.msra.mxu0 0
        %1500 = vmatprep.subr.bf16.mxu0 0
        %1501 = vmatpush1.bf16.msra.mxu0 0
        %1502 = vmatprep.subr.bf16.mxu0 0
        %1503 = vmatpush1.bf16.msra.mxu0 0
        %1504 = vmatprep.subr.bf16.mxu0 0
        %1505 = vmatpush1.bf16.msra.mxu0 0
        %1506 = vmatprep.subr.bf16.mxu0 0
        %1507 = vmatpush1.bf16.msra.mxu0 0
        %1508 = vmatprep.subr.bf16.mxu0 0
        %1509 = vmatpush1.bf16.msra.mxu0 0
        %1510 = vmatprep.subr.bf16.mxu0 0
        %1511 = vmatpush1.bf16.msra.mxu0 0
        %1512 = vmatprep.subr.bf16.mxu0 0
        %1513 = vmatpush1.bf16.msra.mxu0 0
        %1514 = vmatprep.subr.bf16.mxu0 0
        %1515 = vmatpush1.bf16.msra.mxu0 0
        %1516 = vmatprep.subr.bf16.mxu0 0
        %1517 = vmatpush1.bf16.msra.mxu0 0
        %1518 = vmatprep.subr.bf16.mxu0 0
        %1519 = vmatpush1.bf16.msra.mxu0 0
        %1520 = vmatprep.subr.bf16.mxu0 0
        %1521 = vmatpush1.bf16.msra.mxu0 0
        %1522 = vmatprep.mubr.bf16.mxu0 0
        %1523 = vmatmul.mubr.bf16.gmra.mrb[0].mxu0 %v1482
        %v1524 = vpop.f32.mrb[0].mxu0
        %v1525 = vadd.f32 0.0, %v1524
        %v1526 = vpop.f32.mrb[0].mxu0
        %v1527 = vadd.f32 0.0, %v1526
        %v1528 = vpop.f32.mrb[0].mxu0
        %v1529 = vpop.f32.mrb[0].mxu0
        %1530 = vdwg.mxu0
        %v1531 = vadd.f32 %v1442, %v1525
        %v1532 = vadd.f32 %v1443, %v1527
        %v1533 = vlaneseq
        %v1534 = vshrl.u32 %v1533, 7
        %v1535 = vsub.s32 3, %v1534
        %v1536 = vrot.slane %v547, %v1535
        %v1537 = vlaneseq
        %v1538 = vshrl.u32 %v1537, 7
        %v1539 = vsub.s32 3, %v1538
        %v1540 = vrot.slane %v548, %v1539
        %1543 = vrot.lane.b32.xlu0 %v1536, 121
        %v1544 = vpop.permute.xlu0 %1543
        %1545 = vrot.lane.b32.xlu0 %v1540, 121
        %v1546 = vpop.permute.xlu0 %1545
        %vm1547 = vcmask 990208
        %v1548 = vsel %vm1547, %v1544, %v1546
        %v1552 = vmul.f32 %v553, %v1544
        %v1553 = vmul.f32 %v554, %v1548
        %v1554 = vmul.f32 %v555, %v1546
        %v1555 = vpack.c.bf16 %v1552, %v1552
        %v1556 = vpack.c.bf16 %v1553, %v1553
        %v1557 = vpack.c.bf16 %v1554, %v1554
        %1561 = vrot.lane.b32.xlu0 %v1555, 7
        %v1562 = vpop.permute.xlu0 %1561
        %1563 = vrot.lane.b32.xlu0 %v1556, 7
        %v1564 = vpop.permute.xlu0 %1563
        %1565 = vrot.lane.b32.xlu0 %v1557, 7
        %v1566 = vpop.permute.xlu0 %1565
        %vm1567 = vcmask 56320
        %v1568 = vsel %vm1567, %v1562, %v1564
        %v1569 = vsel %vm1567, %v1564, %v1566
        %v1571 = vsel %vm618, %v529, 0
        %v1574 = vsel %vm622, %v1568, 0
        %v1577 = vsel %vm622, %v1569, 0
        %1579 = vmatprep.subr.bf16.mxu0 %v1577
        %1580 = vmatpush1.bf16.msra.mxu0 %v1574
        %1581 = vmatprep.subr.bf16.mxu0 0
        %1582 = vmatpush1.bf16.msra.mxu0 0
        %1583 = vmatprep.subr.bf16.mxu0 0
        %1584 = vmatpush1.bf16.msra.mxu0 0
        %1585 = vmatprep.subr.bf16.mxu0 0
        %1586 = vmatpush1.bf16.msra.mxu0 0
        %1587 = vmatprep.subr.bf16.mxu0 0
        %1588 = vmatpush1.bf16.msra.mxu0 0
        %1589 = vmatprep.subr.bf16.mxu0 0
        %1590 = vmatpush1.bf16.msra.mxu0 0
        %1591 = vmatprep.subr.bf16.mxu0 0
        %1592 = vmatpush1.bf16.msra.mxu0 0
        %1593 = vmatprep.subr.bf16.mxu0 0
        %1594 = vmatpush1.bf16.msra.mxu0 0
        %1595 = vmatprep.subr.bf16.mxu0 0
        %1596 = vmatpush1.bf16.msra.mxu0 0
        %1597 = vmatprep.subr.bf16.mxu0 0
        %1598 = vmatpush1.bf16.msra.mxu0 0
        %1599 = vmatprep.subr.bf16.mxu0 0
        %1600 = vmatpush1.bf16.msra.mxu0 0
        %1601 = vmatprep.subr.bf16.mxu0 0
        %1602 = vmatpush1.bf16.msra.mxu0 0
        %1603 = vmatprep.subr.bf16.mxu0 0
        %1604 = vmatpush1.bf16.msra.mxu0 0
        %1605 = vmatprep.subr.bf16.mxu0 0
        %1606 = vmatpush1.bf16.msra.mxu0 0
        %1607 = vmatprep.subr.bf16.mxu0 0
        %1608 = vmatpush1.bf16.msra.mxu0 0
        %1609 = vmatprep.subr.bf16.mxu0 0
        %1610 = vmatpush1.bf16.msra.mxu0 0
        %1611 = vmatprep.mubr.bf16.mxu0 0
        %1612 = vmatmul.mubr.bf16.gmra.mrb[0].mxu0 %v1571
        %v1613 = vpop.f32.mrb[0].mxu0
        %v1614 = vadd.f32 0.0, %v1613
        %v1615 = vpop.f32.mrb[0].mxu0
        %v1616 = vadd.f32 0.0, %v1615
        %v1617 = vpop.f32.mrb[0].mxu0
        %v1618 = vpop.f32.mrb[0].mxu0
        %1619 = vdwg.mxu0
        %v1620 = vadd.f32 %v1531, %v1614
        %v1621 = vadd.f32 %v1532, %v1616
        %v1622 = vlaneseq
        %v1623 = vshrl.u32 %v1622, 7
        %v1624 = vsub.s32 4, %v1623
        %v1625 = vrot.slane %v547, %v1624
        %v1626 = vlaneseq
        %v1627 = vshrl.u32 %v1626, 7
        %v1628 = vsub.s32 4, %v1627
        %v1629 = vrot.slane %v548, %v1628
        %1632 = vrot.lane.b32.xlu0 %v1625, 127
        %v1633 = vpop.permute.xlu0 %1632
        %1634 = vrot.lane.b32.xlu0 %v1629, 127
        %v1635 = vpop.permute.xlu0 %1634
        %vm1636 = vcmask 1039360
        %v1637 = vsel %vm1636, %v1633, %v1635
        %v1641 = vmul.f32 %v553, %v1633
        %v1642 = vmul.f32 %v554, %v1637
        %v1643 = vmul.f32 %v555, %v1635
        %v1644 = vpack.c.bf16 %v1641, %v1641
        %v1645 = vpack.c.bf16 %v1642, %v1642
        %v1646 = vpack.c.bf16 %v1643, %v1643
        %1650 = vrot.lane.b32.xlu0 %v1644, 1
        %v1651 = vpop.permute.xlu0 %1650
        %1652 = vrot.lane.b32.xlu0 %v1645, 1
        %v1653 = vpop.permute.xlu0 %1652
        %1654 = vrot.lane.b32.xlu0 %v1646, 1
        %v1655 = vpop.permute.xlu0 %1654
        %vm1656 = vcmask 7168
        %v1657 = vsel %vm1656, %v1651, %v1653
        %v1658 = vsel %vm1656, %v1653, %v1655
        %v1660 = vsel %vm618, %v530, 0
        %v1663 = vsel %vm622, %v1657, 0
        %v1666 = vsel %vm622, %v1658, 0
        %1668 = vmatprep.subr.bf16.mxu0 %v1666
        %1669 = vmatpush1.bf16.msra.mxu0 %v1663
        %1670 = vmatprep.subr.bf16.mxu0 0
        %1671 = vmatpush1.bf16.msra.mxu0 0
        %1672 = vmatprep.subr.bf16.mxu0 0
        %1673 = vmatpush1.bf16.msra.mxu0 0
        %1674 = vmatprep.subr.bf16.mxu0 0
        %1675 = vmatpush1.bf16.msra.mxu0 0
        %1676 = vmatprep.subr.bf16.mxu0 0
        %1677 = vmatpush1.bf16.msra.mxu0 0
        %1678 = vmatprep.subr.bf16.mxu0 0
        %1679 = vmatpush1.bf16.msra.mxu0 0
        %1680 = vmatprep.subr.bf16.mxu0 0
        %1681 = vmatpush1.bf16.msra.mxu0 0
        %1682 = vmatprep.subr.bf16.mxu0 0
        %1683 = vmatpush1.bf16.msra.mxu0 0
        %1684 = vmatprep.subr.bf16.mxu0 0
        %1685 = vmatpush1.bf16.msra.mxu0 0
        %1686 = vmatprep.subr.bf16.mxu0 0
        %1687 = vmatpush1.bf16.msra.mxu0 0
        %1688 = vmatprep.subr.bf16.mxu0 0
        %1689 = vmatpush1.bf16.msra.mxu0 0
        %1690 = vmatprep.subr.bf16.mxu0 0
        %1691 = vmatpush1.bf16.msra.mxu0 0
        %1692 = vmatprep.subr.bf16.mxu0 0
        %1693 = vmatpush1.bf16.msra.mxu0 0
        %1694 = vmatprep.subr.bf16.mxu0 0
        %1695 = vmatpush1.bf16.msra.mxu0 0
        %1696 = vmatprep.subr.bf16.mxu0 0
        %1697 = vmatpush1.bf16.msra.mxu0 0
        %1698 = vmatprep.subr.bf16.mxu0 0
        %1699 = vmatpush1.bf16.msra.mxu0 0
        %1700 = vmatprep.mubr.bf16.mxu0 0
        %1701 = vmatmul.mubr.bf16.gmra.mrb[0].mxu0 %v1660
        %v1702 = vpop.f32.mrb[0].mxu0
        %v1703 = vadd.f32 0.0, %v1702
        %v1704 = vpop.f32.mrb[0].mxu0
        %v1705 = vadd.f32 0.0, %v1704
        %v1706 = vpop.f32.mrb[0].mxu0
        %v1707 = vpop.f32.mrb[0].mxu0
        %1708 = vdwg.mxu0
        %v1709 = vadd.f32 %v1620, %v1703
        %v1710 = vadd.f32 %v1621, %v1705
        %v1711 = vpack.c.bf16 %v554, %v554
        %v1712 = vpack.c.bf16 %v555, %v555
        %v1714 = vsel %vm618, %v531, 0
        %v1717 = vsel %vm622, %v1711, 0
        %v1720 = vsel %vm622, %v1712, 0
        %1722 = vmatprep.subr.bf16.mxu0 %v1720
        %1723 = vmatpush1.bf16.msra.mxu0 %v1717
        %1724 = vmatprep.subr.bf16.mxu0 0
        %1725 = vmatpush1.bf16.msra.mxu0 0
        %1726 = vmatprep.subr.bf16.mxu0 0
        %1727 = vmatpush1.bf16.msra.mxu0 0
        %1728 = vmatprep.subr.bf16.mxu0 0
        %1729 = vmatpush1.bf16.msra.mxu0 0
        %1730 = vmatprep.subr.bf16.mxu0 0
        %1731 = vmatpush1.bf16.msra.mxu0 0
        %1732 = vmatprep.subr.bf16.mxu0 0
        %1733 = vmatpush1.bf16.msra.mxu0 0
        %1734 = vmatprep.subr.bf16.mxu0 0
        %1735 = vmatpush1.bf16.msra.mxu0 0
        %1736 = vmatprep.subr.bf16.mxu0 0
        %1737 = vmatpush1.bf16.msra.mxu0 0
        %1738 = vmatprep.subr.bf16.mxu0 0
        %1739 = vmatpush1.bf16.msra.mxu0 0
        %1740 = vmatprep.subr.bf16.mxu0 0
        %1741 = vmatpush1.bf16.msra.mxu0 0
        %1742 = vmatprep.subr.bf16.mxu0 0
        %1743 = vmatpush1.bf16.msra.mxu0 0
        %1744 = vmatprep.subr.bf16.mxu0 0
        %1745 = vmatpush1.bf16.msra.mxu0 0
        %1746 = vmatprep.subr.bf16.mxu0 0
        %1747 = vmatpush1.bf16.msra.mxu0 0
        %1748 = vmatprep.subr.bf16.mxu0 0
        %1749 = vmatpush1.bf16.msra.mxu0 0
        %1750 = vmatprep.subr.bf16.mxu0 0
        %1751 = vmatpush1.bf16.msra.mxu0 0
        %1752 = vmatprep.subr.bf16.mxu0 0
        %1753 = vmatpush1.bf16.msra.mxu0 0
        %1754 = vmatprep.mubr.bf16.mxu0 0
        %1755 = vmatmul.mubr.bf16.gmra.mrb[0].mxu0 %v1714
        %v1756 = vpop.f32.mrb[0].mxu0
        %v1757 = vadd.f32 0.0, %v1756
        %v1758 = vpop.f32.mrb[0].mxu0
        %v1759 = vadd.f32 0.0, %v1758
        %v1760 = vpop.f32.mrb[0].mxu0
        %v1761 = vpop.f32.mrb[0].mxu0
        %1762 = vdwg.mxu0
        %v1763 = vadd.f32 %v1709, %v1757
        %v1764 = vadd.f32 %v1710, %v1759
        %v1765 = vld [vmem:[#allocation2 + $0x8] sm:$0xff]
        %v1766 = vld [vmem:[#allocation2 + $0x10] sm:$0xff]
        %v1767 = vld [vmem:[#allocation2 + $0x18] sm:$0xff]
        %v1768 = vlaneseq
        %v1769 = vshrl.u32 %v1768, 7
        %v1770 = vsub.s32 6, %v1769
        %v1771 = vrot.slane %v547, %v1770
        %v1772 = vlaneseq
        %v1773 = vshrl.u32 %v1772, 7
        %v1774 = vsub.s32 6, %v1773
        %v1775 = vrot.slane %v548, %v1774
        %1778 = vrot.lane.b32.xlu0 %v1771, 1
        %v1779 = vpop.permute.xlu0 %1778
        %1780 = vrot.lane.b32.xlu0 %v1775, 1
        %v1781 = vpop.permute.xlu0 %1780
        %vm1782 = vcmask 7168
        %v1783 = vsel %vm1782, %v1779, %v1781
        %v1787 = vmul.f32 %v1765, %v1779
        %v1788 = vmul.f32 %v1766, %v1783
        %v1789 = vmul.f32 %v1767, %v1781
        %v1790 = vpack.c.bf16 %v1787, %v1787
        %v1791 = vpack.c.bf16 %v1788, %v1788
        %v1792 = vpack.c.bf16 %v1789, %v1789
        %1796 = vrot.lane.b32.xlu0 %v1790, 127
        %v1797 = vpop.permute.xlu0 %1796
        %1798 = vrot.lane.b32.xlu0 %v1791, 127
        %v1799 = vpop.permute.xlu0 %1798
        %1800 = vrot.lane.b32.xlu0 %v1792, 127
        %v1801 = vpop.permute.xlu0 %1800
        %vm1802 = vcmask 1039360
        %v1803 = vsel %vm1802, %v1797, %v1799
        %v1804 = vsel %vm1802, %v1799, %v1801
        %v1806 = vsel %vm618, %v532, 0
        %v1809 = vsel %vm622, %v1803, 0
        %v1812 = vsel %vm622, %v1804, 0
        %1814 = vmatprep.subr.bf16.mxu0 %v1812
        %1815 = vmatpush1.bf16.msra.mxu0 %v1809
        %1816 = vmatprep.subr.bf16.mxu0 0
        %1817 = vmatpush1.bf16.msra.mxu0 0
        %1818 = vmatprep.subr.bf16.mxu0 0
        %1819 = vmatpush1.bf16.msra.mxu0 0
        %1820 = vmatprep.subr.bf16.mxu0 0
        %1821 = vmatpush1.bf16.msra.mxu0 0
        %1822 = vmatprep.subr.bf16.mxu0 0
        %1823 = vmatpush1.bf16.msra.mxu0 0
        %1824 = vmatprep.subr.bf16.mxu0 0
        %1825 = vmatpush1.bf16.msra.mxu0 0
        %1826 = vmatprep.subr.bf16.mxu0 0
        %1827 = vmatpush1.bf16.msra.mxu0 0
        %1828 = vmatprep.subr.bf16.mxu0 0
        %1829 = vmatpush1.bf16.msra.mxu0 0
        %1830 = vmatprep.subr.bf16.mxu0 0
        %1831 = vmatpush1.bf16.msra.mxu0 0
        %1832 = vmatprep.subr.bf16.mxu0 0
        %1833 = vmatpush1.bf16.msra.mxu0 0
        %1834 = vmatprep.subr.bf16.mxu0 0
        %1835 = vmatpush1.bf16.msra.mxu0 0
        %1836 = vmatprep.subr.bf16.mxu0 0
        %1837 = vmatpush1.bf16.msra.mxu0 0
        %1838 = vmatprep.subr.bf16.mxu0 0
        %1839 = vmatpush1.bf16.msra.mxu0 0
        %1840 = vmatprep.subr.bf16.mxu0 0
        %1841 = vmatpush1.bf16.msra.mxu0 0
        %1842 = vmatprep.subr.bf16.mxu0 0
        %1843 = vmatpush1.bf16.msra.mxu0 0
        %1844 = vmatprep.subr.bf16.mxu0 0
        %1845 = vmatpush1.bf16.msra.mxu0 0
        %1846 = vmatprep.mubr.bf16.mxu0 0
        %1847 = vmatmul.mubr.bf16.gmra.mrb[0].mxu0 %v1806
        %v1848 = vpop.f32.mrb[0].mxu0
        %v1849 = vadd.f32 0.0, %v1848
        %v1850 = vpop.f32.mrb[0].mxu0
        %v1851 = vadd.f32 0.0, %v1850
        %v1852 = vpop.f32.mrb[0].mxu0
        %v1853 = vpop.f32.mrb[0].mxu0
        %1854 = vdwg.mxu0
        %v1855 = vadd.f32 %v1763, %v1849
        %v1856 = vadd.f32 %v1764, %v1851
        %v1857 = vlaneseq
        %v1858 = vshrl.u32 %v1857, 7
        %v1859 = vsub.s32 7, %v1858
        %v1860 = vrot.slane %v547, %v1859
        %v1861 = vlaneseq
        %v1862 = vshrl.u32 %v1861, 7
        %v1863 = vsub.s32 7, %v1862
        %v1864 = vrot.slane %v548, %v1863
        %1867 = vrot.lane.b32.xlu0 %v1860, 7
        %v1868 = vpop.permute.xlu0 %1867
        %1869 = vrot.lane.b32.xlu0 %v1864, 7
        %v1870 = vpop.permute.xlu0 %1869
        %vm1871 = vcmask 56320
        %v1872 = vsel %vm1871, %v1868, %v1870
        %v1876 = vmul.f32 %v1765, %v1868
        %v1877 = vmul.f32 %v1766, %v1872
        %v1878 = vmul.f32 %v1767, %v1870
        %v1879 = vpack.c.bf16 %v1876, %v1876
        %v1880 = vpack.c.bf16 %v1877, %v1877
        %v1881 = vpack.c.bf16 %v1878, %v1878
        %1885 = vrot.lane.b32.xlu0 %v1879, 121
        %v1886 = vpop.permute.xlu0 %1885
        %1887 = vrot.lane.b32.xlu0 %v1880, 121
        %v1888 = vpop.permute.xlu0 %1887
        %1889 = vrot.lane.b32.xlu0 %v1881, 121
        %v1890 = vpop.permute.xlu0 %1889
        %vm1891 = vcmask 990208
        %v1892 = vsel %vm1891, %v1886, %v1888
        %v1893 = vsel %vm1891, %v1888, %v1890
        %v1895 = vsel %vm618, %v533, 0
        %v1898 = vsel %vm622, %v1892, 0
        %v1901 = vsel %vm622, %v1893, 0
        %1903 = vmatprep.subr.bf16.mxu0 %v1901
        %1904 = vmatpush1.bf16.msra.mxu0 %v1898
        %1905 = vmatprep.subr.bf16.mxu0 0
        %1906 = vmatpush1.bf16.msra.mxu0 0
        %1907 = vmatprep.subr.bf16.mxu0 0
        %1908 = vmatpush1.bf16.msra.mxu0 0
        %1909 = vmatprep.subr.bf16.mxu0 0
        %1910 = vmatpush1.bf16.msra.mxu0 0
        %1911 = vmatprep.subr.bf16.mxu0 0
        %1912 = vmatpush1.bf16.msra.mxu0 0
        %1913 = vmatprep.subr.bf16.mxu0 0
        %1914 = vmatpush1.bf16.msra.mxu0 0
        %1915 = vmatprep.subr.bf16.mxu0 0
        %1916 = vmatpush1.bf16.msra.mxu0 0
        %1917 = vmatprep.subr.bf16.mxu0 0
        %1918 = vmatpush1.bf16.msra.mxu0 0
        %1919 = vmatprep.subr.bf16.mxu0 0
        %1920 = vmatpush1.bf16.msra.mxu0 0
        %1921 = vmatprep.subr.bf16.mxu0 0
        %1922 = vmatpush1.bf16.msra.mxu0 0
        %1923 = vmatprep.subr.bf16.mxu0 0
        %1924 = vmatpush1.bf16.msra.mxu0 0
        %1925 = vmatprep.subr.bf16.mxu0 0
        %1926 = vmatpush1.bf16.msra.mxu0 0
        %1927 = vmatprep.subr.bf16.mxu0 0
        %1928 = vmatpush1.bf16.msra.mxu0 0
        %1929 = vmatprep.subr.bf16.mxu0 0
        %1930 = vmatpush1.bf16.msra.mxu0 0
        %1931 = vmatprep.subr.bf16.mxu0 0
        %1932 = vmatpush1.bf16.msra.mxu0 0
        %1933 = vmatprep.subr.bf16.mxu0 0
        %1934 = vmatpush1.bf16.msra.mxu0 0
        %1935 = vmatprep.mubr.bf16.mxu0 0
        %1936 = vmatmul.mubr.bf16.gmra.mrb[0].mxu0 %v1895
        %v1937 = vpop.f32.mrb[0].mxu0
        %v1938 = vadd.f32 0.0, %v1937
        %v1939 = vpop.f32.mrb[0].mxu0
        %v1940 = vadd.f32 0.0, %v1939
        %v1941 = vpop.f32.mrb[0].mxu0
        %v1942 = vpop.f32.mrb[0].mxu0
        %1943 = vdwg.mxu0
        %v1944 = vadd.f32 %v1855, %v1938
        %v1945 = vadd.f32 %v1856, %v1940
        %v1946 = vlaneseq
        %v1947 = vshrl.u32 %v1946, 7
        %v1948 = vsub.s32 0, %v1947
        %v1949 = vrot.slane %v549, %v1948
        %v1950 = vlaneseq
        %v1951 = vshrl.u32 %v1950, 7
        %v1952 = vsub.s32 0, %v1951
        %v1953 = vrot.slane %v550, %v1952
        %1956 = vrot.lane.b32.xlu0 %v1949, 8
        %v1957 = vpop.permute.xlu0 %1956
        %1958 = vrot.lane.b32.xlu0 %v1953, 8
        %v1959 = vpop.permute.xlu0 %1958
        %v1960 = vsel %vm618, %v1957, %v1959
        %v1964 = vmul.f32 %v1765, %v1957
        %v1965 = vmul.f32 %v1766, %v1960
        %v1966 = vmul.f32 %v1767, %v1959
        %v1967 = vpack.c.bf16 %v1964, %v1964
        %v1968 = vpack.c.bf16 %v1965, %v1965
        %v1969 = vpack.c.bf16 %v1966, %v1966
        %1973 = vrot.lane.b32.xlu0 %v1967, 120
        %v1974 = vpop.permute.xlu0 %1973
        %1975 = vrot.lane.b32.xlu0 %v1968, 120
        %v1976 = vpop.permute.xlu0 %1975
        %1977 = vrot.lane.b32.xlu0 %v1969, 120
        %v1978 = vpop.permute.xlu0 %1977
        %vm1979 = vcmask 982016
        %v1980 = vsel %vm1979, %v1974, %v1976
        %v1981 = vsel %vm1979, %v1976, %v1978
        %v1983 = vsel %vm618, %v534, 0
        %v1986 = vsel %vm622, %v1980, 0
        %v1989 = vsel %vm622, %v1981, 0
        %1991 = vmatprep.subr.bf16.mxu0 %v1989
        %1992 = vmatpush1.bf16.msra.mxu0 %v1986
        %1993 = vmatprep.subr.bf16.mxu0 0
        %1994 = vmatpush1.bf16.msra.mxu0 0
        %1995 = vmatprep.subr.bf16.mxu0 0
        %1996 = vmatpush1.bf16.msra.mxu0 0
        %1997 = vmatprep.subr.bf16.mxu0 0
        %1998 = vmatpush1.bf16.msra.mxu0 0
        %1999 = vmatprep.subr.bf16.mxu0 0
        %2000 = vmatpush1.bf16.msra.mxu0 0
        %2001 = vmatprep.subr.bf16.mxu0 0
        %2002 = vmatpush1.bf16.msra.mxu0 0
        %2003 = vmatprep.subr.bf16.mxu0 0
        %2004 = vmatpush1.bf16.msra.mxu0 0
        %2005 = vmatprep.subr.bf16.mxu0 0
        %2006 = vmatpush1.bf16.msra.mxu0 0
        %2007 = vmatprep.subr.bf16.mxu0 0
        %2008 = vmatpush1.bf16.msra.mxu0 0
        %2009 = vmatprep.subr.bf16.mxu0 0
        %2010 = vmatpush1.bf16.msra.mxu0 0
        %2011 = vmatprep.subr.bf16.mxu0 0
        %2012 = vmatpush1.bf16.msra.mxu0 0
        %2013 = vmatprep.subr.bf16.mxu0 0
        %2014 = vmatpush1.bf16.msra.mxu0 0
        %2015 = vmatprep.subr.bf16.mxu0 0
        %2016 = vmatpush1.bf16.msra.mxu0 0
        %2017 = vmatprep.subr.bf16.mxu0 0
        %2018 = vmatpush1.bf16.msra.mxu0 0
        %2019 = vmatprep.subr.bf16.mxu0 0
        %2020 = vmatpush1.bf16.msra.mxu0 0
        %2021 = vmatprep.subr.bf16.mxu0 0
        %2022 = vmatpush1.bf16.msra.mxu0 0
        %2023 = vmatprep.mubr.bf16.mxu0 0
        %2024 = vmatmul.mubr.bf16.gmra.mrb[0].mxu0 %v1983
        %v2025 = vpop.f32.mrb[0].mxu0
        %v2026 = vadd.f32 0.0, %v2025
        %v2027 = vpop.f32.mrb[0].mxu0
        %v2028 = vadd.f32 0.0, %v2027
        %v2029 = vpop.f32.mrb[0].mxu0
        %v2030 = vpop.f32.mrb[0].mxu0
        %2031 = vdwg.mxu0
        %v2032 = vadd.f32 %v1944, %v2026
        %v2033 = vadd.f32 %v1945, %v2028
        %v2034 = vlaneseq
        %v2035 = vshrl.u32 %v2034, 7
        %v2036 = vsub.s32 1, %v2035
        %v2037 = vrot.slane %v549, %v2036
        %v2038 = vlaneseq
        %v2039 = vshrl.u32 %v2038, 7
        %v2040 = vsub.s32 1, %v2039
        %v2041 = vrot.slane %v550, %v2040
        %2044 = vrot.lane.b32.xlu0 %v2037, 9
        %v2045 = vpop.permute.xlu0 %2044
        %2046 = vrot.lane.b32.xlu0 %v2041, 9
        %v2047 = vpop.permute.xlu0 %2046
        %vm2048 = vcmask 72704
        %v2049 = vsel %vm2048, %v2045, %v2047
        %v2053 = vmul.f32 %v1765, %v2045
        %v2054 = vmul.f32 %v1766, %v2049
        %v2055 = vmul.f32 %v1767, %v2047
        %v2056 = vpack.c.bf16 %v2053, %v2053
        %v2057 = vpack.c.bf16 %v2054, %v2054
        %v2058 = vpack.c.bf16 %v2055, %v2055
        %2062 = vrot.lane.b32.xlu0 %v2056, 119
        %v2063 = vpop.permute.xlu0 %2062
        %2064 = vrot.lane.b32.xlu0 %v2057, 119
        %v2065 = vpop.permute.xlu0 %2064
        %2066 = vrot.lane.b32.xlu0 %v2058, 119
        %v2067 = vpop.permute.xlu0 %2066
        %vm2068 = vcmask 973824
        %v2069 = vsel %vm2068, %v2063, %v2065
        %v2070 = vsel %vm2068, %v2065, %v2067
        %v2072 = vsel %vm618, %v535, 0
        %v2075 = vsel %vm622, %v2069, 0
        %v2078 = vsel %vm622, %v2070, 0
        %2080 = vmatprep.subr.bf16.mxu0 %v2078
        %2081 = vmatpush1.bf16.msra.mxu0 %v2075
        %2082 = vmatprep.subr.bf16.mxu0 0
        %2083 = vmatpush1.bf16.msra.mxu0 0
        %2084 = vmatprep.subr.bf16.mxu0 0
        %2085 = vmatpush1.bf16.msra.mxu0 0
        %2086 = vmatprep.subr.bf16.mxu0 0
        %2087 = vmatpush1.bf16.msra.mxu0 0
        %2088 = vmatprep.subr.bf16.mxu0 0
        %2089 = vmatpush1.bf16.msra.mxu0 0
        %2090 = vmatprep.subr.bf16.mxu0 0
        %2091 = vmatpush1.bf16.msra.mxu0 0
        %2092 = vmatprep.subr.bf16.mxu0 0
        %2093 = vmatpush1.bf16.msra.mxu0 0
        %2094 = vmatprep.subr.bf16.mxu0 0
        %2095 = vmatpush1.bf16.msra.mxu0 0
        %2096 = vmatprep.subr.bf16.mxu0 0
        %2097 = vmatpush1.bf16.msra.mxu0 0
        %2098 = vmatprep.subr.bf16.mxu0 0
        %2099 = vmatpush1.bf16.msra.mxu0 0
        %2100 = vmatprep.subr.bf16.mxu0 0
        %2101 = vmatpush1.bf16.msra.mxu0 0
        %2102 = vmatprep.subr.bf16.mxu0 0
        %2103 = vmatpush1.bf16.msra.mxu0 0
        %2104 = vmatprep.subr.bf16.mxu0 0
        %2105 = vmatpush1.bf16.msra.mxu0 0
        %2106 = vmatprep.subr.bf16.mxu0 0
        %2107 = vmatpush1.bf16.msra.mxu0 0
        %2108 = vmatprep.subr.bf16.mxu0 0
        %2109 = vmatpush1.bf16.msra.mxu0 0
        %2110 = vmatprep.subr.bf16.mxu0 0
        %2111 = vmatpush1.bf16.msra.mxu0 0
        %2112 = vmatprep.mubr.bf16.mxu0 0
        %2113 = vmatmul.mubr.bf16.gmra.mrb[0].mxu0 %v2072
        %v2114 = vpop.f32.mrb[0].mxu0
        %v2115 = vadd.f32 0.0, %v2114
        %v2116 = vpop.f32.mrb[0].mxu0
        %v2117 = vadd.f32 0.0, %v2116
        %v2118 = vpop.f32.mrb[0].mxu0
        %v2119 = vpop.f32.mrb[0].mxu0
        %2120 = vdwg.mxu0
        %v2121 = vadd.f32 %v2032, %v2115
        %v2122 = vadd.f32 %v2033, %v2117
        %v2123 = vlaneseq
        %v2124 = vshrl.u32 %v2123, 7
        %v2125 = vsub.s32 2, %v2124
        %v2126 = vrot.slane %v549, %v2125
        %v2127 = vlaneseq
        %v2128 = vshrl.u32 %v2127, 7
        %v2129 = vsub.s32 2, %v2128
        %v2130 = vrot.slane %v550, %v2129
        %2133 = vrot.lane.b32.xlu0 %v2126, 55
        %v2134 = vpop.permute.xlu0 %2133
        %2135 = vrot.lane.b32.xlu0 %v2130, 55
        %v2136 = vpop.permute.xlu0 %2135
        %v2137 = vsel %vm570, %v2134, %v2136
        %v2141 = vmul.f32 %v1765, %v2134
        %v2142 = vmul.f32 %v1766, %v2137
        %v2143 = vmul.f32 %v1767, %v2136
        %v2144 = vpack.c.bf16 %v2141, %v2141
        %v2145 = vpack.c.bf16 %v2142, %v2142
        %v2146 = vpack.c.bf16 %v2143, %v2143
        %2150 = vrot.lane.b32.xlu0 %v2144, 73
        %v2151 = vpop.permute.xlu0 %2150
        %2152 = vrot.lane.b32.xlu0 %v2145, 73
        %v2153 = vpop.permute.xlu0 %2152
        %2154 = vrot.lane.b32.xlu0 %v2146, 73
        %v2155 = vpop.permute.xlu0 %2154
        %v2156 = vsel %vm679, %v2151, %v2153
        %v2157 = vsel %vm679, %v2153, %v2155
        %v2159 = vsel %vm618, %v536, 0
        %v2162 = vsel %vm622, %v2156, 0
        %v2165 = vsel %vm622, %v2157, 0
        %2167 = vmatprep.subr.bf16.mxu0 %v2165
        %2168 = vmatpush1.bf16.msra.mxu0 %v2162
        %2169 = vmatprep.subr.bf16.mxu0 0
        %2170 = vmatpush1.bf16.msra.mxu0 0
        %2171 = vmatprep.subr.bf16.mxu0 0
        %2172 = vmatpush1.bf16.msra.mxu0 0
        %2173 = vmatprep.subr.bf16.mxu0 0
        %2174 = vmatpush1.bf16.msra.mxu0 0
        %2175 = vmatprep.subr.bf16.mxu0 0
        %2176 = vmatpush1.bf16.msra.mxu0 0
        %2177 = vmatprep.subr.bf16.mxu0 0
        %2178 = vmatpush1.bf16.msra.mxu0 0
        %2179 = vmatprep.subr.bf16.mxu0 0
        %2180 = vmatpush1.bf16.msra.mxu0 0
        %2181 = vmatprep.subr.bf16.mxu0 0
        %2182 = vmatpush1.bf16.msra.mxu0 0
        %2183 = vmatprep.subr.bf16.mxu0 0
        %2184 = vmatpush1.bf16.msra.mxu0 0
        %2185 = vmatprep.subr.bf16.mxu0 0
        %2186 = vmatpush1.bf16.msra.mxu0 0
        %2187 = vmatprep.subr.bf16.mxu0 0
        %2188 = vmatpush1.bf16.msra.mxu0 0
        %2189 = vmatprep.subr.bf16.mxu0 0
        %2190 = vmatpush1.bf16.msra.mxu0 0
        %2191 = vmatprep.subr.bf16.mxu0 0
        %2192 = vmatpush1.bf16.msra.mxu0 0
        %2193 = vmatprep.subr.bf16.mxu0 0
        %2194 = vmatpush1.bf16.msra.mxu0 0
        %2195 = vmatprep.subr.bf16.mxu0 0
        %2196 = vmatpush1.bf16.msra.mxu0 0
        %2197 = vmatprep.subr.bf16.mxu0 0
        %2198 = vmatpush1.bf16.msra.mxu0 0
        %2199 = vmatprep.mubr.bf16.mxu0 0
        %2200 = vmatmul.mubr.bf16.gmra.mrb[0].mxu0 %v2159
        %v2201 = vpop.f32.mrb[0].mxu0
        %v2202 = vadd.f32 0.0, %v2201
        %v2203 = vpop.f32.mrb[0].mxu0
        %v2204 = vadd.f32 0.0, %v2203
        %v2205 = vpop.f32.mrb[0].mxu0
        %v2206 = vpop.f32.mrb[0].mxu0
        %2207 = vdwg.mxu0
        %v2208 = vadd.f32 %v2121, %v2202
        %v2209 = vadd.f32 %v2122, %v2204
        %v2210 = vlaneseq
        %v2211 = vshrl.u32 %v2210, 7
        %v2212 = vsub.s32 3, %v2211
        %v2213 = vrot.slane %v549, %v2212
        %v2214 = vlaneseq
        %v2215 = vshrl.u32 %v2214, 7
        %v2216 = vsub.s32 3, %v2215
        %v2217 = vrot.slane %v550, %v2216
        %2220 = vrot.lane.b32.xlu0 %v2213, 56
        %v2221 = vpop.permute.xlu0 %2220
        %2222 = vrot.lane.b32.xlu0 %v2217, 56
        %v2223 = vpop.permute.xlu0 %2222
        %v2224 = vsel %vm595, %v2221, %v2223
        %v2228 = vmul.f32 %v1765, %v2221
        %v2229 = vmul.f32 %v1766, %v2224
        %v2230 = vmul.f32 %v1767, %v2223
        %v2231 = vpack.c.bf16 %v2228, %v2228
        %v2232 = vpack.c.bf16 %v2229, %v2229
        %v2233 = vpack.c.bf16 %v2230, %v2230
        %2237 = vrot.lane.b32.xlu0 %v2231, 72
        %v2238 = vpop.permute.xlu0 %2237
        %2239 = vrot.lane.b32.xlu0 %v2232, 72
        %v2240 = vpop.permute.xlu0 %2239
        %2241 = vrot.lane.b32.xlu0 %v2233, 72
        %v2242 = vpop.permute.xlu0 %2241
        %v2243 = vsel %vm615, %v2238, %v2240
        %v2244 = vsel %vm615, %v2240, %v2242
        %v2246 = vsel %vm618, %v537, 0
        %v2249 = vsel %vm622, %v2243, 0
        %v2252 = vsel %vm622, %v2244, 0
        %2254 = vmatprep.subr.bf16.mxu0 %v2252
        %2255 = vmatpush1.bf16.msra.mxu0 %v2249
        %2256 = vmatprep.subr.bf16.mxu0 0
        %2257 = vmatpush1.bf16.msra.mxu0 0
        %2258 = vmatprep.subr.bf16.mxu0 0
        %2259 = vmatpush1.bf16.msra.mxu0 0
        %2260 = vmatprep.subr.bf16.mxu0 0
        %2261 = vmatpush1.bf16.msra.mxu0 0
        %2262 = vmatprep.subr.bf16.mxu0 0
        %2263 = vmatpush1.bf16.msra.mxu0 0
        %2264 = vmatprep.subr.bf16.mxu0 0
        %2265 = vmatpush1.bf16.msra.mxu0 0
        %2266 = vmatprep.subr.bf16.mxu0 0
        %2267 = vmatpush1.bf16.msra.mxu0 0
        %2268 = vmatprep.subr.bf16.mxu0 0
        %2269 = vmatpush1.bf16.msra.mxu0 0
        %2270 = vmatprep.subr.bf16.mxu0 0
        %2271 = vmatpush1.bf16.msra.mxu0 0
        %2272 = vmatprep.subr.bf16.mxu0 0
        %2273 = vmatpush1.bf16.msra.mxu0 0
        %2274 = vmatprep.subr.bf16.mxu0 0
        %2275 = vmatpush1.bf16.msra.mxu0 0
        %2276 = vmatprep.subr.bf16.mxu0 0
        %2277 = vmatpush1.bf16.msra.mxu0 0
        %2278 = vmatprep.subr.bf16.mxu0 0
        %2279 = vmatpush1.bf16.msra.mxu0 0
        %2280 = vmatprep.subr.bf16.mxu0 0
        %2281 = vmatpush1.bf16.msra.mxu0 0
        %2282 = vmatprep.subr.bf16.mxu0 0
        %2283 = vmatpush1.bf16.msra.mxu0 0
        %2284 = vmatprep.subr.bf16.mxu0 0
        %2285 = vmatpush1.bf16.msra.mxu0 0
        %2286 = vmatprep.mubr.bf16.mxu0 0
        %2287 = vmatmul.mubr.bf16.gmra.mrb[0].mxu0 %v2246
        %v2288 = vpop.f32.mrb[0].mxu0
        %v2289 = vadd.f32 0.0, %v2288
        %v2290 = vpop.f32.mrb[0].mxu0
        %v2291 = vadd.f32 0.0, %v2290
        %v2292 = vpop.f32.mrb[0].mxu0
        %v2293 = vpop.f32.mrb[0].mxu0
        %2294 = vdwg.mxu0
        %v2295 = vadd.f32 %v2208, %v2289
        %v2296 = vadd.f32 %v2209, %v2291
        %v2297 = vlaneseq
        %v2298 = vshrl.u32 %v2297, 7
        %v2299 = vsub.s32 4, %v2298
        %v2300 = vrot.slane %v549, %v2299
        %v2301 = vlaneseq
        %v2302 = vshrl.u32 %v2301, 7
        %v2303 = vsub.s32 4, %v2302
        %v2304 = vrot.slane %v550, %v2303
        %2307 = vrot.lane.b32.xlu0 %v2300, 57
        %v2308 = vpop.permute.xlu0 %2307
        %2309 = vrot.lane.b32.xlu0 %v2304, 57
        %v2310 = vpop.permute.xlu0 %2309
        %v2311 = vsel %vm746, %v2308, %v2310
        %v2315 = vmul.f32 %v1765, %v2308
        %v2316 = vmul.f32 %v1766, %v2311
        %v2317 = vmul.f32 %v1767, %v2310
        %v2318 = vpack.c.bf16 %v2315, %v2315
        %v2319 = vpack.c.bf16 %v2316, %v2316
        %v2320 = vpack.c.bf16 %v2317, %v2317
        %2324 = vrot.lane.b32.xlu0 %v2318, 71
        %v2325 = vpop.permute.xlu0 %2324
        %2326 = vrot.lane.b32.xlu0 %v2319, 71
        %v2327 = vpop.permute.xlu0 %2326
        %2328 = vrot.lane.b32.xlu0 %v2320, 71
        %v2329 = vpop.permute.xlu0 %2328
        %v2330 = vsel %vm766, %v2325, %v2327
        %v2331 = vsel %vm766, %v2327, %v2329
        %v2333 = vsel %vm618, %v538, 0
        %v2336 = vsel %vm622, %v2330, 0
        %v2339 = vsel %vm622, %v2331, 0
        %2341 = vmatprep.subr.bf16.mxu0 %v2339
        %2342 = vmatpush1.bf16.msra.mxu0 %v2336
        %2343 = vmatprep.subr.bf16.mxu0 0
        %2344 = vmatpush1.bf16.msra.mxu0 0
        %2345 = vmatprep.subr.bf16.mxu0 0
        %2346 = vmatpush1.bf16.msra.mxu0 0
        %2347 = vmatprep.subr.bf16.mxu0 0
        %2348 = vmatpush1.bf16.msra.mxu0 0
        %2349 = vmatprep.subr.bf16.mxu0 0
        %2350 = vmatpush1.bf16.msra.mxu0 0
        %2351 = vmatprep.subr.bf16.mxu0 0
        %2352 = vmatpush1.bf16.msra.mxu0 0
        %2353 = vmatprep.subr.bf16.mxu0 0
        %2354 = vmatpush1.bf16.msra.mxu0 0
        %2355 = vmatprep.subr.bf16.mxu0 0
        %2356 = vmatpush1.bf16.msra.mxu0 0
        %2357 = vmatprep.subr.bf16.mxu0 0
        %2358 = vmatpush1.bf16.msra.mxu0 0
        %2359 = vmatprep.subr.bf16.mxu0 0
        %2360 = vmatpush1.bf16.msra.mxu0 0
        %2361 = vmatprep.subr.bf16.mxu0 0
        %2362 = vmatpush1.bf16.msra.mxu0 0
        %2363 = vmatprep.subr.bf16.mxu0 0
        %2364 = vmatpush1.bf16.msra.mxu0 0
        %2365 = vmatprep.subr.bf16.mxu0 0
        %2366 = vmatpush1.bf16.msra.mxu0 0
        %2367 = vmatprep.subr.bf16.mxu0 0
        %2368 = vmatpush1.bf16.msra.mxu0 0
        %2369 = vmatprep.subr.bf16.mxu0 0
        %2370 = vmatpush1.bf16.msra.mxu0 0
        %2371 = vmatprep.subr.bf16.mxu0 0
        %2372 = vmatpush1.bf16.msra.mxu0 0
        %2373 = vmatprep.mubr.bf16.mxu0 0
        %2374 = vmatmul.mubr.bf16.gmra.mrb[0].mxu0 %v2333
        %v2375 = vpop.f32.mrb[0].mxu0
        %v2376 = vadd.f32 0.0, %v2375
        %v2377 = vpop.f32.mrb[0].mxu0
        %v2378 = vadd.f32 0.0, %v2377
        %v2379 = vpop.f32.mrb[0].mxu0
        %v2380 = vpop.f32.mrb[0].mxu0
        %2381 = vdwg.mxu0
        %v2382 = vadd.f32 %v2295, %v2376
        %v2383 = vadd.f32 %v2296, %v2378
        %v2384 = vlaneseq
        %v2385 = vshrl.u32 %v2384, 7
        %v2386 = vsub.s32 5, %v2385
        %v2387 = vrot.slane %v549, %v2386
        %v2388 = vlaneseq
        %v2389 = vshrl.u32 %v2388, 7
        %v2390 = vsub.s32 5, %v2389
        %v2391 = vrot.slane %v550, %v2390
        %2394 = vrot.lane.b32.xlu0 %v2387, 63
        %v2395 = vpop.permute.xlu0 %2394
        %2396 = vrot.lane.b32.xlu0 %v2391, 63
        %v2397 = vpop.permute.xlu0 %2396
        %v2398 = vsel %vm835, %v2395, %v2397
        %v2402 = vmul.f32 %v1765, %v2395
        %v2403 = vmul.f32 %v1766, %v2398
        %v2404 = vmul.f32 %v1767, %v2397
        %v2405 = vpack.c.bf16 %v2402, %v2402
        %v2406 = vpack.c.bf16 %v2403, %v2403
        %v2407 = vpack.c.bf16 %v2404, %v2404
        %2411 = vrot.lane.b32.xlu0 %v2405, 65
        %v2412 = vpop.permute.xlu0 %2411
        %2413 = vrot.lane.b32.xlu0 %v2406, 65
        %v2414 = vpop.permute.xlu0 %2413
        %2415 = vrot.lane.b32.xlu0 %v2407, 65
        %v2416 = vpop.permute.xlu0 %2415
        %v2417 = vsel %vm855, %v2412, %v2414
        %v2418 = vsel %vm855, %v2414, %v2416
        %v2420 = vsel %vm618, %v539, 0
        %v2423 = vsel %vm622, %v2417, 0
        %v2426 = vsel %vm622, %v2418, 0
        %2428 = vmatprep.subr.bf16.mxu0 %v2426
        %2429 = vmatpush1.bf16.msra.mxu0 %v2423
        %2430 = vmatprep.subr.bf16.mxu0 0
        %2431 = vmatpush1.bf16.msra.mxu0 0
        %2432 = vmatprep.subr.bf16.mxu0 0
        %2433 = vmatpush1.bf16.msra.mxu0 0
        %2434 = vmatprep.subr.bf16.mxu0 0
        %2435 = vmatpush1.bf16.msra.mxu0 0
        %2436 = vmatprep.subr.bf16.mxu0 0
        %2437 = vmatpush1.bf16.msra.mxu0 0
        %2438 = vmatprep.subr.bf16.mxu0 0
        %2439 = vmatpush1.bf16.msra.mxu0 0
        %2440 = vmatprep.subr.bf16.mxu0 0
        %2441 = vmatpush1.bf16.msra.mxu0 0
        %2442 = vmatprep.subr.bf16.mxu0 0
        %2443 = vmatpush1.bf16.msra.mxu0 0
        %2444 = vmatprep.subr.bf16.mxu0 0
        %2445 = vmatpush1.bf16.msra.mxu0 0
        %2446 = vmatprep.subr.bf16.mxu0 0
        %2447 = vmatpush1.bf16.msra.mxu0 0
        %2448 = vmatprep.subr.bf16.mxu0 0
        %2449 = vmatpush1.bf16.msra.mxu0 0
        %2450 = vmatprep.subr.bf16.mxu0 0
        %2451 = vmatpush1.bf16.msra.mxu0 0
        %2452 = vmatprep.subr.bf16.mxu0 0
        %2453 = vmatpush1.bf16.msra.mxu0 0
        %2454 = vmatprep.subr.bf16.mxu0 0
        %2455 = vmatpush1.bf16.msra.mxu0 0
        %2456 = vmatprep.subr.bf16.mxu0 0
        %2457 = vmatpush1.bf16.msra.mxu0 0
        %2458 = vmatprep.subr.bf16.mxu0 0
        %2459 = vmatpush1.bf16.msra.mxu0 0
        %2460 = vmatprep.mubr.bf16.mxu0 0
        %2461 = vmatmul.mubr.bf16.gmra.mrb[0].mxu0 %v2420
        %v2462 = vpop.f32.mrb[0].mxu0
        %v2463 = vadd.f32 0.0, %v2462
        %v2464 = vpop.f32.mrb[0].mxu0
        %v2465 = vadd.f32 0.0, %v2464
        %v2466 = vpop.f32.mrb[0].mxu0
        %v2467 = vpop.f32.mrb[0].mxu0
        %2468 = vdwg.mxu0
        %v2469 = vadd.f32 %v2382, %v2463
        %v2470 = vadd.f32 %v2383, %v2465
        %v2471 = vlaneseq
        %v2472 = vshrl.u32 %v2471, 7
        %v2473 = vsub.s32 6, %v2472
        %v2474 = vrot.slane %v549, %v2473
        %v2475 = vlaneseq
        %v2476 = vshrl.u32 %v2475, 7
        %v2477 = vsub.s32 6, %v2476
        %v2478 = vrot.slane %v550, %v2477
        %2481 = vrot.lane.b32.xlu0 %v2474, 64
        %v2482 = vpop.permute.xlu0 %2481
        %2483 = vrot.lane.b32.xlu0 %v2478, 64
        %v2484 = vpop.permute.xlu0 %2483
        %v2485 = vsel %vm924, %v2482, %v2484
        %v2489 = vmul.f32 %v1765, %v2482
        %v2490 = vmul.f32 %v1766, %v2485
        %v2491 = vmul.f32 %v1767, %v2484
        %v2492 = vpack.c.bf16 %v2489, %v2489
        %v2493 = vpack.c.bf16 %v2490, %v2490
        %v2494 = vpack.c.bf16 %v2491, %v2491
        %2498 = vrot.lane.b32.xlu0 %v2492, 64
        %v2499 = vpop.permute.xlu0 %2498
        %2500 = vrot.lane.b32.xlu0 %v2493, 64
        %v2501 = vpop.permute.xlu0 %2500
        %2502 = vrot.lane.b32.xlu0 %v2494, 64
        %v2503 = vpop.permute.xlu0 %2502
        %v2504 = vsel %vm944, %v2499, %v2501
        %v2505 = vsel %vm944, %v2501, %v2503
        %v2507 = vsel %vm618, %v540, 0
        %v2510 = vsel %vm622, %v2504, 0
        %v2513 = vsel %vm622, %v2505, 0
        %2515 = vmatprep.subr.bf16.mxu0 %v2513
        %2516 = vmatpush1.bf16.msra.mxu0 %v2510
        %2517 = vmatprep.subr.bf16.mxu0 0
        %2518 = vmatpush1.bf16.msra.mxu0 0
        %2519 = vmatprep.subr.bf16.mxu0 0
        %2520 = vmatpush1.bf16.msra.mxu0 0
        %2521 = vmatprep.subr.bf16.mxu0 0
        %2522 = vmatpush1.bf16.msra.mxu0 0
        %2523 = vmatprep.subr.bf16.mxu0 0
        %2524 = vmatpush1.bf16.msra.mxu0 0
        %2525 = vmatprep.subr.bf16.mxu0 0
        %2526 = vmatpush1.bf16.msra.mxu0 0
        %2527 = vmatprep.subr.bf16.mxu0 0
        %2528 = vmatpush1.bf16.msra.mxu0 0
        %2529 = vmatprep.subr.bf16.mxu0 0
        %2530 = vmatpush1.bf16.msra.mxu0 0
        %2531 = vmatprep.subr.bf16.mxu0 0
        %2532 = vmatpush1.bf16.msra.mxu0 0
        %2533 = vmatprep.subr.bf16.mxu0 0
        %2534 = vmatpush1.bf16.msra.mxu0 0
        %2535 = vmatprep.subr.bf16.mxu0 0
        %2536 = vmatpush1.bf16.msra.mxu0 0
        %2537 = vmatprep.subr.bf16.mxu0 0
        %2538 = vmatpush1.bf16.msra.mxu0 0
        %2539 = vmatprep.subr.bf16.mxu0 0
        %2540 = vmatpush1.bf16.msra.mxu0 0
        %2541 = vmatprep.subr.bf16.mxu0 0
        %2542 = vmatpush1.bf16.msra.mxu0 0
        %2543 = vmatprep.subr.bf16.mxu0 0
        %2544 = vmatpush1.bf16.msra.mxu0 0
        %2545 = vmatprep.subr.bf16.mxu0 0
        %2546 = vmatpush1.bf16.msra.mxu0 0
        %2547 = vmatprep.mubr.bf16.mxu0 0
        %2548 = vmatmul.mubr.bf16.gmra.mrb[0].mxu0 %v2507
        %v2549 = vpop.f32.mrb[0].mxu0
        %v2550 = vadd.f32 0.0, %v2549
        %v2551 = vpop.f32.mrb[0].mxu0
        %v2552 = vadd.f32 0.0, %v2551
        %v2553 = vpop.f32.mrb[0].mxu0
        %v2554 = vpop.f32.mrb[0].mxu0
        %2555 = vdwg.mxu0
        %v2556 = vadd.f32 %v2469, %v2550
        %v2557 = vadd.f32 %v2470, %v2552
        %v2558 = vlaneseq
        %v2559 = vshrl.u32 %v2558, 7
        %v2560 = vsub.s32 7, %v2559
        %v2561 = vrot.slane %v549, %v2560
        %v2562 = vlaneseq
        %v2563 = vshrl.u32 %v2562, 7
        %v2564 = vsub.s32 7, %v2563
        %v2565 = vrot.slane %v550, %v2564
        %2568 = vrot.lane.b32.xlu0 %v2561, 65
        %v2569 = vpop.permute.xlu0 %2568
        %2570 = vrot.lane.b32.xlu0 %v2565, 65
        %v2571 = vpop.permute.xlu0 %2570
        %v2572 = vsel %vm1013, %v2569, %v2571
        %v2576 = vmul.f32 %v1765, %v2569
        %v2577 = vmul.f32 %v1766, %v2572
        %v2578 = vmul.f32 %v1767, %v2571
        %v2579 = vpack.c.bf16 %v2576, %v2576
        %v2580 = vpack.c.bf16 %v2577, %v2577
        %v2581 = vpack.c.bf16 %v2578, %v2578
        %2585 = vrot.lane.b32.xlu0 %v2579, 63
        %v2586 = vpop.permute.xlu0 %2585
        %2587 = vrot.lane.b32.xlu0 %v2580, 63
        %v2588 = vpop.permute.xlu0 %2587
        %2589 = vrot.lane.b32.xlu0 %v2581, 63
        %v2590 = vpop.permute.xlu0 %2589
        %v2591 = vsel %vm1033, %v2586, %v2588
        %v2592 = vsel %vm1033, %v2588, %v2590
        %v2594 = vsel %vm618, %v541, 0
        %v2597 = vsel %vm622, %v2591, 0
        %v2600 = vsel %vm622, %v2592, 0
        %2602 = vmatprep.subr.bf16.mxu0 %v2600
        %2603 = vmatpush1.bf16.msra.mxu0 %v2597
        %2604 = vmatprep.subr.bf16.mxu0 0
        %2605 = vmatpush1.bf16.msra.mxu0 0
        %2606 = vmatprep.subr.bf16.mxu0 0
        %2607 = vmatpush1.bf16.msra.mxu0 0
        %2608 = vmatprep.subr.bf16.mxu0 0
        %2609 = vmatpush1.bf16.msra.mxu0 0
        %2610 = vmatprep.subr.bf16.mxu0 0
        %2611 = vmatpush1.bf16.msra.mxu0 0
        %2612 = vmatprep.subr.bf16.mxu0 0
        %2613 = vmatpush1.bf16.msra.mxu0 0
        %2614 = vmatprep.subr.bf16.mxu0 0
        %2615 = vmatpush1.bf16.msra.mxu0 0
        %2616 = vmatprep.subr.bf16.mxu0 0
        %2617 = vmatpush1.bf16.msra.mxu0 0
        %2618 = vmatprep.subr.bf16.mxu0 0
        %2619 = vmatpush1.bf16.msra.mxu0 0
        %2620 = vmatprep.subr.bf16.mxu0 0
        %2621 = vmatpush1.bf16.msra.mxu0 0
        %2622 = vmatprep.subr.bf16.mxu0 0
        %2623 = vmatpush1.bf16.msra.mxu0 0
        %2624 = vmatprep.subr.bf16.mxu0 0
        %2625 = vmatpush1.bf16.msra.mxu0 0
        %2626 = vmatprep.subr.bf16.mxu0 0
        %2627 = vmatpush1.bf16.msra.mxu0 0
        %2628 = vmatprep.subr.bf16.mxu0 0
        %2629 = vmatpush1.bf16.msra.mxu0 0
        %2630 = vmatprep.subr.bf16.mxu0 0
        %2631 = vmatpush1.bf16.msra.mxu0 0
        %2632 = vmatprep.subr.bf16.mxu0 0
        %2633 = vmatpush1.bf16.msra.mxu0 0
        %2634 = vmatprep.mubr.bf16.mxu0 0
        %2635 = vmatmul.mubr.bf16.gmra.mrb[0].mxu0 %v2594
        %v2636 = vpop.f32.mrb[0].mxu0
        %v2637 = vadd.f32 0.0, %v2636
        %v2638 = vpop.f32.mrb[0].mxu0
        %v2639 = vadd.f32 0.0, %v2638
        %v2640 = vpop.f32.mrb[0].mxu0
        %v2641 = vpop.f32.mrb[0].mxu0
        %2642 = vdwg.mxu0
        %v2643 = vadd.f32 %v2556, %v2637
        %v2644 = vadd.f32 %v2557, %v2639
        %v2645 = vlaneseq
        %v2646 = vshrl.u32 %v2645, 7
        %v2647 = vsub.s32 0, %v2646
        %v2648 = vrot.slane %v551, %v2647
        %v2649 = vlaneseq
        %v2650 = vshrl.u32 %v2649, 7
        %v2651 = vsub.s32 0, %v2650
        %v2652 = vrot.slane %v552, %v2651
        %2655 = vrot.lane.b32.xlu0 %v2648, 71
        %v2656 = vpop.permute.xlu0 %2655
        %2657 = vrot.lane.b32.xlu0 %v2652, 71
        %v2658 = vpop.permute.xlu0 %2657
        %v2659 = vsel %vm1102, %v2656, %v2658
        %v2663 = vmul.f32 %v1765, %v2656
        %v2664 = vmul.f32 %v1766, %v2659
        %v2665 = vmul.f32 %v1767, %v2658
        %v2666 = vpack.c.bf16 %v2663, %v2663
        %v2667 = vpack.c.bf16 %v2664, %v2664
        %v2668 = vpack.c.bf16 %v2665, %v2665
        %2672 = vrot.lane.b32.xlu0 %v2666, 57
        %v2673 = vpop.permute.xlu0 %2672
        %2674 = vrot.lane.b32.xlu0 %v2667, 57
        %v2675 = vpop.permute.xlu0 %2674
        %2676 = vrot.lane.b32.xlu0 %v2668, 57
        %v2677 = vpop.permute.xlu0 %2676
        %v2678 = vsel %vm1122, %v2673, %v2675
        %v2679 = vsel %vm1122, %v2675, %v2677
        %v2681 = vsel %vm618, %v542, 0
        %v2684 = vsel %vm622, %v2678, 0
        %v2687 = vsel %vm622, %v2679, 0
        %2689 = vmatprep.subr.bf16.mxu0 %v2687
        %2690 = vmatpush1.bf16.msra.mxu0 %v2684
        %2691 = vmatprep.subr.bf16.mxu0 0
        %2692 = vmatpush1.bf16.msra.mxu0 0
        %2693 = vmatprep.subr.bf16.mxu0 0
        %2694 = vmatpush1.bf16.msra.mxu0 0
        %2695 = vmatprep.subr.bf16.mxu0 0
        %2696 = vmatpush1.bf16.msra.mxu0 0
        %2697 = vmatprep.subr.bf16.mxu0 0
        %2698 = vmatpush1.bf16.msra.mxu0 0
        %2699 = vmatprep.subr.bf16.mxu0 0
        %2700 = vmatpush1.bf16.msra.mxu0 0
        %2701 = vmatprep.subr.bf16.mxu0 0
        %2702 = vmatpush1.bf16.msra.mxu0 0
        %2703 = vmatprep.subr.bf16.mxu0 0
        %2704 = vmatpush1.bf16.msra.mxu0 0
        %2705 = vmatprep.subr.bf16.mxu0 0
        %2706 = vmatpush1.bf16.msra.mxu0 0
        %2707 = vmatprep.subr.bf16.mxu0 0
        %2708 = vmatpush1.bf16.msra.mxu0 0
        %2709 = vmatprep.subr.bf16.mxu0 0
        %2710 = vmatpush1.bf16.msra.mxu0 0
        %2711 = vmatprep.subr.bf16.mxu0 0
        %2712 = vmatpush1.bf16.msra.mxu0 0
        %2713 = vmatprep.subr.bf16.mxu0 0
        %2714 = vmatpush1.bf16.msra.mxu0 0
        %2715 = vmatprep.subr.bf16.mxu0 0
        %2716 = vmatpush1.bf16.msra.mxu0 0
        %2717 = vmatprep.subr.bf16.mxu0 0
        %2718 = vmatpush1.bf16.msra.mxu0 0
        %2719 = vmatprep.subr.bf16.mxu0 0
        %2720 = vmatpush1.bf16.msra.mxu0 0
        %2721 = vmatprep.mubr.bf16.mxu0 0
        %2722 = vmatmul.mubr.bf16.gmra.mrb[0].mxu0 %v2681
        %v2723 = vpop.f32.mrb[0].mxu0
        %v2724 = vadd.f32 0.0, %v2723
        %v2725 = vpop.f32.mrb[0].mxu0
        %v2726 = vadd.f32 0.0, %v2725
        %v2727 = vpop.f32.mrb[0].mxu0
        %v2728 = vpop.f32.mrb[0].mxu0
        %2729 = vdwg.mxu0
        %v2730 = vadd.f32 %v2643, %v2724
        %v2731 = vadd.f32 %v2644, %v2726
        %v2732 = vlaneseq
        %v2733 = vshrl.u32 %v2732, 7
        %v2734 = vsub.s32 1, %v2733
        %v2735 = vrot.slane %v551, %v2734
        %v2736 = vlaneseq
        %v2737 = vshrl.u32 %v2736, 7
        %v2738 = vsub.s32 1, %v2737
        %v2739 = vrot.slane %v552, %v2738
        %2742 = vrot.lane.b32.xlu0 %v2735, 72
        %v2743 = vpop.permute.xlu0 %2742
        %2744 = vrot.lane.b32.xlu0 %v2739, 72
        %v2745 = vpop.permute.xlu0 %2744
        %v2746 = vsel %vm1191, %v2743, %v2745
        %v2750 = vmul.f32 %v1765, %v2743
        %v2751 = vmul.f32 %v1766, %v2746
        %v2752 = vmul.f32 %v1767, %v2745
        %v2753 = vpack.c.bf16 %v2750, %v2750
        %v2754 = vpack.c.bf16 %v2751, %v2751
        %v2755 = vpack.c.bf16 %v2752, %v2752
        %2759 = vrot.lane.b32.xlu0 %v2753, 56
        %v2760 = vpop.permute.xlu0 %2759
        %2761 = vrot.lane.b32.xlu0 %v2754, 56
        %v2762 = vpop.permute.xlu0 %2761
        %2763 = vrot.lane.b32.xlu0 %v2755, 56
        %v2764 = vpop.permute.xlu0 %2763
        %v2765 = vsel %vm1211, %v2760, %v2762
        %v2766 = vsel %vm1211, %v2762, %v2764
        %v2768 = vsel %vm618, %v543, 0
        %v2771 = vsel %vm622, %v2765, 0
        %v2774 = vsel %vm622, %v2766, 0
        %2776 = vmatprep.subr.bf16.mxu0 %v2774
        %2777 = vmatpush1.bf16.msra.mxu0 %v2771
        %2778 = vmatprep.subr.bf16.mxu0 0
        %2779 = vmatpush1.bf16.msra.mxu0 0
        %2780 = vmatprep.subr.bf16.mxu0 0
        %2781 = vmatpush1.bf16.msra.mxu0 0
        %2782 = vmatprep.subr.bf16.mxu0 0
        %2783 = vmatpush1.bf16.msra.mxu0 0
        %2784 = vmatprep.subr.bf16.mxu0 0
        %2785 = vmatpush1.bf16.msra.mxu0 0
        %2786 = vmatprep.subr.bf16.mxu0 0
        %2787 = vmatpush1.bf16.msra.mxu0 0
        %2788 = vmatprep.subr.bf16.mxu0 0
        %2789 = vmatpush1.bf16.msra.mxu0 0
        %2790 = vmatprep.subr.bf16.mxu0 0
        %2791 = vmatpush1.bf16.msra.mxu0 0
        %2792 = vmatprep.subr.bf16.mxu0 0
        %2793 = vmatpush1.bf16.msra.mxu0 0
        %2794 = vmatprep.subr.bf16.mxu0 0
        %2795 = vmatpush1.bf16.msra.mxu0 0
        %2796 = vmatprep.subr.bf16.mxu0 0
        %2797 = vmatpush1.bf16.msra.mxu0 0
        %2798 = vmatprep.subr.bf16.mxu0 0
        %2799 = vmatpush1.bf16.msra.mxu0 0
        %2800 = vmatprep.subr.bf16.mxu0 0
        %2801 = vmatpush1.bf16.msra.mxu0 0
        %2802 = vmatprep.subr.bf16.mxu0 0
        %2803 = vmatpush1.bf16.msra.mxu0 0
        %2804 = vmatprep.subr.bf16.mxu0 0
        %2805 = vmatpush1.bf16.msra.mxu0 0
        %2806 = vmatprep.subr.bf16.mxu0 0
        %2807 = vmatpush1.bf16.msra.mxu0 0
        %2808 = vmatprep.mubr.bf16.mxu0 0
        %2809 = vmatmul.mubr.bf16.gmra.mrb[0].mxu0 %v2768
        %v2810 = vpop.f32.mrb[0].mxu0
        %v2811 = vadd.f32 0.0, %v2810
        %v2812 = vpop.f32.mrb[0].mxu0
        %v2813 = vadd.f32 0.0, %v2812
        %v2814 = vpop.f32.mrb[0].mxu0
        %v2815 = vpop.f32.mrb[0].mxu0
        %2816 = vdwg.mxu0
        %v2817 = vadd.f32 %v2730, %v2811
        %v2818 = vadd.f32 %v2731, %v2813
        %v2819 = vlaneseq
        %v2820 = vshrl.u32 %v2819, 7
        %v2821 = vsub.s32 2, %v2820
        %v2822 = vrot.slane %v551, %v2821
        %v2823 = vlaneseq
        %v2824 = vshrl.u32 %v2823, 7
        %v2825 = vsub.s32 2, %v2824
        %v2826 = vrot.slane %v552, %v2825
        %2829 = vrot.lane.b32.xlu0 %v2822, 73
        %v2830 = vpop.permute.xlu0 %2829
        %2831 = vrot.lane.b32.xlu0 %v2826, 73
        %v2832 = vpop.permute.xlu0 %2831
        %v2833 = vsel %vm1280, %v2830, %v2832
        %v2837 = vmul.f32 %v1765, %v2830
        %v2838 = vmul.f32 %v1766, %v2833
        %v2839 = vmul.f32 %v1767, %v2832
        %v2840 = vpack.c.bf16 %v2837, %v2837
        %v2841 = vpack.c.bf16 %v2838, %v2838
        %v2842 = vpack.c.bf16 %v2839, %v2839
        %2846 = vrot.lane.b32.xlu0 %v2840, 55
        %v2847 = vpop.permute.xlu0 %2846
        %2848 = vrot.lane.b32.xlu0 %v2841, 55
        %v2849 = vpop.permute.xlu0 %2848
        %2850 = vrot.lane.b32.xlu0 %v2842, 55
        %v2851 = vpop.permute.xlu0 %2850
        %v2852 = vsel %vm1300, %v2847, %v2849
        %v2853 = vsel %vm1300, %v2849, %v2851
        %v2855 = vsel %vm618, %v544, 0
        %v2858 = vsel %vm622, %v2852, 0
        %v2861 = vsel %vm622, %v2853, 0
        %2863 = vmatprep.subr.bf16.mxu0 %v2861
        %2864 = vmatpush1.bf16.msra.mxu0 %v2858
        %2865 = vmatprep.subr.bf16.mxu0 0
        %2866 = vmatpush1.bf16.msra.mxu0 0
        %2867 = vmatprep.subr.bf16.mxu0 0
        %2868 = vmatpush1.bf16.msra.mxu0 0
        %2869 = vmatprep.subr.bf16.mxu0 0
        %2870 = vmatpush1.bf16.msra.mxu0 0
        %2871 = vmatprep.subr.bf16.mxu0 0
        %2872 = vmatpush1.bf16.msra.mxu0 0
        %2873 = vmatprep.subr.bf16.mxu0 0
        %2874 = vmatpush1.bf16.msra.mxu0 0
        %2875 = vmatprep.subr.bf16.mxu0 0
        %2876 = vmatpush1.bf16.msra.mxu0 0
        %2877 = vmatprep.subr.bf16.mxu0 0
        %2878 = vmatpush1.bf16.msra.mxu0 0
        %2879 = vmatprep.subr.bf16.mxu0 0
        %2880 = vmatpush1.bf16.msra.mxu0 0
        %2881 = vmatprep.subr.bf16.mxu0 0
        %2882 = vmatpush1.bf16.msra.mxu0 0
        %2883 = vmatprep.subr.bf16.mxu0 0
        %2884 = vmatpush1.bf16.msra.mxu0 0
        %2885 = vmatprep.subr.bf16.mxu0 0
        %2886 = vmatpush1.bf16.msra.mxu0 0
        %2887 = vmatprep.subr.bf16.mxu0 0
        %2888 = vmatpush1.bf16.msra.mxu0 0
        %2889 = vmatprep.subr.bf16.mxu0 0
        %2890 = vmatpush1.bf16.msra.mxu0 0
        %2891 = vmatprep.subr.bf16.mxu0 0
        %2892 = vmatpush1.bf16.msra.mxu0 0
        %2893 = vmatprep.subr.bf16.mxu0 0
        %2894 = vmatpush1.bf16.msra.mxu0 0
        %2895 = vmatprep.mubr.bf16.mxu0 0
        %2896 = vmatmul.mubr.bf16.gmra.mrb[0].mxu0 %v2855
        %v2897 = vpop.f32.mrb[0].mxu0
        %v2898 = vadd.f32 0.0, %v2897
        %v2899 = vpop.f32.mrb[0].mxu0
        %v2900 = vadd.f32 0.0, %v2899
        %v2901 = vpop.f32.mrb[0].mxu0
        %v2902 = vpop.f32.mrb[0].mxu0
        %2903 = vdwg.mxu0
        %v2904 = vadd.f32 %v2817, %v2898
        %v2905 = vadd.f32 %v2818, %v2900
        %v2906 = vld [vmem:[%s494] sm:$0xff]
        %v2908 = vcombine.high %v2906, %v2906
        %v2910 = vadd.f32 %v2904, %v2906
        %v2911 = vadd.f32 %v2905, %v2908
        %v2914 = vcombine.low %v2910, %v2911
        %2916 = vst [vmem:[%s504] sm:$0xff] %v2914
        %s2917 = smul.u32 2, %s22
        %p2918 = scmp.lt.s32.totalorder %s21, 1
        %s2919 = scalar_select %p2918, %s21, 1
        %p2920 = scmp.lt.s32.totalorder %s2917, 3
        %s2921 = scalar_select %p2920, %s2917, 3
        %s2922 = smul.addr %s2919, 4
        %s2923 = sadd.s32 %s2921, %s2922
        %s2924 = smul.addr %s2923, 4
        %s2925 = scalar_lea.vmem %s6, %s2924
        // Predicated region
        $region68: #{resblock_pallas.7} parent=62 // pred_check
          %p2926 = pneg %p220
        $region69: #{resblock_pallas.7} parent=62 // pred_check_branch
          %2928 = sbr.rel (%p2926) target = $region71
        $region70: #{resblock_pallas.7} parent=62 // pred_region
          %s2929 = smul.u32 2, %s22
        $region71: #{resblock_pallas.7} parent=62 // pred_fallthru
          _
      $region63: #{resblock_pallas.7} parent=5 // pred_fallthru
        _
      %p2930 = scmp.le.s32.totalorder 2, %s12
      // Predicated region
      $region72: #{resblock_pallas.7} parent=5 // pred_check
        %p2931 = pneg %p2930
      $region73: #{resblock_pallas.7} parent=5 // pred_check_branch
        %2933 = sbr.rel (%p2931) target = $region75
      $region74: #{resblock_pallas.7} parent=5 // pred_region
        %s2934 = ssub.s32 %s12, 2
        // Predicated region
        $region76: #{resblock_pallas.7} parent=74 // pred_check
          %p2935 = pneg %p226
        $region77: #{resblock_pallas.7} parent=74 // pred_check_branch
          %2937 = sbr.rel (%p2935) target = $region79
        $region78: #{resblock_pallas.7} parent=74 // pred_region
          %s2938 = smul.u32 2, %s24
          %p2939 = scmp.lt.s32.totalorder %s23, 1
          %s2940 = scalar_select %p2939, %s23, 1
          %p2941 = scmp.lt.s32.totalorder %s2938, 3
          %s2942 = scalar_select %p2941, %s2938, 3
          %s2943 = smul.addr %s2940, 4
          %s2944 = sadd.s32 %s2942, %s2943
          %s2945 = smul.addr %s2944, 4
          %s2946 = scalar_lea.vmem %s6, %s2945
        $region79: #{resblock_pallas.7} parent=74 // pred_fallthru
          _
      $region75: #{resblock_pallas.7} parent=5 // pred_fallthru
        _
    $region6: #{resblock_pallas.7} parent=1 // loop_footer
      %s16 = sadd.s32 1, %s12
    $region7: #{resblock_pallas.7} parent=1 // loop_footer_branch
      %11 = sbr.rel target = $region3
    $region8: #{resblock_pallas.7} parent=1 // loop_exit
      _

</llo_original>
